<compile_context>
chip_gen: v6e
topology: v6e:2x2x1
jax: 0.10.0
libtpu: 0.0.40
codegen_flags: <defaults>
</compile_context>

<pallas_src>
import math
from functools import partial

import jax
import jax.numpy as jnp
from jax import lax
from jax.experimental import pallas as pl
from jax.experimental.pallas import tpu as pltpu

# ----------------------------- static hyper-parameters -----------------------------
DIM = 32
DIM_HEAD = 8
HEADS = 4
NUM_EXPERTS = 2
LOCAL_WINDOW = 4          # local_attn_window_size
ROUTED_WINDOW = 4         # routed_window_size (defaults to local window)
NUM_ROUTED_QUERIES = 2
NUM_ROUTED_KV = 3
AVERAGE_ROUTED = False

BATCH = 2
SEQ = 12

INNER = DIM_HEAD * HEADS
NEG_INF = -1e30


# =============================== Pallas kernels ===============================
#
# Kernel 1: fused LocalMHA (LayerNorm + Wqkv + causal-window attention + Wout), grid=(B,).
# Kernel 2: fused routed grouped Attention (grouped RMSNorm + Wq/Wkv + null-KV masked
#           attention + Wout + value/output scales), grid=(2,) over the window-batch axis.
# Both grids are marked "parallel" so v7x shards them across its 2 TensorCores; on v5e/v6e
# they are 2 cheap sequential steps over a few-KB working set that lives entirely in VMEM.

def _local_mha_kernel(x_ref, lnw_ref, lnb_ref, wqkv_ref, wout_ref, o_ref,
                      *, heads, dim_head, window, scale):
    x = x_ref[0]                                     # (N, D)
    n = x.shape[0]
    inner = heads * dim_head

    # prenorm LayerNorm
    mu = jnp.mean(x, axis=-1, keepdims=True)
    xc = x - mu
    var = jnp.mean(xc * xc, axis=-1, keepdims=True)
    xn = xc * lax.rsqrt(var + 1e-5) * lnw_ref[...] + lnb_ref[...]

    qkv = jnp.dot(xn, wqkv_ref[...], preferred_element_type=jnp.float32)   # (N, 3*inner)
    wout = wout_ref[...]                             # (inner, D)

    # TODO(synk): LocalAttention's exact bucketed windowing (look_backward buckets) is
    # approximated with a sliding causal window of `window` previous tokens.
    i = lax.broadcasted_iota(jnp.int32, (n, n), 0)
    j = lax.broadcasted_iota(jnp.int32, (n, n), 1)
    allowed = (j <= i) & ((i - j) <= window)

    out = jnp.zeros((n, wout.shape[-1]), jnp.float32)
    for h in range(heads):                           # fully unrolled, all data stays in vregs
        qh = qkv[:, h * dim_head:(h + 1) * dim_head]
        kh = qkv[:, inner + h * dim_head: inner + (h + 1) * dim_head]
        vh = qkv[:, 2 * inner + h * dim_head: 2 * inner + (h + 1) * dim_head]
        sim = lax.dot_general(qh, kh, (((1,), (1,)), ((), ())),
                              preferred_element_type=jnp.float32) * scale   # (N, N)
        sim = jnp.where(allowed, sim, NEG_INF)
        sim = sim - jnp.max(sim, axis=-1, keepdims=True)
        p = jnp.exp(sim)
        p = p * pl.reciprocal(jnp.sum(p, axis=-1, keepdims=True), approx=True)
        oh = jnp.dot(p, vh, preferred_element_type=jnp.float32)             # (N, dh)
        # accumulate the out-projection per head (aligned sublane slices of Wout; no concat)
        out = out + jnp.dot(oh, wout[h * dim_head:(h + 1) * dim_head, :],
                            preferred_element_type=jnp.float32)
    o_ref[0] = out.astype(o_ref.dtype)


def fused_local_mha(params, x):
    B, N, D = x.shape
    lnw = params["local_ln_w"].reshape(1, D)
    lnb = params["local_ln_b"].reshape(1, D)
    kern = partial(_local_mha_kernel, heads=HEADS, dim_head=DIM_HEAD,
                   window=LOCAL_WINDOW, scale=DIM_HEAD ** -0.5)
    return pl.pallas_call(
        kern,
        out_shape=jax.ShapeDtypeStruct((B, N, D), jnp.float32),
        grid=(B,),
        in_specs=[
            pl.BlockSpec((1, N, D), lambda b: (b, 0, 0)),
            pl.BlockSpec((1, D), lambda b: (0, 0)),
            pl.BlockSpec((1, D), lambda b: (0, 0)),
            pl.BlockSpec((D, 3 * INNER), lambda b: (0, 0)),
            pl.BlockSpec((INNER, D), lambda b: (0, 0)),
        ],
        out_specs=pl.BlockSpec((1, N, D), lambda b: (b, 0, 0)),
        compiler_params=pltpu.CompilerParams(dimension_semantics=("parallel",)),
    )(x, lnw, lnb, params["local_Wqkv"], params["local_Wout"])


def _routed_attn_kernel(q_ref, ctx_ref, mask_ref, vscale_ref, oscale_ref,
                        gq_ref, gc_ref, wq_ref, wkv_ref, wout_ref, nk_ref, nv_ref,
                        o_ref, *, heads, dim_head, scale):
    bpb, G, Nq, D = q_ref.shape
    Nk = ctx_ref.shape[2]
    inner = heads * dim_head
    sqrt_d = float(D) ** 0.5

    gq = gq_ref[...]          # (G, D)
    gc = gc_ref[...]
    nk = nk_ref[...]          # (G, inner)  head-major null keys
    nv = nv_ref[...]          # (G, inner)  head-major null values

    def rms_norm(t, gamma_row):
        nrm = jnp.sqrt(jnp.sum(t * t, axis=-1, keepdims=True))
        return t / jnp.maximum(nrm, 1e-12) * sqrt_d * gamma_row

    for bp in range(bpb):
        # grouped-conv kv projections for every group first: torch's chunk(2, dim=channel)
        # followed by 'b (g h d) n' rearrange mixes channels ACROSS conv groups; reproduce it.
        kv_per_g = []
        for g in range(G):
            cn = rms_norm(ctx_ref[bp, g], gc[g:g + 1, :])                           # (Nk, D)
            kv_per_g.append(jnp.dot(cn, wkv_ref[g], preferred_element_type=jnp.float32))

        def chunk_slice(flat_start):
            src_g = flat_start // (2 * inner)
            off = flat_start % (2 * inner)
            return kv_per_g[src_g][:, off:off + inner]

        k_groups = [chunk_slice(g * inner) for g in range(G)]          # K fed to group g
        v_groups = [chunk_slice((G + g) * inner) for g in range(G)]    # V fed to group g

        for g in range(G):
            qn = rms_norm(q_ref[bp, g], gq[g:g + 1, :])                             # (Nq, D)
            q = jnp.dot(qn, wq_ref[g], preferred_element_type=jnp.float32)          # (Nq, inner)
            kf = k_groups[g]                                                        # (Nk, inner)
            vf = v_groups[g] * vscale_ref[bp, g]          # values_scale applied before null-kv
            msk = mask_ref[bp, g] > 0.5                                             # (1, Nk)
            wout = wout_ref[g]                                                      # (inner, D)

            out = jnp.zeros((Nq, D), jnp.float32)
            for h in range(heads):
                sl = slice(h * dim_head, (h + 1) * dim_head)
                qh, kh, vh = q[:, sl], kf[:, sl], vf[:, sl]
                nkh, nvh = nk[g:g + 1, sl], nv[g:g + 1, sl]                         # (1, dh)
                sim = lax.dot_general(qh, kh, (((1,), (1,)), ((), ())),
                                      preferred_element_type=jnp.float32) * scale  # (Nq, Nk)
                sim = jnp.where(msk, sim, NEG_INF)
                nsim = lax.dot_general(qh, nkh, (((1,), (1,)), ((), ())),
                                       preferred_element_type=jnp.float32) * scale  # (Nq, 1)
                # softmax over [null key, real keys] without materializing a concat
                m = jnp.maximum(jnp.max(sim, axis=-1, keepdims=True), nsim)
                e = jnp.exp(sim - m)
                en = jnp.exp(nsim - m)
                inv = pl.reciprocal(en + jnp.sum(e, axis=-1, keepdims=True), approx=True)
                oh = (jnp.dot(e * inv, vh, preferred_element_type=jnp.float32)
                      + (en * inv) * nvh)                                           # (Nq, dh)
                out = out + jnp.dot(oh, wout[h * dim_head:(h + 1) * dim_head, :],
                                    preferred_element_type=jnp.float32)
            out = out * oscale_ref[bp, g]                                           # (Nq, 1)
            o_ref[bp, g] = out.astype(o_ref.dtype)


def fused_routed_attention(params, queries, context, context_mask, values_scale, output_scale):
    """queries: (BP,G,Nq,D); context: (BP,G,Nk,D); context_mask: (BP,G,Nk) bool;
    values_scale: (BP,G,Nk); output_scale: (BP,G,Nq)  ->  (BP,G,Nq,D)."""
    BP, G, Nq, D = queries.shape
    Nk = context.shape[2]
    mask_f = context_mask.astype(jnp.float32).reshape(BP, G, 1, Nk)
    vscale = values_scale.astype(jnp.float32).reshape(BP, G, Nk, 1)
    oscale = output_scale.astype(jnp.float32).reshape(BP, G, Nq, 1)
    null_k = params["null_kv"][0].reshape(G, INNER)       # (G, h*dh), head-major
    null_v = params["null_kv"][1].reshape(G, INNER)

    grid_n = 2 if BP % 2 == 0 else 1                       # 2-way parallel axis for v7x
    bpb = BP // grid_n

    blk4 = lambda i: (i, 0, 0, 0)
    zero2 = lambda i: (0, 0)
    zero3 = lambda i: (0, 0, 0)
    kern = partial(_routed_attn_kernel, heads=HEADS, dim_head=DIM_HEAD,
                   scale=DIM_HEAD ** -0.5)
    return pl.pallas_call(
        kern,
        out_shape=jax.ShapeDtypeStruct((BP, G, Nq, D), jnp.float32),
        grid=(grid_n,),
        in_specs=[
            pl.BlockSpec((bpb, G, Nq, D), blk4),
            pl.BlockSpec((bpb, G, Nk, D), blk4),
            pl.BlockSpec((bpb, G, 1, Nk), blk4),
            pl.BlockSpec((bpb, G, Nk, 1), blk4),
            pl.BlockSpec((bpb, G, Nq, 1), blk4),
            pl.BlockSpec((G, D), zero2),
            pl.BlockSpec((G, D), zero2),
            pl.BlockSpec((G, D, INNER), zero3),
            pl.BlockSpec((G, D, 2 * INNER), zero3),
            pl.BlockSpec((G, INNER, D), zero3),
            pl.BlockSpec((G, INNER), zero2),
            pl.BlockSpec((G, INNER), zero2),
        ],
        out_specs=pl.BlockSpec((bpb, G, Nq, D), blk4),
        compiler_params=pltpu.CompilerParams(dimension_semantics=("parallel",)),
    )(queries, context, mask_f, vscale, oscale,
      params["attn_q_gamma"], params["attn_ctx_gamma"],
      params["attn_Wq"], params["attn_Wkv"], params["attn_Wout"],
      null_k, null_v)


# =============================== plain-JAX glue ===============================

def coordinate_descent_router(W, x, mask, num_tokens):
    """x: (B, N, D), mask: (B, N) bool -> (indices, scores, routed_tokens, routed_mask)."""
    # TODO(synk): the true CoordinateDescentRouter runs iterative coordinate-descent sparse
    # top-k; approximated by a sigmoid-gated hard top-k over router logits (kept in XLA so it
    # fuses with top_k / gathers — the projection is a (N,32)@(32,2) sliver, not worth a launch).
    B, N, D = x.shape
    G = W.shape[-1]
    logits = jnp.einsum("bnd,dg->bgn", x, W)                     # (B, G, N)
    gate = jax.nn.sigmoid(logits)
    masked_logits = jnp.where(mask[:, None, :], logits, jnp.finfo(logits.dtype).min)
    _, idx = lax.top_k(masked_logits, num_tokens)                # (B, G, k)
    scores = jnp.take_along_axis(gate, idx, axis=2)
    routed_mask = jnp.take_along_axis(
        jnp.broadcast_to(mask[:, None, :], (B, G, N)), idx, axis=2)
    scores = scores * routed_mask.astype(scores.dtype)
    xg = jnp.broadcast_to(x[:, None], (B, G, N, D))
    routed = jnp.take_along_axis(
        xg, jnp.broadcast_to(idx[..., None], (B, G, num_tokens, D)), axis=2)
    return idx, scores, routed, routed_mask


def mixture_forward(params, x):
    b, n, d = x.shape
    w = ROUTED_WINDOW
    num_windows = math.ceil(n / w) - 1

    local_out = fused_local_mha(params, x)
    if num_windows == 0:
        return local_out

    pad_len = (-n) % w
    x_p = jnp.pad(x, ((0, 0), (0, pad_len), (0, 0)))
    mask = jnp.concatenate([jnp.ones((b, n), bool), jnp.zeros((b, pad_len), bool)], axis=1)
    n_pad = n + pad_len
    nw = num_windows

    # context = everything but the last window, replicated per window row
    context = x_p[:, :-w, :]
    context = jnp.broadcast_to(context[:, None], (b, nw, n_pad - w, d)).reshape(b * nw, n_pad - w, d)
    cm = jnp.tril(jnp.ones((nw, nw), bool))
    cm = jnp.repeat(cm, w, axis=1)                                      # (nw, nw*w)
    context_mask = jnp.broadcast_to(cm[None], (b, nw, nw * w)).reshape(b * nw, nw * w)

    xw = x_p.reshape(b, n_pad // w, w, d)[:, 1:].reshape(b * nw, w, d)
    mw = mask.reshape(b, n_pad // w, w)[:, 1:].reshape(b * nw, w)

    q_idx, q_scores, queries, q_mask = coordinate_descent_router(
        params["router_q_W"], xw, mw, NUM_ROUTED_QUERIES)
    kv_idx, kv_scores, key_values, kv_mask = coordinate_descent_router(
        params["router_kv_W"], context, context_mask, NUM_ROUTED_KV)

    attn_out = fused_routed_attention(
        params, queries, key_values, kv_mask,
        values_scale=kv_scores, output_scale=q_scores)                  # (b*nw, G, nq, d)

    bp, g = b * nw, NUM_EXPERTS

    # scatter-add routed outputs back into window positions (one-hot matmul == scatter_add);
    # counts and sums are collapsed into ONE einsum by augmenting with a ones/mask channel.
    onehot = (q_idx[..., None] == jnp.arange(w)[None, None, None, :]).astype(x.dtype)  # (bp,g,nq,w)
    aug = jnp.concatenate([attn_out, q_mask.astype(x.dtype)[..., None]], axis=-1)      # (bp,g,nq,d+1)
    summed = jnp.einsum("bgqw,bgqc->bgwc", onehot, aug)                                # (bp,g,w,d+1)
    attn_out_summed = summed[..., :d]
    counts = summed[..., d]

    # NOTE: reference `counts == 0 & ~mask` — Python precedence reduces this to counts == 0.
    fill_null = counts == 0
    attn_out_summed = jnp.where(fill_null[..., None],
                                params["null_tokens"][None, :, None, :],
                                attn_out_summed)

    attn_out_summed = (attn_out_summed
                       .reshape(b, nw, g, w, d)
                       .transpose(0, 2, 1, 3, 4)
                       .reshape(b, g, nw * w, d))
    attn_out_summed = jnp.pad(attn_out_summed, ((0, 0), (0, 0), (w, 0), (0, 0)))
    attn_out_summed = attn_out_summed[:, :, :n, :]
    out = jnp.sum(attn_out_summed, axis=1) + local_out
    if AVERAGE_ROUTED:
        out = out / (NUM_EXPERTS + 1)
    return out


# =============================== parameters ===============================

def init_params(key):
    ks = jax.random.split(key, 9)
    s = 0.02
    f32 = jnp.float32
    return {
        # LocalMHA
        "local_ln_w": jnp.ones((DIM,), f32),
        "local_ln_b": jnp.zeros((DIM,), f32),
        "local_Wqkv": jax.random.normal(ks[0], (DIM, 3 * INNER), f32) * s,
        "local_Wout": jax.random.normal(ks[1], (INNER, DIM), f32) * s,
        # routers (dim -> num_routing_tokens)
        "router_q_W": jax.random.normal(ks[2], (DIM, NUM_EXPERTS), f32) * s,
        "router_kv_W": jax.random.normal(ks[3], (DIM, NUM_EXPERTS), f32) * s,
        # grouped Attention
        "attn_q_gamma": jnp.ones((NUM_EXPERTS, DIM), f32),
        "attn_ctx_gamma": jnp.ones((NUM_EXPERTS, DIM), f32),
        "attn_Wq": jax.random.normal(ks[4], (NUM_EXPERTS, DIM, INNER), f32) * s,
        "attn_Wkv": jax.random.normal(ks[5], (NUM_EXPERTS, DIM, 2 * INNER), f32) * s,
        "attn_Wout": jax.random.normal(ks[6], (NUM_EXPERTS, INNER, DIM), f32) * s,
        "null_kv": jax.random.normal(ks[7], (2, NUM_EXPERTS, HEADS, 1, DIM_HEAD), f32),
        # MoA null tokens
        "null_tokens": jax.random.normal(ks[8], (NUM_EXPERTS, DIM), f32),
    }


if __name__ == "__main__":
    key = jax.random.PRNGKey(0)
    pkey, xkey = jax.random.split(key)
    params = init_params(pkey)
    x = jax.random.normal(xkey, (BATCH, SEQ, DIM), jnp.float32)

    out = jax.jit(mixture_forward)(params, x)
    out = jax.block_until_ready(out)

    assert out.shape == (BATCH, SEQ, DIM), out.shape
    assert bool(jnp.all(jnp.isfinite(out)))
    print("KERNEL_OK")
</pallas_src>

<mosaic_0001>
module attributes {stable_mosaic.version = 11 : i64} {
  func.func @_routed_attn_kernel(%arg0: i32, %arg1: memref<2x2x2x32xf32, #tpu.memory_space<vmem>>, %arg2: memref<2x2x3x32xf32, #tpu.memory_space<vmem>>, %arg3: memref<2x2x1x3xf32, #tpu.memory_space<vmem>>, %arg4: memref<2x2x3x1xf32, #tpu.memory_space<vmem>>, %arg5: memref<2x2x2x1xf32, #tpu.memory_space<vmem>>, %arg6: memref<2x32xf32, #tpu.memory_space<vmem>>, %arg7: memref<2x32xf32, #tpu.memory_space<vmem>>, %arg8: memref<2x32x32xf32, #tpu.memory_space<vmem>>, %arg9: memref<2x32x64xf32, #tpu.memory_space<vmem>>, %arg10: memref<2x32x32xf32, #tpu.memory_space<vmem>>, %arg11: memref<2x32xf32, #tpu.memory_space<vmem>>, %arg12: memref<2x32xf32, #tpu.memory_space<vmem>>, %arg13: memref<2x2x2x32xf32, #tpu.memory_space<vmem>>) attributes {dimension_semantics = [#tpu.dimension_semantics<parallel>], iteration_bounds = array<i64: 2>, scalar_prefetch = 0 : i64, scratch_operands = 0 : i64, tpu.core_type = #tpu.core_type<tc>, window_params = [{transform_indices = @transform_0, window_bounds = array<i64: 2, 2, 2, 32>}, {transform_indices = @transform_1, window_bounds = array<i64: 2, 2, 3, 32>}, {transform_indices = @transform_2, window_bounds = array<i64: 2, 2, 1, 3>}, {transform_indices = @transform_3, window_bounds = array<i64: 2, 2, 3, 1>}, {transform_indices = @transform_4, window_bounds = array<i64: 2, 2, 2, 1>}, {pipeline_mode = #tpu.pipeline_mode<synchronous>, transform_indices = @transform_5, window_bounds = array<i64: 2, 32>}, {pipeline_mode = #tpu.pipeline_mode<synchronous>, transform_indices = @transform_6, window_bounds = array<i64: 2, 32>}, {pipeline_mode = #tpu.pipeline_mode<synchronous>, transform_indices = @transform_7, window_bounds = array<i64: 2, 32, 32>}, {pipeline_mode = #tpu.pipeline_mode<synchronous>, transform_indices = @transform_8, window_bounds = array<i64: 2, 32, 64>}, {pipeline_mode = #tpu.pipeline_mode<synchronous>, transform_indices = @transform_9, window_bounds = array<i64: 2, 32, 32>}, {pipeline_mode = #tpu.pipeline_mode<synchronous>, transform_indices = @transform_10, window_bounds = array<i64: 2, 32>}, {pipeline_mode = #tpu.pipeline_mode<synchronous>, transform_indices = @transform_11, window_bounds = array<i64: 2, 32>}, {transform_indices = @transform_12, window_bounds = array<i64: 2, 2, 2, 32>}]} {
    %c0 = arith.constant 0 : index
    %c0_0 = arith.constant 0 : index
    %0 = vector.load %arg6[%c0, %c0_0] : memref<2x32xf32, #tpu.memory_space<vmem>>, vector<2x32xf32>
    %c0_1 = arith.constant 0 : index
    %c0_2 = arith.constant 0 : index
    %1 = vector.load %arg7[%c0_1, %c0_2] : memref<2x32xf32, #tpu.memory_space<vmem>>, vector<2x32xf32>
    %c0_3 = arith.constant 0 : index
    %c0_4 = arith.constant 0 : index
    %2 = vector.load %arg11[%c0_3, %c0_4] : memref<2x32xf32, #tpu.memory_space<vmem>>, vector<2x32xf32>
    %c0_5 = arith.constant 0 : index
    %c0_6 = arith.constant 0 : index
    %3 = vector.load %arg12[%c0_5, %c0_6] : memref<2x32xf32, #tpu.memory_space<vmem>>, vector<2x32xf32>
    %c0_7 = arith.constant 0 : index
    %c0_8 = arith.constant 0 : index
    %c0_9 = arith.constant 0 : index
    %c0_10 = arith.constant 0 : index
    %4 = vector.load %arg2[%c0_7, %c0_8, %c0_9, %c0_10] : memref<2x2x3x32xf32, #tpu.memory_space<vmem>>, vector<1x1x3x32xf32>
    %5 = vector.shape_cast %4 : vector<1x1x3x32xf32> to vector<3x32xf32>
    %6 = vector.extract_strided_slice %1 {offsets = [0, 0], sizes = [1, 32], strides = [1, 1]} : vector<2x32xf32> to vector<1x32xf32>
    %7 = arith.mulf %5, %5 : vector<3x32xf32>
    %cst = arith.constant dense<0.000000e+00> : vector<3xf32>
    %8 = vector.multi_reduction <add>, %7, %cst [1] : vector<3x32xf32> to vector<3xf32>
    %9 = vector.shape_cast %8 : vector<3xf32> to vector<3x1xf32>
    %10 = math.sqrt %9 : vector<3x1xf32>
    %cst_11 = arith.constant 9.99999996E-13 : f32
    %11 = vector.broadcast %cst_11 : f32 to vector<3x1xf32>
    %12 = arith.maximumf %10, %11 : vector<3x1xf32>
    %13 = vector.broadcast %12 : vector<3x1xf32> to vector<3x32xf32>
    %14 = arith.divf %5, %13 : vector<3x32xf32>
    %cst_12 = arith.constant 5.65685415 : f32
    %15 = vector.broadcast %cst_12 : f32 to vector<3x32xf32>
    %16 = arith.mulf %14, %15 : vector<3x32xf32>
    %17 = vector.broadcast %6 : vector<1x32xf32> to vector<3x32xf32>
    %18 = arith.mulf %16, %17 : vector<3x32xf32>
    %c0_13 = arith.constant 0 : index
    %c0_14 = arith.constant 0 : index
    %c0_15 = arith.constant 0 : index
    %19 = vector.load %arg9[%c0_13, %c0_14, %c0_15] : memref<2x32x64xf32, #tpu.memory_space<vmem>>, vector<1x32x64xf32>
    %20 = vector.shape_cast %19 : vector<1x32x64xf32> to vector<32x64xf32>
    %cst_16 = arith.constant dense<0.000000e+00> : vector<3x64xf32>
    %21 = tpu.matmul %18, %20, %cst_16 {dimension_numbers = #tpu.dot_dimension_numbers<[1], [0], [0], [1], [0, 0, 1, 1], [], []>} : vector<3x32xf32>, vector<32x64xf32>, vector<3x64xf32> -> vector<3x64xf32>
    %c0_17 = arith.constant 0 : index
    %c1 = arith.constant 1 : index
    %c0_18 = arith.constant 0 : index
    %c0_19 = arith.constant 0 : index
    %22 = vector.load %arg2[%c0_17, %c1, %c0_18, %c0_19] : memref<2x2x3x32xf32, #tpu.memory_space<vmem>>, vector<1x1x3x32xf32>
    %23 = vector.shape_cast %22 : vector<1x1x3x32xf32> to vector<3x32xf32>
    %24 = vector.extract_strided_slice %1 {offsets = [1, 0], sizes = [1, 32], strides = [1, 1]} : vector<2x32xf32> to vector<1x32xf32>
    %25 = arith.mulf %23, %23 : vector<3x32xf32>
    %cst_20 = arith.constant dense<0.000000e+00> : vector<3xf32>
    %26 = vector.multi_reduction <add>, %25, %cst_20 [1] : vector<3x32xf32> to vector<3xf32>
    %27 = vector.shape_cast %26 : vector<3xf32> to vector<3x1xf32>
    %28 = math.sqrt %27 : vector<3x1xf32>
    %cst_21 = arith.constant 9.99999996E-13 : f32
    %29 = vector.broadcast %cst_21 : f32 to vector<3x1xf32>
    %30 = arith.maximumf %28, %29 : vector<3x1xf32>
    %31 = vector.broadcast %30 : vector<3x1xf32> to vector<3x32xf32>
    %32 = arith.divf %23, %31 : vector<3x32xf32>
    %cst_22 = arith.constant 5.65685415 : f32
    %33 = vector.broadcast %cst_22 : f32 to vector<3x32xf32>
    %34 = arith.mulf %32, %33 : vector<3x32xf32>
    %35 = vector.broadcast %24 : vector<1x32xf32> to vector<3x32xf32>
    %36 = arith.mulf %34, %35 : vector<3x32xf32>
    %c1_23 = arith.constant 1 : index
    %c0_24 = arith.constant 0 : index
    %c0_25 = arith.constant 0 : index
    %37 = vector.load %arg9[%c1_23, %c0_24, %c0_25] : memref<2x32x64xf32, #tpu.memory_space<vmem>>, vector<1x32x64xf32>
    %38 = vector.shape_cast %37 : vector<1x32x64xf32> to vector<32x64xf32>
    %cst_26 = arith.constant dense<0.000000e+00> : vector<3x64xf32>
    %39 = tpu.matmul %36, %38, %cst_26 {dimension_numbers = #tpu.dot_dimension_numbers<[1], [0], [0], [1], [0, 0, 1, 1], [], []>} : vector<3x32xf32>, vector<32x64xf32>, vector<3x64xf32> -> vector<3x64xf32>
    %40 = vector.extract_strided_slice %21 {offsets = [0, 0], sizes = [3, 32], strides = [1, 1]} : vector<3x64xf32> to vector<3x32xf32>
    %41 = vector.extract_strided_slice %21 {offsets = [0, 32], sizes = [3, 32], strides = [1, 1]} : vector<3x64xf32> to vector<3x32xf32>
    %42 = vector.extract_strided_slice %39 {offsets = [0, 0], sizes = [3, 32], strides = [1, 1]} : vector<3x64xf32> to vector<3x32xf32>
    %43 = vector.extract_strided_slice %39 {offsets = [0, 32], sizes = [3, 32], strides = [1, 1]} : vector<3x64xf32> to vector<3x32xf32>
    %c0_27 = arith.constant 0 : index
    %c0_28 = arith.constant 0 : index
    %c0_29 = arith.constant 0 : index
    %c0_30 = arith.constant 0 : index
    %44 = vector.load %arg1[%c0_27, %c0_28, %c0_29, %c0_30] : memref<2x2x2x32xf32, #tpu.memory_space<vmem>>, vector<1x1x2x32xf32>
    %45 = vector.shape_cast %44 : vector<1x1x2x32xf32> to vector<2x32xf32>
    %46 = vector.extract_strided_slice %0 {offsets = [0, 0], sizes = [1, 32], strides = [1, 1]} : vector<2x32xf32> to vector<1x32xf32>
    %47 = arith.mulf %45, %45 : vector<2x32xf32>
    %cst_31 = arith.constant dense<0.000000e+00> : vector<2xf32>
    %48 = vector.multi_reduction <add>, %47, %cst_31 [1] : vector<2x32xf32> to vector<2xf32>
    %49 = vector.shape_cast %48 : vector<2xf32> to vector<2x1xf32>
    %50 = math.sqrt %49 : vector<2x1xf32>
    %cst_32 = arith.constant 9.99999996E-13 : f32
    %51 = vector.broadcast %cst_32 : f32 to vector<2x1xf32>
    %52 = arith.maximumf %50, %51 : vector<2x1xf32>
    %53 = vector.broadcast %52 : vector<2x1xf32> to vector<2x32xf32>
    %54 = arith.divf %45, %53 : vector<2x32xf32>
    %cst_33 = arith.constant 5.65685415 : f32
    %55 = vector.broadcast %cst_33 : f32 to vector<2x32xf32>
    %56 = arith.mulf %54, %55 : vector<2x32xf32>
    %57 = vector.broadcast %46 : vector<1x32xf32> to vector<2x32xf32>
    %58 = arith.mulf %56, %57 : vector<2x32xf32>
    %c0_34 = arith.constant 0 : index
    %c0_35 = arith.constant 0 : index
    %c0_36 = arith.constant 0 : index
    %59 = vector.load %arg8[%c0_34, %c0_35, %c0_36] : memref<2x32x32xf32, #tpu.memory_space<vmem>>, vector<1x32x32xf32>
    %60 = vector.shape_cast %59 : vector<1x32x32xf32> to vector<32x32xf32>
    %cst_37 = arith.constant dense<0.000000e+00> : vector<2x32xf32>
    %61 = tpu.matmul %58, %60, %cst_37 {dimension_numbers = #tpu.dot_dimension_numbers<[1], [0], [0], [1], [0, 0, 1, 1], [], []>} : vector<2x32xf32>, vector<32x32xf32>, vector<2x32xf32> -> vector<2x32xf32>
    %c0_38 = arith.constant 0 : index
    %c0_39 = arith.constant 0 : index
    %c0_40 = arith.constant 0 : index
    %c0_41 = arith.constant 0 : index
    %62 = vector.load %arg4[%c0_38, %c0_39, %c0_40, %c0_41] : memref<2x2x3x1xf32, #tpu.memory_space<vmem>>, vector<1x1x3x1xf32>
    %63 = vector.shape_cast %62 : vector<1x1x3x1xf32> to vector<3x1xf32>
    %64 = vector.broadcast %63 : vector<3x1xf32> to vector<3x32xf32>
    %65 = arith.mulf %42, %64 : vector<3x32xf32>
    %c0_42 = arith.constant 0 : index
    %c0_43 = arith.constant 0 : index
    %c0_44 = arith.constant 0 : index
    %c0_45 = arith.constant 0 : index
    %66 = vector.load %arg3[%c0_42, %c0_43, %c0_44, %c0_45] : memref<2x2x1x3xf32, #tpu.memory_space<vmem>>, vector<1x1x1x3xf32>
    %67 = vector.shape_cast %66 : vector<1x1x1x3xf32> to vector<1x3xf32>
    %cst_46 = arith.constant 5.000000e-01 : f32
    %68 = vector.broadcast %cst_46 : f32 to vector<1x3xf32>
    %69 = arith.cmpf ogt, %67, %68 : vector<1x3xf32>
    %c0_47 = arith.constant 0 : index
    %c0_48 = arith.constant 0 : index
    %c0_49 = arith.constant 0 : index
    %70 = vector.load %arg10[%c0_47, %c0_48, %c0_49] : memref<2x32x32xf32, #tpu.memory_space<vmem>>, vector<1x32x32xf32>
    %71 = vector.shape_cast %70 : vector<1x32x32xf32> to vector<32x32xf32>
    %cst_50 = arith.constant 0.000000e+00 : f32
    %72 = vector.broadcast %cst_50 : f32 to vector<2x32xf32>
    %73 = vector.extract_strided_slice %61 {offsets = [0, 0], sizes = [2, 8], strides = [1, 1]} : vector<2x32xf32> to vector<2x8xf32>
    %74 = vector.extract_strided_slice %40 {offsets = [0, 0], sizes = [3, 8], strides = [1, 1]} : vector<3x32xf32> to vector<3x8xf32>
    %75 = vector.extract_strided_slice %65 {offsets = [0, 0], sizes = [3, 8], strides = [1, 1]} : vector<3x32xf32> to vector<3x8xf32>
    %76 = vector.extract_strided_slice %2 {offsets = [0, 0], sizes = [1, 8], strides = [1, 1]} : vector<2x32xf32> to vector<1x8xf32>
    %77 = vector.extract_strided_slice %3 {offsets = [0, 0], sizes = [1, 8], strides = [1, 1]} : vector<2x32xf32> to vector<1x8xf32>
    %cst_51 = arith.constant dense<0.000000e+00> : vector<2x3xf32>
    %78 = tpu.matmul %73, %74, %cst_51 {dimension_numbers = #tpu.dot_dimension_numbers<[1], [1], [0], [0], [0, 0, 1, 0], [], []>} : vector<2x8xf32>, vector<3x8xf32>, vector<2x3xf32> -> vector<2x3xf32>
    %cst_52 = arith.constant 0.353553385 : f32
    %79 = vector.broadcast %cst_52 : f32 to vector<2x3xf32>
    %80 = arith.mulf %78, %79 : vector<2x3xf32>
    %cst_53 = arith.constant -1.000000e+30 : f32
    %81 = vector.shape_cast %69 : vector<1x3xi1> to vector<1x3xi1>
    %82 = vector.broadcast %81 : vector<1x3xi1> to vector<2x3xi1>
    %83 = vector.broadcast %cst_53 : f32 to vector<2x3xf32>
    %84 = arith.select %82, %80, %83 : vector<2x3xi1>, vector<2x3xf32>
    %cst_54 = arith.constant dense<0.000000e+00> : vector<2x1xf32>
    %85 = tpu.matmul %73, %76, %cst_54 {dimension_numbers = #tpu.dot_dimension_numbers<[1], [1], [0], [0], [0, 0, 1, 0], [], []>} : vector<2x8xf32>, vector<1x8xf32>, vector<2x1xf32> -> vector<2x1xf32>
    %cst_55 = arith.constant 0.353553385 : f32
    %86 = vector.broadcast %cst_55 : f32 to vector<2x1xf32>
    %87 = arith.mulf %85, %86 : vector<2x1xf32>
    %cst_56 = arith.constant dense<0xFF800000> : vector<2xf32>
    %88 = vector.multi_reduction <maximumf>, %84, %cst_56 [1] : vector<2x3xf32> to vector<2xf32>
    %89 = vector.shape_cast %88 : vector<2xf32> to vector<2x1xf32>
    %90 = arith.maximumf %89, %87 : vector<2x1xf32>
    %91 = vector.broadcast %90 : vector<2x1xf32> to vector<2x3xf32>
    %92 = arith.subf %84, %91 : vector<2x3xf32>
    %93 = math.exp %92 : vector<2x3xf32>
    %94 = arith.subf %87, %90 : vector<2x1xf32>
    %95 = math.exp %94 : vector<2x1xf32>
    %cst_57 = arith.constant dense<0.000000e+00> : vector<2xf32>
    %96 = vector.multi_reduction <add>, %93, %cst_57 [1] : vector<2x3xf32> to vector<2xf32>
    %97 = vector.shape_cast %96 : vector<2xf32> to vector<2x1xf32>
    %98 = arith.addf %95, %97 : vector<2x1xf32>
    %99 = tpu.reciprocal %98 {approx = true} : vector<2x1xf32> -> vector<2x1xf32>
    %100 = vector.broadcast %99 : vector<2x1xf32> to vector<2x3xf32>
    %101 = arith.mulf %93, %100 : vector<2x3xf32>
    %cst_58 = arith.constant dense<0.000000e+00> : vector<2x8xf32>
    %102 = tpu.matmul %101, %75, %cst_58 {dimension_numbers = #tpu.dot_dimension_numbers<[1], [0], [0], [1], [0, 0, 1, 1], [], []>} : vector<2x3xf32>, vector<3x8xf32>, vector<2x8xf32> -> vector<2x8xf32>
    %103 = arith.mulf %95, %99 : vector<2x1xf32>
    %104 = vector.broadcast %103 : vector<2x1xf32> to vector<2x8xf32>
    %105 = vector.broadcast %77 : vector<1x8xf32> to vector<2x8xf32>
    %106 = arith.mulf %104, %105 : vector<2x8xf32>
    %107 = arith.addf %102, %106 : vector<2x8xf32>
    %108 = vector.extract_strided_slice %71 {offsets = [0, 0], sizes = [8, 32], strides = [1, 1]} : vector<32x32xf32> to vector<8x32xf32>
    %cst_59 = arith.constant dense<0.000000e+00> : vector<2x32xf32>
    %109 = tpu.matmul %107, %108, %cst_59 {dimension_numbers = #tpu.dot_dimension_numbers<[1], [0], [0], [1], [0, 0, 1, 1], [], []>} : vector<2x8xf32>, vector<8x32xf32>, vector<2x32xf32> -> vector<2x32xf32>
    %110 = arith.addf %72, %109 : vector<2x32xf32>
    %111 = vector.extract_strided_slice %61 {offsets = [0, 8], sizes = [2, 8], strides = [1, 1]} : vector<2x32xf32> to vector<2x8xf32>
    %112 = vector.extract_strided_slice %40 {offsets = [0, 8], sizes = [3, 8], strides = [1, 1]} : vector<3x32xf32> to vector<3x8xf32>
    %113 = vector.extract_strided_slice %65 {offsets = [0, 8], sizes = [3, 8], strides = [1, 1]} : vector<3x32xf32> to vector<3x8xf32>
    %114 = vector.extract_strided_slice %2 {offsets = [0, 8], sizes = [1, 8], strides = [1, 1]} : vector<2x32xf32> to vector<1x8xf32>
    %115 = vector.extract_strided_slice %3 {offsets = [0, 8], sizes = [1, 8], strides = [1, 1]} : vector<2x32xf32> to vector<1x8xf32>
    %cst_60 = arith.constant dense<0.000000e+00> : vector<2x3xf32>
    %116 = tpu.matmul %111, %112, %cst_60 {dimension_numbers = #tpu.dot_dimension_numbers<[1], [1], [0], [0], [0, 0, 1, 0], [], []>} : vector<2x8xf32>, vector<3x8xf32>, vector<2x3xf32> -> vector<2x3xf32>
    %cst_61 = arith.constant 0.353553385 : f32
    %117 = vector.broadcast %cst_61 : f32 to vector<2x3xf32>
    %118 = arith.mulf %116, %117 : vector<2x3xf32>
    %cst_62 = arith.constant -1.000000e+30 : f32
    %119 = vector.shape_cast %69 : vector<1x3xi1> to vector<1x3xi1>
    %120 = vector.broadcast %119 : vector<1x3xi1> to vector<2x3xi1>
    %121 = vector.broadcast %cst_62 : f32 to vector<2x3xf32>
    %122 = arith.select %120, %118, %121 : vector<2x3xi1>, vector<2x3xf32>
    %cst_63 = arith.constant dense<0.000000e+00> : vector<2x1xf32>
    %123 = tpu.matmul %111, %114, %cst_63 {dimension_numbers = #tpu.dot_dimension_numbers<[1], [1], [0], [0], [0, 0, 1, 0], [], []>} : vector<2x8xf32>, vector<1x8xf32>, vector<2x1xf32> -> vector<2x1xf32>
    %cst_64 = arith.constant 0.353553385 : f32
    %124 = vector.broadcast %cst_64 : f32 to vector<2x1xf32>
    %125 = arith.mulf %123, %124 : vector<2x1xf32>
    %cst_65 = arith.constant dense<0xFF800000> : vector<2xf32>
    %126 = vector.multi_reduction <maximumf>, %122, %cst_65 [1] : vector<2x3xf32> to vector<2xf32>
    %127 = vector.shape_cast %126 : vector<2xf32> to vector<2x1xf32>
    %128 = arith.maximumf %127, %125 : vector<2x1xf32>
    %129 = vector.broadcast %128 : vector<2x1xf32> to vector<2x3xf32>
    %130 = arith.subf %122, %129 : vector<2x3xf32>
    %131 = math.exp %130 : vector<2x3xf32>
    %132 = arith.subf %125, %128 : vector<2x1xf32>
    %133 = math.exp %132 : vector<2x1xf32>
    %cst_66 = arith.constant dense<0.000000e+00> : vector<2xf32>
    %134 = vector.multi_reduction <add>, %131, %cst_66 [1] : vector<2x3xf32> to vector<2xf32>
    %135 = vector.shape_cast %134 : vector<2xf32> to vector<2x1xf32>
    %136 = arith.addf %133, %135 : vector<2x1xf32>
    %137 = tpu.reciprocal %136 {approx = true} : vector<2x1xf32> -> vector<2x1xf32>
    %138 = vector.broadcast %137 : vector<2x1xf32> to vector<2x3xf32>
    %139 = arith.mulf %131, %138 : vector<2x3xf32>
    %cst_67 = arith.constant dense<0.000000e+00> : vector<2x8xf32>
    %140 = tpu.matmul %139, %113, %cst_67 {dimension_numbers = #tpu.dot_dimension_numbers<[1], [0], [0], [1], [0, 0, 1, 1], [], []>} : vector<2x3xf32>, vector<3x8xf32>, vector<2x8xf32> -> vector<2x8xf32>
    %141 = arith.mulf %133, %137 : vector<2x1xf32>
    %142 = vector.broadcast %141 : vector<2x1xf32> to vector<2x8xf32>
    %143 = vector.broadcast %115 : vector<1x8xf32> to vector<2x8xf32>
    %144 = arith.mulf %142, %143 : vector<2x8xf32>
    %145 = arith.addf %140, %144 : vector<2x8xf32>
    %146 = vector.extract_strided_slice %71 {offsets = [8, 0], sizes = [8, 32], strides = [1, 1]} : vector<32x32xf32> to vector<8x32xf32>
    %cst_68 = arith.constant dense<0.000000e+00> : vector<2x32xf32>
    %147 = tpu.matmul %145, %146, %cst_68 {dimension_numbers = #tpu.dot_dimension_numbers<[1], [0], [0], [1], [0, 0, 1, 1], [], []>} : vector<2x8xf32>, vector<8x32xf32>, vector<2x32xf32> -> vector<2x32xf32>
    %148 = arith.addf %110, %147 : vector<2x32xf32>
    %149 = vector.extract_strided_slice %61 {offsets = [0, 16], sizes = [2, 8], strides = [1, 1]} : vector<2x32xf32> to vector<2x8xf32>
    %150 = vector.extract_strided_slice %40 {offsets = [0, 16], sizes = [3, 8], strides = [1, 1]} : vector<3x32xf32> to vector<3x8xf32>
    %151 = vector.extract_strided_slice %65 {offsets = [0, 16], sizes = [3, 8], strides = [1, 1]} : vector<3x32xf32> to vector<3x8xf32>
    %152 = vector.extract_strided_slice %2 {offsets = [0, 16], sizes = [1, 8], strides = [1, 1]} : vector<2x32xf32> to vector<1x8xf32>
    %153 = vector.extract_strided_slice %3 {offsets = [0, 16], sizes = [1, 8], strides = [1, 1]} : vector<2x32xf32> to vector<1x8xf32>
    %cst_69 = arith.constant dense<0.000000e+00> : vector<2x3xf32>
    %154 = tpu.matmul %149, %150, %cst_69 {dimension_numbers = #tpu.dot_dimension_numbers<[1], [1], [0], [0], [0, 0, 1, 0], [], []>} : vector<2x8xf32>, vector<3x8xf32>, vector<2x3xf32> -> vector<2x3xf32>
    %cst_70 = arith.constant 0.353553385 : f32
    %155 = vector.broadcast %cst_70 : f32 to vector<2x3xf32>
    %156 = arith.mulf %154, %155 : vector<2x3xf32>
    %cst_71 = arith.constant -1.000000e+30 : f32
    %157 = vector.shape_cast %69 : vector<1x3xi1> to vector<1x3xi1>
    %158 = vector.broadcast %157 : vector<1x3xi1> to vector<2x3xi1>
    %159 = vector.broadcast %cst_71 : f32 to vector<2x3xf32>
    %160 = arith.select %158, %156, %159 : vector<2x3xi1>, vector<2x3xf32>
    %cst_72 = arith.constant dense<0.000000e+00> : vector<2x1xf32>
    %161 = tpu.matmul %149, %152, %cst_72 {dimension_numbers = #tpu.dot_dimension_numbers<[1], [1], [0], [0], [0, 0, 1, 0], [], []>} : vector<2x8xf32>, vector<1x8xf32>, vector<2x1xf32> -> vector<2x1xf32>
    %cst_73 = arith.constant 0.353553385 : f32
    %162 = vector.broadcast %cst_73 : f32 to vector<2x1xf32>
    %163 = arith.mulf %161, %162 : vector<2x1xf32>
    %cst_74 = arith.constant dense<0xFF800000> : vector<2xf32>
    %164 = vector.multi_reduction <maximumf>, %160, %cst_74 [1] : vector<2x3xf32> to vector<2xf32>
    %165 = vector.shape_cast %164 : vector<2xf32> to vector<2x1xf32>
    %166 = arith.maximumf %165, %163 : vector<2x1xf32>
    %167 = vector.broadcast %166 : vector<2x1xf32> to vector<2x3xf32>
    %168 = arith.subf %160, %167 : vector<2x3xf32>
    %169 = math.exp %168 : vector<2x3xf32>
    %170 = arith.subf %163, %166 : vector<2x1xf32>
    %171 = math.exp %170 : vector<2x1xf32>
    %cst_75 = arith.constant dense<0.000000e+00> : vector<2xf32>
    %172 = vector.multi_reduction <add>, %169, %cst_75 [1] : vector<2x3xf32> to vector<2xf32>
    %173 = vector.shape_cast %172 : vector<2xf32> to vector<2x1xf32>
    %174 = arith.addf %171, %173 : vector<2x1xf32>
    %175 = tpu.reciprocal %174 {approx = true} : vector<2x1xf32> -> vector<2x1xf32>
    %176 = vector.broadcast %175 : vector<2x1xf32> to vector<2x3xf32>
    %177 = arith.mulf %169, %176 : vector<2x3xf32>
    %cst_76 = arith.constant dense<0.000000e+00> : vector<2x8xf32>
    %178 = tpu.matmul %177, %151, %cst_76 {dimension_numbers = #tpu.dot_dimension_numbers<[1], [0], [0], [1], [0, 0, 1, 1], [], []>} : vector<2x3xf32>, vector<3x8xf32>, vector<2x8xf32> -> vector<2x8xf32>
    %179 = arith.mulf %171, %175 : vector<2x1xf32>
    %180 = vector.broadcast %179 : vector<2x1xf32> to vector<2x8xf32>
    %181 = vector.broadcast %153 : vector<1x8xf32> to vector<2x8xf32>
    %182 = arith.mulf %180, %181 : vector<2x8xf32>
    %183 = arith.addf %178, %182 : vector<2x8xf32>
    %184 = vector.extract_strided_slice %71 {offsets = [16, 0], sizes = [8, 32], strides = [1, 1]} : vector<32x32xf32> to vector<8x32xf32>
    %cst_77 = arith.constant dense<0.000000e+00> : vector<2x32xf32>
    %185 = tpu.matmul %183, %184, %cst_77 {dimension_numbers = #tpu.dot_dimension_numbers<[1], [0], [0], [1], [0, 0, 1, 1], [], []>} : vector<2x8xf32>, vector<8x32xf32>, vector<2x32xf32> -> vector<2x32xf32>
    %186 = arith.addf %148, %185 : vector<2x32xf32>
    %187 = vector.extract_strided_slice %61 {offsets = [0, 24], sizes = [2, 8], strides = [1, 1]} : vector<2x32xf32> to vector<2x8xf32>
    %188 = vector.extract_strided_slice %40 {offsets = [0, 24], sizes = [3, 8], strides = [1, 1]} : vector<3x32xf32> to vector<3x8xf32>
    %189 = vector.extract_strided_slice %65 {offsets = [0, 24], sizes = [3, 8], strides = [1, 1]} : vector<3x32xf32> to vector<3x8xf32>
    %190 = vector.extract_strided_slice %2 {offsets = [0, 24], sizes = [1, 8], strides = [1, 1]} : vector<2x32xf32> to vector<1x8xf32>
    %191 = vector.extract_strided_slice %3 {offsets = [0, 24], sizes = [1, 8], strides = [1, 1]} : vector<2x32xf32> to vector<1x8xf32>
    %cst_78 = arith.constant dense<0.000000e+00> : vector<2x3xf32>
    %192 = tpu.matmul %187, %188, %cst_78 {dimension_numbers = #tpu.dot_dimension_numbers<[1], [1], [0], [0], [0, 0, 1, 0], [], []>} : vector<2x8xf32>, vector<3x8xf32>, vector<2x3xf32> -> vector<2x3xf32>
    %cst_79 = arith.constant 0.353553385 : f32
    %193 = vector.broadcast %cst_79 : f32 to vector<2x3xf32>
    %194 = arith.mulf %192, %193 : vector<2x3xf32>
    %cst_80 = arith.constant -1.000000e+30 : f32
    %195 = vector.shape_cast %69 : vector<1x3xi1> to vector<1x3xi1>
    %196 = vector.broadcast %195 : vector<1x3xi1> to vector<2x3xi1>
    %197 = vector.broadcast %cst_80 : f32 to vector<2x3xf32>
    %198 = arith.select %196, %194, %197 : vector<2x3xi1>, vector<2x3xf32>
    %cst_81 = arith.constant dense<0.000000e+00> : vector<2x1xf32>
    %199 = tpu.matmul %187, %190, %cst_81 {dimension_numbers = #tpu.dot_dimension_numbers<[1], [1], [0], [0], [0, 0, 1, 0], [], []>} : vector<2x8xf32>, vector<1x8xf32>, vector<2x1xf32> -> vector<2x1xf32>
    %cst_82 = arith.constant 0.353553385 : f32
    %200 = vector.broadcast %cst_82 : f32 to vector<2x1xf32>
    %201 = arith.mulf %199, %200 : vector<2x1xf32>
    %cst_83 = arith.constant dense<0xFF800000> : vector<2xf32>
    %202 = vector.multi_reduction <maximumf>, %198, %cst_83 [1] : vector<2x3xf32> to vector<2xf32>
    %203 = vector.shape_cast %202 : vector<2xf32> to vector<2x1xf32>
    %204 = arith.maximumf %203, %201 : vector<2x1xf32>
    %205 = vector.broadcast %204 : vector<2x1xf32> to vector<2x3xf32>
    %206 = arith.subf %198, %205 : vector<2x3xf32>
    %207 = math.exp %206 : vector<2x3xf32>
    %208 = arith.subf %201, %204 : vector<2x1xf32>
    %209 = math.exp %208 : vector<2x1xf32>
    %cst_84 = arith.constant dense<0.000000e+00> : vector<2xf32>
    %210 = vector.multi_reduction <add>, %207, %cst_84 [1] : vector<2x3xf32> to vector<2xf32>
    %211 = vector.shape_cast %210 : vector<2xf32> to vector<2x1xf32>
    %212 = arith.addf %209, %211 : vector<2x1xf32>
    %213 = tpu.reciprocal %212 {approx = true} : vector<2x1xf32> -> vector<2x1xf32>
    %214 = vector.broadcast %213 : vector<2x1xf32> to vector<2x3xf32>
    %215 = arith.mulf %207, %214 : vector<2x3xf32>
    %cst_85 = arith.constant dense<0.000000e+00> : vector<2x8xf32>
    %216 = tpu.matmul %215, %189, %cst_85 {dimension_numbers = #tpu.dot_dimension_numbers<[1], [0], [0], [1], [0, 0, 1, 1], [], []>} : vector<2x3xf32>, vector<3x8xf32>, vector<2x8xf32> -> vector<2x8xf32>
    %217 = arith.mulf %209, %213 : vector<2x1xf32>
    %218 = vector.broadcast %217 : vector<2x1xf32> to vector<2x8xf32>
    %219 = vector.broadcast %191 : vector<1x8xf32> to vector<2x8xf32>
    %220 = arith.mulf %218, %219 : vector<2x8xf32>
    %221 = arith.addf %216, %220 : vector<2x8xf32>
    %222 = vector.extract_strided_slice %71 {offsets = [24, 0], sizes = [8, 32], strides = [1, 1]} : vector<32x32xf32> to vector<8x32xf32>
    %cst_86 = arith.constant dense<0.000000e+00> : vector<2x32xf32>
    %223 = tpu.matmul %221, %222, %cst_86 {dimension_numbers = #tpu.dot_dimension_numbers<[1], [0], [0], [1], [0, 0, 1, 1], [], []>} : vector<2x8xf32>, vector<8x32xf32>, vector<2x32xf32> -> vector<2x32xf32>
    %224 = arith.addf %186, %223 : vector<2x32xf32>
    %c0_87 = arith.constant 0 : index
    %c0_88 = arith.constant 0 : index
    %c0_89 = arith.constant 0 : index
    %c0_90 = arith.constant 0 : index
    %225 = vector.load %arg5[%c0_87, %c0_88, %c0_89, %c0_90] : memref<2x2x2x1xf32, #tpu.memory_space<vmem>>, vector<1x1x2x1xf32>
    %226 = vector.shape_cast %225 : vector<1x1x2x1xf32> to vector<2x1xf32>
    %227 = vector.broadcast %226 : vector<2x1xf32> to vector<2x32xf32>
    %228 = arith.mulf %224, %227 : vector<2x32xf32>
    %c0_91 = arith.constant 0 : index
    %c0_92 = arith.constant 0 : index
    %c0_93 = arith.constant 0 : index
    %c0_94 = arith.constant 0 : index
    %229 = vector.load %arg13[%c0_91, %c0_92, %c0_93, %c0_94] : memref<2x2x2x32xf32, #tpu.memory_space<vmem>>, vector<1x1x2x32xf32>
    %230 = vector.shape_cast %229 : vector<1x1x2x32xf32> to vector<2x32xf32>
    %231 = vector.shape_cast %228 : vector<2x32xf32> to vector<1x1x2x32xf32>
    tpu.vector_store %arg13[%c0_91, %c0_92, %c0_93, %c0_94], %231 {strides = array<i32>} : memref<2x2x2x32xf32, #tpu.memory_space<vmem>>, vector<1x1x2x32xf32>,
    %c0_95 = arith.constant 0 : index
    %c1_96 = arith.constant 1 : index
    %c0_97 = arith.constant 0 : index
    %c0_98 = arith.constant 0 : index
    %232 = vector.load %arg1[%c0_95, %c1_96, %c0_97, %c0_98] : memref<2x2x2x32xf32, #tpu.memory_space<vmem>>, vector<1x1x2x32xf32>
    %233 = vector.shape_cast %232 : vector<1x1x2x32xf32> to vector<2x32xf32>
    %234 = vector.extract_strided_slice %0 {offsets = [1, 0], sizes = [1, 32], strides = [1, 1]} : vector<2x32xf32> to vector<1x32xf32>
    %235 = arith.mulf %233, %233 : vector<2x32xf32>
    %cst_99 = arith.constant dense<0.000000e+00> : vector<2xf32>
    %236 = vector.multi_reduction <add>, %235, %cst_99 [1] : vector<2x32xf32> to vector<2xf32>
    %237 = vector.shape_cast %236 : vector<2xf32> to vector<2x1xf32>
    %238 = math.sqrt %237 : vector<2x1xf32>
    %cst_100 = arith.constant 9.99999996E-13 : f32
    %239 = vector.broadcast %cst_100 : f32 to vector<2x1xf32>
    %240 = arith.maximumf %238, %239 : vector<2x1xf32>
    %241 = vector.broadcast %240 : vector<2x1xf32> to vector<2x32xf32>
    %242 = arith.divf %233, %241 : vector<2x32xf32>
    %cst_101 = arith.constant 5.65685415 : f32
    %243 = vector.broadcast %cst_101 : f32 to vector<2x32xf32>
    %244 = arith.mulf %242, %243 : vector<2x32xf32>
    %245 = vector.broadcast %234 : vector<1x32xf32> to vector<2x32xf32>
    %246 = arith.mulf %244, %245 : vector<2x32xf32>
    %c1_102 = arith.constant 1 : index
    %c0_103 = arith.constant 0 : index
    %c0_104 = arith.constant 0 : index
    %247 = vector.load %arg8[%c1_102, %c0_103, %c0_104] : memref<2x32x32xf32, #tpu.memory_space<vmem>>, vector<1x32x32xf32>
    %248 = vector.shape_cast %247 : vector<1x32x32xf32> to vector<32x32xf32>
    %cst_105 = arith.constant dense<0.000000e+00> : vector<2x32xf32>
    %249 = tpu.matmul %246, %248, %cst_105 {dimension_numbers = #tpu.dot_dimension_numbers<[1], [0], [0], [1], [0, 0, 1, 1], [], []>} : vector<2x32xf32>, vector<32x32xf32>, vector<2x32xf32> -> vector<2x32xf32>
    %c0_106 = arith.constant 0 : index
    %c1_107 = arith.constant 1 : index
    %c0_108 = arith.constant 0 : index
    %c0_109 = arith.constant 0 : index
    %250 = vector.load %arg4[%c0_106, %c1_107, %c0_108, %c0_109] : memref<2x2x3x1xf32, #tpu.memory_space<vmem>>, vector<1x1x3x1xf32>
    %251 = vector.shape_cast %250 : vector<1x1x3x1xf32> to vector<3x1xf32>
    %252 = vector.broadcast %251 : vector<3x1xf32> to vector<3x32xf32>
    %253 = arith.mulf %43, %252 : vector<3x32xf32>
    %c0_110 = arith.constant 0 : index
    %c1_111 = arith.constant 1 : index
    %c0_112 = arith.constant 0 : index
    %c0_113 = arith.constant 0 : index
    %254 = vector.load %arg3[%c0_110, %c1_111, %c0_112, %c0_113] : memref<2x2x1x3xf32, #tpu.memory_space<vmem>>, vector<1x1x1x3xf32>
    %255 = vector.shape_cast %254 : vector<1x1x1x3xf32> to vector<1x3xf32>
    %cst_114 = arith.constant 5.000000e-01 : f32
    %256 = vector.broadcast %cst_114 : f32 to vector<1x3xf32>
    %257 = arith.cmpf ogt, %255, %256 : vector<1x3xf32>
    %c1_115 = arith.constant 1 : index
    %c0_116 = arith.constant 0 : index
    %c0_117 = arith.constant 0 : index
    %258 = vector.load %arg10[%c1_115, %c0_116, %c0_117] : memref<2x32x32xf32, #tpu.memory_space<vmem>>, vector<1x32x32xf32>
    %259 = vector.shape_cast %258 : vector<1x32x32xf32> to vector<32x32xf32>
    %cst_118 = arith.constant 0.000000e+00 : f32
    %260 = vector.broadcast %cst_118 : f32 to vector<2x32xf32>
    %261 = vector.extract_strided_slice %249 {offsets = [0, 0], sizes = [2, 8], strides = [1, 1]} : vector<2x32xf32> to vector<2x8xf32>
    %262 = vector.extract_strided_slice %41 {offsets = [0, 0], sizes = [3, 8], strides = [1, 1]} : vector<3x32xf32> to vector<3x8xf32>
    %263 = vector.extract_strided_slice %253 {offsets = [0, 0], sizes = [3, 8], strides = [1, 1]} : vector<3x32xf32> to vector<3x8xf32>
    %264 = vector.extract_strided_slice %2 {offsets = [1, 0], sizes = [1, 8], strides = [1, 1]} : vector<2x32xf32> to vector<1x8xf32>
    %265 = vector.extract_strided_slice %3 {offsets = [1, 0], sizes = [1, 8], strides = [1, 1]} : vector<2x32xf32> to vector<1x8xf32>
    %cst_119 = arith.constant dense<0.000000e+00> : vector<2x3xf32>
    %266 = tpu.matmul %261, %262, %cst_119 {dimension_numbers = #tpu.dot_dimension_numbers<[1], [1], [0], [0], [0, 0, 1, 0], [], []>} : vector<2x8xf32>, vector<3x8xf32>, vector<2x3xf32> -> vector<2x3xf32>
    %cst_120 = arith.constant 0.353553385 : f32
    %267 = vector.broadcast %cst_120 : f32 to vector<2x3xf32>
    %268 = arith.mulf %266, %267 : vector<2x3xf32>
    %cst_121 = arith.constant -1.000000e+30 : f32
    %269 = vector.shape_cast %257 : vector<1x3xi1> to vector<1x3xi1>
    %270 = vector.broadcast %269 : vector<1x3xi1> to vector<2x3xi1>
    %271 = vector.broadcast %cst_121 : f32 to vector<2x3xf32>
    %272 = arith.select %270, %268, %271 : vector<2x3xi1>, vector<2x3xf32>
    %cst_122 = arith.constant dense<0.000000e+00> : vector<2x1xf32>
    %273 = tpu.matmul %261, %264, %cst_122 {dimension_numbers = #tpu.dot_dimension_numbers<[1], [1], [0], [0], [0, 0, 1, 0], [], []>} : vector<2x8xf32>, vector<1x8xf32>, vector<2x1xf32> -> vector<2x1xf32>
    %cst_123 = arith.constant 0.353553385 : f32
    %274 = vector.broadcast %cst_123 : f32 to vector<2x1xf32>
    %275 = arith.mulf %273, %274 : vector<2x1xf32>
    %cst_124 = arith.constant dense<0xFF800000> : vector<2xf32>
    %276 = vector.multi_reduction <maximumf>, %272, %cst_124 [1] : vector<2x3xf32> to vector<2xf32>
    %277 = vector.shape_cast %276 : vector<2xf32> to vector<2x1xf32>
    %278 = arith.maximumf %277, %275 : vector<2x1xf32>
    %279 = vector.broadcast %278 : vector<2x1xf32> to vector<2x3xf32>
    %280 = arith.subf %272, %279 : vector<2x3xf32>
    %281 = math.exp %280 : vector<2x3xf32>
    %282 = arith.subf %275, %278 : vector<2x1xf32>
    %283 = math.exp %282 : vector<2x1xf32>
    %cst_125 = arith.constant dense<0.000000e+00> : vector<2xf32>
    %284 = vector.multi_reduction <add>, %281, %cst_125 [1] : vector<2x3xf32> to vector<2xf32>
    %285 = vector.shape_cast %284 : vector<2xf32> to vector<2x1xf32>
    %286 = arith.addf %283, %285 : vector<2x1xf32>
    %287 = tpu.reciprocal %286 {approx = true} : vector<2x1xf32> -> vector<2x1xf32>
    %288 = vector.broadcast %287 : vector<2x1xf32> to vector<2x3xf32>
    %289 = arith.mulf %281, %288 : vector<2x3xf32>
    %cst_126 = arith.constant dense<0.000000e+00> : vector<2x8xf32>
    %290 = tpu.matmul %289, %263, %cst_126 {dimension_numbers = #tpu.dot_dimension_numbers<[1], [0], [0], [1], [0, 0, 1, 1], [], []>} : vector<2x3xf32>, vector<3x8xf32>, vector<2x8xf32> -> vector<2x8xf32>
    %291 = arith.mulf %283, %287 : vector<2x1xf32>
    %292 = vector.broadcast %291 : vector<2x1xf32> to vector<2x8xf32>
    %293 = vector.broadcast %265 : vector<1x8xf32> to vector<2x8xf32>
    %294 = arith.mulf %292, %293 : vector<2x8xf32>
    %295 = arith.addf %290, %294 : vector<2x8xf32>
    %296 = vector.extract_strided_slice %259 {offsets = [0, 0], sizes = [8, 32], strides = [1, 1]} : vector<32x32xf32> to vector<8x32xf32>
    %cst_127 = arith.constant dense<0.000000e+00> : vector<2x32xf32>
    %297 = tpu.matmul %295, %296, %cst_127 {dimension_numbers = #tpu.dot_dimension_numbers<[1], [0], [0], [1], [0, 0, 1, 1], [], []>} : vector<2x8xf32>, vector<8x32xf32>, vector<2x32xf32> -> vector<2x32xf32>
    %298 = arith.addf %260, %297 : vector<2x32xf32>
    %299 = vector.extract_strided_slice %249 {offsets = [0, 8], sizes = [2, 8], strides = [1, 1]} : vector<2x32xf32> to vector<2x8xf32>
    %300 = vector.extract_strided_slice %41 {offsets = [0, 8], sizes = [3, 8], strides = [1, 1]} : vector<3x32xf32> to vector<3x8xf32>
    %301 = vector.extract_strided_slice %253 {offsets = [0, 8], sizes = [3, 8], strides = [1, 1]} : vector<3x32xf32> to vector<3x8xf32>
    %302 = vector.extract_strided_slice %2 {offsets = [1, 8], sizes = [1, 8], strides = [1, 1]} : vector<2x32xf32> to vector<1x8xf32>
    %303 = vector.extract_strided_slice %3 {offsets = [1, 8], sizes = [1, 8], strides = [1, 1]} : vector<2x32xf32> to vector<1x8xf32>
    %cst_128 = arith.constant dense<0.000000e+00> : vector<2x3xf32>
    %304 = tpu.matmul %299, %300, %cst_128 {dimension_numbers = #tpu.dot_dimension_numbers<[1], [1], [0], [0], [0, 0, 1, 0], [], []>} : vector<2x8xf32>, vector<3x8xf32>, vector<2x3xf32> -> vector<2x3xf32>
    %cst_129 = arith.constant 0.353553385 : f32
    %305 = vector.broadcast %cst_129 : f32 to vector<2x3xf32>
    %306 = arith.mulf %304, %305 : vector<2x3xf32>
    %cst_130 = arith.constant -1.000000e+30 : f32
    %307 = vector.shape_cast %257 : vector<1x3xi1> to vector<1x3xi1>
    %308 = vector.broadcast %307 : vector<1x3xi1> to vector<2x3xi1>
    %309 = vector.broadcast %cst_130 : f32 to vector<2x3xf32>
    %310 = arith.select %308, %306, %309 : vector<2x3xi1>, vector<2x3xf32>
    %cst_131 = arith.constant dense<0.000000e+00> : vector<2x1xf32>
    %311 = tpu.matmul %299, %302, %cst_131 {dimension_numbers = #tpu.dot_dimension_numbers<[1], [1], [0], [0], [0, 0, 1, 0], [], []>} : vector<2x8xf32>, vector<1x8xf32>, vector<2x1xf32> -> vector<2x1xf32>
    %cst_132 = arith.constant 0.353553385 : f32
    %312 = vector.broadcast %cst_132 : f32 to vector<2x1xf32>
    %313 = arith.mulf %311, %312 : vector<2x1xf32>
    %cst_133 = arith.constant dense<0xFF800000> : vector<2xf32>
    %314 = vector.multi_reduction <maximumf>, %310, %cst_133 [1] : vector<2x3xf32> to vector<2xf32>
    %315 = vector.shape_cast %314 : vector<2xf32> to vector<2x1xf32>
    %316 = arith.maximumf %315, %313 : vector<2x1xf32>
    %317 = vector.broadcast %316 : vector<2x1xf32> to vector<2x3xf32>
    %318 = arith.subf %310, %317 : vector<2x3xf32>
    %319 = math.exp %318 : vector<2x3xf32>
    %320 = arith.subf %313, %316 : vector<2x1xf32>
    %321 = math.exp %320 : vector<2x1xf32>
    %cst_134 = arith.constant dense<0.000000e+00> : vector<2xf32>
    %322 = vector.multi_reduction <add>, %319, %cst_134 [1] : vector<2x3xf32> to vector<2xf32>
    %323 = vector.shape_cast %322 : vector<2xf32> to vector<2x1xf32>
    %324 = arith.addf %321, %323 : vector<2x1xf32>
    %325 = tpu.reciprocal %324 {approx = true} : vector<2x1xf32> -> vector<2x1xf32>
    %326 = vector.broadcast %325 : vector<2x1xf32> to vector<2x3xf32>
    %327 = arith.mulf %319, %326 : vector<2x3xf32>
    %cst_135 = arith.constant dense<0.000000e+00> : vector<2x8xf32>
    %328 = tpu.matmul %327, %301, %cst_135 {dimension_numbers = #tpu.dot_dimension_numbers<[1], [0], [0], [1], [0, 0, 1, 1], [], []>} : vector<2x3xf32>, vector<3x8xf32>, vector<2x8xf32> -> vector<2x8xf32>
    %329 = arith.mulf %321, %325 : vector<2x1xf32>
    %330 = vector.broadcast %329 : vector<2x1xf32> to vector<2x8xf32>
    %331 = vector.broadcast %303 : vector<1x8xf32> to vector<2x8xf32>
    %332 = arith.mulf %330, %331 : vector<2x8xf32>
    %333 = arith.addf %328, %332 : vector<2x8xf32>
    %334 = vector.extract_strided_slice %259 {offsets = [8, 0], sizes = [8, 32], strides = [1, 1]} : vector<32x32xf32> to vector<8x32xf32>
    %cst_136 = arith.constant dense<0.000000e+00> : vector<2x32xf32>
    %335 = tpu.matmul %333, %334, %cst_136 {dimension_numbers = #tpu.dot_dimension_numbers<[1], [0], [0], [1], [0, 0, 1, 1], [], []>} : vector<2x8xf32>, vector<8x32xf32>, vector<2x32xf32> -> vector<2x32xf32>
    %336 = arith.addf %298, %335 : vector<2x32xf32>
    %337 = vector.extract_strided_slice %249 {offsets = [0, 16], sizes = [2, 8], strides = [1, 1]} : vector<2x32xf32> to vector<2x8xf32>
    %338 = vector.extract_strided_slice %41 {offsets = [0, 16], sizes = [3, 8], strides = [1, 1]} : vector<3x32xf32> to vector<3x8xf32>
    %339 = vector.extract_strided_slice %253 {offsets = [0, 16], sizes = [3, 8], strides = [1, 1]} : vector<3x32xf32> to vector<3x8xf32>
    %340 = vector.extract_strided_slice %2 {offsets = [1, 16], sizes = [1, 8], strides = [1, 1]} : vector<2x32xf32> to vector<1x8xf32>
    %341 = vector.extract_strided_slice %3 {offsets = [1, 16], sizes = [1, 8], strides = [1, 1]} : vector<2x32xf32> to vector<1x8xf32>
    %cst_137 = arith.constant dense<0.000000e+00> : vector<2x3xf32>
    %342 = tpu.matmul %337, %338, %cst_137 {dimension_numbers = #tpu.dot_dimension_numbers<[1], [1], [0], [0], [0, 0, 1, 0], [], []>} : vector<2x8xf32>, vector<3x8xf32>, vector<2x3xf32> -> vector<2x3xf32>
    %cst_138 = arith.constant 0.353553385 : f32
    %343 = vector.broadcast %cst_138 : f32 to vector<2x3xf32>
    %344 = arith.mulf %342, %343 : vector<2x3xf32>
    %cst_139 = arith.constant -1.000000e+30 : f32
    %345 = vector.shape_cast %257 : vector<1x3xi1> to vector<1x3xi1>
    %346 = vector.broadcast %345 : vector<1x3xi1> to vector<2x3xi1>
    %347 = vector.broadcast %cst_139 : f32 to vector<2x3xf32>
    %348 = arith.select %346, %344, %347 : vector<2x3xi1>, vector<2x3xf32>
    %cst_140 = arith.constant dense<0.000000e+00> : vector<2x1xf32>
    %349 = tpu.matmul %337, %340, %cst_140 {dimension_numbers = #tpu.dot_dimension_numbers<[1], [1], [0], [0], [0, 0, 1, 0], [], []>} : vector<2x8xf32>, vector<1x8xf32>, vector<2x1xf32> -> vector<2x1xf32>
    %cst_141 = arith.constant 0.353553385 : f32
    %350 = vector.broadcast %cst_141 : f32 to vector<2x1xf32>
    %351 = arith.mulf %349, %350 : vector<2x1xf32>
    %cst_142 = arith.constant dense<0xFF800000> : vector<2xf32>
    %352 = vector.multi_reduction <maximumf>, %348, %cst_142 [1] : vector<2x3xf32> to vector<2xf32>
    %353 = vector.shape_cast %352 : vector<2xf32> to vector<2x1xf32>
    %354 = arith.maximumf %353, %351 : vector<2x1xf32>
    %355 = vector.broadcast %354 : vector<2x1xf32> to vector<2x3xf32>
    %356 = arith.subf %348, %355 : vector<2x3xf32>
    %357 = math.exp %356 : vector<2x3xf32>
    %358 = arith.subf %351, %354 : vector<2x1xf32>
    %359 = math.exp %358 : vector<2x1xf32>
    %cst_143 = arith.constant dense<0.000000e+00> : vector<2xf32>
    %360 = vector.multi_reduction <add>, %357, %cst_143 [1] : vector<2x3xf32> to vector<2xf32>
    %361 = vector.shape_cast %360 : vector<2xf32> to vector<2x1xf32>
    %362 = arith.addf %359, %361 : vector<2x1xf32>
    %363 = tpu.reciprocal %362 {approx = true} : vector<2x1xf32> -> vector<2x1xf32>
    %364 = vector.broadcast %363 : vector<2x1xf32> to vector<2x3xf32>
    %365 = arith.mulf %357, %364 : vector<2x3xf32>
    %cst_144 = arith.constant dense<0.000000e+00> : vector<2x8xf32>
    %366 = tpu.matmul %365, %339, %cst_144 {dimension_numbers = #tpu.dot_dimension_numbers<[1], [0], [0], [1], [0, 0, 1, 1], [], []>} : vector<2x3xf32>, vector<3x8xf32>, vector<2x8xf32> -> vector<2x8xf32>
    %367 = arith.mulf %359, %363 : vector<2x1xf32>
    %368 = vector.broadcast %367 : vector<2x1xf32> to vector<2x8xf32>
    %369 = vector.broadcast %341 : vector<1x8xf32> to vector<2x8xf32>
    %370 = arith.mulf %368, %369 : vector<2x8xf32>
    %371 = arith.addf %366, %370 : vector<2x8xf32>
    %372 = vector.extract_strided_slice %259 {offsets = [16, 0], sizes = [8, 32], strides = [1, 1]} : vector<32x32xf32> to vector<8x32xf32>
    %cst_145 = arith.constant dense<0.000000e+00> : vector<2x32xf32>
    %373 = tpu.matmul %371, %372, %cst_145 {dimension_numbers = #tpu.dot_dimension_numbers<[1], [0], [0], [1], [0, 0, 1, 1], [], []>} : vector<2x8xf32>, vector<8x32xf32>, vector<2x32xf32> -> vector<2x32xf32>
    %374 = arith.addf %336, %373 : vector<2x32xf32>
    %375 = vector.extract_strided_slice %249 {offsets = [0, 24], sizes = [2, 8], strides = [1, 1]} : vector<2x32xf32> to vector<2x8xf32>
    %376 = vector.extract_strided_slice %41 {offsets = [0, 24], sizes = [3, 8], strides = [1, 1]} : vector<3x32xf32> to vector<3x8xf32>
    %377 = vector.extract_strided_slice %253 {offsets = [0, 24], sizes = [3, 8], strides = [1, 1]} : vector<3x32xf32> to vector<3x8xf32>
    %378 = vector.extract_strided_slice %2 {offsets = [1, 24], sizes = [1, 8], strides = [1, 1]} : vector<2x32xf32> to vector<1x8xf32>
    %379 = vector.extract_strided_slice %3 {offsets = [1, 24], sizes = [1, 8], strides = [1, 1]} : vector<2x32xf32> to vector<1x8xf32>
    %cst_146 = arith.constant dense<0.000000e+00> : vector<2x3xf32>
    %380 = tpu.matmul %375, %376, %cst_146 {dimension_numbers = #tpu.dot_dimension_numbers<[1], [1], [0], [0], [0, 0, 1, 0], [], []>} : vector<2x8xf32>, vector<3x8xf32>, vector<2x3xf32> -> vector<2x3xf32>
    %cst_147 = arith.constant 0.353553385 : f32
    %381 = vector.broadcast %cst_147 : f32 to vector<2x3xf32>
    %382 = arith.mulf %380, %381 : vector<2x3xf32>
    %cst_148 = arith.constant -1.000000e+30 : f32
    %383 = vector.shape_cast %257 : vector<1x3xi1> to vector<1x3xi1>
    %384 = vector.broadcast %383 : vector<1x3xi1> to vector<2x3xi1>
    %385 = vector.broadcast %cst_148 : f32 to vector<2x3xf32>
    %386 = arith.select %384, %382, %385 : vector<2x3xi1>, vector<2x3xf32>
    %cst_149 = arith.constant dense<0.000000e+00> : vector<2x1xf32>
    %387 = tpu.matmul %375, %378, %cst_149 {dimension_numbers = #tpu.dot_dimension_numbers<[1], [1], [0], [0], [0, 0, 1, 0], [], []>} : vector<2x8xf32>, vector<1x8xf32>, vector<2x1xf32> -> vector<2x1xf32>
    %cst_150 = arith.constant 0.353553385 : f32
    %388 = vector.broadcast %cst_150 : f32 to vector<2x1xf32>
    %389 = arith.mulf %387, %388 : vector<2x1xf32>
    %cst_151 = arith.constant dense<0xFF800000> : vector<2xf32>
    %390 = vector.multi_reduction <maximumf>, %386, %cst_151 [1] : vector<2x3xf32> to vector<2xf32>
    %391 = vector.shape_cast %390 : vector<2xf32> to vector<2x1xf32>
    %392 = arith.maximumf %391, %389 : vector<2x1xf32>
    %393 = vector.broadcast %392 : vector<2x1xf32> to vector<2x3xf32>
    %394 = arith.subf %386, %393 : vector<2x3xf32>
    %395 = math.exp %394 : vector<2x3xf32>
    %396 = arith.subf %389, %392 : vector<2x1xf32>
    %397 = math.exp %396 : vector<2x1xf32>
    %cst_152 = arith.constant dense<0.000000e+00> : vector<2xf32>
    %398 = vector.multi_reduction <add>, %395, %cst_152 [1] : vector<2x3xf32> to vector<2xf32>
    %399 = vector.shape_cast %398 : vector<2xf32> to vector<2x1xf32>
    %400 = arith.addf %397, %399 : vector<2x1xf32>
    %401 = tpu.reciprocal %400 {approx = true} : vector<2x1xf32> -> vector<2x1xf32>
    %402 = vector.broadcast %401 : vector<2x1xf32> to vector<2x3xf32>
    %403 = arith.mulf %395, %402 : vector<2x3xf32>
    %cst_153 = arith.constant dense<0.000000e+00> : vector<2x8xf32>
    %404 = tpu.matmul %403, %377, %cst_153 {dimension_numbers = #tpu.dot_dimension_numbers<[1], [0], [0], [1], [0, 0, 1, 1], [], []>} : vector<2x3xf32>, vector<3x8xf32>, vector<2x8xf32> -> vector<2x8xf32>
    %405 = arith.mulf %397, %401 : vector<2x1xf32>
    %406 = vector.broadcast %405 : vector<2x1xf32> to vector<2x8xf32>
    %407 = vector.broadcast %379 : vector<1x8xf32> to vector<2x8xf32>
    %408 = arith.mulf %406, %407 : vector<2x8xf32>
    %409 = arith.addf %404, %408 : vector<2x8xf32>
    %410 = vector.extract_strided_slice %259 {offsets = [24, 0], sizes = [8, 32], strides = [1, 1]} : vector<32x32xf32> to vector<8x32xf32>
    %cst_154 = arith.constant dense<0.000000e+00> : vector<2x32xf32>
    %411 = tpu.matmul %409, %410, %cst_154 {dimension_numbers = #tpu.dot_dimension_numbers<[1], [0], [0], [1], [0, 0, 1, 1], [], []>} : vector<2x8xf32>, vector<8x32xf32>, vector<2x32xf32> -> vector<2x32xf32>
    %412 = arith.addf %374, %411 : vector<2x32xf32>
    %c0_155 = arith.constant 0 : index
    %c1_156 = arith.constant 1 : index
    %c0_157 = arith.constant 0 : index
    %c0_158 = arith.constant 0 : index
    %413 = vector.load %arg5[%c0_155, %c1_156, %c0_157, %c0_158] : memref<2x2x2x1xf32, #tpu.memory_space<vmem>>, vector<1x1x2x1xf32>
    %414 = vector.shape_cast %413 : vector<1x1x2x1xf32> to vector<2x1xf32>
    %415 = vector.broadcast %414 : vector<2x1xf32> to vector<2x32xf32>
    %416 = arith.mulf %412, %415 : vector<2x32xf32>
    %c0_159 = arith.constant 0 : index
    %c1_160 = arith.constant 1 : index
    %c0_161 = arith.constant 0 : index
    %c0_162 = arith.constant 0 : index
    %417 = vector.load %arg13[%c0_159, %c1_160, %c0_161, %c0_162] : memref<2x2x2x32xf32, #tpu.memory_space<vmem>>, vector<1x1x2x32xf32>
    %418 = vector.shape_cast %417 : vector<1x1x2x32xf32> to vector<2x32xf32>
    %419 = vector.shape_cast %416 : vector<2x32xf32> to vector<1x1x2x32xf32>
    tpu.vector_store %arg13[%c0_159, %c1_160, %c0_161, %c0_162], %419 {strides = array<i32>} : memref<2x2x2x32xf32, #tpu.memory_space<vmem>>, vector<1x1x2x32xf32>,
    %c1_163 = arith.constant 1 : index
    %c0_164 = arith.constant 0 : index
    %c0_165 = arith.constant 0 : index
    %c0_166 = arith.constant 0 : index
    %420 = vector.load %arg2[%c1_163, %c0_164, %c0_165, %c0_166] : memref<2x2x3x32xf32, #tpu.memory_space<vmem>>, vector<1x1x3x32xf32>
    %421 = vector.shape_cast %420 : vector<1x1x3x32xf32> to vector<3x32xf32>
    %422 = vector.extract_strided_slice %1 {offsets = [0, 0], sizes = [1, 32], strides = [1, 1]} : vector<2x32xf32> to vector<1x32xf32>
    %423 = arith.mulf %421, %421 : vector<3x32xf32>
    %cst_167 = arith.constant dense<0.000000e+00> : vector<3xf32>
    %424 = vector.multi_reduction <add>, %423, %cst_167 [1] : vector<3x32xf32> to vector<3xf32>
    %425 = vector.shape_cast %424 : vector<3xf32> to vector<3x1xf32>
    %426 = math.sqrt %425 : vector<3x1xf32>
    %cst_168 = arith.constant 9.99999996E-13 : f32
    %427 = vector.broadcast %cst_168 : f32 to vector<3x1xf32>
    %428 = arith.maximumf %426, %427 : vector<3x1xf32>
    %429 = vector.broadcast %428 : vector<3x1xf32> to vector<3x32xf32>
    %430 = arith.divf %421, %429 : vector<3x32xf32>
    %cst_169 = arith.constant 5.65685415 : f32
    %431 = vector.broadcast %cst_169 : f32 to vector<3x32xf32>
    %432 = arith.mulf %430, %431 : vector<3x32xf32>
    %433 = vector.broadcast %422 : vector<1x32xf32> to vector<3x32xf32>
    %434 = arith.mulf %432, %433 : vector<3x32xf32>
    %c0_170 = arith.constant 0 : index
    %c0_171 = arith.constant 0 : index
    %c0_172 = arith.constant 0 : index
    %435 = vector.load %arg9[%c0_170, %c0_171, %c0_172] : memref<2x32x64xf32, #tpu.memory_space<vmem>>, vector<1x32x64xf32>
    %436 = vector.shape_cast %435 : vector<1x32x64xf32> to vector<32x64xf32>
    %cst_173 = arith.constant dense<0.000000e+00> : vector<3x64xf32>
    %437 = tpu.matmul %434, %436, %cst_173 {dimension_numbers = #tpu.dot_dimension_numbers<[1], [0], [0], [1], [0, 0, 1, 1], [], []>} : vector<3x32xf32>, vector<32x64xf32>, vector<3x64xf32> -> vector<3x64xf32>
    %c1_174 = arith.constant 1 : index
    %c1_175 = arith.constant 1 : index
    %c0_176 = arith.constant 0 : index
    %c0_177 = arith.constant 0 : index
    %438 = vector.load %arg2[%c1_174, %c1_175, %c0_176, %c0_177] : memref<2x2x3x32xf32, #tpu.memory_space<vmem>>, vector<1x1x3x32xf32>
    %439 = vector.shape_cast %438 : vector<1x1x3x32xf32> to vector<3x32xf32>
    %440 = vector.extract_strided_slice %1 {offsets = [1, 0], sizes = [1, 32], strides = [1, 1]} : vector<2x32xf32> to vector<1x32xf32>
    %441 = arith.mulf %439, %439 : vector<3x32xf32>
    %cst_178 = arith.constant dense<0.000000e+00> : vector<3xf32>
    %442 = vector.multi_reduction <add>, %441, %cst_178 [1] : vector<3x32xf32> to vector<3xf32>
    %443 = vector.shape_cast %442 : vector<3xf32> to vector<3x1xf32>
    %444 = math.sqrt %443 : vector<3x1xf32>
    %cst_179 = arith.constant 9.99999996E-13 : f32
    %445 = vector.broadcast %cst_179 : f32 to vector<3x1xf32>
    %446 = arith.maximumf %444, %445 : vector<3x1xf32>
    %447 = vector.broadcast %446 : vector<3x1xf32> to vector<3x32xf32>
    %448 = arith.divf %439, %447 : vector<3x32xf32>
    %cst_180 = arith.constant 5.65685415 : f32
    %449 = vector.broadcast %cst_180 : f32 to vector<3x32xf32>
    %450 = arith.mulf %448, %449 : vector<3x32xf32>
    %451 = vector.broadcast %440 : vector<1x32xf32> to vector<3x32xf32>
    %452 = arith.mulf %450, %451 : vector<3x32xf32>
    %c1_181 = arith.constant 1 : index
    %c0_182 = arith.constant 0 : index
    %c0_183 = arith.constant 0 : index
    %453 = vector.load %arg9[%c1_181, %c0_182, %c0_183] : memref<2x32x64xf32, #tpu.memory_space<vmem>>, vector<1x32x64xf32>
    %454 = vector.shape_cast %453 : vector<1x32x64xf32> to vector<32x64xf32>
    %cst_184 = arith.constant dense<0.000000e+00> : vector<3x64xf32>
    %455 = tpu.matmul %452, %454, %cst_184 {dimension_numbers = #tpu.dot_dimension_numbers<[1], [0], [0], [1], [0, 0, 1, 1], [], []>} : vector<3x32xf32>, vector<32x64xf32>, vector<3x64xf32> -> vector<3x64xf32>
    %456 = vector.extract_strided_slice %437 {offsets = [0, 0], sizes = [3, 32], strides = [1, 1]} : vector<3x64xf32> to vector<3x32xf32>
    %457 = vector.extract_strided_slice %437 {offsets = [0, 32], sizes = [3, 32], strides = [1, 1]} : vector<3x64xf32> to vector<3x32xf32>
    %458 = vector.extract_strided_slice %455 {offsets = [0, 0], sizes = [3, 32], strides = [1, 1]} : vector<3x64xf32> to vector<3x32xf32>
    %459 = vector.extract_strided_slice %455 {offsets = [0, 32], sizes = [3, 32], strides = [1, 1]} : vector<3x64xf32> to vector<3x32xf32>
    %c1_185 = arith.constant 1 : index
    %c0_186 = arith.constant 0 : index
    %c0_187 = arith.constant 0 : index
    %c0_188 = arith.constant 0 : index
    %460 = vector.load %arg1[%c1_185, %c0_186, %c0_187, %c0_188] : memref<2x2x2x32xf32, #tpu.memory_space<vmem>>, vector<1x1x2x32xf32>
    %461 = vector.shape_cast %460 : vector<1x1x2x32xf32> to vector<2x32xf32>
    %462 = vector.extract_strided_slice %0 {offsets = [0, 0], sizes = [1, 32], strides = [1, 1]} : vector<2x32xf32> to vector<1x32xf32>
    %463 = arith.mulf %461, %461 : vector<2x32xf32>
    %cst_189 = arith.constant dense<0.000000e+00> : vector<2xf32>
    %464 = vector.multi_reduction <add>, %463, %cst_189 [1] : vector<2x32xf32> to vector<2xf32>
    %465 = vector.shape_cast %464 : vector<2xf32> to vector<2x1xf32>
    %466 = math.sqrt %465 : vector<2x1xf32>
    %cst_190 = arith.constant 9.99999996E-13 : f32
    %467 = vector.broadcast %cst_190 : f32 to vector<2x1xf32>
    %468 = arith.maximumf %466, %467 : vector<2x1xf32>
    %469 = vector.broadcast %468 : vector<2x1xf32> to vector<2x32xf32>
    %470 = arith.divf %461, %469 : vector<2x32xf32>
    %cst_191 = arith.constant 5.65685415 : f32
    %471 = vector.broadcast %cst_191 : f32 to vector<2x32xf32>
    %472 = arith.mulf %470, %471 : vector<2x32xf32>
    %473 = vector.broadcast %462 : vector<1x32xf32> to vector<2x32xf32>
    %474 = arith.mulf %472, %473 : vector<2x32xf32>
    %c0_192 = arith.constant 0 : index
    %c0_193 = arith.constant 0 : index
    %c0_194 = arith.constant 0 : index
    %475 = vector.load %arg8[%c0_192, %c0_193, %c0_194] : memref<2x32x32xf32, #tpu.memory_space<vmem>>, vector<1x32x32xf32>
    %476 = vector.shape_cast %475 : vector<1x32x32xf32> to vector<32x32xf32>
    %cst_195 = arith.constant dense<0.000000e+00> : vector<2x32xf32>
    %477 = tpu.matmul %474, %476, %cst_195 {dimension_numbers = #tpu.dot_dimension_numbers<[1], [0], [0], [1], [0, 0, 1, 1], [], []>} : vector<2x32xf32>, vector<32x32xf32>, vector<2x32xf32> -> vector<2x32xf32>
    %c1_196 = arith.constant 1 : index
    %c0_197 = arith.constant 0 : index
    %c0_198 = arith.constant 0 : index
    %c0_199 = arith.constant 0 : index
    %478 = vector.load %arg4[%c1_196, %c0_197, %c0_198, %c0_199] : memref<2x2x3x1xf32, #tpu.memory_space<vmem>>, vector<1x1x3x1xf32>
    %479 = vector.shape_cast %478 : vector<1x1x3x1xf32> to vector<3x1xf32>
    %480 = vector.broadcast %479 : vector<3x1xf32> to vector<3x32xf32>
    %481 = arith.mulf %458, %480 : vector<3x32xf32>
    %c1_200 = arith.constant 1 : index
    %c0_201 = arith.constant 0 : index
    %c0_202 = arith.constant 0 : index
    %c0_203 = arith.constant 0 : index
    %482 = vector.load %arg3[%c1_200, %c0_201, %c0_202, %c0_203] : memref<2x2x1x3xf32, #tpu.memory_space<vmem>>, vector<1x1x1x3xf32>
    %483 = vector.shape_cast %482 : vector<1x1x1x3xf32> to vector<1x3xf32>
    %cst_204 = arith.constant 5.000000e-01 : f32
    %484 = vector.broadcast %cst_204 : f32 to vector<1x3xf32>
    %485 = arith.cmpf ogt, %483, %484 : vector<1x3xf32>
    %c0_205 = arith.constant 0 : index
    %c0_206 = arith.constant 0 : index
    %c0_207 = arith.constant 0 : index
    %486 = vector.load %arg10[%c0_205, %c0_206, %c0_207] : memref<2x32x32xf32, #tpu.memory_space<vmem>>, vector<1x32x32xf32>
    %487 = vector.shape_cast %486 : vector<1x32x32xf32> to vector<32x32xf32>
    %cst_208 = arith.constant 0.000000e+00 : f32
    %488 = vector.broadcast %cst_208 : f32 to vector<2x32xf32>
    %489 = vector.extract_strided_slice %477 {offsets = [0, 0], sizes = [2, 8], strides = [1, 1]} : vector<2x32xf32> to vector<2x8xf32>
    %490 = vector.extract_strided_slice %456 {offsets = [0, 0], sizes = [3, 8], strides = [1, 1]} : vector<3x32xf32> to vector<3x8xf32>
    %491 = vector.extract_strided_slice %481 {offsets = [0, 0], sizes = [3, 8], strides = [1, 1]} : vector<3x32xf32> to vector<3x8xf32>
    %492 = vector.extract_strided_slice %2 {offsets = [0, 0], sizes = [1, 8], strides = [1, 1]} : vector<2x32xf32> to vector<1x8xf32>
    %493 = vector.extract_strided_slice %3 {offsets = [0, 0], sizes = [1, 8], strides = [1, 1]} : vector<2x32xf32> to vector<1x8xf32>
    %cst_209 = arith.constant dense<0.000000e+00> : vector<2x3xf32>
    %494 = tpu.matmul %489, %490, %cst_209 {dimension_numbers = #tpu.dot_dimension_numbers<[1], [1], [0], [0], [0, 0, 1, 0], [], []>} : vector<2x8xf32>, vector<3x8xf32>, vector<2x3xf32> -> vector<2x3xf32>
    %cst_210 = arith.constant 0.353553385 : f32
    %495 = vector.broadcast %cst_210 : f32 to vector<2x3xf32>
    %496 = arith.mulf %494, %495 : vector<2x3xf32>
    %cst_211 = arith.constant -1.000000e+30 : f32
    %497 = vector.shape_cast %485 : vector<1x3xi1> to vector<1x3xi1>
    %498 = vector.broadcast %497 : vector<1x3xi1> to vector<2x3xi1>
    %499 = vector.broadcast %cst_211 : f32 to vector<2x3xf32>
    %500 = arith.select %498, %496, %499 : vector<2x3xi1>, vector<2x3xf32>
    %cst_212 = arith.constant dense<0.000000e+00> : vector<2x1xf32>
    %501 = tpu.matmul %489, %492, %cst_212 {dimension_numbers = #tpu.dot_dimension_numbers<[1], [1], [0], [0], [0, 0, 1, 0], [], []>} : vector<2x8xf32>, vector<1x8xf32>, vector<2x1xf32> -> vector<2x1xf32>
    %cst_213 = arith.constant 0.353553385 : f32
    %502 = vector.broadcast %cst_213 : f32 to vector<2x1xf32>
    %503 = arith.mulf %501, %502 : vector<2x1xf32>
    %cst_214 = arith.constant dense<0xFF800000> : vector<2xf32>
    %504 = vector.multi_reduction <maximumf>, %500, %cst_214 [1] : vector<2x3xf32> to vector<2xf32>
    %505 = vector.shape_cast %504 : vector<2xf32> to vector<2x1xf32>
    %506 = arith.maximumf %505, %503 : vector<2x1xf32>
    %507 = vector.broadcast %506 : vector<2x1xf32> to vector<2x3xf32>
    %508 = arith.subf %500, %507 : vector<2x3xf32>
    %509 = math.exp %508 : vector<2x3xf32>
    %510 = arith.subf %503, %506 : vector<2x1xf32>
    %511 = math.exp %510 : vector<2x1xf32>
    %cst_215 = arith.constant dense<0.000000e+00> : vector<2xf32>
    %512 = vector.multi_reduction <add>, %509, %cst_215 [1] : vector<2x3xf32> to vector<2xf32>
    %513 = vector.shape_cast %512 : vector<2xf32> to vector<2x1xf32>
    %514 = arith.addf %511, %513 : vector<2x1xf32>
    %515 = tpu.reciprocal %514 {approx = true} : vector<2x1xf32> -> vector<2x1xf32>
    %516 = vector.broadcast %515 : vector<2x1xf32> to vector<2x3xf32>
    %517 = arith.mulf %509, %516 : vector<2x3xf32>
    %cst_216 = arith.constant dense<0.000000e+00> : vector<2x8xf32>
    %518 = tpu.matmul %517, %491, %cst_216 {dimension_numbers = #tpu.dot_dimension_numbers<[1], [0], [0], [1], [0, 0, 1, 1], [], []>} : vector<2x3xf32>, vector<3x8xf32>, vector<2x8xf32> -> vector<2x8xf32>
    %519 = arith.mulf %511, %515 : vector<2x1xf32>
    %520 = vector.broadcast %519 : vector<2x1xf32> to vector<2x8xf32>
    %521 = vector.broadcast %493 : vector<1x8xf32> to vector<2x8xf32>
    %522 = arith.mulf %520, %521 : vector<2x8xf32>
    %523 = arith.addf %518, %522 : vector<2x8xf32>
    %524 = vector.extract_strided_slice %487 {offsets = [0, 0], sizes = [8, 32], strides = [1, 1]} : vector<32x32xf32> to vector<8x32xf32>
    %cst_217 = arith.constant dense<0.000000e+00> : vector<2x32xf32>
    %525 = tpu.matmul %523, %524, %cst_217 {dimension_numbers = #tpu.dot_dimension_numbers<[1], [0], [0], [1], [0, 0, 1, 1], [], []>} : vector<2x8xf32>, vector<8x32xf32>, vector<2x32xf32> -> vector<2x32xf32>
    %526 = arith.addf %488, %525 : vector<2x32xf32>
    %527 = vector.extract_strided_slice %477 {offsets = [0, 8], sizes = [2, 8], strides = [1, 1]} : vector<2x32xf32> to vector<2x8xf32>
    %528 = vector.extract_strided_slice %456 {offsets = [0, 8], sizes = [3, 8], strides = [1, 1]} : vector<3x32xf32> to vector<3x8xf32>
    %529 = vector.extract_strided_slice %481 {offsets = [0, 8], sizes = [3, 8], strides = [1, 1]} : vector<3x32xf32> to vector<3x8xf32>
    %530 = vector.extract_strided_slice %2 {offsets = [0, 8], sizes = [1, 8], strides = [1, 1]} : vector<2x32xf32> to vector<1x8xf32>
    %531 = vector.extract_strided_slice %3 {offsets = [0, 8], sizes = [1, 8], strides = [1, 1]} : vector<2x32xf32> to vector<1x8xf32>
    %cst_218 = arith.constant dense<0.000000e+00> : vector<2x3xf32>
    %532 = tpu.matmul %527, %528, %cst_218 {dimension_numbers = #tpu.dot_dimension_numbers<[1], [1], [0], [0], [0, 0, 1, 0], [], []>} : vector<2x8xf32>, vector<3x8xf32>, vector<2x3xf32> -> vector<2x3xf32>
    %cst_219 = arith.constant 0.353553385 : f32
    %533 = vector.broadcast %cst_219 : f32 to vector<2x3xf32>
    %534 = arith.mulf %532, %533 : vector<2x3xf32>
    %cst_220 = arith.constant -1.000000e+30 : f32
    %535 = vector.shape_cast %485 : vector<1x3xi1> to vector<1x3xi1>
    %536 = vector.broadcast %535 : vector<1x3xi1> to vector<2x3xi1>
    %537 = vector.broadcast %cst_220 : f32 to vector<2x3xf32>
    %538 = arith.select %536, %534, %537 : vector<2x3xi1>, vector<2x3xf32>
    %cst_221 = arith.constant dense<0.000000e+00> : vector<2x1xf32>
    %539 = tpu.matmul %527, %530, %cst_221 {dimension_numbers = #tpu.dot_dimension_numbers<[1], [1], [0], [0], [0, 0, 1, 0], [], []>} : vector<2x8xf32>, vector<1x8xf32>, vector<2x1xf32> -> vector<2x1xf32>
    %cst_222 = arith.constant 0.353553385 : f32
    %540 = vector.broadcast %cst_222 : f32 to vector<2x1xf32>
    %541 = arith.mulf %539, %540 : vector<2x1xf32>
    %cst_223 = arith.constant dense<0xFF800000> : vector<2xf32>
    %542 = vector.multi_reduction <maximumf>, %538, %cst_223 [1] : vector<2x3xf32> to vector<2xf32>
    %543 = vector.shape_cast %542 : vector<2xf32> to vector<2x1xf32>
    %544 = arith.maximumf %543, %541 : vector<2x1xf32>
    %545 = vector.broadcast %544 : vector<2x1xf32> to vector<2x3xf32>
    %546 = arith.subf %538, %545 : vector<2x3xf32>
    %547 = math.exp %546 : vector<2x3xf32>
    %548 = arith.subf %541, %544 : vector<2x1xf32>
    %549 = math.exp %548 : vector<2x1xf32>
    %cst_224 = arith.constant dense<0.000000e+00> : vector<2xf32>
    %550 = vector.multi_reduction <add>, %547, %cst_224 [1] : vector<2x3xf32> to vector<2xf32>
    %551 = vector.shape_cast %550 : vector<2xf32> to vector<2x1xf32>
    %552 = arith.addf %549, %551 : vector<2x1xf32>
    %553 = tpu.reciprocal %552 {approx = true} : vector<2x1xf32> -> vector<2x1xf32>
    %554 = vector.broadcast %553 : vector<2x1xf32> to vector<2x3xf32>
    %555 = arith.mulf %547, %554 : vector<2x3xf32>
    %cst_225 = arith.constant dense<0.000000e+00> : vector<2x8xf32>
    %556 = tpu.matmul %555, %529, %cst_225 {dimension_numbers = #tpu.dot_dimension_numbers<[1], [0], [0], [1], [0, 0, 1, 1], [], []>} : vector<2x3xf32>, vector<3x8xf32>, vector<2x8xf32> -> vector<2x8xf32>
    %557 = arith.mulf %549, %553 : vector<2x1xf32>
    %558 = vector.broadcast %557 : vector<2x1xf32> to vector<2x8xf32>
    %559 = vector.broadcast %531 : vector<1x8xf32> to vector<2x8xf32>
    %560 = arith.mulf %558, %559 : vector<2x8xf32>
    %561 = arith.addf %556, %560 : vector<2x8xf32>
    %562 = vector.extract_strided_slice %487 {offsets = [8, 0], sizes = [8, 32], strides = [1, 1]} : vector<32x32xf32> to vector<8x32xf32>
    %cst_226 = arith.constant dense<0.000000e+00> : vector<2x32xf32>
    %563 = tpu.matmul %561, %562, %cst_226 {dimension_numbers = #tpu.dot_dimension_numbers<[1], [0], [0], [1], [0, 0, 1, 1], [], []>} : vector<2x8xf32>, vector<8x32xf32>, vector<2x32xf32> -> vector<2x32xf32>
    %564 = arith.addf %526, %563 : vector<2x32xf32>
    %565 = vector.extract_strided_slice %477 {offsets = [0, 16], sizes = [2, 8], strides = [1, 1]} : vector<2x32xf32> to vector<2x8xf32>
    %566 = vector.extract_strided_slice %456 {offsets = [0, 16], sizes = [3, 8], strides = [1, 1]} : vector<3x32xf32> to vector<3x8xf32>
    %567 = vector.extract_strided_slice %481 {offsets = [0, 16], sizes = [3, 8], strides = [1, 1]} : vector<3x32xf32> to vector<3x8xf32>
    %568 = vector.extract_strided_slice %2 {offsets = [0, 16], sizes = [1, 8], strides = [1, 1]} : vector<2x32xf32> to vector<1x8xf32>
    %569 = vector.extract_strided_slice %3 {offsets = [0, 16], sizes = [1, 8], strides = [1, 1]} : vector<2x32xf32> to vector<1x8xf32>
    %cst_227 = arith.constant dense<0.000000e+00> : vector<2x3xf32>
    %570 = tpu.matmul %565, %566, %cst_227 {dimension_numbers = #tpu.dot_dimension_numbers<[1], [1], [0], [0], [0, 0, 1, 0], [], []>} : vector<2x8xf32>, vector<3x8xf32>, vector<2x3xf32> -> vector<2x3xf32>
    %cst_228 = arith.constant 0.353553385 : f32
    %571 = vector.broadcast %cst_228 : f32 to vector<2x3xf32>
    %572 = arith.mulf %570, %571 : vector<2x3xf32>
    %cst_229 = arith.constant -1.000000e+30 : f32
    %573 = vector.shape_cast %485 : vector<1x3xi1> to vector<1x3xi1>
    %574 = vector.broadcast %573 : vector<1x3xi1> to vector<2x3xi1>
    %575 = vector.broadcast %cst_229 : f32 to vector<2x3xf32>
    %576 = arith.select %574, %572, %575 : vector<2x3xi1>, vector<2x3xf32>
    %cst_230 = arith.constant dense<0.000000e+00> : vector<2x1xf32>
    %577 = tpu.matmul %565, %568, %cst_230 {dimension_numbers = #tpu.dot_dimension_numbers<[1], [1], [0], [0], [0, 0, 1, 0], [], []>} : vector<2x8xf32>, vector<1x8xf32>, vector<2x1xf32> -> vector<2x1xf32>
    %cst_231 = arith.constant 0.353553385 : f32
    %578 = vector.broadcast %cst_231 : f32 to vector<2x1xf32>
    %579 = arith.mulf %577, %578 : vector<2x1xf32>
    %cst_232 = arith.constant dense<0xFF800000> : vector<2xf32>
    %580 = vector.multi_reduction <maximumf>, %576, %cst_232 [1] : vector<2x3xf32> to vector<2xf32>
    %581 = vector.shape_cast %580 : vector<2xf32> to vector<2x1xf32>
    %582 = arith.maximumf %581, %579 : vector<2x1xf32>
    %583 = vector.broadcast %582 : vector<2x1xf32> to vector<2x3xf32>
    %584 = arith.subf %576, %583 : vector<2x3xf32>
    %585 = math.exp %584 : vector<2x3xf32>
    %586 = arith.subf %579, %582 : vector<2x1xf32>
    %587 = math.exp %586 : vector<2x1xf32>
    %cst_233 = arith.constant dense<0.000000e+00> : vector<2xf32>
    %588 = vector.multi_reduction <add>, %585, %cst_233 [1] : vector<2x3xf32> to vector<2xf32>
    %589 = vector.shape_cast %588 : vector<2xf32> to vector<2x1xf32>
    %590 = arith.addf %587, %589 : vector<2x1xf32>
    %591 = tpu.reciprocal %590 {approx = true} : vector<2x1xf32> -> vector<2x1xf32>
    %592 = vector.broadcast %591 : vector<2x1xf32> to vector<2x3xf32>
    %593 = arith.mulf %585, %592 : vector<2x3xf32>
    %cst_234 = arith.constant dense<0.000000e+00> : vector<2x8xf32>
    %594 = tpu.matmul %593, %567, %cst_234 {dimension_numbers = #tpu.dot_dimension_numbers<[1], [0], [0], [1], [0, 0, 1, 1], [], []>} : vector<2x3xf32>, vector<3x8xf32>, vector<2x8xf32> -> vector<2x8xf32>
    %595 = arith.mulf %587, %591 : vector<2x1xf32>
    %596 = vector.broadcast %595 : vector<2x1xf32> to vector<2x8xf32>
    %597 = vector.broadcast %569 : vector<1x8xf32> to vector<2x8xf32>
    %598 = arith.mulf %596, %597 : vector<2x8xf32>
    %599 = arith.addf %594, %598 : vector<2x8xf32>
    %600 = vector.extract_strided_slice %487 {offsets = [16, 0], sizes = [8, 32], strides = [1, 1]} : vector<32x32xf32> to vector<8x32xf32>
    %cst_235 = arith.constant dense<0.000000e+00> : vector<2x32xf32>
    %601 = tpu.matmul %599, %600, %cst_235 {dimension_numbers = #tpu.dot_dimension_numbers<[1], [0], [0], [1], [0, 0, 1, 1], [], []>} : vector<2x8xf32>, vector<8x32xf32>, vector<2x32xf32> -> vector<2x32xf32>
    %602 = arith.addf %564, %601 : vector<2x32xf32>
    %603 = vector.extract_strided_slice %477 {offsets = [0, 24], sizes = [2, 8], strides = [1, 1]} : vector<2x32xf32> to vector<2x8xf32>
    %604 = vector.extract_strided_slice %456 {offsets = [0, 24], sizes = [3, 8], strides = [1, 1]} : vector<3x32xf32> to vector<3x8xf32>
    %605 = vector.extract_strided_slice %481 {offsets = [0, 24], sizes = [3, 8], strides = [1, 1]} : vector<3x32xf32> to vector<3x8xf32>
    %606 = vector.extract_strided_slice %2 {offsets = [0, 24], sizes = [1, 8], strides = [1, 1]} : vector<2x32xf32> to vector<1x8xf32>
    %607 = vector.extract_strided_slice %3 {offsets = [0, 24], sizes = [1, 8], strides = [1, 1]} : vector<2x32xf32> to vector<1x8xf32>
    %cst_236 = arith.constant dense<0.000000e+00> : vector<2x3xf32>
    %608 = tpu.matmul %603, %604, %cst_236 {dimension_numbers = #tpu.dot_dimension_numbers<[1], [1], [0], [0], [0, 0, 1, 0], [], []>} : vector<2x8xf32>, vector<3x8xf32>, vector<2x3xf32> -> vector<2x3xf32>
    %cst_237 = arith.constant 0.353553385 : f32
    %609 = vector.broadcast %cst_237 : f32 to vector<2x3xf32>
    %610 = arith.mulf %608, %609 : vector<2x3xf32>
    %cst_238 = arith.constant -1.000000e+30 : f32
    %611 = vector.shape_cast %485 : vector<1x3xi1> to vector<1x3xi1>
    %612 = vector.broadcast %611 : vector<1x3xi1> to vector<2x3xi1>
    %613 = vector.broadcast %cst_238 : f32 to vector<2x3xf32>
    %614 = arith.select %612, %610, %613 : vector<2x3xi1>, vector<2x3xf32>
    %cst_239 = arith.constant dense<0.000000e+00> : vector<2x1xf32>
    %615 = tpu.matmul %603, %606, %cst_239 {dimension_numbers = #tpu.dot_dimension_numbers<[1], [1], [0], [0], [0, 0, 1, 0], [], []>} : vector<2x8xf32>, vector<1x8xf32>, vector<2x1xf32> -> vector<2x1xf32>
    %cst_240 = arith.constant 0.353553385 : f32
    %616 = vector.broadcast %cst_240 : f32 to vector<2x1xf32>
    %617 = arith.mulf %615, %616 : vector<2x1xf32>
    %cst_241 = arith.constant dense<0xFF800000> : vector<2xf32>
    %618 = vector.multi_reduction <maximumf>, %614, %cst_241 [1] : vector<2x3xf32> to vector<2xf32>
    %619 = vector.shape_cast %618 : vector<2xf32> to vector<2x1xf32>
    %620 = arith.maximumf %619, %617 : vector<2x1xf32>
    %621 = vector.broadcast %620 : vector<2x1xf32> to vector<2x3xf32>
    %622 = arith.subf %614, %621 : vector<2x3xf32>
    %623 = math.exp %622 : vector<2x3xf32>
    %624 = arith.subf %617, %620 : vector<2x1xf32>
    %625 = math.exp %624 : vector<2x1xf32>
    %cst_242 = arith.constant dense<0.000000e+00> : vector<2xf32>
    %626 = vector.multi_reduction <add>, %623, %cst_242 [1] : vector<2x3xf32> to vector<2xf32>
    %627 = vector.shape_cast %626 : vector<2xf32> to vector<2x1xf32>
    %628 = arith.addf %625, %627 : vector<2x1xf32>
    %629 = tpu.reciprocal %628 {approx = true} : vector<2x1xf32> -> vector<2x1xf32>
    %630 = vector.broadcast %629 : vector<2x1xf32> to vector<2x3xf32>
    %631 = arith.mulf %623, %630 : vector<2x3xf32>
    %cst_243 = arith.constant dense<0.000000e+00> : vector<2x8xf32>
    %632 = tpu.matmul %631, %605, %cst_243 {dimension_numbers = #tpu.dot_dimension_numbers<[1], [0], [0], [1], [0, 0, 1, 1], [], []>} : vector<2x3xf32>, vector<3x8xf32>, vector<2x8xf32> -> vector<2x8xf32>
    %633 = arith.mulf %625, %629 : vector<2x1xf32>
    %634 = vector.broadcast %633 : vector<2x1xf32> to vector<2x8xf32>
    %635 = vector.broadcast %607 : vector<1x8xf32> to vector<2x8xf32>
    %636 = arith.mulf %634, %635 : vector<2x8xf32>
    %637 = arith.addf %632, %636 : vector<2x8xf32>
    %638 = vector.extract_strided_slice %487 {offsets = [24, 0], sizes = [8, 32], strides = [1, 1]} : vector<32x32xf32> to vector<8x32xf32>
    %cst_244 = arith.constant dense<0.000000e+00> : vector<2x32xf32>
    %639 = tpu.matmul %637, %638, %cst_244 {dimension_numbers = #tpu.dot_dimension_numbers<[1], [0], [0], [1], [0, 0, 1, 1], [], []>} : vector<2x8xf32>, vector<8x32xf32>, vector<2x32xf32> -> vector<2x32xf32>
    %640 = arith.addf %602, %639 : vector<2x32xf32>
    %c1_245 = arith.constant 1 : index
    %c0_246 = arith.constant 0 : index
    %c0_247 = arith.constant 0 : index
    %c0_248 = arith.constant 0 : index
    %641 = vector.load %arg5[%c1_245, %c0_246, %c0_247, %c0_248] : memref<2x2x2x1xf32, #tpu.memory_space<vmem>>, vector<1x1x2x1xf32>
    %642 = vector.shape_cast %641 : vector<1x1x2x1xf32> to vector<2x1xf32>
    %643 = vector.broadcast %642 : vector<2x1xf32> to vector<2x32xf32>
    %644 = arith.mulf %640, %643 : vector<2x32xf32>
    %c1_249 = arith.constant 1 : index
    %c0_250 = arith.constant 0 : index
    %c0_251 = arith.constant 0 : index
    %c0_252 = arith.constant 0 : index
    %645 = vector.load %arg13[%c1_249, %c0_250, %c0_251, %c0_252] : memref<2x2x2x32xf32, #tpu.memory_space<vmem>>, vector<1x1x2x32xf32>
    %646 = vector.shape_cast %645 : vector<1x1x2x32xf32> to vector<2x32xf32>
    %647 = vector.shape_cast %644 : vector<2x32xf32> to vector<1x1x2x32xf32>
    tpu.vector_store %arg13[%c1_249, %c0_250, %c0_251, %c0_252], %647 {strides = array<i32>} : memref<2x2x2x32xf32, #tpu.memory_space<vmem>>, vector<1x1x2x32xf32>,
    %c1_253 = arith.constant 1 : index
    %c1_254 = arith.constant 1 : index
    %c0_255 = arith.constant 0 : index
    %c0_256 = arith.constant 0 : index
    %648 = vector.load %arg1[%c1_253, %c1_254, %c0_255, %c0_256] : memref<2x2x2x32xf32, #tpu.memory_space<vmem>>, vector<1x1x2x32xf32>
    %649 = vector.shape_cast %648 : vector<1x1x2x32xf32> to vector<2x32xf32>
    %650 = vector.extract_strided_slice %0 {offsets = [1, 0], sizes = [1, 32], strides = [1, 1]} : vector<2x32xf32> to vector<1x32xf32>
    %651 = arith.mulf %649, %649 : vector<2x32xf32>
    %cst_257 = arith.constant dense<0.000000e+00> : vector<2xf32>
    %652 = vector.multi_reduction <add>, %651, %cst_257 [1] : vector<2x32xf32> to vector<2xf32>
    %653 = vector.shape_cast %652 : vector<2xf32> to vector<2x1xf32>
    %654 = math.sqrt %653 : vector<2x1xf32>
    %cst_258 = arith.constant 9.99999996E-13 : f32
    %655 = vector.broadcast %cst_258 : f32 to vector<2x1xf32>
    %656 = arith.maximumf %654, %655 : vector<2x1xf32>
    %657 = vector.broadcast %656 : vector<2x1xf32> to vector<2x32xf32>
    %658 = arith.divf %649, %657 : vector<2x32xf32>
    %cst_259 = arith.constant 5.65685415 : f32
    %659 = vector.broadcast %cst_259 : f32 to vector<2x32xf32>
    %660 = arith.mulf %658, %659 : vector<2x32xf32>
    %661 = vector.broadcast %650 : vector<1x32xf32> to vector<2x32xf32>
    %662 = arith.mulf %660, %661 : vector<2x32xf32>
    %c1_260 = arith.constant 1 : index
    %c0_261 = arith.constant 0 : index
    %c0_262 = arith.constant 0 : index
    %663 = vector.load %arg8[%c1_260, %c0_261, %c0_262] : memref<2x32x32xf32, #tpu.memory_space<vmem>>, vector<1x32x32xf32>
    %664 = vector.shape_cast %663 : vector<1x32x32xf32> to vector<32x32xf32>
    %cst_263 = arith.constant dense<0.000000e+00> : vector<2x32xf32>
    %665 = tpu.matmul %662, %664, %cst_263 {dimension_numbers = #tpu.dot_dimension_numbers<[1], [0], [0], [1], [0, 0, 1, 1], [], []>} : vector<2x32xf32>, vector<32x32xf32>, vector<2x32xf32> -> vector<2x32xf32>
    %c1_264 = arith.constant 1 : index
    %c1_265 = arith.constant 1 : index
    %c0_266 = arith.constant 0 : index
    %c0_267 = arith.constant 0 : index
    %666 = vector.load %arg4[%c1_264, %c1_265, %c0_266, %c0_267] : memref<2x2x3x1xf32, #tpu.memory_space<vmem>>, vector<1x1x3x1xf32>
    %667 = vector.shape_cast %666 : vector<1x1x3x1xf32> to vector<3x1xf32>
    %668 = vector.broadcast %667 : vector<3x1xf32> to vector<3x32xf32>
    %669 = arith.mulf %459, %668 : vector<3x32xf32>
    %c1_268 = arith.constant 1 : index
    %c1_269 = arith.constant 1 : index
    %c0_270 = arith.constant 0 : index
    %c0_271 = arith.constant 0 : index
    %670 = vector.load %arg3[%c1_268, %c1_269, %c0_270, %c0_271] : memref<2x2x1x3xf32, #tpu.memory_space<vmem>>, vector<1x1x1x3xf32>
    %671 = vector.shape_cast %670 : vector<1x1x1x3xf32> to vector<1x3xf32>
    %cst_272 = arith.constant 5.000000e-01 : f32
    %672 = vector.broadcast %cst_272 : f32 to vector<1x3xf32>
    %673 = arith.cmpf ogt, %671, %672 : vector<1x3xf32>
    %c1_273 = arith.constant 1 : index
    %c0_274 = arith.constant 0 : index
    %c0_275 = arith.constant 0 : index
    %674 = vector.load %arg10[%c1_273, %c0_274, %c0_275] : memref<2x32x32xf32, #tpu.memory_space<vmem>>, vector<1x32x32xf32>
    %675 = vector.shape_cast %674 : vector<1x32x32xf32> to vector<32x32xf32>
    %cst_276 = arith.constant 0.000000e+00 : f32
    %676 = vector.broadcast %cst_276 : f32 to vector<2x32xf32>
    %677 = vector.extract_strided_slice %665 {offsets = [0, 0], sizes = [2, 8], strides = [1, 1]} : vector<2x32xf32> to vector<2x8xf32>
    %678 = vector.extract_strided_slice %457 {offsets = [0, 0], sizes = [3, 8], strides = [1, 1]} : vector<3x32xf32> to vector<3x8xf32>
    %679 = vector.extract_strided_slice %669 {offsets = [0, 0], sizes = [3, 8], strides = [1, 1]} : vector<3x32xf32> to vector<3x8xf32>
    %680 = vector.extract_strided_slice %2 {offsets = [1, 0], sizes = [1, 8], strides = [1, 1]} : vector<2x32xf32> to vector<1x8xf32>
    %681 = vector.extract_strided_slice %3 {offsets = [1, 0], sizes = [1, 8], strides = [1, 1]} : vector<2x32xf32> to vector<1x8xf32>
    %cst_277 = arith.constant dense<0.000000e+00> : vector<2x3xf32>
    %682 = tpu.matmul %677, %678, %cst_277 {dimension_numbers = #tpu.dot_dimension_numbers<[1], [1], [0], [0], [0, 0, 1, 0], [], []>} : vector<2x8xf32>, vector<3x8xf32>, vector<2x3xf32> -> vector<2x3xf32>
    %cst_278 = arith.constant 0.353553385 : f32
    %683 = vector.broadcast %cst_278 : f32 to vector<2x3xf32>
    %684 = arith.mulf %682, %683 : vector<2x3xf32>
    %cst_279 = arith.constant -1.000000e+30 : f32
    %685 = vector.shape_cast %673 : vector<1x3xi1> to vector<1x3xi1>
    %686 = vector.broadcast %685 : vector<1x3xi1> to vector<2x3xi1>
    %687 = vector.broadcast %cst_279 : f32 to vector<2x3xf32>
    %688 = arith.select %686, %684, %687 : vector<2x3xi1>, vector<2x3xf32>
    %cst_280 = arith.constant dense<0.000000e+00> : vector<2x1xf32>
    %689 = tpu.matmul %677, %680, %cst_280 {dimension_numbers = #tpu.dot_dimension_numbers<[1], [1], [0], [0], [0, 0, 1, 0], [], []>} : vector<2x8xf32>, vector<1x8xf32>, vector<2x1xf32> -> vector<2x1xf32>
    %cst_281 = arith.constant 0.353553385 : f32
    %690 = vector.broadcast %cst_281 : f32 to vector<2x1xf32>
    %691 = arith.mulf %689, %690 : vector<2x1xf32>
    %cst_282 = arith.constant dense<0xFF800000> : vector<2xf32>
    %692 = vector.multi_reduction <maximumf>, %688, %cst_282 [1] : vector<2x3xf32> to vector<2xf32>
    %693 = vector.shape_cast %692 : vector<2xf32> to vector<2x1xf32>
    %694 = arith.maximumf %693, %691 : vector<2x1xf32>
    %695 = vector.broadcast %694 : vector<2x1xf32> to vector<2x3xf32>
    %696 = arith.subf %688, %695 : vector<2x3xf32>
    %697 = math.exp %696 : vector<2x3xf32>
    %698 = arith.subf %691, %694 : vector<2x1xf32>
    %699 = math.exp %698 : vector<2x1xf32>
    %cst_283 = arith.constant dense<0.000000e+00> : vector<2xf32>
    %700 = vector.multi_reduction <add>, %697, %cst_283 [1] : vector<2x3xf32> to vector<2xf32>
    %701 = vector.shape_cast %700 : vector<2xf32> to vector<2x1xf32>
    %702 = arith.addf %699, %701 : vector<2x1xf32>
    %703 = tpu.reciprocal %702 {approx = true} : vector<2x1xf32> -> vector<2x1xf32>
    %704 = vector.broadcast %703 : vector<2x1xf32> to vector<2x3xf32>
    %705 = arith.mulf %697, %704 : vector<2x3xf32>
    %cst_284 = arith.constant dense<0.000000e+00> : vector<2x8xf32>
    %706 = tpu.matmul %705, %679, %cst_284 {dimension_numbers = #tpu.dot_dimension_numbers<[1], [0], [0], [1], [0, 0, 1, 1], [], []>} : vector<2x3xf32>, vector<3x8xf32>, vector<2x8xf32> -> vector<2x8xf32>
    %707 = arith.mulf %699, %703 : vector<2x1xf32>
    %708 = vector.broadcast %707 : vector<2x1xf32> to vector<2x8xf32>
    %709 = vector.broadcast %681 : vector<1x8xf32> to vector<2x8xf32>
    %710 = arith.mulf %708, %709 : vector<2x8xf32>
    %711 = arith.addf %706, %710 : vector<2x8xf32>
    %712 = vector.extract_strided_slice %675 {offsets = [0, 0], sizes = [8, 32], strides = [1, 1]} : vector<32x32xf32> to vector<8x32xf32>
    %cst_285 = arith.constant dense<0.000000e+00> : vector<2x32xf32>
    %713 = tpu.matmul %711, %712, %cst_285 {dimension_numbers = #tpu.dot_dimension_numbers<[1], [0], [0], [1], [0, 0, 1, 1], [], []>} : vector<2x8xf32>, vector<8x32xf32>, vector<2x32xf32> -> vector<2x32xf32>
    %714 = arith.addf %676, %713 : vector<2x32xf32>
    %715 = vector.extract_strided_slice %665 {offsets = [0, 8], sizes = [2, 8], strides = [1, 1]} : vector<2x32xf32> to vector<2x8xf32>
    %716 = vector.extract_strided_slice %457 {offsets = [0, 8], sizes = [3, 8], strides = [1, 1]} : vector<3x32xf32> to vector<3x8xf32>
    %717 = vector.extract_strided_slice %669 {offsets = [0, 8], sizes = [3, 8], strides = [1, 1]} : vector<3x32xf32> to vector<3x8xf32>
    %718 = vector.extract_strided_slice %2 {offsets = [1, 8], sizes = [1, 8], strides = [1, 1]} : vector<2x32xf32> to vector<1x8xf32>
    %719 = vector.extract_strided_slice %3 {offsets = [1, 8], sizes = [1, 8], strides = [1, 1]} : vector<2x32xf32> to vector<1x8xf32>
    %cst_286 = arith.constant dense<0.000000e+00> : vector<2x3xf32>
    %720 = tpu.matmul %715, %716, %cst_286 {dimension_numbers = #tpu.dot_dimension_numbers<[1], [1], [0], [0], [0, 0, 1, 0], [], []>} : vector<2x8xf32>, vector<3x8xf32>, vector<2x3xf32> -> vector<2x3xf32>
    %cst_287 = arith.constant 0.353553385 : f32
    %721 = vector.broadcast %cst_287 : f32 to vector<2x3xf32>
    %722 = arith.mulf %720, %721 : vector<2x3xf32>
    %cst_288 = arith.constant -1.000000e+30 : f32
    %723 = vector.shape_cast %673 : vector<1x3xi1> to vector<1x3xi1>
    %724 = vector.broadcast %723 : vector<1x3xi1> to vector<2x3xi1>
    %725 = vector.broadcast %cst_288 : f32 to vector<2x3xf32>
    %726 = arith.select %724, %722, %725 : vector<2x3xi1>, vector<2x3xf32>
    %cst_289 = arith.constant dense<0.000000e+00> : vector<2x1xf32>
    %727 = tpu.matmul %715, %718, %cst_289 {dimension_numbers = #tpu.dot_dimension_numbers<[1], [1], [0], [0], [0, 0, 1, 0], [], []>} : vector<2x8xf32>, vector<1x8xf32>, vector<2x1xf32> -> vector<2x1xf32>
    %cst_290 = arith.constant 0.353553385 : f32
    %728 = vector.broadcast %cst_290 : f32 to vector<2x1xf32>
    %729 = arith.mulf %727, %728 : vector<2x1xf32>
    %cst_291 = arith.constant dense<0xFF800000> : vector<2xf32>
    %730 = vector.multi_reduction <maximumf>, %726, %cst_291 [1] : vector<2x3xf32> to vector<2xf32>
    %731 = vector.shape_cast %730 : vector<2xf32> to vector<2x1xf32>
    %732 = arith.maximumf %731, %729 : vector<2x1xf32>
    %733 = vector.broadcast %732 : vector<2x1xf32> to vector<2x3xf32>
    %734 = arith.subf %726, %733 : vector<2x3xf32>
    %735 = math.exp %734 : vector<2x3xf32>
    %736 = arith.subf %729, %732 : vector<2x1xf32>
    %737 = math.exp %736 : vector<2x1xf32>
    %cst_292 = arith.constant dense<0.000000e+00> : vector<2xf32>
    %738 = vector.multi_reduction <add>, %735, %cst_292 [1] : vector<2x3xf32> to vector<2xf32>
    %739 = vector.shape_cast %738 : vector<2xf32> to vector<2x1xf32>
    %740 = arith.addf %737, %739 : vector<2x1xf32>
    %741 = tpu.reciprocal %740 {approx = true} : vector<2x1xf32> -> vector<2x1xf32>
    %742 = vector.broadcast %741 : vector<2x1xf32> to vector<2x3xf32>
    %743 = arith.mulf %735, %742 : vector<2x3xf32>
    %cst_293 = arith.constant dense<0.000000e+00> : vector<2x8xf32>
    %744 = tpu.matmul %743, %717, %cst_293 {dimension_numbers = #tpu.dot_dimension_numbers<[1], [0], [0], [1], [0, 0, 1, 1], [], []>} : vector<2x3xf32>, vector<3x8xf32>, vector<2x8xf32> -> vector<2x8xf32>
    %745 = arith.mulf %737, %741 : vector<2x1xf32>
    %746 = vector.broadcast %745 : vector<2x1xf32> to vector<2x8xf32>
    %747 = vector.broadcast %719 : vector<1x8xf32> to vector<2x8xf32>
    %748 = arith.mulf %746, %747 : vector<2x8xf32>
    %749 = arith.addf %744, %748 : vector<2x8xf32>
    %750 = vector.extract_strided_slice %675 {offsets = [8, 0], sizes = [8, 32], strides = [1, 1]} : vector<32x32xf32> to vector<8x32xf32>
    %cst_294 = arith.constant dense<0.000000e+00> : vector<2x32xf32>
    %751 = tpu.matmul %749, %750, %cst_294 {dimension_numbers = #tpu.dot_dimension_numbers<[1], [0], [0], [1], [0, 0, 1, 1], [], []>} : vector<2x8xf32>, vector<8x32xf32>, vector<2x32xf32> -> vector<2x32xf32>
    %752 = arith.addf %714, %751 : vector<2x32xf32>
    %753 = vector.extract_strided_slice %665 {offsets = [0, 16], sizes = [2, 8], strides = [1, 1]} : vector<2x32xf32> to vector<2x8xf32>
    %754 = vector.extract_strided_slice %457 {offsets = [0, 16], sizes = [3, 8], strides = [1, 1]} : vector<3x32xf32> to vector<3x8xf32>
    %755 = vector.extract_strided_slice %669 {offsets = [0, 16], sizes = [3, 8], strides = [1, 1]} : vector<3x32xf32> to vector<3x8xf32>
    %756 = vector.extract_strided_slice %2 {offsets = [1, 16], sizes = [1, 8], strides = [1, 1]} : vector<2x32xf32> to vector<1x8xf32>
    %757 = vector.extract_strided_slice %3 {offsets = [1, 16], sizes = [1, 8], strides = [1, 1]} : vector<2x32xf32> to vector<1x8xf32>
    %cst_295 = arith.constant dense<0.000000e+00> : vector<2x3xf32>
    %758 = tpu.matmul %753, %754, %cst_295 {dimension_numbers = #tpu.dot_dimension_numbers<[1], [1], [0], [0], [0, 0, 1, 0], [], []>} : vector<2x8xf32>, vector<3x8xf32>, vector<2x3xf32> -> vector<2x3xf32>
    %cst_296 = arith.constant 0.353553385 : f32
    %759 = vector.broadcast %cst_296 : f32 to vector<2x3xf32>
    %760 = arith.mulf %758, %759 : vector<2x3xf32>
    %cst_297 = arith.constant -1.000000e+30 : f32
    %761 = vector.shape_cast %673 : vector<1x3xi1> to vector<1x3xi1>
    %762 = vector.broadcast %761 : vector<1x3xi1> to vector<2x3xi1>
    %763 = vector.broadcast %cst_297 : f32 to vector<2x3xf32>
    %764 = arith.select %762, %760, %763 : vector<2x3xi1>, vector<2x3xf32>
    %cst_298 = arith.constant dense<0.000000e+00> : vector<2x1xf32>
    %765 = tpu.matmul %753, %756, %cst_298 {dimension_numbers = #tpu.dot_dimension_numbers<[1], [1], [0], [0], [0, 0, 1, 0], [], []>} : vector<2x8xf32>, vector<1x8xf32>, vector<2x1xf32> -> vector<2x1xf32>
    %cst_299 = arith.constant 0.353553385 : f32
    %766 = vector.broadcast %cst_299 : f32 to vector<2x1xf32>
    %767 = arith.mulf %765, %766 : vector<2x1xf32>
    %cst_300 = arith.constant dense<0xFF800000> : vector<2xf32>
    %768 = vector.multi_reduction <maximumf>, %764, %cst_300 [1] : vector<2x3xf32> to vector<2xf32>
    %769 = vector.shape_cast %768 : vector<2xf32> to vector<2x1xf32>
    %770 = arith.maximumf %769, %767 : vector<2x1xf32>
    %771 = vector.broadcast %770 : vector<2x1xf32> to vector<2x3xf32>
    %772 = arith.subf %764, %771 : vector<2x3xf32>
    %773 = math.exp %772 : vector<2x3xf32>
    %774 = arith.subf %767, %770 : vector<2x1xf32>
    %775 = math.exp %774 : vector<2x1xf32>
    %cst_301 = arith.constant dense<0.000000e+00> : vector<2xf32>
    %776 = vector.multi_reduction <add>, %773, %cst_301 [1] : vector<2x3xf32> to vector<2xf32>
    %777 = vector.shape_cast %776 : vector<2xf32> to vector<2x1xf32>
    %778 = arith.addf %775, %777 : vector<2x1xf32>
    %779 = tpu.reciprocal %778 {approx = true} : vector<2x1xf32> -> vector<2x1xf32>
    %780 = vector.broadcast %779 : vector<2x1xf32> to vector<2x3xf32>
    %781 = arith.mulf %773, %780 : vector<2x3xf32>
    %cst_302 = arith.constant dense<0.000000e+00> : vector<2x8xf32>
    %782 = tpu.matmul %781, %755, %cst_302 {dimension_numbers = #tpu.dot_dimension_numbers<[1], [0], [0], [1], [0, 0, 1, 1], [], []>} : vector<2x3xf32>, vector<3x8xf32>, vector<2x8xf32> -> vector<2x8xf32>
    %783 = arith.mulf %775, %779 : vector<2x1xf32>
    %784 = vector.broadcast %783 : vector<2x1xf32> to vector<2x8xf32>
    %785 = vector.broadcast %757 : vector<1x8xf32> to vector<2x8xf32>
    %786 = arith.mulf %784, %785 : vector<2x8xf32>
    %787 = arith.addf %782, %786 : vector<2x8xf32>
    %788 = vector.extract_strided_slice %675 {offsets = [16, 0], sizes = [8, 32], strides = [1, 1]} : vector<32x32xf32> to vector<8x32xf32>
    %cst_303 = arith.constant dense<0.000000e+00> : vector<2x32xf32>
    %789 = tpu.matmul %787, %788, %cst_303 {dimension_numbers = #tpu.dot_dimension_numbers<[1], [0], [0], [1], [0, 0, 1, 1], [], []>} : vector<2x8xf32>, vector<8x32xf32>, vector<2x32xf32> -> vector<2x32xf32>
    %790 = arith.addf %752, %789 : vector<2x32xf32>
    %791 = vector.extract_strided_slice %665 {offsets = [0, 24], sizes = [2, 8], strides = [1, 1]} : vector<2x32xf32> to vector<2x8xf32>
    %792 = vector.extract_strided_slice %457 {offsets = [0, 24], sizes = [3, 8], strides = [1, 1]} : vector<3x32xf32> to vector<3x8xf32>
    %793 = vector.extract_strided_slice %669 {offsets = [0, 24], sizes = [3, 8], strides = [1, 1]} : vector<3x32xf32> to vector<3x8xf32>
    %794 = vector.extract_strided_slice %2 {offsets = [1, 24], sizes = [1, 8], strides = [1, 1]} : vector<2x32xf32> to vector<1x8xf32>
    %795 = vector.extract_strided_slice %3 {offsets = [1, 24], sizes = [1, 8], strides = [1, 1]} : vector<2x32xf32> to vector<1x8xf32>
    %cst_304 = arith.constant dense<0.000000e+00> : vector<2x3xf32>
    %796 = tpu.matmul %791, %792, %cst_304 {dimension_numbers = #tpu.dot_dimension_numbers<[1], [1], [0], [0], [0, 0, 1, 0], [], []>} : vector<2x8xf32>, vector<3x8xf32>, vector<2x3xf32> -> vector<2x3xf32>
    %cst_305 = arith.constant 0.353553385 : f32
    %797 = vector.broadcast %cst_305 : f32 to vector<2x3xf32>
    %798 = arith.mulf %796, %797 : vector<2x3xf32>
    %cst_306 = arith.constant -1.000000e+30 : f32
    %799 = vector.shape_cast %673 : vector<1x3xi1> to vector<1x3xi1>
    %800 = vector.broadcast %799 : vector<1x3xi1> to vector<2x3xi1>
    %801 = vector.broadcast %cst_306 : f32 to vector<2x3xf32>
    %802 = arith.select %800, %798, %801 : vector<2x3xi1>, vector<2x3xf32>
    %cst_307 = arith.constant dense<0.000000e+00> : vector<2x1xf32>
    %803 = tpu.matmul %791, %794, %cst_307 {dimension_numbers = #tpu.dot_dimension_numbers<[1], [1], [0], [0], [0, 0, 1, 0], [], []>} : vector<2x8xf32>, vector<1x8xf32>, vector<2x1xf32> -> vector<2x1xf32>
    %cst_308 = arith.constant 0.353553385 : f32
    %804 = vector.broadcast %cst_308 : f32 to vector<2x1xf32>
    %805 = arith.mulf %803, %804 : vector<2x1xf32>
    %cst_309 = arith.constant dense<0xFF800000> : vector<2xf32>
    %806 = vector.multi_reduction <maximumf>, %802, %cst_309 [1] : vector<2x3xf32> to vector<2xf32>
    %807 = vector.shape_cast %806 : vector<2xf32> to vector<2x1xf32>
    %808 = arith.maximumf %807, %805 : vector<2x1xf32>
    %809 = vector.broadcast %808 : vector<2x1xf32> to vector<2x3xf32>
    %810 = arith.subf %802, %809 : vector<2x3xf32>
    %811 = math.exp %810 : vector<2x3xf32>
    %812 = arith.subf %805, %808 : vector<2x1xf32>
    %813 = math.exp %812 : vector<2x1xf32>
    %cst_310 = arith.constant dense<0.000000e+00> : vector<2xf32>
    %814 = vector.multi_reduction <add>, %811, %cst_310 [1] : vector<2x3xf32> to vector<2xf32>
    %815 = vector.shape_cast %814 : vector<2xf32> to vector<2x1xf32>
    %816 = arith.addf %813, %815 : vector<2x1xf32>
    %817 = tpu.reciprocal %816 {approx = true} : vector<2x1xf32> -> vector<2x1xf32>
    %818 = vector.broadcast %817 : vector<2x1xf32> to vector<2x3xf32>
    %819 = arith.mulf %811, %818 : vector<2x3xf32>
    %cst_311 = arith.constant dense<0.000000e+00> : vector<2x8xf32>
    %820 = tpu.matmul %819, %793, %cst_311 {dimension_numbers = #tpu.dot_dimension_numbers<[1], [0], [0], [1], [0, 0, 1, 1], [], []>} : vector<2x3xf32>, vector<3x8xf32>, vector<2x8xf32> -> vector<2x8xf32>
    %821 = arith.mulf %813, %817 : vector<2x1xf32>
    %822 = vector.broadcast %821 : vector<2x1xf32> to vector<2x8xf32>
    %823 = vector.broadcast %795 : vector<1x8xf32> to vector<2x8xf32>
    %824 = arith.mulf %822, %823 : vector<2x8xf32>
    %825 = arith.addf %820, %824 : vector<2x8xf32>
    %826 = vector.extract_strided_slice %675 {offsets = [24, 0], sizes = [8, 32], strides = [1, 1]} : vector<32x32xf32> to vector<8x32xf32>
    %cst_312 = arith.constant dense<0.000000e+00> : vector<2x32xf32>
    %827 = tpu.matmul %825, %826, %cst_312 {dimension_numbers = #tpu.dot_dimension_numbers<[1], [0], [0], [1], [0, 0, 1, 1], [], []>} : vector<2x8xf32>, vector<8x32xf32>, vector<2x32xf32> -> vector<2x32xf32>
    %828 = arith.addf %790, %827 : vector<2x32xf32>
    %c1_313 = arith.constant 1 : index
    %c1_314 = arith.constant 1 : index
    %c0_315 = arith.constant 0 : index
    %c0_316 = arith.constant 0 : index
    %829 = vector.load %arg5[%c1_313, %c1_314, %c0_315, %c0_316] : memref<2x2x2x1xf32, #tpu.memory_space<vmem>>, vector<1x1x2x1xf32>
    %830 = vector.shape_cast %829 : vector<1x1x2x1xf32> to vector<2x1xf32>
    %831 = vector.broadcast %830 : vector<2x1xf32> to vector<2x32xf32>
    %832 = arith.mulf %828, %831 : vector<2x32xf32>
    %c1_317 = arith.constant 1 : index
    %c1_318 = arith.constant 1 : index
    %c0_319 = arith.constant 0 : index
    %c0_320 = arith.constant 0 : index
    %833 = vector.load %arg13[%c1_317, %c1_318, %c0_319, %c0_320] : memref<2x2x2x32xf32, #tpu.memory_space<vmem>>, vector<1x1x2x32xf32>
    %834 = vector.shape_cast %833 : vector<1x1x2x32xf32> to vector<2x32xf32>
    %835 = vector.shape_cast %832 : vector<2x32xf32> to vector<1x1x2x32xf32>
    tpu.vector_store %arg13[%c1_317, %c1_318, %c0_319, %c0_320], %835 {strides = array<i32>} : memref<2x2x2x32xf32, #tpu.memory_space<vmem>>, vector<1x1x2x32xf32>,
    return
  }
  func.func @transform_0(%arg0: i32) -> (i32, i32, i32, i32) {
    %c0_i32 = arith.constant 0 : i32
    %c0_i32_0 = arith.constant 0 : i32
    %c0_i32_1 = arith.constant 0 : i32
    %c0_i32_2 = arith.constant 0 : i32
    return %arg0, %c0_i32, %c0_i32_0, %c0_i32_1 : i32, i32, i32, i32
  }
  func.func @transform_1(%arg0: i32) -> (i32, i32, i32, i32) {
    %c0_i32 = arith.constant 0 : i32
    %c0_i32_0 = arith.constant 0 : i32
    %c0_i32_1 = arith.constant 0 : i32
    %c0_i32_2 = arith.constant 0 : i32
    return %arg0, %c0_i32, %c0_i32_0, %c0_i32_1 : i32, i32, i32, i32
  }
  func.func @transform_2(%arg0: i32) -> (i32, i32, i32, i32) {
    %c0_i32 = arith.constant 0 : i32
    %c0_i32_0 = arith.constant 0 : i32
    %c0_i32_1 = arith.constant 0 : i32
    %c0_i32_2 = arith.constant 0 : i32
    return %arg0, %c0_i32, %c0_i32_0, %c0_i32_1 : i32, i32, i32, i32
  }
  func.func @transform_3(%arg0: i32) -> (i32, i32, i32, i32) {
    %c0_i32 = arith.constant 0 : i32
    %c0_i32_0 = arith.constant 0 : i32
    %c0_i32_1 = arith.constant 0 : i32
    %c0_i32_2 = arith.constant 0 : i32
    return %arg0, %c0_i32, %c0_i32_0, %c0_i32_1 : i32, i32, i32, i32
  }
  func.func @transform_4(%arg0: i32) -> (i32, i32, i32, i32) {
    %c0_i32 = arith.constant 0 : i32
    %c0_i32_0 = arith.constant 0 : i32
    %c0_i32_1 = arith.constant 0 : i32
    %c0_i32_2 = arith.constant 0 : i32
    return %arg0, %c0_i32, %c0_i32_0, %c0_i32_1 : i32, i32, i32, i32
  }
  func.func @transform_5(%arg0: i32) -> (i32, i32) {
    %c0_i32 = arith.constant 0 : i32
    %c0_i32_0 = arith.constant 0 : i32
    %c0_i32_1 = arith.constant 0 : i32
    return %c0_i32, %c0_i32_0 : i32, i32
  }
  func.func @transform_6(%arg0: i32) -> (i32, i32) {
    %c0_i32 = arith.constant 0 : i32
    %c0_i32_0 = arith.constant 0 : i32
    %c0_i32_1 = arith.constant 0 : i32
    return %c0_i32, %c0_i32_0 : i32, i32
  }
  func.func @transform_7(%arg0: i32) -> (i32, i32, i32) {
    %c0_i32 = arith.constant 0 : i32
    %c0_i32_0 = arith.constant 0 : i32
    %c0_i32_1 = arith.constant 0 : i32
    %c0_i32_2 = arith.constant 0 : i32
    return %c0_i32, %c0_i32_0, %c0_i32_1 : i32, i32, i32
  }
  func.func @transform_8(%arg0: i32) -> (i32, i32, i32) {
    %c0_i32 = arith.constant 0 : i32
    %c0_i32_0 = arith.constant 0 : i32
    %c0_i32_1 = arith.constant 0 : i32
    %c0_i32_2 = arith.constant 0 : i32
    return %c0_i32, %c0_i32_0, %c0_i32_1 : i32, i32, i32
  }
  func.func @transform_9(%arg0: i32) -> (i32, i32, i32) {
    %c0_i32 = arith.constant 0 : i32
    %c0_i32_0 = arith.constant 0 : i32
    %c0_i32_1 = arith.constant 0 : i32
    %c0_i32_2 = arith.constant 0 : i32
    return %c0_i32, %c0_i32_0, %c0_i32_1 : i32, i32, i32
  }
  func.func @transform_10(%arg0: i32) -> (i32, i32) {
    %c0_i32 = arith.constant 0 : i32
    %c0_i32_0 = arith.constant 0 : i32
    %c0_i32_1 = arith.constant 0 : i32
    return %c0_i32, %c0_i32_0 : i32, i32
  }
  func.func @transform_11(%arg0: i32) -> (i32, i32) {
    %c0_i32 = arith.constant 0 : i32
    %c0_i32_0 = arith.constant 0 : i32
    %c0_i32_1 = arith.constant 0 : i32
    return %c0_i32, %c0_i32_0 : i32, i32
  }
  func.func @transform_12(%arg0: i32) -> (i32, i32, i32, i32) {
    %c0_i32 = arith.constant 0 : i32
    %c0_i32_0 = arith.constant 0 : i32
    %c0_i32_1 = arith.constant 0 : i32
    %c0_i32_2 = arith.constant 0 : i32
    return %arg0, %c0_i32, %c0_i32_0, %c0_i32_1 : i32, i32, i32, i32
  }
}

module attributes {stable_mosaic.version = 11 : i64} {
  func.func @_local_mha_kernel(%arg0: i32, %arg1: memref<1x12x32xf32, #tpu.memory_space<vmem>>, %arg2: memref<1x32xf32, #tpu.memory_space<vmem>>, %arg3: memref<1x32xf32, #tpu.memory_space<vmem>>, %arg4: memref<32x96xf32, #tpu.memory_space<vmem>>, %arg5: memref<32x32xf32, #tpu.memory_space<vmem>>, %arg6: memref<1x12x32xf32, #tpu.memory_space<vmem>>) attributes {dimension_semantics = [#tpu.dimension_semantics<parallel>], iteration_bounds = array<i64: 2>, scalar_prefetch = 0 : i64, scratch_operands = 0 : i64, tpu.core_type = #tpu.core_type<tc>, window_params = [{transform_indices = @transform_0, window_bounds = array<i64: 1, 12, 32>}, {pipeline_mode = #tpu.pipeline_mode<synchronous>, transform_indices = @transform_1, window_bounds = array<i64: 1, 32>}, {pipeline_mode = #tpu.pipeline_mode<synchronous>, transform_indices = @transform_2, window_bounds = array<i64: 1, 32>}, {pipeline_mode = #tpu.pipeline_mode<synchronous>, transform_indices = @transform_3, window_bounds = array<i64: 32, 96>}, {pipeline_mode = #tpu.pipeline_mode<synchronous>, transform_indices = @transform_4, window_bounds = array<i64: 32, 32>}, {transform_indices = @transform_5, window_bounds = array<i64: 1, 12, 32>}]} {
    %c0 = arith.constant 0 : index
    %c0_0 = arith.constant 0 : index
    %c0_1 = arith.constant 0 : index
    %0 = vector.load %arg1[%c0, %c0_0, %c0_1] : memref<1x12x32xf32, #tpu.memory_space<vmem>>, vector<1x12x32xf32>
    %1 = vector.shape_cast %0 : vector<1x12x32xf32> to vector<12x32xf32>
    %cst = arith.constant dense<0.000000e+00> : vector<12xf32>
    %2 = vector.multi_reduction <add>, %1, %cst [1] : vector<12x32xf32> to vector<12xf32>
    %3 = vector.shape_cast %2 : vector<12xf32> to vector<12x1xf32>
    %cst_2 = arith.constant 3.200000e+01 : f32
    %4 = vector.broadcast %cst_2 : f32 to vector<12x1xf32>
    %5 = arith.divf %3, %4 : vector<12x1xf32>
    %6 = vector.broadcast %5 : vector<12x1xf32> to vector<12x32xf32>
    %7 = arith.subf %1, %6 : vector<12x32xf32>
    %8 = arith.mulf %7, %7 : vector<12x32xf32>
    %cst_3 = arith.constant dense<0.000000e+00> : vector<12xf32>
    %9 = vector.multi_reduction <add>, %8, %cst_3 [1] : vector<12x32xf32> to vector<12xf32>
    %10 = vector.shape_cast %9 : vector<12xf32> to vector<12x1xf32>
    %cst_4 = arith.constant 3.200000e+01 : f32
    %11 = vector.broadcast %cst_4 : f32 to vector<12x1xf32>
    %12 = arith.divf %10, %11 : vector<12x1xf32>
    %cst_5 = arith.constant 9.99999974E-6 : f32
    %13 = vector.broadcast %cst_5 : f32 to vector<12x1xf32>
    %14 = arith.addf %12, %13 : vector<12x1xf32>
    %15 = math.rsqrt %14 : vector<12x1xf32>
    %16 = vector.broadcast %15 : vector<12x1xf32> to vector<12x32xf32>
    %17 = arith.mulf %7, %16 : vector<12x32xf32>
    %c0_6 = arith.constant 0 : index
    %c0_7 = arith.constant 0 : index
    %18 = vector.load %arg2[%c0_6, %c0_7] : memref<1x32xf32, #tpu.memory_space<vmem>>, vector<1x32xf32>
    %19 = vector.broadcast %18 : vector<1x32xf32> to vector<12x32xf32>
    %20 = arith.mulf %17, %19 : vector<12x32xf32>
    %c0_8 = arith.constant 0 : index
    %c0_9 = arith.constant 0 : index
    %21 = vector.load %arg3[%c0_8, %c0_9] : memref<1x32xf32, #tpu.memory_space<vmem>>, vector<1x32xf32>
    %22 = vector.broadcast %21 : vector<1x32xf32> to vector<12x32xf32>
    %23 = arith.addf %20, %22 : vector<12x32xf32>
    %c0_10 = arith.constant 0 : index
    %c0_11 = arith.constant 0 : index
    %24 = vector.load %arg4[%c0_10, %c0_11] : memref<32x96xf32, #tpu.memory_space<vmem>>, vector<32x96xf32>
    %cst_12 = arith.constant dense<0.000000e+00> : vector<12x96xf32>
    %25 = tpu.matmul %23, %24, %cst_12 {dimension_numbers = #tpu.dot_dimension_numbers<[1], [0], [0], [1], [0, 0, 1, 1], [], []>} : vector<12x32xf32>, vector<32x96xf32>, vector<12x96xf32> -> vector<12x96xf32>
    %c0_13 = arith.constant 0 : index
    %c0_14 = arith.constant 0 : index
    %26 = vector.load %arg5[%c0_13, %c0_14] : memref<32x32xf32, #tpu.memory_space<vmem>>, vector<32x32xf32>
    %27 = tpu.iota {dimensions = array<i32: 0>} : vector<12x12xi32>
    %28 = tpu.iota {dimensions = array<i32: 1>} : vector<12x12xi32>
    %29 = arith.cmpi sle, %28, %27 : vector<12x12xi32>
    %30 = arith.subi %27, %28 : vector<12x12xi32>
    %c4_i32 = arith.constant 4 : i32
    %31 = vector.broadcast %c4_i32 : i32 to vector<12x12xi32>
    %32 = arith.cmpi sle, %30, %31 : vector<12x12xi32>
    %33 = arith.andi %29, %32 : vector<12x12xi1>
    %cst_15 = arith.constant 0.000000e+00 : f32
    %34 = vector.broadcast %cst_15 : f32 to vector<12x32xf32>
    %35 = vector.extract_strided_slice %25 {offsets = [0, 0], sizes = [12, 8], strides = [1, 1]} : vector<12x96xf32> to vector<12x8xf32>
    %36 = vector.extract_strided_slice %25 {offsets = [0, 32], sizes = [12, 8], strides = [1, 1]} : vector<12x96xf32> to vector<12x8xf32>
    %37 = vector.extract_strided_slice %25 {offsets = [0, 64], sizes = [12, 8], strides = [1, 1]} : vector<12x96xf32> to vector<12x8xf32>
    %cst_16 = arith.constant dense<0.000000e+00> : vector<12x12xf32>
    %38 = tpu.matmul %35, %36, %cst_16 {dimension_numbers = #tpu.dot_dimension_numbers<[1], [1], [0], [0], [0, 0, 1, 0], [], []>} : vector<12x8xf32>, vector<12x8xf32>, vector<12x12xf32> -> vector<12x12xf32>
    %cst_17 = arith.constant 0.353553385 : f32
    %39 = vector.broadcast %cst_17 : f32 to vector<12x12xf32>
    %40 = arith.mulf %38, %39 : vector<12x12xf32>
    %cst_18 = arith.constant -1.000000e+30 : f32
    %41 = vector.broadcast %cst_18 : f32 to vector<12x12xf32>
    %42 = arith.select %33, %40, %41 : vector<12x12xi1>, vector<12x12xf32>
    %cst_19 = arith.constant dense<0xFF800000> : vector<12xf32>
    %43 = vector.multi_reduction <maximumf>, %42, %cst_19 [1] : vector<12x12xf32> to vector<12xf32>
    %44 = vector.shape_cast %43 : vector<12xf32> to vector<12x1xf32>
    %45 = vector.broadcast %44 : vector<12x1xf32> to vector<12x12xf32>
    %46 = arith.subf %42, %45 : vector<12x12xf32>
    %47 = math.exp %46 : vector<12x12xf32>
    %cst_20 = arith.constant dense<0.000000e+00> : vector<12xf32>
    %48 = vector.multi_reduction <add>, %47, %cst_20 [1] : vector<12x12xf32> to vector<12xf32>
    %49 = vector.shape_cast %48 : vector<12xf32> to vector<12x1xf32>
    %50 = tpu.reciprocal %49 {approx = true} : vector<12x1xf32> -> vector<12x1xf32>
    %51 = vector.broadcast %50 : vector<12x1xf32> to vector<12x12xf32>
    %52 = arith.mulf %47, %51 : vector<12x12xf32>
    %cst_21 = arith.constant dense<0.000000e+00> : vector<12x8xf32>
    %53 = tpu.matmul %52, %37, %cst_21 {dimension_numbers = #tpu.dot_dimension_numbers<[1], [0], [0], [1], [0, 0, 1, 1], [], []>} : vector<12x12xf32>, vector<12x8xf32>, vector<12x8xf32> -> vector<12x8xf32>
    %54 = vector.extract_strided_slice %26 {offsets = [0, 0], sizes = [8, 32], strides = [1, 1]} : vector<32x32xf32> to vector<8x32xf32>
    %cst_22 = arith.constant dense<0.000000e+00> : vector<12x32xf32>
    %55 = tpu.matmul %53, %54, %cst_22 {dimension_numbers = #tpu.dot_dimension_numbers<[1], [0], [0], [1], [0, 0, 1, 1], [], []>} : vector<12x8xf32>, vector<8x32xf32>, vector<12x32xf32> -> vector<12x32xf32>
    %56 = arith.addf %34, %55 : vector<12x32xf32>
    %57 = vector.extract_strided_slice %25 {offsets = [0, 8], sizes = [12, 8], strides = [1, 1]} : vector<12x96xf32> to vector<12x8xf32>
    %58 = vector.extract_strided_slice %25 {offsets = [0, 40], sizes = [12, 8], strides = [1, 1]} : vector<12x96xf32> to vector<12x8xf32>
    %59 = vector.extract_strided_slice %25 {offsets = [0, 72], sizes = [12, 8], strides = [1, 1]} : vector<12x96xf32> to vector<12x8xf32>
    %cst_23 = arith.constant dense<0.000000e+00> : vector<12x12xf32>
    %60 = tpu.matmul %57, %58, %cst_23 {dimension_numbers = #tpu.dot_dimension_numbers<[1], [1], [0], [0], [0, 0, 1, 0], [], []>} : vector<12x8xf32>, vector<12x8xf32>, vector<12x12xf32> -> vector<12x12xf32>
    %cst_24 = arith.constant 0.353553385 : f32
    %61 = vector.broadcast %cst_24 : f32 to vector<12x12xf32>
    %62 = arith.mulf %60, %61 : vector<12x12xf32>
    %cst_25 = arith.constant -1.000000e+30 : f32
    %63 = vector.broadcast %cst_25 : f32 to vector<12x12xf32>
    %64 = arith.select %33, %62, %63 : vector<12x12xi1>, vector<12x12xf32>
    %cst_26 = arith.constant dense<0xFF800000> : vector<12xf32>
    %65 = vector.multi_reduction <maximumf>, %64, %cst_26 [1] : vector<12x12xf32> to vector<12xf32>
    %66 = vector.shape_cast %65 : vector<12xf32> to vector<12x1xf32>
    %67 = vector.broadcast %66 : vector<12x1xf32> to vector<12x12xf32>
    %68 = arith.subf %64, %67 : vector<12x12xf32>
    %69 = math.exp %68 : vector<12x12xf32>
    %cst_27 = arith.constant dense<0.000000e+00> : vector<12xf32>
    %70 = vector.multi_reduction <add>, %69, %cst_27 [1] : vector<12x12xf32> to vector<12xf32>
    %71 = vector.shape_cast %70 : vector<12xf32> to vector<12x1xf32>
    %72 = tpu.reciprocal %71 {approx = true} : vector<12x1xf32> -> vector<12x1xf32>
    %73 = vector.broadcast %72 : vector<12x1xf32> to vector<12x12xf32>
    %74 = arith.mulf %69, %73 : vector<12x12xf32>
    %cst_28 = arith.constant dense<0.000000e+00> : vector<12x8xf32>
    %75 = tpu.matmul %74, %59, %cst_28 {dimension_numbers = #tpu.dot_dimension_numbers<[1], [0], [0], [1], [0, 0, 1, 1], [], []>} : vector<12x12xf32>, vector<12x8xf32>, vector<12x8xf32> -> vector<12x8xf32>
    %76 = vector.extract_strided_slice %26 {offsets = [8, 0], sizes = [8, 32], strides = [1, 1]} : vector<32x32xf32> to vector<8x32xf32>
    %cst_29 = arith.constant dense<0.000000e+00> : vector<12x32xf32>
    %77 = tpu.matmul %75, %76, %cst_29 {dimension_numbers = #tpu.dot_dimension_numbers<[1], [0], [0], [1], [0, 0, 1, 1], [], []>} : vector<12x8xf32>, vector<8x32xf32>, vector<12x32xf32> -> vector<12x32xf32>
    %78 = arith.addf %56, %77 : vector<12x32xf32>
    %79 = vector.extract_strided_slice %25 {offsets = [0, 16], sizes = [12, 8], strides = [1, 1]} : vector<12x96xf32> to vector<12x8xf32>
    %80 = vector.extract_strided_slice %25 {offsets = [0, 48], sizes = [12, 8], strides = [1, 1]} : vector<12x96xf32> to vector<12x8xf32>
    %81 = vector.extract_strided_slice %25 {offsets = [0, 80], sizes = [12, 8], strides = [1, 1]} : vector<12x96xf32> to vector<12x8xf32>
    %cst_30 = arith.constant dense<0.000000e+00> : vector<12x12xf32>
    %82 = tpu.matmul %79, %80, %cst_30 {dimension_numbers = #tpu.dot_dimension_numbers<[1], [1], [0], [0], [0, 0, 1, 0], [], []>} : vector<12x8xf32>, vector<12x8xf32>, vector<12x12xf32> -> vector<12x12xf32>
    %cst_31 = arith.constant 0.353553385 : f32
    %83 = vector.broadcast %cst_31 : f32 to vector<12x12xf32>
    %84 = arith.mulf %82, %83 : vector<12x12xf32>
    %cst_32 = arith.constant -1.000000e+30 : f32
    %85 = vector.broadcast %cst_32 : f32 to vector<12x12xf32>
    %86 = arith.select %33, %84, %85 : vector<12x12xi1>, vector<12x12xf32>
    %cst_33 = arith.constant dense<0xFF800000> : vector<12xf32>
    %87 = vector.multi_reduction <maximumf>, %86, %cst_33 [1] : vector<12x12xf32> to vector<12xf32>
    %88 = vector.shape_cast %87 : vector<12xf32> to vector<12x1xf32>
    %89 = vector.broadcast %88 : vector<12x1xf32> to vector<12x12xf32>
    %90 = arith.subf %86, %89 : vector<12x12xf32>
    %91 = math.exp %90 : vector<12x12xf32>
    %cst_34 = arith.constant dense<0.000000e+00> : vector<12xf32>
    %92 = vector.multi_reduction <add>, %91, %cst_34 [1] : vector<12x12xf32> to vector<12xf32>
    %93 = vector.shape_cast %92 : vector<12xf32> to vector<12x1xf32>
    %94 = tpu.reciprocal %93 {approx = true} : vector<12x1xf32> -> vector<12x1xf32>
    %95 = vector.broadcast %94 : vector<12x1xf32> to vector<12x12xf32>
    %96 = arith.mulf %91, %95 : vector<12x12xf32>
    %cst_35 = arith.constant dense<0.000000e+00> : vector<12x8xf32>
    %97 = tpu.matmul %96, %81, %cst_35 {dimension_numbers = #tpu.dot_dimension_numbers<[1], [0], [0], [1], [0, 0, 1, 1], [], []>} : vector<12x12xf32>, vector<12x8xf32>, vector<12x8xf32> -> vector<12x8xf32>
    %98 = vector.extract_strided_slice %26 {offsets = [16, 0], sizes = [8, 32], strides = [1, 1]} : vector<32x32xf32> to vector<8x32xf32>
    %cst_36 = arith.constant dense<0.000000e+00> : vector<12x32xf32>
    %99 = tpu.matmul %97, %98, %cst_36 {dimension_numbers = #tpu.dot_dimension_numbers<[1], [0], [0], [1], [0, 0, 1, 1], [], []>} : vector<12x8xf32>, vector<8x32xf32>, vector<12x32xf32> -> vector<12x32xf32>
    %100 = arith.addf %78, %99 : vector<12x32xf32>
    %101 = vector.extract_strided_slice %25 {offsets = [0, 24], sizes = [12, 8], strides = [1, 1]} : vector<12x96xf32> to vector<12x8xf32>
    %102 = vector.extract_strided_slice %25 {offsets = [0, 56], sizes = [12, 8], strides = [1, 1]} : vector<12x96xf32> to vector<12x8xf32>
    %103 = vector.extract_strided_slice %25 {offsets = [0, 88], sizes = [12, 8], strides = [1, 1]} : vector<12x96xf32> to vector<12x8xf32>
    %cst_37 = arith.constant dense<0.000000e+00> : vector<12x12xf32>
    %104 = tpu.matmul %101, %102, %cst_37 {dimension_numbers = #tpu.dot_dimension_numbers<[1], [1], [0], [0], [0, 0, 1, 0], [], []>} : vector<12x8xf32>, vector<12x8xf32>, vector<12x12xf32> -> vector<12x12xf32>
    %cst_38 = arith.constant 0.353553385 : f32
    %105 = vector.broadcast %cst_38 : f32 to vector<12x12xf32>
    %106 = arith.mulf %104, %105 : vector<12x12xf32>
    %cst_39 = arith.constant -1.000000e+30 : f32
    %107 = vector.broadcast %cst_39 : f32 to vector<12x12xf32>
    %108 = arith.select %33, %106, %107 : vector<12x12xi1>, vector<12x12xf32>
    %cst_40 = arith.constant dense<0xFF800000> : vector<12xf32>
    %109 = vector.multi_reduction <maximumf>, %108, %cst_40 [1] : vector<12x12xf32> to vector<12xf32>
    %110 = vector.shape_cast %109 : vector<12xf32> to vector<12x1xf32>
    %111 = vector.broadcast %110 : vector<12x1xf32> to vector<12x12xf32>
    %112 = arith.subf %108, %111 : vector<12x12xf32>
    %113 = math.exp %112 : vector<12x12xf32>
    %cst_41 = arith.constant dense<0.000000e+00> : vector<12xf32>
    %114 = vector.multi_reduction <add>, %113, %cst_41 [1] : vector<12x12xf32> to vector<12xf32>
    %115 = vector.shape_cast %114 : vector<12xf32> to vector<12x1xf32>
    %116 = tpu.reciprocal %115 {approx = true} : vector<12x1xf32> -> vector<12x1xf32>
    %117 = vector.broadcast %116 : vector<12x1xf32> to vector<12x12xf32>
    %118 = arith.mulf %113, %117 : vector<12x12xf32>
    %cst_42 = arith.constant dense<0.000000e+00> : vector<12x8xf32>
    %119 = tpu.matmul %118, %103, %cst_42 {dimension_numbers = #tpu.dot_dimension_numbers<[1], [0], [0], [1], [0, 0, 1, 1], [], []>} : vector<12x12xf32>, vector<12x8xf32>, vector<12x8xf32> -> vector<12x8xf32>
    %120 = vector.extract_strided_slice %26 {offsets = [24, 0], sizes = [8, 32], strides = [1, 1]} : vector<32x32xf32> to vector<8x32xf32>
    %cst_43 = arith.constant dense<0.000000e+00> : vector<12x32xf32>
    %121 = tpu.matmul %119, %120, %cst_43 {dimension_numbers = #tpu.dot_dimension_numbers<[1], [0], [0], [1], [0, 0, 1, 1], [], []>} : vector<12x8xf32>, vector<8x32xf32>, vector<12x32xf32> -> vector<12x32xf32>
    %122 = arith.addf %100, %121 : vector<12x32xf32>
    %c0_44 = arith.constant 0 : index
    %c0_45 = arith.constant 0 : index
    %c0_46 = arith.constant 0 : index
    %123 = vector.load %arg6[%c0_44, %c0_45, %c0_46] : memref<1x12x32xf32, #tpu.memory_space<vmem>>, vector<1x12x32xf32>
    %124 = vector.shape_cast %123 : vector<1x12x32xf32> to vector<12x32xf32>
    %125 = vector.shape_cast %122 : vector<12x32xf32> to vector<1x12x32xf32>
    tpu.vector_store %arg6[%c0_44, %c0_45, %c0_46], %125 {strides = array<i32>} : memref<1x12x32xf32, #tpu.memory_space<vmem>>, vector<1x12x32xf32>,
    return
  }
  func.func @transform_0(%arg0: i32) -> (i32, i32, i32) {
    %c0_i32 = arith.constant 0 : i32
    %c0_i32_0 = arith.constant 0 : i32
    %c0_i32_1 = arith.constant 0 : i32
    return %arg0, %c0_i32, %c0_i32_0 : i32, i32, i32
  }
  func.func @transform_1(%arg0: i32) -> (i32, i32) {
    %c0_i32 = arith.constant 0 : i32
    %c0_i32_0 = arith.constant 0 : i32
    %c0_i32_1 = arith.constant 0 : i32
    return %c0_i32, %c0_i32_0 : i32, i32
  }
  func.func @transform_2(%arg0: i32) -> (i32, i32) {
    %c0_i32 = arith.constant 0 : i32
    %c0_i32_0 = arith.constant 0 : i32
    %c0_i32_1 = arith.constant 0 : i32
    return %c0_i32, %c0_i32_0 : i32, i32
  }
  func.func @transform_3(%arg0: i32) -> (i32, i32) {
    %c0_i32 = arith.constant 0 : i32
    %c0_i32_0 = arith.constant 0 : i32
    %c0_i32_1 = arith.constant 0 : i32
    return %c0_i32, %c0_i32_0 : i32, i32
  }
  func.func @transform_4(%arg0: i32) -> (i32, i32) {
    %c0_i32 = arith.constant 0 : i32
    %c0_i32_0 = arith.constant 0 : i32
    %c0_i32_1 = arith.constant 0 : i32
    return %c0_i32, %c0_i32_0 : i32, i32
  }
  func.func @transform_5(%arg0: i32) -> (i32, i32, i32) {
    %c0_i32 = arith.constant 0 : i32
    %c0_i32_0 = arith.constant 0 : i32
    %c0_i32_1 = arith.constant 0 : i32
    return %arg0, %c0_i32, %c0_i32_0 : i32, i32, i32
  }
}

</mosaic_0001>

<llo_original>
// kernel: squeeze.3
$region0: #{squeeze.3}
  %s0 = inlined_call_operand.vmem [shape: f32[2,4,8], index: 0, kind: input, shape index: {}]
  %s1 = inlined_call_operand.vmem [shape: f32[2,32], index: 1, kind: output, shape index: {}]
  $region1: #{squeeze.3} parent=0
    #allocation0 [shape = 'u8[4096]{0}', space=vmem, size = 0x1000, scoped, tag = 'scoped mem for output reshape']
    #allocation1 [shape = 'u8[8192]{0}', space=vmem, size = 0x2000, scoped, tag = 'scoped mem for input reshape']
    %s3 = sshll.u32 1, 4
    %s4 = ssub.s32 %s3, 1
    %s5 = scalar_lea.vmem %s0, 4
    %v6 = vld [vmem:[%s5] sm:%s4]
    %s7 = scalar_lea.vmem [#allocation1], 8
    %8 = vst [vmem:[%s7] sm:%s4] %v6
    %v9 = vld [vmem:[%s0] sm:%s4]
    %10 = vst [vmem:[#allocation1] sm:%s4] %v9
    %s11 = smov 3
    %v12 = vld [vmem:[#allocation1] ss:$8 sm:%s11]
    %vm13 = vcmask 64512
    %14 = vst.msk [vmem:[#allocation0] sm:$0x3] %vm13, %v12
    %s15 = scalar_lea.vmem [#allocation1], 3
    %s16 = smov 3
    %v17 = vld [vmem:[%s15] ss:$8 sm:%s16]
    %18 = vrot.lane.b32.xlu0 %v17, 24
    %v19 = vpop.permute.xlu0 %18
    %vm20 = vcmask 261312
    %21 = vst.msk [vmem:[#allocation0] sm:$0x3] %vm20, %v19
    %s22 = scalar_lea.vmem [#allocation1], 2
    %s23 = smov 3
    %v24 = vld [vmem:[%s22] ss:$8 sm:%s23]
    %25 = vrot.lane.b32.xlu0 %v24, 16
    %v26 = vpop.permute.xlu0 %25
    %vm27 = vcmask 195712
    %28 = vst.msk [vmem:[#allocation0] sm:$0x3] %vm27, %v26
    %s29 = scalar_lea.vmem [#allocation1], 1
    %s30 = smov 3
    %v31 = vld [vmem:[%s29] ss:$8 sm:%s30]
    %32 = vrot.lane.b32.xlu0 %v31, 8
    %v33 = vpop.permute.xlu0 %32
    %vm34 = vcmask 130112
    %35 = vst.msk [vmem:[#allocation0] sm:$0x3] %vm34, %v33
    %s37 = sshll.u32 1, 2
    %s38 = ssub.s32 %s37, 1
    %v40 = vld [vmem:[#allocation0] sm:%s38]
    %s41 = sshll.u32 1, 2
    %s42 = ssub.s32 %s41, 1
    %43 = vst [vmem:[%s1] sm:%s42] %v40

// kernel: mixture_forward.2
$region0: #{mixture_forward.2}
  #allocation0 [shape = 'u32[]', space=smem, size = 0x4, offset = 0x4, fixed_abs, tag = 'smem constant byte address 0x4 - core index']
  #allocation1 [shape = 'u32[144,128]{1,0:T(1,128)}', space=vmem, size = 0x12000, scoped, tag = 'internal scratch']
  %s0 = inlined_call_operand.vmem [shape: f32[2,12,32], index: 0, kind: input, shape index: {}]
  %s1 = inlined_call_operand.vmem [shape: f32[1,32], index: 1, kind: input, shape index: {}]
  %s2 = inlined_call_operand.vmem [shape: f32[1,32], index: 2, kind: input, shape index: {}]
  %s3 = inlined_call_operand.vmem [shape: f32[32,96], index: 3, kind: input, shape index: {}]
  %s4 = inlined_call_operand.vmem [shape: f32[32,32], index: 4, kind: input, shape index: {}]
  %s5 = inlined_call_operand.vmem [shape: f32[2,12,32], index: 5, kind: output, shape index: {}]
  %s6 = sld [smem:[#allocation0]]
  $region53: #{mixture_forward.2} parent=0
    _
  %s8 = ssub.s32 1, %s6
  %s9 = scalar_select 0, %s8, %s6
  loop: start=0, step=1, limit=4
  $region2: #{mixture_forward.2} parent=0 // loop_pre_header
    _
  $region3: #{mixture_forward.2} parent=0 // loop_header
    %s11 = sphi 0, %s15
    %p12 = scmp.ge.s32.totalorder %s11, 4
    %s21 = sphi 0, %s23
    %s24 = sphi 0, %s21
    %s25 = sphi 0, %s24
    %s41 = sphi 0, %s25
    %s45 = sphi 0, %s45
    %s47 = sphi 0, %s45
    %s48 = sphi 0, %s47
    %s62 = sphi 0, %s48
    %s66 = sphi 0, %s66
    %s68 = sphi 0, %s66
    %s69 = sphi 0, %s68
    %s83 = sphi 0, %s69
    %s87 = sphi 0, %s87
    %s89 = sphi 0, %s87
    %s90 = sphi 0, %s89
    %s104 = sphi 0, %s90
    %s108 = sphi 0, %s108
    %s110 = sphi 0, %s108
    %s111 = sphi 0, %s110
    %s125 = sphi 0, %s111
    %s131 = sphi 0, %s133
    %s134 = sphi 0, %s131
    %s135 = sphi 0, %s134
    %s151 = sphi 0, %s135
  $region4: #{mixture_forward.2} parent=0 // loop_header_branch
    %14 = sbr.rel (%p12) target = $region8
  $region5: #{mixture_forward.2} parent=0 // loop_body
    %s16 = ssub.s32 %s11, 1
    %s17 = ssub.s32 %s11, 2
    %s18 = sadd.s32 %s11, 1
    %s19 = ssub.s32 %s11, %s18
    %p20 = scmp.eq.s32.totalorder %s19, 0
    %s22 = sadd.s32 %s21, 1
    %s23 = scalar_select %p20, %s21, %s22
    %p26 = pneg %p20
    %p27 = scmp.eq.s32.totalorder %s11, 1
    %p28 = por %p26, %p27
    %p29 = scmp.ne.s32.totalorder %s21, %s24
    %p30 = scmp.eq.s32.totalorder %s11, 0
    %p31 = por %p29, %p30
    %p32 = scmp.ne.s32.totalorder %s21, %s24
    %p33 = scmp.eq.s32.totalorder %s16, 1
    %p34 = por %p32, %p33
    %p35 = scmp.ne.s32.totalorder %s24, %s25
    %p36 = scmp.eq.s32.totalorder %s16, 0
    %p37 = por %p35, %p36
    %p38 = scmp.ne.s32.totalorder %s24, %s25
    %p39 = scmp.eq.s32.totalorder %s17, 1
    %p40 = por %p38, %p39
    %p42 = scmp.ne.s32.totalorder %s25, %s41
    %p43 = scmp.eq.s32.totalorder %s17, 0
    %p44 = por %p42, %p43
    %s46 = sadd.s32 %s45, 1
    %p49 = scmp.eq.s32.totalorder %s11, 1
    %p50 = scmp.ne.s32.totalorder %s45, %s47
    %p51 = scmp.eq.s32.totalorder %s11, 0
    %p52 = por %p50, %p51
    %p53 = scmp.ne.s32.totalorder %s45, %s47
    %p54 = scmp.eq.s32.totalorder %s16, 1
    %p55 = por %p53, %p54
    %p56 = scmp.ne.s32.totalorder %s47, %s48
    %p57 = scmp.eq.s32.totalorder %s16, 0
    %p58 = por %p56, %p57
    %p59 = scmp.ne.s32.totalorder %s47, %s48
    %p60 = scmp.eq.s32.totalorder %s17, 1
    %p61 = por %p59, %p60
    %p63 = scmp.ne.s32.totalorder %s48, %s62
    %p64 = scmp.eq.s32.totalorder %s17, 0
    %p65 = por %p63, %p64
    %s67 = sadd.s32 %s66, 1
    %p70 = scmp.eq.s32.totalorder %s11, 1
    %p71 = scmp.ne.s32.totalorder %s66, %s68
    %p72 = scmp.eq.s32.totalorder %s11, 0
    %p73 = por %p71, %p72
    %p74 = scmp.ne.s32.totalorder %s66, %s68
    %p75 = scmp.eq.s32.totalorder %s16, 1
    %p76 = por %p74, %p75
    %p77 = scmp.ne.s32.totalorder %s68, %s69
    %p78 = scmp.eq.s32.totalorder %s16, 0
    %p79 = por %p77, %p78
    %p80 = scmp.ne.s32.totalorder %s68, %s69
    %p81 = scmp.eq.s32.totalorder %s17, 1
    %p82 = por %p80, %p81
    %p84 = scmp.ne.s32.totalorder %s69, %s83
    %p85 = scmp.eq.s32.totalorder %s17, 0
    %p86 = por %p84, %p85
    %s88 = sadd.s32 %s87, 1
    %p91 = scmp.eq.s32.totalorder %s11, 1
    %p92 = scmp.ne.s32.totalorder %s87, %s89
    %p93 = scmp.eq.s32.totalorder %s11, 0
    %p94 = por %p92, %p93
    %p95 = scmp.ne.s32.totalorder %s87, %s89
    %p96 = scmp.eq.s32.totalorder %s16, 1
    %p97 = por %p95, %p96
    %p98 = scmp.ne.s32.totalorder %s89, %s90
    %p99 = scmp.eq.s32.totalorder %s16, 0
    %p100 = por %p98, %p99
    %p101 = scmp.ne.s32.totalorder %s89, %s90
    %p102 = scmp.eq.s32.totalorder %s17, 1
    %p103 = por %p101, %p102
    %p105 = scmp.ne.s32.totalorder %s90, %s104
    %p106 = scmp.eq.s32.totalorder %s17, 0
    %p107 = por %p105, %p106
    %s109 = sadd.s32 %s108, 1
    %p112 = scmp.eq.s32.totalorder %s11, 1
    %p113 = scmp.ne.s32.totalorder %s108, %s110
    %p114 = scmp.eq.s32.totalorder %s11, 0
    %p115 = por %p113, %p114
    %p116 = scmp.ne.s32.totalorder %s108, %s110
    %p117 = scmp.eq.s32.totalorder %s16, 1
    %p118 = por %p116, %p117
    %p119 = scmp.ne.s32.totalorder %s110, %s111
    %p120 = scmp.eq.s32.totalorder %s16, 0
    %p121 = por %p119, %p120
    %p122 = scmp.ne.s32.totalorder %s110, %s111
    %p123 = scmp.eq.s32.totalorder %s17, 1
    %p124 = por %p122, %p123
    %p126 = scmp.ne.s32.totalorder %s111, %s125
    %p127 = scmp.eq.s32.totalorder %s17, 0
    %p128 = por %p126, %p127
    %s129 = ssub.s32 %s11, %s18
    %p130 = scmp.eq.s32.totalorder %s129, 0
    %s132 = sadd.s32 %s131, 1
    %s133 = scalar_select %p130, %s131, %s132
    %p136 = pneg %p130
    %p137 = scmp.eq.s32.totalorder %s11, 1
    %p138 = por %p136, %p137
    %p139 = scmp.ne.s32.totalorder %s131, %s134
    %p140 = scmp.eq.s32.totalorder %s11, 0
    %p141 = por %p139, %p140
    %p142 = scmp.ne.s32.totalorder %s131, %s134
    %p143 = scmp.eq.s32.totalorder %s16, 1
    %p144 = por %p142, %p143
    %p145 = scmp.ne.s32.totalorder %s134, %s135
    %p146 = scmp.eq.s32.totalorder %s16, 0
    %p147 = por %p145, %p146
    %p148 = scmp.ne.s32.totalorder %s134, %s135
    %p149 = scmp.eq.s32.totalorder %s17, 1
    %p150 = por %p148, %p149
    %p152 = scmp.ne.s32.totalorder %s135, %s151
    %p153 = scmp.eq.s32.totalorder %s17, 0
    %p154 = por %p152, %p153
    %p155 = scmp.le.s32.totalorder 1, %s11
    %p156 = scmp.lt.s32.totalorder %s11, 3
    %p157 = pnand %p155, %p156
    %p158 = pneg %p157
    // Predicated region
    $region9: #{mixture_forward.2} parent=5 // pred_check
      _
    $region10: #{mixture_forward.2} parent=5 // pred_check_branch
      %160 = sbr.rel (%p157) target = $region12
    $region11: #{mixture_forward.2} parent=5 // pred_region
      %s161 = ssub.s32 %s11, 1
      // Predicated region
      $region13: #{mixture_forward.2} parent=11 // pred_check
        %p162 = pneg %p58
      $region14: #{mixture_forward.2} parent=11 // pred_check_branch
        %164 = sbr.rel (%p162) target = $region16
      $region15: #{mixture_forward.2} parent=11 // pred_region
        _
      $region16: #{mixture_forward.2} parent=11 // pred_fallthru
        _
      // Predicated region
      $region17: #{mixture_forward.2} parent=11 // pred_check
        %p165 = pneg %p79
      $region18: #{mixture_forward.2} parent=11 // pred_check_branch
        %167 = sbr.rel (%p165) target = $region20
      $region19: #{mixture_forward.2} parent=11 // pred_region
        _
      $region20: #{mixture_forward.2} parent=11 // pred_fallthru
        _
      // Predicated region
      $region21: #{mixture_forward.2} parent=11 // pred_check
        %p168 = pneg %p100
      $region22: #{mixture_forward.2} parent=11 // pred_check_branch
        %170 = sbr.rel (%p168) target = $region24
      $region23: #{mixture_forward.2} parent=11 // pred_region
        _
      $region24: #{mixture_forward.2} parent=11 // pred_fallthru
        _
      // Predicated region
      $region25: #{mixture_forward.2} parent=11 // pred_check
        %p171 = pneg %p121
      $region26: #{mixture_forward.2} parent=11 // pred_check_branch
        %173 = sbr.rel (%p171) target = $region28
      $region27: #{mixture_forward.2} parent=11 // pred_region
        _
      $region28: #{mixture_forward.2} parent=11 // pred_fallthru
        _
    $region12: #{mixture_forward.2} parent=5 // pred_fallthru
      _
    %p174 = scmp.lt.s32.totalorder %s11, 2
    // Predicated region
    $region29: #{mixture_forward.2} parent=5 // pred_check
      %p175 = pneg %p174
    $region30: #{mixture_forward.2} parent=5 // pred_check_branch
      %177 = sbr.rel (%p175) target = $region32
    $region31: #{mixture_forward.2} parent=5 // pred_region
      // Predicated region
      $region33: #{mixture_forward.2} parent=31 // pred_check
        %p178 = pneg %p31
      $region34: #{mixture_forward.2} parent=31 // pred_check_branch
        %180 = sbr.rel (%p178) target = $region36
      $region35: #{mixture_forward.2} parent=31 // pred_region
        %p181 = scmp.lt.s32.totalorder %s11, 1
        %s182 = scalar_select %p181, %s11, 1
        %s183 = smul.addr %s182, 2
        %s184 = smul.addr %s183, 8
        %s185 = scalar_lea.vmem %s0, %s184
      $region36: #{mixture_forward.2} parent=31 // pred_fallthru
        _
    $region32: #{mixture_forward.2} parent=5 // pred_fallthru
      _
    %p186 = scmp.le.s32.totalorder 1, %s11
    %p187 = scmp.lt.s32.totalorder %s11, 3
    %p188 = pnand %p186, %p187
    %p189 = pneg %p188
    // Predicated region
    $region37: #{mixture_forward.2} parent=5 // pred_check
      _
    $region38: #{mixture_forward.2} parent=5 // pred_check_branch
      %191 = sbr.rel (%p188) target = $region40
    $region39: #{mixture_forward.2} parent=5 // pred_region
      %s192 = ssub.s32 %s11, 1
      %p193 = scmp.lt.s32.totalorder %s16, 1
      %s194 = scalar_select %p193, %s16, 1
      %s195 = smul.addr %s194, 2
      %s196 = smul.addr %s195, 8
      %s197 = scalar_lea.vmem %s0, %s196
      %p198 = pneg %p37
      %p199 = pneg %p34
      %p200 = pneg %p58
      %p201 = pneg %p55
      %p202 = pneg %p79
      %p203 = pneg %p76
      %p204 = pneg %p100
      %p205 = pneg %p97
      %p206 = pneg %p121
      %p207 = pneg %p118
      %p208 = pneg %p147
      %p209 = pneg %p144
      %p210 = scmp.lt.s32.totalorder %s16, 1
      %s211 = scalar_select %p210, %s16, 1
      %s212 = smul.addr %s211, 2
      %s213 = smul.addr %s212, 8
      %s214 = scalar_lea.vmem %s5, %s213
      %p215 = scmp.lt.s32.totalorder %s16, 1
      %s216 = scalar_select %p215, %s16, 1
      %s217 = smul.addr %s216, 2
      %s218 = smul.addr %s217, 8
      %s219 = scalar_lea.vmem %s0, %s218
      %p220 = scmp.lt.s32.totalorder %s16, 1
      %s221 = scalar_select %p220, %s16, 1
      %s222 = smul.addr %s221, 2
      %s223 = smul.addr %s222, 8
      %s224 = scalar_lea.vmem %s5, %s223
      %v225 = vld [vmem:[%s219] sm:$0xff]
      %v226 = vld [vmem:[%s219 + $0x8] sm:$0xf]
      %vm227 = vcmask 261120
      %v228 = vsel %vm227, %v225, 0.0
      %229 = vadd.xlane.f32.xlu0 %v228
      %v230 = vpop.xlane.xlu0 %229
      %vm231 = vcmask 257024
      %v232 = vsel %vm231, %v226, 0.0
      %233 = vadd.xlane.f32.xlu0 %v232
      %v234 = vpop.xlane.xlu0 %233
      %v235 = vrcp.pop 32.0
      %v236 = vmul.f32 %v230, %v235
      %v237 = vmul.f32 %v234, %v235
      %v238 = vsub.f32 %v225, %v236
      %v239 = vsub.f32 %v226, %v237
      %v240 = vmul.f32 %v238, %v238
      %v241 = vmul.f32 %v239, %v239
      %v242 = vsel %vm227, %v240, 0.0
      %243 = vadd.xlane.f32.xlu0 %v242
      %v244 = vpop.xlane.xlu0 %243
      %v245 = vsel %vm231, %v241, 0.0
      %246 = vadd.xlane.f32.xlu0 %v245
      %v247 = vpop.xlane.xlu0 %246
      %v248 = vmul.f32 %v244, %v235
      %v249 = vmul.f32 %v247, %v235
      %v250 = vadd.f32 %v248, 1e-05
      %v251 = vadd.f32 %v249, 1e-05
      %v252 = vrsqrt.pop %v250
      %v253 = vrsqrt.pop %v251
      %v254 = vmul.f32 %v238, %v252
      %v255 = vmul.f32 %v239, %v253
      %v256 = vld [vmem:[%s1] sm:$0x1]
      %v258 = vlaneseq
      %v259 = vshrl.u32 %v258, 7
      %v260 = vsub.s32 0, %v259
      %v261 = vrot.slane %v256, %v260
      %v263 = vmul.f32 %v254, %v261
      %v264 = vmul.f32 %v255, %v261
      %v265 = vld [vmem:[%s2] sm:$0x1]
      %v267 = vlaneseq
      %v268 = vshrl.u32 %v267, 7
      %v269 = vsub.s32 0, %v268
      %v270 = vrot.slane %v265, %v269
      %v272 = vadd.f32 %v263, %v270
      %v273 = vadd.f32 %v264, %v270
      %v274 = vld [vmem:[%s3] sm:$0xff]
      %v275 = vld [vmem:[%s3 + $0x8] sm:$0xff]
      %v276 = vld [vmem:[%s3 + $0x10] sm:$0xff]
      %v277 = vld [vmem:[%s3 + $0x18] sm:$0xff]
      %v279 = vsel %vm227, %v272, 0
      %v282 = vsel %vm227, %v273, 0
      %284 = vmatprep.subr.mxu0 0.0
      %285 = vmatpush1.msra.mxu0 0.0
      %286 = vmatprep.subr.mxu0 0.0
      %287 = vmatpush1.msra.mxu0 0.0
      %288 = vmatprep.subr.mxu0 0.0
      %289 = vmatpush1.msra.mxu0 0.0
      %290 = vmatprep.subr.mxu0 0.0
      %291 = vmatpush1.msra.mxu0 0.0
      %292 = vmatprep.subr.mxu0 0.0
      %293 = vmatpush1.msra.mxu0 0.0
      %294 = vmatprep.subr.mxu0 0.0
      %295 = vmatpush1.msra.mxu0 0.0
      %296 = vmatprep.subr.mxu0 0.0
      %297 = vmatpush1.msra.mxu0 0.0
      %298 = vmatprep.subr.mxu0 0.0
      %299 = vmatpush1.msra.mxu0 0.0
      %300 = vmatprep.subr.mxu0 0.0
      %301 = vmatpush1.msra.mxu0 0.0
      %302 = vmatprep.subr.mxu0 0.0
      %303 = vmatpush1.msra.mxu0 0.0
      %304 = vmatprep.subr.mxu0 0.0
      %305 = vmatpush1.msra.mxu0 0.0
      %306 = vmatprep.subr.mxu0 0.0
      %307 = vmatpush1.msra.mxu0 0.0
      %308 = vmatprep.subr.mxu0 0.0
      %309 = vmatpush1.msra.mxu0 %v277
      %310 = vmatprep.subr.mxu0 0.0
      %311 = vmatpush1.msra.mxu0 %v276
      %312 = vmatprep.subr.mxu0 0.0
      %313 = vmatpush1.msra.mxu0 %v275
      %314 = vmatprep.subr.mxu0 0.0
      %315 = vmatpush1.msra.mxu0 %v274
      %316 = vmatprep.subr.mxu0 0.0
      %317 = vmatpush2.msra.mxu0 0.0
      %318 = vmatprep.subr.mxu0 0.0
      %319 = vmatpush2.msra.mxu0 0.0
      %320 = vmatprep.subr.mxu0 0.0
      %321 = vmatpush2.msra.mxu0 0.0
      %322 = vmatprep.subr.mxu0 0.0
      %323 = vmatpush2.msra.mxu0 0.0
      %324 = vmatprep.subr.mxu0 0.0
      %325 = vmatpush2.msra.mxu0 0.0
      %326 = vmatprep.subr.mxu0 0.0
      %327 = vmatpush2.msra.mxu0 0.0
      %328 = vmatprep.subr.mxu0 0.0
      %329 = vmatpush2.msra.mxu0 0.0
      %330 = vmatprep.subr.mxu0 0.0
      %331 = vmatpush2.msra.mxu0 0.0
      %332 = vmatprep.subr.mxu0 0.0
      %333 = vmatpush2.msra.mxu0 0.0
      %334 = vmatprep.subr.mxu0 0.0
      %335 = vmatpush2.msra.mxu0 0.0
      %336 = vmatprep.subr.mxu0 0.0
      %337 = vmatpush2.msra.mxu0 0.0
      %338 = vmatprep.subr.mxu0 0.0
      %339 = vmatpush2.msra.mxu0 0.0
      %340 = vmatprep.subr.mxu0 0.0
      %341 = vmatpush2.msra.mxu0 0.0
      %342 = vmatprep.subr.mxu0 0.0
      %343 = vmatpush2.msra.mxu0 0.0
      %344 = vmatprep.subr.mxu0 0.0
      %345 = vmatpush2.msra.mxu0 0.0
      %346 = vmatprep.subr.mxu0 0.0
      %347 = vmatpush2.msra.mxu0 0.0
      %348 = vmatprep.mubr.f32.mxu0 0.0
      %349 = vmatmul.mubr.f32.gmra.mxu0 %v279
      %v350 = vpop.f32.mrf.mxu0
      %v351 = vadd.f32 0.0, %v350
      %v352 = vpop.f32.mrf.mxu0
      %353 = vmatprep.mubr.f32.mxu0 0.0
      %354 = vmatmul.mubr.f32.gmra.mxu0 %v282
      %v355 = vpop.f32.mrf.mxu0
      %v356 = vadd.f32 0.0, %v355
      %v357 = vpop.f32.mrf.mxu0
      %358 = vdwg.mxu0
      %v359 = vld [vmem:[%s4] sm:$0xff]
      %v360 = vld [vmem:[%s4 + $0x8] sm:$0xff]
      %v361 = vld [vmem:[%s4 + $0x10] sm:$0xff]
      %v362 = vld [vmem:[%s4 + $0x18] sm:$0xff]
      %v363 = vlaneseq
      %v364 = vshrl.u32 %v363, 7
      %v365 = vadd.s32 %v364, 8
      %v366 = vlaneseq
      %v367 = vand.u32 %v366, 127
      %vm368 = vcmp.le.s32.totalorder %v367, %v364
      %vm369 = vcmp.le.s32.totalorder %v367, %v365
      %v370 = vsub.s32 %v364, %v367
      %v371 = vsub.s32 %v365, %v367
      %vm372 = vcmp.le.s32.totalorder %v370, 4
      %vm373 = vcmp.le.s32.totalorder %v371, 4
      %vm374 = vmand %vm368, %vm372
      %vm375 = vmand %vm369, %vm373
      %378 = vrot.lane.b32.xlu0 %v351, 96
      %v379 = vpop.permute.xlu0 %378
      %380 = vrot.lane.b32.xlu0 %v356, 96
      %v381 = vpop.permute.xlu0 %380
      %vm382 = vcmask 64512
      %v383 = vsel %vm382, %v351, 0
      %v385 = vsel %vm382, %v356, 0
      %v387 = vsel %vm382, %v379, 0
      %v389 = vsel %vm382, %v381, 0
      %391 = vmatprep.subr.mxu0 0.0
      %392 = vmatpush1.xpose.msra.mxu0 0.0
      %393 = vmatprep.subr.mxu0 0.0
      %394 = vmatpush1.xpose.msra.mxu0 0.0
      %395 = vmatprep.subr.mxu0 0.0
      %396 = vmatpush1.xpose.msra.mxu0 0.0
      %397 = vmatprep.subr.mxu0 0.0
      %398 = vmatpush1.xpose.msra.mxu0 0.0
      %399 = vmatprep.subr.mxu0 0.0
      %400 = vmatpush1.xpose.msra.mxu0 0.0
      %401 = vmatprep.subr.mxu0 0.0
      %402 = vmatpush1.xpose.msra.mxu0 0.0
      %403 = vmatprep.subr.mxu0 0.0
      %404 = vmatpush1.xpose.msra.mxu0 0.0
      %405 = vmatprep.subr.mxu0 0.0
      %406 = vmatpush1.xpose.msra.mxu0 0.0
      %407 = vmatprep.subr.mxu0 0.0
      %408 = vmatpush1.xpose.msra.mxu0 0.0
      %409 = vmatprep.subr.mxu0 0.0
      %410 = vmatpush1.xpose.msra.mxu0 0.0
      %411 = vmatprep.subr.mxu0 0.0
      %412 = vmatpush1.xpose.msra.mxu0 0.0
      %413 = vmatprep.subr.mxu0 0.0
      %414 = vmatpush1.xpose.msra.mxu0 0.0
      %415 = vmatprep.subr.mxu0 0.0
      %416 = vmatpush1.xpose.msra.mxu0 0.0
      %417 = vmatprep.subr.mxu0 0.0
      %418 = vmatpush1.xpose.msra.mxu0 0.0
      %419 = vmatprep.subr.mxu0 0.0
      %420 = vmatpush1.xpose.msra.mxu0 %v389
      %421 = vmatprep.subr.mxu0 0.0
      %422 = vmatpush1.xpose.msra.mxu0 %v387
      %423 = vmatprep.subr.mxu0 0.0
      %424 = vmatpush2.xpose.msra.mxu0 0.0
      %425 = vmatprep.subr.mxu0 0.0
      %426 = vmatpush2.xpose.msra.mxu0 0.0
      %427 = vmatprep.subr.mxu0 0.0
      %428 = vmatpush2.xpose.msra.mxu0 0.0
      %429 = vmatprep.subr.mxu0 0.0
      %430 = vmatpush2.xpose.msra.mxu0 0.0
      %431 = vmatprep.subr.mxu0 0.0
      %432 = vmatpush2.xpose.msra.mxu0 0.0
      %433 = vmatprep.subr.mxu0 0.0
      %434 = vmatpush2.xpose.msra.mxu0 0.0
      %435 = vmatprep.subr.mxu0 0.0
      %436 = vmatpush2.xpose.msra.mxu0 0.0
      %437 = vmatprep.subr.mxu0 0.0
      %438 = vmatpush2.xpose.msra.mxu0 0.0
      %439 = vmatprep.subr.mxu0 0.0
      %440 = vmatpush2.xpose.msra.mxu0 0.0
      %441 = vmatprep.subr.mxu0 0.0
      %442 = vmatpush2.xpose.msra.mxu0 0.0
      %443 = vmatprep.subr.mxu0 0.0
      %444 = vmatpush2.xpose.msra.mxu0 0.0
      %445 = vmatprep.subr.mxu0 0.0
      %446 = vmatpush2.xpose.msra.mxu0 0.0
      %447 = vmatprep.subr.mxu0 0.0
      %448 = vmatpush2.xpose.msra.mxu0 0.0
      %449 = vmatprep.subr.mxu0 0.0
      %450 = vmatpush2.xpose.msra.mxu0 0.0
      %451 = vmatprep.subr.mxu0 0.0
      %452 = vmatpush2.xpose.msra.mxu0 0.0
      %453 = vmatprep.subr.mxu0 0.0
      %454 = vmatpush2.xpose.msra.mxu0 0.0
      %455 = vmatprep.mubr.f32.mxu0 0.0
      %456 = vmatmul.mubr.f32.gmra.mxu0 %v383
      %v457 = vpop.f32.mrf.mxu0
      %v458 = vadd.f32 0.0, %v457
      %v459 = vpop.f32.mrf.mxu0
      %460 = vmatprep.mubr.f32.mxu0 0.0
      %461 = vmatmul.mubr.f32.gmra.mxu0 %v385
      %v462 = vpop.f32.mrf.mxu0
      %v463 = vadd.f32 0.0, %v462
      %v464 = vpop.f32.mrf.mxu0
      %465 = vdwg.mxu0
      %v466 = vmul.f32 %v458, 0.35355338
      %v467 = vmul.f32 %v463, 0.35355338
      %v468 = vsel %vm374, %v466, -1e+30
      %v469 = vsel %vm375, %v467, -1e+30
      %vm470 = vcmask 97280
      %v471 = vsel %vm470, %v468, -inf
      %472 = vmax.xlane.f32.xlu0 %v471
      %v473 = vpop.xlane.xlu0 %472
      %vm474 = vcmask 93184
      %v475 = vsel %vm474, %v469, -inf
      %476 = vmax.xlane.f32.xlu0 %v475
      %v477 = vpop.xlane.xlu0 %476
      %v478 = vsub.f32 %v468, %v473
      %v479 = vsub.f32 %v469, %v477
      %v480 = vmul.f32 %v478, 1.442695
      %v481 = vpow.pop %v480
      %v482 = vmul.f32 %v479, 1.442695
      %v483 = vpow.pop %v482
      %v484 = vsel %vm470, %v481, 0.0
      %485 = vadd.xlane.f32.xlu0 %v484
      %v486 = vpop.xlane.xlu0 %485
      %v487 = vsel %vm474, %v483, 0.0
      %488 = vadd.xlane.f32.xlu0 %v487
      %v489 = vpop.xlane.xlu0 %488
      %v490 = vrcp.pop %v486
      %v491 = vrcp.pop %v489
      %v492 = vmul.f32 %v481, %v490
      %v493 = vmul.f32 %v483, %v491
      %494 = vrot.lane.b32.xlu0 %v351, 64
      %v495 = vpop.permute.xlu0 %494
      %496 = vrot.lane.b32.xlu0 %v356, 64
      %v497 = vpop.permute.xlu0 %496
      %v500 = vsel %vm470, %v492, 0
      %v503 = vsel %vm470, %v493, 0
      %vm505 = vcmask 1043456
      %v506 = vsel %vm505, %v497, 0
      %508 = vmatprep.subr.mxu0 0.0
      %509 = vmatpush1.msra.mxu0 0.0
      %510 = vmatprep.subr.mxu0 0.0
      %511 = vmatpush1.msra.mxu0 0.0
      %512 = vmatprep.subr.mxu0 0.0
      %513 = vmatpush1.msra.mxu0 0.0
      %514 = vmatprep.subr.mxu0 0.0
      %515 = vmatpush1.msra.mxu0 0.0
      %516 = vmatprep.subr.mxu0 0.0
      %517 = vmatpush1.msra.mxu0 0.0
      %518 = vmatprep.subr.mxu0 0.0
      %519 = vmatpush1.msra.mxu0 0.0
      %520 = vmatprep.subr.mxu0 0.0
      %521 = vmatpush1.msra.mxu0 0.0
      %522 = vmatprep.subr.mxu0 0.0
      %523 = vmatpush1.msra.mxu0 0.0
      %524 = vmatprep.subr.mxu0 0.0
      %525 = vmatpush1.msra.mxu0 0.0
      %526 = vmatprep.subr.mxu0 0.0
      %527 = vmatpush1.msra.mxu0 0.0
      %528 = vmatprep.subr.mxu0 0.0
      %529 = vmatpush1.msra.mxu0 0.0
      %530 = vmatprep.subr.mxu0 0.0
      %531 = vmatpush1.msra.mxu0 0.0
      %532 = vmatprep.subr.mxu0 0.0
      %533 = vmatpush1.msra.mxu0 0.0
      %534 = vmatprep.subr.mxu0 0.0
      %535 = vmatpush1.msra.mxu0 0.0
      %536 = vmatprep.subr.mxu0 0.0
      %537 = vmatpush1.msra.mxu0 %v506
      %538 = vmatprep.subr.mxu0 0.0
      %539 = vmatpush1.msra.mxu0 %v495
      %540 = vmatprep.subr.mxu0 0.0
      %541 = vmatpush2.msra.mxu0 0.0
      %542 = vmatprep.subr.mxu0 0.0
      %543 = vmatpush2.msra.mxu0 0.0
      %544 = vmatprep.subr.mxu0 0.0
      %545 = vmatpush2.msra.mxu0 0.0
      %546 = vmatprep.subr.mxu0 0.0
      %547 = vmatpush2.msra.mxu0 0.0
      %548 = vmatprep.subr.mxu0 0.0
      %549 = vmatpush2.msra.mxu0 0.0
      %550 = vmatprep.subr.mxu0 0.0
      %551 = vmatpush2.msra.mxu0 0.0
      %552 = vmatprep.subr.mxu0 0.0
      %553 = vmatpush2.msra.mxu0 0.0
      %554 = vmatprep.subr.mxu0 0.0
      %555 = vmatpush2.msra.mxu0 0.0
      %556 = vmatprep.subr.mxu0 0.0
      %557 = vmatpush2.msra.mxu0 0.0
      %558 = vmatprep.subr.mxu0 0.0
      %559 = vmatpush2.msra.mxu0 0.0
      %560 = vmatprep.subr.mxu0 0.0
      %561 = vmatpush2.msra.mxu0 0.0
      %562 = vmatprep.subr.mxu0 0.0
      %563 = vmatpush2.msra.mxu0 0.0
      %564 = vmatprep.subr.mxu0 0.0
      %565 = vmatpush2.msra.mxu0 0.0
      %566 = vmatprep.subr.mxu0 0.0
      %567 = vmatpush2.msra.mxu0 0.0
      %568 = vmatprep.subr.mxu0 0.0
      %569 = vmatpush2.msra.mxu0 0.0
      %570 = vmatprep.subr.mxu0 0.0
      %571 = vmatpush2.msra.mxu0 0.0
      %572 = vmatprep.mubr.f32.mxu0 0.0
      %573 = vmatmul.mubr.f32.gmra.mxu0 %v500
      %v574 = vpop.f32.mrf.mxu0
      %v575 = vadd.f32 0.0, %v574
      %v576 = vpop.f32.mrf.mxu0
      %577 = vmatprep.mubr.f32.mxu0 0.0
      %578 = vmatmul.mubr.f32.gmra.mxu0 %v503
      %v579 = vpop.f32.mrf.mxu0
      %v580 = vadd.f32 0.0, %v579
      %v581 = vpop.f32.mrf.mxu0
      %582 = vdwg.mxu0
      %583 = vrot.lane.b32.xlu0 %v351, 120
      %v584 = vpop.permute.xlu0 %583
      %585 = vrot.lane.b32.xlu0 %v356, 120
      %v586 = vpop.permute.xlu0 %585
      %587 = vrot.lane.b32.xlu0 %v351, 88
      %v588 = vpop.permute.xlu0 %587
      %589 = vrot.lane.b32.xlu0 %v356, 88
      %v590 = vpop.permute.xlu0 %589
      %v591 = vsel %vm382, %v584, 0
      %v593 = vsel %vm382, %v586, 0
      %v595 = vsel %vm382, %v588, 0
      %v597 = vsel %vm382, %v590, 0
      %599 = vmatprep.subr.mxu0 0.0
      %600 = vmatpush1.xpose.msra.mxu0 0.0
      %601 = vmatprep.subr.mxu0 0.0
      %602 = vmatpush1.xpose.msra.mxu0 0.0
      %603 = vmatprep.subr.mxu0 0.0
      %604 = vmatpush1.xpose.msra.mxu0 0.0
      %605 = vmatprep.subr.mxu0 0.0
      %606 = vmatpush1.xpose.msra.mxu0 0.0
      %607 = vmatprep.subr.mxu0 0.0
      %608 = vmatpush1.xpose.msra.mxu0 0.0
      %609 = vmatprep.subr.mxu0 0.0
      %610 = vmatpush1.xpose.msra.mxu0 0.0
      %611 = vmatprep.subr.mxu0 0.0
      %612 = vmatpush1.xpose.msra.mxu0 0.0
      %613 = vmatprep.subr.mxu0 0.0
      %614 = vmatpush1.xpose.msra.mxu0 0.0
      %615 = vmatprep.subr.mxu0 0.0
      %616 = vmatpush1.xpose.msra.mxu0 0.0
      %617 = vmatprep.subr.mxu0 0.0
      %618 = vmatpush1.xpose.msra.mxu0 0.0
      %619 = vmatprep.subr.mxu0 0.0
      %620 = vmatpush1.xpose.msra.mxu0 0.0
      %621 = vmatprep.subr.mxu0 0.0
      %622 = vmatpush1.xpose.msra.mxu0 0.0
      %623 = vmatprep.subr.mxu0 0.0
      %624 = vmatpush1.xpose.msra.mxu0 0.0
      %625 = vmatprep.subr.mxu0 0.0
      %626 = vmatpush1.xpose.msra.mxu0 0.0
      %627 = vmatprep.subr.mxu0 0.0
      %628 = vmatpush1.xpose.msra.mxu0 %v597
      %629 = vmatprep.subr.mxu0 0.0
      %630 = vmatpush1.xpose.msra.mxu0 %v595
      %631 = vmatprep.subr.mxu0 0.0
      %632 = vmatpush2.xpose.msra.mxu0 0.0
      %633 = vmatprep.subr.mxu0 0.0
      %634 = vmatpush2.xpose.msra.mxu0 0.0
      %635 = vmatprep.subr.mxu0 0.0
      %636 = vmatpush2.xpose.msra.mxu0 0.0
      %637 = vmatprep.subr.mxu0 0.0
      %638 = vmatpush2.xpose.msra.mxu0 0.0
      %639 = vmatprep.subr.mxu0 0.0
      %640 = vmatpush2.xpose.msra.mxu0 0.0
      %641 = vmatprep.subr.mxu0 0.0
      %642 = vmatpush2.xpose.msra.mxu0 0.0
      %643 = vmatprep.subr.mxu0 0.0
      %644 = vmatpush2.xpose.msra.mxu0 0.0
      %645 = vmatprep.subr.mxu0 0.0
      %646 = vmatpush2.xpose.msra.mxu0 0.0
      %647 = vmatprep.subr.mxu0 0.0
      %648 = vmatpush2.xpose.msra.mxu0 0.0
      %649 = vmatprep.subr.mxu0 0.0
      %650 = vmatpush2.xpose.msra.mxu0 0.0
      %651 = vmatprep.subr.mxu0 0.0
      %652 = vmatpush2.xpose.msra.mxu0 0.0
      %653 = vmatprep.subr.mxu0 0.0
      %654 = vmatpush2.xpose.msra.mxu0 0.0
      %655 = vmatprep.subr.mxu0 0.0
      %656 = vmatpush2.xpose.msra.mxu0 0.0
      %657 = vmatprep.subr.mxu0 0.0
      %658 = vmatpush2.xpose.msra.mxu0 0.0
      %659 = vmatprep.subr.mxu0 0.0
      %660 = vmatpush2.xpose.msra.mxu0 0.0
      %661 = vmatprep.subr.mxu0 0.0
      %662 = vmatpush2.xpose.msra.mxu0 0.0
      %663 = vmatprep.mubr.f32.mxu0 0.0
      %664 = vmatmul.mubr.f32.gmra.mxu0 %v591
      %v665 = vpop.f32.mrf.mxu0
      %v666 = vadd.f32 0.0, %v665
      %v667 = vpop.f32.mrf.mxu0
      %668 = vmatprep.mubr.f32.mxu0 0.0
      %669 = vmatmul.mubr.f32.gmra.mxu0 %v593
      %v670 = vpop.f32.mrf.mxu0
      %v671 = vadd.f32 0.0, %v670
      %v672 = vpop.f32.mrf.mxu0
      %673 = vdwg.mxu0
      %v674 = vmul.f32 %v666, 0.35355338
      %v675 = vmul.f32 %v671, 0.35355338
      %v676 = vsel %vm374, %v674, -1e+30
      %v677 = vsel %vm375, %v675, -1e+30
      %v678 = vsel %vm470, %v676, -inf
      %679 = vmax.xlane.f32.xlu0 %v678
      %v680 = vpop.xlane.xlu0 %679
      %v681 = vsel %vm474, %v677, -inf
      %682 = vmax.xlane.f32.xlu0 %v681
      %v683 = vpop.xlane.xlu0 %682
      %v684 = vsub.f32 %v676, %v680
      %v685 = vsub.f32 %v677, %v683
      %v686 = vmul.f32 %v684, 1.442695
      %v687 = vpow.pop %v686
      %v688 = vmul.f32 %v685, 1.442695
      %v689 = vpow.pop %v688
      %v690 = vsel %vm470, %v687, 0.0
      %691 = vadd.xlane.f32.xlu0 %v690
      %v692 = vpop.xlane.xlu0 %691
      %v693 = vsel %vm474, %v689, 0.0
      %694 = vadd.xlane.f32.xlu0 %v693
      %v695 = vpop.xlane.xlu0 %694
      %v696 = vrcp.pop %v692
      %v697 = vrcp.pop %v695
      %v698 = vmul.f32 %v687, %v696
      %v699 = vmul.f32 %v689, %v697
      %700 = vrot.lane.b32.xlu0 %v351, 56
      %v701 = vpop.permute.xlu0 %700
      %702 = vrot.lane.b32.xlu0 %v356, 56
      %v703 = vpop.permute.xlu0 %702
      %v706 = vsel %vm470, %v698, 0
      %v709 = vsel %vm470, %v699, 0
      %v711 = vsel %vm505, %v703, 0
      %713 = vmatprep.subr.mxu0 0.0
      %714 = vmatpush1.msra.mxu0 0.0
      %715 = vmatprep.subr.mxu0 0.0
      %716 = vmatpush1.msra.mxu0 0.0
      %717 = vmatprep.subr.mxu0 0.0
      %718 = vmatpush1.msra.mxu0 0.0
      %719 = vmatprep.subr.mxu0 0.0
      %720 = vmatpush1.msra.mxu0 0.0
      %721 = vmatprep.subr.mxu0 0.0
      %722 = vmatpush1.msra.mxu0 0.0
      %723 = vmatprep.subr.mxu0 0.0
      %724 = vmatpush1.msra.mxu0 0.0
      %725 = vmatprep.subr.mxu0 0.0
      %726 = vmatpush1.msra.mxu0 0.0
      %727 = vmatprep.subr.mxu0 0.0
      %728 = vmatpush1.msra.mxu0 0.0
      %729 = vmatprep.subr.mxu0 0.0
      %730 = vmatpush1.msra.mxu0 0.0
      %731 = vmatprep.subr.mxu0 0.0
      %732 = vmatpush1.msra.mxu0 0.0
      %733 = vmatprep.subr.mxu0 0.0
      %734 = vmatpush1.msra.mxu0 0.0
      %735 = vmatprep.subr.mxu0 0.0
      %736 = vmatpush1.msra.mxu0 0.0
      %737 = vmatprep.subr.mxu0 0.0
      %738 = vmatpush1.msra.mxu0 0.0
      %739 = vmatprep.subr.mxu0 0.0
      %740 = vmatpush1.msra.mxu0 0.0
      %741 = vmatprep.subr.mxu0 0.0
      %742 = vmatpush1.msra.mxu0 %v711
      %743 = vmatprep.subr.mxu0 0.0
      %744 = vmatpush1.msra.mxu0 %v701
      %745 = vmatprep.subr.mxu0 0.0
      %746 = vmatpush2.msra.mxu0 0.0
      %747 = vmatprep.subr.mxu0 0.0
      %748 = vmatpush2.msra.mxu0 0.0
      %749 = vmatprep.subr.mxu0 0.0
      %750 = vmatpush2.msra.mxu0 0.0
      %751 = vmatprep.subr.mxu0 0.0
      %752 = vmatpush2.msra.mxu0 0.0
      %753 = vmatprep.subr.mxu0 0.0
      %754 = vmatpush2.msra.mxu0 0.0
      %755 = vmatprep.subr.mxu0 0.0
      %756 = vmatpush2.msra.mxu0 0.0
      %757 = vmatprep.subr.mxu0 0.0
      %758 = vmatpush2.msra.mxu0 0.0
      %759 = vmatprep.subr.mxu0 0.0
      %760 = vmatpush2.msra.mxu0 0.0
      %761 = vmatprep.subr.mxu0 0.0
      %762 = vmatpush2.msra.mxu0 0.0
      %763 = vmatprep.subr.mxu0 0.0
      %764 = vmatpush2.msra.mxu0 0.0
      %765 = vmatprep.subr.mxu0 0.0
      %766 = vmatpush2.msra.mxu0 0.0
      %767 = vmatprep.subr.mxu0 0.0
      %768 = vmatpush2.msra.mxu0 0.0
      %769 = vmatprep.subr.mxu0 0.0
      %770 = vmatpush2.msra.mxu0 0.0
      %771 = vmatprep.subr.mxu0 0.0
      %772 = vmatpush2.msra.mxu0 0.0
      %773 = vmatprep.subr.mxu0 0.0
      %774 = vmatpush2.msra.mxu0 0.0
      %775 = vmatprep.subr.mxu0 0.0
      %776 = vmatpush2.msra.mxu0 0.0
      %777 = vmatprep.mubr.f32.mxu0 0.0
      %778 = vmatmul.mubr.f32.gmra.mxu0 %v706
      %v779 = vpop.f32.mrf.mxu0
      %v780 = vadd.f32 0.0, %v779
      %v781 = vpop.f32.mrf.mxu0
      %782 = vmatprep.mubr.f32.mxu0 0.0
      %783 = vmatmul.mubr.f32.gmra.mxu0 %v709
      %v784 = vpop.f32.mrf.mxu0
      %v785 = vadd.f32 0.0, %v784
      %v786 = vpop.f32.mrf.mxu0
      %787 = vdwg.mxu0
      %v789 = vsel %vm382, %v780, 0
      %v792 = vsel %vm382, %v785, 0
      %794 = vmatprep.subr.mxu0 0.0
      %795 = vmatpush1.msra.mxu0 0.0
      %796 = vmatprep.subr.mxu0 0.0
      %797 = vmatpush1.msra.mxu0 0.0
      %798 = vmatprep.subr.mxu0 0.0
      %799 = vmatpush1.msra.mxu0 0.0
      %800 = vmatprep.subr.mxu0 0.0
      %801 = vmatpush1.msra.mxu0 0.0
      %802 = vmatprep.subr.mxu0 0.0
      %803 = vmatpush1.msra.mxu0 0.0
      %804 = vmatprep.subr.mxu0 0.0
      %805 = vmatpush1.msra.mxu0 0.0
      %806 = vmatprep.subr.mxu0 0.0
      %807 = vmatpush1.msra.mxu0 0.0
      %808 = vmatprep.subr.mxu0 0.0
      %809 = vmatpush1.msra.mxu0 0.0
      %810 = vmatprep.subr.mxu0 0.0
      %811 = vmatpush1.msra.mxu0 0.0
      %812 = vmatprep.subr.mxu0 0.0
      %813 = vmatpush1.msra.mxu0 0.0
      %814 = vmatprep.subr.mxu0 0.0
      %815 = vmatpush1.msra.mxu0 0.0
      %816 = vmatprep.subr.mxu0 0.0
      %817 = vmatpush1.msra.mxu0 0.0
      %818 = vmatprep.subr.mxu0 0.0
      %819 = vmatpush1.msra.mxu0 0.0
      %820 = vmatprep.subr.mxu0 0.0
      %821 = vmatpush1.msra.mxu0 0.0
      %822 = vmatprep.subr.mxu0 0.0
      %823 = vmatpush1.msra.mxu0 0.0
      %824 = vmatprep.subr.mxu0 0.0
      %825 = vmatpush1.msra.mxu0 %v360
      %826 = vmatprep.subr.mxu0 0.0
      %827 = vmatpush2.msra.mxu0 0.0
      %828 = vmatprep.subr.mxu0 0.0
      %829 = vmatpush2.msra.mxu0 0.0
      %830 = vmatprep.subr.mxu0 0.0
      %831 = vmatpush2.msra.mxu0 0.0
      %832 = vmatprep.subr.mxu0 0.0
      %833 = vmatpush2.msra.mxu0 0.0
      %834 = vmatprep.subr.mxu0 0.0
      %835 = vmatpush2.msra.mxu0 0.0
      %836 = vmatprep.subr.mxu0 0.0
      %837 = vmatpush2.msra.mxu0 0.0
      %838 = vmatprep.subr.mxu0 0.0
      %839 = vmatpush2.msra.mxu0 0.0
      %840 = vmatprep.subr.mxu0 0.0
      %841 = vmatpush2.msra.mxu0 0.0
      %842 = vmatprep.subr.mxu0 0.0
      %843 = vmatpush2.msra.mxu0 0.0
      %844 = vmatprep.subr.mxu0 0.0
      %845 = vmatpush2.msra.mxu0 0.0
      %846 = vmatprep.subr.mxu0 0.0
      %847 = vmatpush2.msra.mxu0 0.0
      %848 = vmatprep.subr.mxu0 0.0
      %849 = vmatpush2.msra.mxu0 0.0
      %850 = vmatprep.subr.mxu0 0.0
      %851 = vmatpush2.msra.mxu0 0.0
      %852 = vmatprep.subr.mxu0 0.0
      %853 = vmatpush2.msra.mxu0 0.0
      %854 = vmatprep.subr.mxu0 0.0
      %855 = vmatpush2.msra.mxu0 0.0
      %856 = vmatprep.subr.mxu0 0.0
      %857 = vmatpush2.msra.mxu0 0.0
      %858 = vmatprep.mubr.f32.mxu0 0.0
      %859 = vmatmul.mubr.f32.gmra.mxu0 %v789
      %v860 = vpop.f32.mrf.mxu0
      %v861 = vadd.f32 0.0, %v860
      %v862 = vpop.f32.mrf.mxu0
      %863 = vmatprep.mubr.f32.mxu0 0.0
      %864 = vmatmul.mubr.f32.gmra.mxu0 %v792
      %v865 = vpop.f32.mrf.mxu0
      %v866 = vadd.f32 0.0, %v865
      %v867 = vpop.f32.mrf.mxu0
      %868 = vdwg.mxu0
      %v870 = vsel %vm382, %v575, 0
      %v873 = vsel %vm382, %v580, 0
      %875 = vmatprep.subr.mxu0 0.0
      %876 = vmatpush1.msra.mxu0 0.0
      %877 = vmatprep.subr.mxu0 0.0
      %878 = vmatpush1.msra.mxu0 0.0
      %879 = vmatprep.subr.mxu0 0.0
      %880 = vmatpush1.msra.mxu0 0.0
      %881 = vmatprep.subr.mxu0 0.0
      %882 = vmatpush1.msra.mxu0 0.0
      %883 = vmatprep.subr.mxu0 0.0
      %884 = vmatpush1.msra.mxu0 0.0
      %885 = vmatprep.subr.mxu0 0.0
      %886 = vmatpush1.msra.mxu0 0.0
      %887 = vmatprep.subr.mxu0 0.0
      %888 = vmatpush1.msra.mxu0 0.0
      %889 = vmatprep.subr.mxu0 0.0
      %890 = vmatpush1.msra.mxu0 0.0
      %891 = vmatprep.subr.mxu0 0.0
      %892 = vmatpush1.msra.mxu0 0.0
      %893 = vmatprep.subr.mxu0 0.0
      %894 = vmatpush1.msra.mxu0 0.0
      %895 = vmatprep.subr.mxu0 0.0
      %896 = vmatpush1.msra.mxu0 0.0
      %897 = vmatprep.subr.mxu0 0.0
      %898 = vmatpush1.msra.mxu0 0.0
      %899 = vmatprep.subr.mxu0 0.0
      %900 = vmatpush1.msra.mxu0 0.0
      %901 = vmatprep.subr.mxu0 0.0
      %902 = vmatpush1.msra.mxu0 0.0
      %903 = vmatprep.subr.mxu0 0.0
      %904 = vmatpush1.msra.mxu0 0.0
      %905 = vmatprep.subr.mxu0 0.0
      %906 = vmatpush1.msra.mxu0 %v359
      %907 = vmatprep.subr.mxu0 0.0
      %908 = vmatpush2.msra.mxu0 0.0
      %909 = vmatprep.subr.mxu0 0.0
      %910 = vmatpush2.msra.mxu0 0.0
      %911 = vmatprep.subr.mxu0 0.0
      %912 = vmatpush2.msra.mxu0 0.0
      %913 = vmatprep.subr.mxu0 0.0
      %914 = vmatpush2.msra.mxu0 0.0
      %915 = vmatprep.subr.mxu0 0.0
      %916 = vmatpush2.msra.mxu0 0.0
      %917 = vmatprep.subr.mxu0 0.0
      %918 = vmatpush2.msra.mxu0 0.0
      %919 = vmatprep.subr.mxu0 0.0
      %920 = vmatpush2.msra.mxu0 0.0
      %921 = vmatprep.subr.mxu0 0.0
      %922 = vmatpush2.msra.mxu0 0.0
      %923 = vmatprep.subr.mxu0 0.0
      %924 = vmatpush2.msra.mxu0 0.0
      %925 = vmatprep.subr.mxu0 0.0
      %926 = vmatpush2.msra.mxu0 0.0
      %927 = vmatprep.subr.mxu0 0.0
      %928 = vmatpush2.msra.mxu0 0.0
      %929 = vmatprep.subr.mxu0 0.0
      %930 = vmatpush2.msra.mxu0 0.0
      %931 = vmatprep.subr.mxu0 0.0
      %932 = vmatpush2.msra.mxu0 0.0
      %933 = vmatprep.subr.mxu0 0.0
      %934 = vmatpush2.msra.mxu0 0.0
      %935 = vmatprep.subr.mxu0 0.0
      %936 = vmatpush2.msra.mxu0 0.0
      %937 = vmatprep.subr.mxu0 0.0
      %938 = vmatpush2.msra.mxu0 0.0
      %939 = vmatprep.mubr.f32.mxu0 0.0
      %940 = vmatmul.mubr.f32.gmra.mxu0 %v870
      %v941 = vpop.f32.mrf.mxu0
      %v942 = vadd.f32 %v861, %v941
      %v943 = vpop.f32.mrf.mxu0
      %944 = vmatprep.mubr.f32.mxu0 0.0
      %945 = vmatmul.mubr.f32.gmra.mxu0 %v873
      %v946 = vpop.f32.mrf.mxu0
      %v947 = vadd.f32 %v866, %v946
      %v948 = vpop.f32.mrf.mxu0
      %949 = vdwg.mxu0
      %950 = vrot.lane.b32.xlu0 %v351, 112
      %v951 = vpop.permute.xlu0 %950
      %952 = vrot.lane.b32.xlu0 %v356, 112
      %v953 = vpop.permute.xlu0 %952
      %954 = vrot.lane.b32.xlu0 %v351, 80
      %v955 = vpop.permute.xlu0 %954
      %956 = vrot.lane.b32.xlu0 %v356, 80
      %v957 = vpop.permute.xlu0 %956
      %v958 = vsel %vm382, %v951, 0
      %v960 = vsel %vm382, %v953, 0
      %v962 = vsel %vm382, %v955, 0
      %v964 = vsel %vm382, %v957, 0
      %966 = vmatprep.subr.mxu0 0.0
      %967 = vmatpush1.xpose.msra.mxu0 0.0
      %968 = vmatprep.subr.mxu0 0.0
      %969 = vmatpush1.xpose.msra.mxu0 0.0
      %970 = vmatprep.subr.mxu0 0.0
      %971 = vmatpush1.xpose.msra.mxu0 0.0
      %972 = vmatprep.subr.mxu0 0.0
      %973 = vmatpush1.xpose.msra.mxu0 0.0
      %974 = vmatprep.subr.mxu0 0.0
      %975 = vmatpush1.xpose.msra.mxu0 0.0
      %976 = vmatprep.subr.mxu0 0.0
      %977 = vmatpush1.xpose.msra.mxu0 0.0
      %978 = vmatprep.subr.mxu0 0.0
      %979 = vmatpush1.xpose.msra.mxu0 0.0
      %980 = vmatprep.subr.mxu0 0.0
      %981 = vmatpush1.xpose.msra.mxu0 0.0
      %982 = vmatprep.subr.mxu0 0.0
      %983 = vmatpush1.xpose.msra.mxu0 0.0
      %984 = vmatprep.subr.mxu0 0.0
      %985 = vmatpush1.xpose.msra.mxu0 0.0
      %986 = vmatprep.subr.mxu0 0.0
      %987 = vmatpush1.xpose.msra.mxu0 0.0
      %988 = vmatprep.subr.mxu0 0.0
      %989 = vmatpush1.xpose.msra.mxu0 0.0
      %990 = vmatprep.subr.mxu0 0.0
      %991 = vmatpush1.xpose.msra.mxu0 0.0
      %992 = vmatprep.subr.mxu0 0.0
      %993 = vmatpush1.xpose.msra.mxu0 0.0
      %994 = vmatprep.subr.mxu0 0.0
      %995 = vmatpush1.xpose.msra.mxu0 %v964
      %996 = vmatprep.subr.mxu0 0.0
      %997 = vmatpush1.xpose.msra.mxu0 %v962
      %998 = vmatprep.subr.mxu0 0.0
      %999 = vmatpush2.xpose.msra.mxu0 0.0
      %1000 = vmatprep.subr.mxu0 0.0
      %1001 = vmatpush2.xpose.msra.mxu0 0.0
      %1002 = vmatprep.subr.mxu0 0.0
      %1003 = vmatpush2.xpose.msra.mxu0 0.0
      %1004 = vmatprep.subr.mxu0 0.0
      %1005 = vmatpush2.xpose.msra.mxu0 0.0
      %1006 = vmatprep.subr.mxu0 0.0
      %1007 = vmatpush2.xpose.msra.mxu0 0.0
      %1008 = vmatprep.subr.mxu0 0.0
      %1009 = vmatpush2.xpose.msra.mxu0 0.0
      %1010 = vmatprep.subr.mxu0 0.0
      %1011 = vmatpush2.xpose.msra.mxu0 0.0
      %1012 = vmatprep.subr.mxu0 0.0
      %1013 = vmatpush2.xpose.msra.mxu0 0.0
      %1014 = vmatprep.subr.mxu0 0.0
      %1015 = vmatpush2.xpose.msra.mxu0 0.0
      %1016 = vmatprep.subr.mxu0 0.0
      %1017 = vmatpush2.xpose.msra.mxu0 0.0
      %1018 = vmatprep.subr.mxu0 0.0
      %1019 = vmatpush2.xpose.msra.mxu0 0.0
      %1020 = vmatprep.subr.mxu0 0.0
      %1021 = vmatpush2.xpose.msra.mxu0 0.0
      %1022 = vmatprep.subr.mxu0 0.0
      %1023 = vmatpush2.xpose.msra.mxu0 0.0
      %1024 = vmatprep.subr.mxu0 0.0
      %1025 = vmatpush2.xpose.msra.mxu0 0.0
      %1026 = vmatprep.subr.mxu0 0.0
      %1027 = vmatpush2.xpose.msra.mxu0 0.0
      %1028 = vmatprep.subr.mxu0 0.0
      %1029 = vmatpush2.xpose.msra.mxu0 0.0
      %1030 = vmatprep.mubr.f32.mxu0 0.0
      %1031 = vmatmul.mubr.f32.gmra.mxu0 %v958
      %v1032 = vpop.f32.mrf.mxu0
      %v1033 = vadd.f32 0.0, %v1032
      %v1034 = vpop.f32.mrf.mxu0
      %1035 = vmatprep.mubr.f32.mxu0 0.0
      %1036 = vmatmul.mubr.f32.gmra.mxu0 %v960
      %v1037 = vpop.f32.mrf.mxu0
      %v1038 = vadd.f32 0.0, %v1037
      %v1039 = vpop.f32.mrf.mxu0
      %1040 = vdwg.mxu0
      %v1041 = vmul.f32 %v1033, 0.35355338
      %v1042 = vmul.f32 %v1038, 0.35355338
      %v1043 = vsel %vm374, %v1041, -1e+30
      %v1044 = vsel %vm375, %v1042, -1e+30
      %v1045 = vsel %vm470, %v1043, -inf
      %1046 = vmax.xlane.f32.xlu0 %v1045
      %v1047 = vpop.xlane.xlu0 %1046
      %v1048 = vsel %vm474, %v1044, -inf
      %1049 = vmax.xlane.f32.xlu0 %v1048
      %v1050 = vpop.xlane.xlu0 %1049
      %v1051 = vsub.f32 %v1043, %v1047
      %v1052 = vsub.f32 %v1044, %v1050
      %v1053 = vmul.f32 %v1051, 1.442695
      %v1054 = vpow.pop %v1053
      %v1055 = vmul.f32 %v1052, 1.442695
      %v1056 = vpow.pop %v1055
      %v1057 = vsel %vm470, %v1054, 0.0
      %1058 = vadd.xlane.f32.xlu0 %v1057
      %v1059 = vpop.xlane.xlu0 %1058
      %v1060 = vsel %vm474, %v1056, 0.0
      %1061 = vadd.xlane.f32.xlu0 %v1060
      %v1062 = vpop.xlane.xlu0 %1061
      %v1063 = vrcp.pop %v1059
      %v1064 = vrcp.pop %v1062
      %v1065 = vmul.f32 %v1054, %v1063
      %v1066 = vmul.f32 %v1056, %v1064
      %1067 = vrot.lane.b32.xlu0 %v351, 48
      %v1068 = vpop.permute.xlu0 %1067
      %1069 = vrot.lane.b32.xlu0 %v356, 48
      %v1070 = vpop.permute.xlu0 %1069
      %v1073 = vsel %vm470, %v1065, 0
      %v1076 = vsel %vm470, %v1066, 0
      %v1078 = vsel %vm505, %v1070, 0
      %1080 = vmatprep.subr.mxu0 0.0
      %1081 = vmatpush1.msra.mxu0 0.0
      %1082 = vmatprep.subr.mxu0 0.0
      %1083 = vmatpush1.msra.mxu0 0.0
      %1084 = vmatprep.subr.mxu0 0.0
      %1085 = vmatpush1.msra.mxu0 0.0
      %1086 = vmatprep.subr.mxu0 0.0
      %1087 = vmatpush1.msra.mxu0 0.0
      %1088 = vmatprep.subr.mxu0 0.0
      %1089 = vmatpush1.msra.mxu0 0.0
      %1090 = vmatprep.subr.mxu0 0.0
      %1091 = vmatpush1.msra.mxu0 0.0
      %1092 = vmatprep.subr.mxu0 0.0
      %1093 = vmatpush1.msra.mxu0 0.0
      %1094 = vmatprep.subr.mxu0 0.0
      %1095 = vmatpush1.msra.mxu0 0.0
      %1096 = vmatprep.subr.mxu0 0.0
      %1097 = vmatpush1.msra.mxu0 0.0
      %1098 = vmatprep.subr.mxu0 0.0
      %1099 = vmatpush1.msra.mxu0 0.0
      %1100 = vmatprep.subr.mxu0 0.0
      %1101 = vmatpush1.msra.mxu0 0.0
      %1102 = vmatprep.subr.mxu0 0.0
      %1103 = vmatpush1.msra.mxu0 0.0
      %1104 = vmatprep.subr.mxu0 0.0
      %1105 = vmatpush1.msra.mxu0 0.0
      %1106 = vmatprep.subr.mxu0 0.0
      %1107 = vmatpush1.msra.mxu0 0.0
      %1108 = vmatprep.subr.mxu0 0.0
      %1109 = vmatpush1.msra.mxu0 %v1078
      %1110 = vmatprep.subr.mxu0 0.0
      %1111 = vmatpush1.msra.mxu0 %v1068
      %1112 = vmatprep.subr.mxu0 0.0
      %1113 = vmatpush2.msra.mxu0 0.0
      %1114 = vmatprep.subr.mxu0 0.0
      %1115 = vmatpush2.msra.mxu0 0.0
      %1116 = vmatprep.subr.mxu0 0.0
      %1117 = vmatpush2.msra.mxu0 0.0
      %1118 = vmatprep.subr.mxu0 0.0
      %1119 = vmatpush2.msra.mxu0 0.0
      %1120 = vmatprep.subr.mxu0 0.0
      %1121 = vmatpush2.msra.mxu0 0.0
      %1122 = vmatprep.subr.mxu0 0.0
      %1123 = vmatpush2.msra.mxu0 0.0
      %1124 = vmatprep.subr.mxu0 0.0
      %1125 = vmatpush2.msra.mxu0 0.0
      %1126 = vmatprep.subr.mxu0 0.0
      %1127 = vmatpush2.msra.mxu0 0.0
      %1128 = vmatprep.subr.mxu0 0.0
      %1129 = vmatpush2.msra.mxu0 0.0
      %1130 = vmatprep.subr.mxu0 0.0
      %1131 = vmatpush2.msra.mxu0 0.0
      %1132 = vmatprep.subr.mxu0 0.0
      %1133 = vmatpush2.msra.mxu0 0.0
      %1134 = vmatprep.subr.mxu0 0.0
      %1135 = vmatpush2.msra.mxu0 0.0
      %1136 = vmatprep.subr.mxu0 0.0
      %1137 = vmatpush2.msra.mxu0 0.0
      %1138 = vmatprep.subr.mxu0 0.0
      %1139 = vmatpush2.msra.mxu0 0.0
      %1140 = vmatprep.subr.mxu0 0.0
      %1141 = vmatpush2.msra.mxu0 0.0
      %1142 = vmatprep.subr.mxu0 0.0
      %1143 = vmatpush2.msra.mxu0 0.0
      %1144 = vmatprep.mubr.f32.mxu0 0.0
      %1145 = vmatmul.mubr.f32.gmra.mxu0 %v1073
      %v1146 = vpop.f32.mrf.mxu0
      %v1147 = vadd.f32 0.0, %v1146
      %v1148 = vpop.f32.mrf.mxu0
      %1149 = vmatprep.mubr.f32.mxu0 0.0
      %1150 = vmatmul.mubr.f32.gmra.mxu0 %v1076
      %v1151 = vpop.f32.mrf.mxu0
      %v1152 = vadd.f32 0.0, %v1151
      %v1153 = vpop.f32.mrf.mxu0
      %1154 = vdwg.mxu0
      %v1156 = vsel %vm382, %v1147, 0
      %v1159 = vsel %vm382, %v1152, 0
      %1161 = vmatprep.subr.mxu0 0.0
      %1162 = vmatpush1.msra.mxu0 0.0
      %1163 = vmatprep.subr.mxu0 0.0
      %1164 = vmatpush1.msra.mxu0 0.0
      %1165 = vmatprep.subr.mxu0 0.0
      %1166 = vmatpush1.msra.mxu0 0.0
      %1167 = vmatprep.subr.mxu0 0.0
      %1168 = vmatpush1.msra.mxu0 0.0
      %1169 = vmatprep.subr.mxu0 0.0
      %1170 = vmatpush1.msra.mxu0 0.0
      %1171 = vmatprep.subr.mxu0 0.0
      %1172 = vmatpush1.msra.mxu0 0.0
      %1173 = vmatprep.subr.mxu0 0.0
      %1174 = vmatpush1.msra.mxu0 0.0
      %1175 = vmatprep.subr.mxu0 0.0
      %1176 = vmatpush1.msra.mxu0 0.0
      %1177 = vmatprep.subr.mxu0 0.0
      %1178 = vmatpush1.msra.mxu0 0.0
      %1179 = vmatprep.subr.mxu0 0.0
      %1180 = vmatpush1.msra.mxu0 0.0
      %1181 = vmatprep.subr.mxu0 0.0
      %1182 = vmatpush1.msra.mxu0 0.0
      %1183 = vmatprep.subr.mxu0 0.0
      %1184 = vmatpush1.msra.mxu0 0.0
      %1185 = vmatprep.subr.mxu0 0.0
      %1186 = vmatpush1.msra.mxu0 0.0
      %1187 = vmatprep.subr.mxu0 0.0
      %1188 = vmatpush1.msra.mxu0 0.0
      %1189 = vmatprep.subr.mxu0 0.0
      %1190 = vmatpush1.msra.mxu0 0.0
      %1191 = vmatprep.subr.mxu0 0.0
      %1192 = vmatpush1.msra.mxu0 %v361
      %1193 = vmatprep.subr.mxu0 0.0
      %1194 = vmatpush2.msra.mxu0 0.0
      %1195 = vmatprep.subr.mxu0 0.0
      %1196 = vmatpush2.msra.mxu0 0.0
      %1197 = vmatprep.subr.mxu0 0.0
      %1198 = vmatpush2.msra.mxu0 0.0
      %1199 = vmatprep.subr.mxu0 0.0
      %1200 = vmatpush2.msra.mxu0 0.0
      %1201 = vmatprep.subr.mxu0 0.0
      %1202 = vmatpush2.msra.mxu0 0.0
      %1203 = vmatprep.subr.mxu0 0.0
      %1204 = vmatpush2.msra.mxu0 0.0
      %1205 = vmatprep.subr.mxu0 0.0
      %1206 = vmatpush2.msra.mxu0 0.0
      %1207 = vmatprep.subr.mxu0 0.0
      %1208 = vmatpush2.msra.mxu0 0.0
      %1209 = vmatprep.subr.mxu0 0.0
      %1210 = vmatpush2.msra.mxu0 0.0
      %1211 = vmatprep.subr.mxu0 0.0
      %1212 = vmatpush2.msra.mxu0 0.0
      %1213 = vmatprep.subr.mxu0 0.0
      %1214 = vmatpush2.msra.mxu0 0.0
      %1215 = vmatprep.subr.mxu0 0.0
      %1216 = vmatpush2.msra.mxu0 0.0
      %1217 = vmatprep.subr.mxu0 0.0
      %1218 = vmatpush2.msra.mxu0 0.0
      %1219 = vmatprep.subr.mxu0 0.0
      %1220 = vmatpush2.msra.mxu0 0.0
      %1221 = vmatprep.subr.mxu0 0.0
      %1222 = vmatpush2.msra.mxu0 0.0
      %1223 = vmatprep.subr.mxu0 0.0
      %1224 = vmatpush2.msra.mxu0 0.0
      %1225 = vmatprep.mubr.f32.mxu0 0.0
      %1226 = vmatmul.mubr.f32.gmra.mxu0 %v1156
      %v1227 = vpop.f32.mrf.mxu0
      %v1228 = vadd.f32 0.0, %v1227
      %v1229 = vpop.f32.mrf.mxu0
      %1230 = vmatprep.mubr.f32.mxu0 0.0
      %1231 = vmatmul.mubr.f32.gmra.mxu0 %v1159
      %v1232 = vpop.f32.mrf.mxu0
      %v1233 = vadd.f32 0.0, %v1232
      %v1234 = vpop.f32.mrf.mxu0
      %1235 = vdwg.mxu0
      %v1236 = vadd.f32 %v942, %v1228
      %v1237 = vadd.f32 %v947, %v1233
      %1238 = vrot.lane.b32.xlu0 %v351, 104
      %v1239 = vpop.permute.xlu0 %1238
      %1240 = vrot.lane.b32.xlu0 %v356, 104
      %v1241 = vpop.permute.xlu0 %1240
      %1242 = vrot.lane.b32.xlu0 %v351, 72
      %v1243 = vpop.permute.xlu0 %1242
      %1244 = vrot.lane.b32.xlu0 %v356, 72
      %v1245 = vpop.permute.xlu0 %1244
      %v1246 = vsel %vm382, %v1239, 0
      %v1248 = vsel %vm382, %v1241, 0
      %v1250 = vsel %vm382, %v1243, 0
      %v1252 = vsel %vm382, %v1245, 0
      %1254 = vmatprep.subr.mxu0 0.0
      %1255 = vmatpush1.xpose.msra.mxu0 0.0
      %1256 = vmatprep.subr.mxu0 0.0
      %1257 = vmatpush1.xpose.msra.mxu0 0.0
      %1258 = vmatprep.subr.mxu0 0.0
      %1259 = vmatpush1.xpose.msra.mxu0 0.0
      %1260 = vmatprep.subr.mxu0 0.0
      %1261 = vmatpush1.xpose.msra.mxu0 0.0
      %1262 = vmatprep.subr.mxu0 0.0
      %1263 = vmatpush1.xpose.msra.mxu0 0.0
      %1264 = vmatprep.subr.mxu0 0.0
      %1265 = vmatpush1.xpose.msra.mxu0 0.0
      %1266 = vmatprep.subr.mxu0 0.0
      %1267 = vmatpush1.xpose.msra.mxu0 0.0
      %1268 = vmatprep.subr.mxu0 0.0
      %1269 = vmatpush1.xpose.msra.mxu0 0.0
      %1270 = vmatprep.subr.mxu0 0.0
      %1271 = vmatpush1.xpose.msra.mxu0 0.0
      %1272 = vmatprep.subr.mxu0 0.0
      %1273 = vmatpush1.xpose.msra.mxu0 0.0
      %1274 = vmatprep.subr.mxu0 0.0
      %1275 = vmatpush1.xpose.msra.mxu0 0.0
      %1276 = vmatprep.subr.mxu0 0.0
      %1277 = vmatpush1.xpose.msra.mxu0 0.0
      %1278 = vmatprep.subr.mxu0 0.0
      %1279 = vmatpush1.xpose.msra.mxu0 0.0
      %1280 = vmatprep.subr.mxu0 0.0
      %1281 = vmatpush1.xpose.msra.mxu0 0.0
      %1282 = vmatprep.subr.mxu0 0.0
      %1283 = vmatpush1.xpose.msra.mxu0 %v1252
      %1284 = vmatprep.subr.mxu0 0.0
      %1285 = vmatpush1.xpose.msra.mxu0 %v1250
      %1286 = vmatprep.subr.mxu0 0.0
      %1287 = vmatpush2.xpose.msra.mxu0 0.0
      %1288 = vmatprep.subr.mxu0 0.0
      %1289 = vmatpush2.xpose.msra.mxu0 0.0
      %1290 = vmatprep.subr.mxu0 0.0
      %1291 = vmatpush2.xpose.msra.mxu0 0.0
      %1292 = vmatprep.subr.mxu0 0.0
      %1293 = vmatpush2.xpose.msra.mxu0 0.0
      %1294 = vmatprep.subr.mxu0 0.0
      %1295 = vmatpush2.xpose.msra.mxu0 0.0
      %1296 = vmatprep.subr.mxu0 0.0
      %1297 = vmatpush2.xpose.msra.mxu0 0.0
      %1298 = vmatprep.subr.mxu0 0.0
      %1299 = vmatpush2.xpose.msra.mxu0 0.0
      %1300 = vmatprep.subr.mxu0 0.0
      %1301 = vmatpush2.xpose.msra.mxu0 0.0
      %1302 = vmatprep.subr.mxu0 0.0
      %1303 = vmatpush2.xpose.msra.mxu0 0.0
      %1304 = vmatprep.subr.mxu0 0.0
      %1305 = vmatpush2.xpose.msra.mxu0 0.0
      %1306 = vmatprep.subr.mxu0 0.0
      %1307 = vmatpush2.xpose.msra.mxu0 0.0
      %1308 = vmatprep.subr.mxu0 0.0
      %1309 = vmatpush2.xpose.msra.mxu0 0.0
      %1310 = vmatprep.subr.mxu0 0.0
      %1311 = vmatpush2.xpose.msra.mxu0 0.0
      %1312 = vmatprep.subr.mxu0 0.0
      %1313 = vmatpush2.xpose.msra.mxu0 0.0
      %1314 = vmatprep.subr.mxu0 0.0
      %1315 = vmatpush2.xpose.msra.mxu0 0.0
      %1316 = vmatprep.subr.mxu0 0.0
      %1317 = vmatpush2.xpose.msra.mxu0 0.0
      %1318 = vmatprep.mubr.f32.mxu0 0.0
      %1319 = vmatmul.mubr.f32.gmra.mxu0 %v1246
      %v1320 = vpop.f32.mrf.mxu0
      %v1321 = vadd.f32 0.0, %v1320
      %v1322 = vpop.f32.mrf.mxu0
      %1323 = vmatprep.mubr.f32.mxu0 0.0
      %1324 = vmatmul.mubr.f32.gmra.mxu0 %v1248
      %v1325 = vpop.f32.mrf.mxu0
      %v1326 = vadd.f32 0.0, %v1325
      %v1327 = vpop.f32.mrf.mxu0
      %1328 = vdwg.mxu0
      %v1329 = vmul.f32 %v1321, 0.35355338
      %v1330 = vmul.f32 %v1326, 0.35355338
      %v1331 = vsel %vm374, %v1329, -1e+30
      %v1332 = vsel %vm375, %v1330, -1e+30
      %v1333 = vsel %vm470, %v1331, -inf
      %1334 = vmax.xlane.f32.xlu0 %v1333
      %v1335 = vpop.xlane.xlu0 %1334
      %v1336 = vsel %vm474, %v1332, -inf
      %1337 = vmax.xlane.f32.xlu0 %v1336
      %v1338 = vpop.xlane.xlu0 %1337
      %v1339 = vsub.f32 %v1331, %v1335
      %v1340 = vsub.f32 %v1332, %v1338
      %v1341 = vmul.f32 %v1339, 1.442695
      %v1342 = vpow.pop %v1341
      %v1343 = vmul.f32 %v1340, 1.442695
      %v1344 = vpow.pop %v1343
      %v1345 = vsel %vm470, %v1342, 0.0
      %1346 = vadd.xlane.f32.xlu0 %v1345
      %v1347 = vpop.xlane.xlu0 %1346
      %v1348 = vsel %vm474, %v1344, 0.0
      %1349 = vadd.xlane.f32.xlu0 %v1348
      %v1350 = vpop.xlane.xlu0 %1349
      %v1351 = vrcp.pop %v1347
      %v1352 = vrcp.pop %v1350
      %v1353 = vmul.f32 %v1342, %v1351
      %v1354 = vmul.f32 %v1344, %v1352
      %1355 = vrot.lane.b32.xlu0 %v351, 40
      %v1356 = vpop.permute.xlu0 %1355
      %1357 = vrot.lane.b32.xlu0 %v356, 40
      %v1358 = vpop.permute.xlu0 %1357
      %v1361 = vsel %vm470, %v1353, 0
      %v1364 = vsel %vm470, %v1354, 0
      %v1366 = vsel %vm505, %v1358, 0
      %1368 = vmatprep.subr.mxu0 0.0
      %1369 = vmatpush1.msra.mxu0 0.0
      %1370 = vmatprep.subr.mxu0 0.0
      %1371 = vmatpush1.msra.mxu0 0.0
      %1372 = vmatprep.subr.mxu0 0.0
      %1373 = vmatpush1.msra.mxu0 0.0
      %1374 = vmatprep.subr.mxu0 0.0
      %1375 = vmatpush1.msra.mxu0 0.0
      %1376 = vmatprep.subr.mxu0 0.0
      %1377 = vmatpush1.msra.mxu0 0.0
      %1378 = vmatprep.subr.mxu0 0.0
      %1379 = vmatpush1.msra.mxu0 0.0
      %1380 = vmatprep.subr.mxu0 0.0
      %1381 = vmatpush1.msra.mxu0 0.0
      %1382 = vmatprep.subr.mxu0 0.0
      %1383 = vmatpush1.msra.mxu0 0.0
      %1384 = vmatprep.subr.mxu0 0.0
      %1385 = vmatpush1.msra.mxu0 0.0
      %1386 = vmatprep.subr.mxu0 0.0
      %1387 = vmatpush1.msra.mxu0 0.0
      %1388 = vmatprep.subr.mxu0 0.0
      %1389 = vmatpush1.msra.mxu0 0.0
      %1390 = vmatprep.subr.mxu0 0.0
      %1391 = vmatpush1.msra.mxu0 0.0
      %1392 = vmatprep.subr.mxu0 0.0
      %1393 = vmatpush1.msra.mxu0 0.0
      %1394 = vmatprep.subr.mxu0 0.0
      %1395 = vmatpush1.msra.mxu0 0.0
      %1396 = vmatprep.subr.mxu0 0.0
      %1397 = vmatpush1.msra.mxu0 %v1366
      %1398 = vmatprep.subr.mxu0 0.0
      %1399 = vmatpush1.msra.mxu0 %v1356
      %1400 = vmatprep.subr.mxu0 0.0
      %1401 = vmatpush2.msra.mxu0 0.0
      %1402 = vmatprep.subr.mxu0 0.0
      %1403 = vmatpush2.msra.mxu0 0.0
      %1404 = vmatprep.subr.mxu0 0.0
      %1405 = vmatpush2.msra.mxu0 0.0
      %1406 = vmatprep.subr.mxu0 0.0
      %1407 = vmatpush2.msra.mxu0 0.0
      %1408 = vmatprep.subr.mxu0 0.0
      %1409 = vmatpush2.msra.mxu0 0.0
      %1410 = vmatprep.subr.mxu0 0.0
      %1411 = vmatpush2.msra.mxu0 0.0
      %1412 = vmatprep.subr.mxu0 0.0
      %1413 = vmatpush2.msra.mxu0 0.0
      %1414 = vmatprep.subr.mxu0 0.0
      %1415 = vmatpush2.msra.mxu0 0.0
      %1416 = vmatprep.subr.mxu0 0.0
      %1417 = vmatpush2.msra.mxu0 0.0
      %1418 = vmatprep.subr.mxu0 0.0
      %1419 = vmatpush2.msra.mxu0 0.0
      %1420 = vmatprep.subr.mxu0 0.0
      %1421 = vmatpush2.msra.mxu0 0.0
      %1422 = vmatprep.subr.mxu0 0.0
      %1423 = vmatpush2.msra.mxu0 0.0
      %1424 = vmatprep.subr.mxu0 0.0
      %1425 = vmatpush2.msra.mxu0 0.0
      %1426 = vmatprep.subr.mxu0 0.0
      %1427 = vmatpush2.msra.mxu0 0.0
      %1428 = vmatprep.subr.mxu0 0.0
      %1429 = vmatpush2.msra.mxu0 0.0
      %1430 = vmatprep.subr.mxu0 0.0
      %1431 = vmatpush2.msra.mxu0 0.0
      %1432 = vmatprep.mubr.f32.mxu0 0.0
      %1433 = vmatmul.mubr.f32.gmra.mxu0 %v1361
      %v1434 = vpop.f32.mrf.mxu0
      %v1435 = vadd.f32 0.0, %v1434
      %v1436 = vpop.f32.mrf.mxu0
      %1437 = vmatprep.mubr.f32.mxu0 0.0
      %1438 = vmatmul.mubr.f32.gmra.mxu0 %v1364
      %v1439 = vpop.f32.mrf.mxu0
      %v1440 = vadd.f32 0.0, %v1439
      %v1441 = vpop.f32.mrf.mxu0
      %1442 = vdwg.mxu0
      %v1444 = vsel %vm382, %v1435, 0
      %v1447 = vsel %vm382, %v1440, 0
      %1449 = vmatprep.subr.mxu0 0.0
      %1450 = vmatpush1.msra.mxu0 0.0
      %1451 = vmatprep.subr.mxu0 0.0
      %1452 = vmatpush1.msra.mxu0 0.0
      %1453 = vmatprep.subr.mxu0 0.0
      %1454 = vmatpush1.msra.mxu0 0.0
      %1455 = vmatprep.subr.mxu0 0.0
      %1456 = vmatpush1.msra.mxu0 0.0
      %1457 = vmatprep.subr.mxu0 0.0
      %1458 = vmatpush1.msra.mxu0 0.0
      %1459 = vmatprep.subr.mxu0 0.0
      %1460 = vmatpush1.msra.mxu0 0.0
      %1461 = vmatprep.subr.mxu0 0.0
      %1462 = vmatpush1.msra.mxu0 0.0
      %1463 = vmatprep.subr.mxu0 0.0
      %1464 = vmatpush1.msra.mxu0 0.0
      %1465 = vmatprep.subr.mxu0 0.0
      %1466 = vmatpush1.msra.mxu0 0.0
      %1467 = vmatprep.subr.mxu0 0.0
      %1468 = vmatpush1.msra.mxu0 0.0
      %1469 = vmatprep.subr.mxu0 0.0
      %1470 = vmatpush1.msra.mxu0 0.0
      %1471 = vmatprep.subr.mxu0 0.0
      %1472 = vmatpush1.msra.mxu0 0.0
      %1473 = vmatprep.subr.mxu0 0.0
      %1474 = vmatpush1.msra.mxu0 0.0
      %1475 = vmatprep.subr.mxu0 0.0
      %1476 = vmatpush1.msra.mxu0 0.0
      %1477 = vmatprep.subr.mxu0 0.0
      %1478 = vmatpush1.msra.mxu0 0.0
      %1479 = vmatprep.subr.mxu0 0.0
      %1480 = vmatpush1.msra.mxu0 %v362
      %1481 = vmatprep.subr.mxu0 0.0
      %1482 = vmatpush2.msra.mxu0 0.0
      %1483 = vmatprep.subr.mxu0 0.0
      %1484 = vmatpush2.msra.mxu0 0.0
      %1485 = vmatprep.subr.mxu0 0.0
      %1486 = vmatpush2.msra.mxu0 0.0
      %1487 = vmatprep.subr.mxu0 0.0
      %1488 = vmatpush2.msra.mxu0 0.0
      %1489 = vmatprep.subr.mxu0 0.0
      %1490 = vmatpush2.msra.mxu0 0.0
      %1491 = vmatprep.subr.mxu0 0.0
      %1492 = vmatpush2.msra.mxu0 0.0
      %1493 = vmatprep.subr.mxu0 0.0
      %1494 = vmatpush2.msra.mxu0 0.0
      %1495 = vmatprep.subr.mxu0 0.0
      %1496 = vmatpush2.msra.mxu0 0.0
      %1497 = vmatprep.subr.mxu0 0.0
      %1498 = vmatpush2.msra.mxu0 0.0
      %1499 = vmatprep.subr.mxu0 0.0
      %1500 = vmatpush2.msra.mxu0 0.0
      %1501 = vmatprep.subr.mxu0 0.0
      %1502 = vmatpush2.msra.mxu0 0.0
      %1503 = vmatprep.subr.mxu0 0.0
      %1504 = vmatpush2.msra.mxu0 0.0
      %1505 = vmatprep.subr.mxu0 0.0
      %1506 = vmatpush2.msra.mxu0 0.0
      %1507 = vmatprep.subr.mxu0 0.0
      %1508 = vmatpush2.msra.mxu0 0.0
      %1509 = vmatprep.subr.mxu0 0.0
      %1510 = vmatpush2.msra.mxu0 0.0
      %1511 = vmatprep.subr.mxu0 0.0
      %1512 = vmatpush2.msra.mxu0 0.0
      %1513 = vmatprep.mubr.f32.mxu0 0.0
      %1514 = vmatmul.mubr.f32.gmra.mxu0 %v1444
      %v1515 = vpop.f32.mrf.mxu0
      %v1516 = vadd.f32 0.0, %v1515
      %v1517 = vpop.f32.mrf.mxu0
      %1518 = vmatprep.mubr.f32.mxu0 0.0
      %1519 = vmatmul.mubr.f32.gmra.mxu0 %v1447
      %v1520 = vpop.f32.mrf.mxu0
      %v1521 = vadd.f32 0.0, %v1520
      %v1522 = vpop.f32.mrf.mxu0
      %1523 = vdwg.mxu0
      %v1524 = vadd.f32 %v1236, %v1516
      %v1525 = vadd.f32 %v1237, %v1521
      %1526 = vst.msk [vmem:[%s224] sm:$0xff] %vm227, %v1524
      %1527 = vst.msk [vmem:[%s224 + $0x8] sm:$0xf] %vm231, %v1525
      %p1528 = scmp.lt.s32.totalorder %s16, 1
      %s1529 = scalar_select %p1528, %s16, 1
      %s1530 = smul.addr %s1529, 2
      %s1531 = smul.addr %s1530, 8
      %s1532 = scalar_lea.vmem %s5, %s1531
      // Predicated region
      $region41: #{mixture_forward.2} parent=39 // pred_check
        %p1533 = pneg %p144
      $region42: #{mixture_forward.2} parent=39 // pred_check_branch
        %1535 = sbr.rel (%p1533) target = $region44
      $region43: #{mixture_forward.2} parent=39 // pred_region
        _
      $region44: #{mixture_forward.2} parent=39 // pred_fallthru
        _
    $region40: #{mixture_forward.2} parent=5 // pred_fallthru
      _
    %p1536 = scmp.le.s32.totalorder 2, %s11
    // Predicated region
    $region45: #{mixture_forward.2} parent=5 // pred_check
      %p1537 = pneg %p1536
    $region46: #{mixture_forward.2} parent=5 // pred_check_branch
      %1539 = sbr.rel (%p1537) target = $region48
    $region47: #{mixture_forward.2} parent=5 // pred_region
      %s1540 = ssub.s32 %s11, 2
      // Predicated region
      $region49: #{mixture_forward.2} parent=47 // pred_check
        %p1541 = pneg %p150
      $region50: #{mixture_forward.2} parent=47 // pred_check_branch
        %1543 = sbr.rel (%p1541) target = $region52
      $region51: #{mixture_forward.2} parent=47 // pred_region
        %p1544 = scmp.lt.s32.totalorder %s17, 1
        %s1545 = scalar_select %p1544, %s17, 1
        %s1546 = smul.addr %s1545, 2
        %s1547 = smul.addr %s1546, 8
        %s1548 = scalar_lea.vmem %s5, %s1547
      $region52: #{mixture_forward.2} parent=47 // pred_fallthru
        _
    $region48: #{mixture_forward.2} parent=5 // pred_fallthru
      _
  $region6: #{mixture_forward.2} parent=0 // loop_footer
    %s15 = sadd.s32 1, %s11
  $region7: #{mixture_forward.2} parent=0 // loop_footer_branch
    %10 = sbr.rel target = $region3
  $region8: #{mixture_forward.2} parent=0 // loop_exit
    _

// kernel: mixture_forward.3
$region0: #{mixture_forward.3}
  #allocation0 [shape = 'u32[]', space=smem, size = 0x4, offset = 0x4, fixed_abs, tag = 'smem constant byte address 0x4 - core index']
  #allocation1 [shape = 'u32[144,128]{1,0:T(1,128)}', space=vmem, size = 0x12000, scoped, tag = 'internal scratch']
  %s0 = inlined_call_operand.vmem [shape: f32[4,2,2,32], index: 0, kind: input, shape index: {}]
  %s1 = inlined_call_operand.vmem [shape: f32[4,2,3,32], index: 1, kind: input, shape index: {}]
  %s2 = inlined_call_operand.vmem [shape: f32[4,2,1,3], index: 2, kind: input, shape index: {}]
  %s3 = inlined_call_operand.vmem [shape: f32[4,2,3,1], index: 3, kind: input, shape index: {}]
  %s4 = inlined_call_operand.vmem [shape: f32[4,2,2,1], index: 4, kind: input, shape index: {}]
  %s5 = inlined_call_operand.vmem [shape: f32[2,32], index: 5, kind: input, shape index: {}]
  %s6 = inlined_call_operand.vmem [shape: f32[2,32], index: 6, kind: input, shape index: {}]
  %s7 = inlined_call_operand.vmem [shape: f32[2,32,32], index: 7, kind: input, shape index: {}]
  %s8 = inlined_call_operand.vmem [shape: f32[2,32,64], index: 8, kind: input, shape index: {}]
  %s9 = inlined_call_operand.vmem [shape: f32[2,32,32], index: 9, kind: input, shape index: {}]
  %s10 = inlined_call_operand.vmem [shape: f32[2,32], index: 10, kind: input, shape index: {}]
  %s11 = inlined_call_operand.vmem [shape: f32[2,32], index: 11, kind: input, shape index: {}]
  %s12 = inlined_call_operand.vmem [shape: f32[4,2,2,32], index: 12, kind: output, shape index: {}]
  %s13 = sld [smem:[#allocation0]]
  $region81: #{mixture_forward.3} parent=0
    _
  %s15 = ssub.s32 1, %s13
  %s16 = scalar_select 0, %s15, %s13
  loop: start=0, step=1, limit=4
  $region2: #{mixture_forward.3} parent=0 // loop_pre_header
    _
  $region3: #{mixture_forward.3} parent=0 // loop_header
    %s18 = sphi 0, %s22
    %p19 = scmp.ge.s32.totalorder %s18, 4
    %s28 = sphi 0, %s30
    %s31 = sphi 0, %s28
    %s32 = sphi 0, %s31
    %s48 = sphi 0, %s32
    %s54 = sphi 0, %s56
    %s57 = sphi 0, %s54
    %s58 = sphi 0, %s57
    %s74 = sphi 0, %s58
    %s80 = sphi 0, %s82
    %s83 = sphi 0, %s80
    %s84 = sphi 0, %s83
    %s100 = sphi 0, %s84
    %s106 = sphi 0, %s108
    %s109 = sphi 0, %s106
    %s110 = sphi 0, %s109
    %s126 = sphi 0, %s110
    %s132 = sphi 0, %s134
    %s135 = sphi 0, %s132
    %s136 = sphi 0, %s135
    %s152 = sphi 0, %s136
    %s156 = sphi 0, %s156
    %s158 = sphi 0, %s156
    %s159 = sphi 0, %s158
    %s173 = sphi 0, %s159
    %s177 = sphi 0, %s177
    %s179 = sphi 0, %s177
    %s180 = sphi 0, %s179
    %s194 = sphi 0, %s180
    %s198 = sphi 0, %s198
    %s200 = sphi 0, %s198
    %s201 = sphi 0, %s200
    %s215 = sphi 0, %s201
    %s219 = sphi 0, %s219
    %s221 = sphi 0, %s219
    %s222 = sphi 0, %s221
    %s236 = sphi 0, %s222
    %s240 = sphi 0, %s240
    %s242 = sphi 0, %s240
    %s243 = sphi 0, %s242
    %s257 = sphi 0, %s243
    %s261 = sphi 0, %s261
    %s263 = sphi 0, %s261
    %s264 = sphi 0, %s263
    %s278 = sphi 0, %s264
    %s282 = sphi 0, %s282
    %s284 = sphi 0, %s282
    %s285 = sphi 0, %s284
    %s299 = sphi 0, %s285
    %s305 = sphi 0, %s307
    %s308 = sphi 0, %s305
    %s309 = sphi 0, %s308
    %s325 = sphi 0, %s309
  $region4: #{mixture_forward.3} parent=0 // loop_header_branch
    %21 = sbr.rel (%p19) target = $region8
  $region5: #{mixture_forward.3} parent=0 // loop_body
    %s23 = ssub.s32 %s18, 1
    %s24 = ssub.s32 %s18, 2
    %s25 = sadd.s32 %s18, 1
    %s26 = ssub.s32 %s18, %s25
    %p27 = scmp.eq.s32.totalorder %s26, 0
    %s29 = sadd.s32 %s28, 1
    %s30 = scalar_select %p27, %s28, %s29
    %p33 = pneg %p27
    %p34 = scmp.eq.s32.totalorder %s18, 1
    %p35 = por %p33, %p34
    %p36 = scmp.ne.s32.totalorder %s28, %s31
    %p37 = scmp.eq.s32.totalorder %s18, 0
    %p38 = por %p36, %p37
    %p39 = scmp.ne.s32.totalorder %s28, %s31
    %p40 = scmp.eq.s32.totalorder %s23, 1
    %p41 = por %p39, %p40
    %p42 = scmp.ne.s32.totalorder %s31, %s32
    %p43 = scmp.eq.s32.totalorder %s23, 0
    %p44 = por %p42, %p43
    %p45 = scmp.ne.s32.totalorder %s31, %s32
    %p46 = scmp.eq.s32.totalorder %s24, 1
    %p47 = por %p45, %p46
    %p49 = scmp.ne.s32.totalorder %s32, %s48
    %p50 = scmp.eq.s32.totalorder %s24, 0
    %p51 = por %p49, %p50
    %s52 = ssub.s32 %s18, %s25
    %p53 = scmp.eq.s32.totalorder %s52, 0
    %s55 = sadd.s32 %s54, 1
    %s56 = scalar_select %p53, %s54, %s55
    %p59 = pneg %p53
    %p60 = scmp.eq.s32.totalorder %s18, 1
    %p61 = por %p59, %p60
    %p62 = scmp.ne.s32.totalorder %s54, %s57
    %p63 = scmp.eq.s32.totalorder %s18, 0
    %p64 = por %p62, %p63
    %p65 = scmp.ne.s32.totalorder %s54, %s57
    %p66 = scmp.eq.s32.totalorder %s23, 1
    %p67 = por %p65, %p66
    %p68 = scmp.ne.s32.totalorder %s57, %s58
    %p69 = scmp.eq.s32.totalorder %s23, 0
    %p70 = por %p68, %p69
    %p71 = scmp.ne.s32.totalorder %s57, %s58
    %p72 = scmp.eq.s32.totalorder %s24, 1
    %p73 = por %p71, %p72
    %p75 = scmp.ne.s32.totalorder %s58, %s74
    %p76 = scmp.eq.s32.totalorder %s24, 0
    %p77 = por %p75, %p76
    %s78 = ssub.s32 %s18, %s25
    %p79 = scmp.eq.s32.totalorder %s78, 0
    %s81 = sadd.s32 %s80, 1
    %s82 = scalar_select %p79, %s80, %s81
    %p85 = pneg %p79
    %p86 = scmp.eq.s32.totalorder %s18, 1
    %p87 = por %p85, %p86
    %p88 = scmp.ne.s32.totalorder %s80, %s83
    %p89 = scmp.eq.s32.totalorder %s18, 0
    %p90 = por %p88, %p89
    %p91 = scmp.ne.s32.totalorder %s80, %s83
    %p92 = scmp.eq.s32.totalorder %s23, 1
    %p93 = por %p91, %p92
    %p94 = scmp.ne.s32.totalorder %s83, %s84
    %p95 = scmp.eq.s32.totalorder %s23, 0
    %p96 = por %p94, %p95
    %p97 = scmp.ne.s32.totalorder %s83, %s84
    %p98 = scmp.eq.s32.totalorder %s24, 1
    %p99 = por %p97, %p98
    %p101 = scmp.ne.s32.totalorder %s84, %s100
    %p102 = scmp.eq.s32.totalorder %s24, 0
    %p103 = por %p101, %p102
    %s104 = ssub.s32 %s18, %s25
    %p105 = scmp.eq.s32.totalorder %s104, 0
    %s107 = sadd.s32 %s106, 1
    %s108 = scalar_select %p105, %s106, %s107
    %p111 = pneg %p105
    %p112 = scmp.eq.s32.totalorder %s18, 1
    %p113 = por %p111, %p112
    %p114 = scmp.ne.s32.totalorder %s106, %s109
    %p115 = scmp.eq.s32.totalorder %s18, 0
    %p116 = por %p114, %p115
    %p117 = scmp.ne.s32.totalorder %s106, %s109
    %p118 = scmp.eq.s32.totalorder %s23, 1
    %p119 = por %p117, %p118
    %p120 = scmp.ne.s32.totalorder %s109, %s110
    %p121 = scmp.eq.s32.totalorder %s23, 0
    %p122 = por %p120, %p121
    %p123 = scmp.ne.s32.totalorder %s109, %s110
    %p124 = scmp.eq.s32.totalorder %s24, 1
    %p125 = por %p123, %p124
    %p127 = scmp.ne.s32.totalorder %s110, %s126
    %p128 = scmp.eq.s32.totalorder %s24, 0
    %p129 = por %p127, %p128
    %s130 = ssub.s32 %s18, %s25
    %p131 = scmp.eq.s32.totalorder %s130, 0
    %s133 = sadd.s32 %s132, 1
    %s134 = scalar_select %p131, %s132, %s133
    %p137 = pneg %p131
    %p138 = scmp.eq.s32.totalorder %s18, 1
    %p139 = por %p137, %p138
    %p140 = scmp.ne.s32.totalorder %s132, %s135
    %p141 = scmp.eq.s32.totalorder %s18, 0
    %p142 = por %p140, %p141
    %p143 = scmp.ne.s32.totalorder %s132, %s135
    %p144 = scmp.eq.s32.totalorder %s23, 1
    %p145 = por %p143, %p144
    %p146 = scmp.ne.s32.totalorder %s135, %s136
    %p147 = scmp.eq.s32.totalorder %s23, 0
    %p148 = por %p146, %p147
    %p149 = scmp.ne.s32.totalorder %s135, %s136
    %p150 = scmp.eq.s32.totalorder %s24, 1
    %p151 = por %p149, %p150
    %p153 = scmp.ne.s32.totalorder %s136, %s152
    %p154 = scmp.eq.s32.totalorder %s24, 0
    %p155 = por %p153, %p154
    %s157 = sadd.s32 %s156, 1
    %p160 = scmp.eq.s32.totalorder %s18, 1
    %p161 = scmp.ne.s32.totalorder %s156, %s158
    %p162 = scmp.eq.s32.totalorder %s18, 0
    %p163 = por %p161, %p162
    %p164 = scmp.ne.s32.totalorder %s156, %s158
    %p165 = scmp.eq.s32.totalorder %s23, 1
    %p166 = por %p164, %p165
    %p167 = scmp.ne.s32.totalorder %s158, %s159
    %p168 = scmp.eq.s32.totalorder %s23, 0
    %p169 = por %p167, %p168
    %p170 = scmp.ne.s32.totalorder %s158, %s159
    %p171 = scmp.eq.s32.totalorder %s24, 1
    %p172 = por %p170, %p171
    %p174 = scmp.ne.s32.totalorder %s159, %s173
    %p175 = scmp.eq.s32.totalorder %s24, 0
    %p176 = por %p174, %p175
    %s178 = sadd.s32 %s177, 1
    %p181 = scmp.eq.s32.totalorder %s18, 1
    %p182 = scmp.ne.s32.totalorder %s177, %s179
    %p183 = scmp.eq.s32.totalorder %s18, 0
    %p184 = por %p182, %p183
    %p185 = scmp.ne.s32.totalorder %s177, %s179
    %p186 = scmp.eq.s32.totalorder %s23, 1
    %p187 = por %p185, %p186
    %p188 = scmp.ne.s32.totalorder %s179, %s180
    %p189 = scmp.eq.s32.totalorder %s23, 0
    %p190 = por %p188, %p189
    %p191 = scmp.ne.s32.totalorder %s179, %s180
    %p192 = scmp.eq.s32.totalorder %s24, 1
    %p193 = por %p191, %p192
    %p195 = scmp.ne.s32.totalorder %s180, %s194
    %p196 = scmp.eq.s32.totalorder %s24, 0
    %p197 = por %p195, %p196
    %s199 = sadd.s32 %s198, 1
    %p202 = scmp.eq.s32.totalorder %s18, 1
    %p203 = scmp.ne.s32.totalorder %s198, %s200
    %p204 = scmp.eq.s32.totalorder %s18, 0
    %p205 = por %p203, %p204
    %p206 = scmp.ne.s32.totalorder %s198, %s200
    %p207 = scmp.eq.s32.totalorder %s23, 1
    %p208 = por %p206, %p207
    %p209 = scmp.ne.s32.totalorder %s200, %s201
    %p210 = scmp.eq.s32.totalorder %s23, 0
    %p211 = por %p209, %p210
    %p212 = scmp.ne.s32.totalorder %s200, %s201
    %p213 = scmp.eq.s32.totalorder %s24, 1
    %p214 = por %p212, %p213
    %p216 = scmp.ne.s32.totalorder %s201, %s215
    %p217 = scmp.eq.s32.totalorder %s24, 0
    %p218 = por %p216, %p217
    %s220 = sadd.s32 %s219, 1
    %p223 = scmp.eq.s32.totalorder %s18, 1
    %p224 = scmp.ne.s32.totalorder %s219, %s221
    %p225 = scmp.eq.s32.totalorder %s18, 0
    %p226 = por %p224, %p225
    %p227 = scmp.ne.s32.totalorder %s219, %s221
    %p228 = scmp.eq.s32.totalorder %s23, 1
    %p229 = por %p227, %p228
    %p230 = scmp.ne.s32.totalorder %s221, %s222
    %p231 = scmp.eq.s32.totalorder %s23, 0
    %p232 = por %p230, %p231
    %p233 = scmp.ne.s32.totalorder %s221, %s222
    %p234 = scmp.eq.s32.totalorder %s24, 1
    %p235 = por %p233, %p234
    %p237 = scmp.ne.s32.totalorder %s222, %s236
    %p238 = scmp.eq.s32.totalorder %s24, 0
    %p239 = por %p237, %p238
    %s241 = sadd.s32 %s240, 1
    %p244 = scmp.eq.s32.totalorder %s18, 1
    %p245 = scmp.ne.s32.totalorder %s240, %s242
    %p246 = scmp.eq.s32.totalorder %s18, 0
    %p247 = por %p245, %p246
    %p248 = scmp.ne.s32.totalorder %s240, %s242
    %p249 = scmp.eq.s32.totalorder %s23, 1
    %p250 = por %p248, %p249
    %p251 = scmp.ne.s32.totalorder %s242, %s243
    %p252 = scmp.eq.s32.totalorder %s23, 0
    %p253 = por %p251, %p252
    %p254 = scmp.ne.s32.totalorder %s242, %s243
    %p255 = scmp.eq.s32.totalorder %s24, 1
    %p256 = por %p254, %p255
    %p258 = scmp.ne.s32.totalorder %s243, %s257
    %p259 = scmp.eq.s32.totalorder %s24, 0
    %p260 = por %p258, %p259
    %s262 = sadd.s32 %s261, 1
    %p265 = scmp.eq.s32.totalorder %s18, 1
    %p266 = scmp.ne.s32.totalorder %s261, %s263
    %p267 = scmp.eq.s32.totalorder %s18, 0
    %p268 = por %p266, %p267
    %p269 = scmp.ne.s32.totalorder %s261, %s263
    %p270 = scmp.eq.s32.totalorder %s23, 1
    %p271 = por %p269, %p270
    %p272 = scmp.ne.s32.totalorder %s263, %s264
    %p273 = scmp.eq.s32.totalorder %s23, 0
    %p274 = por %p272, %p273
    %p275 = scmp.ne.s32.totalorder %s263, %s264
    %p276 = scmp.eq.s32.totalorder %s24, 1
    %p277 = por %p275, %p276
    %p279 = scmp.ne.s32.totalorder %s264, %s278
    %p280 = scmp.eq.s32.totalorder %s24, 0
    %p281 = por %p279, %p280
    %s283 = sadd.s32 %s282, 1
    %p286 = scmp.eq.s32.totalorder %s18, 1
    %p287 = scmp.ne.s32.totalorder %s282, %s284
    %p288 = scmp.eq.s32.totalorder %s18, 0
    %p289 = por %p287, %p288
    %p290 = scmp.ne.s32.totalorder %s282, %s284
    %p291 = scmp.eq.s32.totalorder %s23, 1
    %p292 = por %p290, %p291
    %p293 = scmp.ne.s32.totalorder %s284, %s285
    %p294 = scmp.eq.s32.totalorder %s23, 0
    %p295 = por %p293, %p294
    %p296 = scmp.ne.s32.totalorder %s284, %s285
    %p297 = scmp.eq.s32.totalorder %s24, 1
    %p298 = por %p296, %p297
    %p300 = scmp.ne.s32.totalorder %s285, %s299
    %p301 = scmp.eq.s32.totalorder %s24, 0
    %p302 = por %p300, %p301
    %s303 = ssub.s32 %s18, %s25
    %p304 = scmp.eq.s32.totalorder %s303, 0
    %s306 = sadd.s32 %s305, 1
    %s307 = scalar_select %p304, %s305, %s306
    %p310 = pneg %p304
    %p311 = scmp.eq.s32.totalorder %s18, 1
    %p312 = por %p310, %p311
    %p313 = scmp.ne.s32.totalorder %s305, %s308
    %p314 = scmp.eq.s32.totalorder %s18, 0
    %p315 = por %p313, %p314
    %p316 = scmp.ne.s32.totalorder %s305, %s308
    %p317 = scmp.eq.s32.totalorder %s23, 1
    %p318 = por %p316, %p317
    %p319 = scmp.ne.s32.totalorder %s308, %s309
    %p320 = scmp.eq.s32.totalorder %s23, 0
    %p321 = por %p319, %p320
    %p322 = scmp.ne.s32.totalorder %s308, %s309
    %p323 = scmp.eq.s32.totalorder %s24, 1
    %p324 = por %p322, %p323
    %p326 = scmp.ne.s32.totalorder %s309, %s325
    %p327 = scmp.eq.s32.totalorder %s24, 0
    %p328 = por %p326, %p327
    %p329 = scmp.le.s32.totalorder 1, %s18
    %p330 = scmp.lt.s32.totalorder %s18, 3
    %p331 = pnand %p329, %p330
    %p332 = pneg %p331
    // Predicated region
    $region9: #{mixture_forward.3} parent=5 // pred_check
      _
    $region10: #{mixture_forward.3} parent=5 // pred_check_branch
      %334 = sbr.rel (%p331) target = $region12
    $region11: #{mixture_forward.3} parent=5 // pred_region
      %s335 = ssub.s32 %s18, 1
      // Predicated region
      $region13: #{mixture_forward.3} parent=11 // pred_check
        %p336 = pneg %p169
      $region14: #{mixture_forward.3} parent=11 // pred_check_branch
        %338 = sbr.rel (%p336) target = $region16
      $region15: #{mixture_forward.3} parent=11 // pred_region
        _
      $region16: #{mixture_forward.3} parent=11 // pred_fallthru
        _
      // Predicated region
      $region17: #{mixture_forward.3} parent=11 // pred_check
        %p339 = pneg %p190
      $region18: #{mixture_forward.3} parent=11 // pred_check_branch
        %341 = sbr.rel (%p339) target = $region20
      $region19: #{mixture_forward.3} parent=11 // pred_region
        _
      $region20: #{mixture_forward.3} parent=11 // pred_fallthru
        _
      // Predicated region
      $region21: #{mixture_forward.3} parent=11 // pred_check
        %p342 = pneg %p211
      $region22: #{mixture_forward.3} parent=11 // pred_check_branch
        %344 = sbr.rel (%p342) target = $region24
      $region23: #{mixture_forward.3} parent=11 // pred_region
        _
      $region24: #{mixture_forward.3} parent=11 // pred_fallthru
        _
      // Predicated region
      $region25: #{mixture_forward.3} parent=11 // pred_check
        %p345 = pneg %p232
      $region26: #{mixture_forward.3} parent=11 // pred_check_branch
        %347 = sbr.rel (%p345) target = $region28
      $region27: #{mixture_forward.3} parent=11 // pred_region
        _
      $region28: #{mixture_forward.3} parent=11 // pred_fallthru
        _
      // Predicated region
      $region29: #{mixture_forward.3} parent=11 // pred_check
        %p348 = pneg %p253
      $region30: #{mixture_forward.3} parent=11 // pred_check_branch
        %350 = sbr.rel (%p348) target = $region32
      $region31: #{mixture_forward.3} parent=11 // pred_region
        _
      $region32: #{mixture_forward.3} parent=11 // pred_fallthru
        _
      // Predicated region
      $region33: #{mixture_forward.3} parent=11 // pred_check
        %p351 = pneg %p274
      $region34: #{mixture_forward.3} parent=11 // pred_check_branch
        %353 = sbr.rel (%p351) target = $region36
      $region35: #{mixture_forward.3} parent=11 // pred_region
        _
      $region36: #{mixture_forward.3} parent=11 // pred_fallthru
        _
      // Predicated region
      $region37: #{mixture_forward.3} parent=11 // pred_check
        %p354 = pneg %p295
      $region38: #{mixture_forward.3} parent=11 // pred_check_branch
        %356 = sbr.rel (%p354) target = $region40
      $region39: #{mixture_forward.3} parent=11 // pred_region
        _
      $region40: #{mixture_forward.3} parent=11 // pred_fallthru
        _
    $region12: #{mixture_forward.3} parent=5 // pred_fallthru
      _
    %p357 = scmp.lt.s32.totalorder %s18, 2
    // Predicated region
    $region41: #{mixture_forward.3} parent=5 // pred_check
      %p358 = pneg %p357
    $region42: #{mixture_forward.3} parent=5 // pred_check_branch
      %360 = sbr.rel (%p358) target = $region44
    $region43: #{mixture_forward.3} parent=5 // pred_region
      // Predicated region
      $region45: #{mixture_forward.3} parent=43 // pred_check
        %p361 = pneg %p38
      $region46: #{mixture_forward.3} parent=43 // pred_check_branch
        %363 = sbr.rel (%p361) target = $region48
      $region47: #{mixture_forward.3} parent=43 // pred_region
        %s364 = smul.u32 2, %s18
        %p365 = scmp.lt.s32.totalorder %s364, 3
        %s366 = scalar_select %p365, %s364, 3
        %s367 = smul.addr %s366, 2
        %s368 = smul.addr %s367, 2
        %s369 = scalar_lea.vmem %s0, %s368
        %s370 = smul.u32 2, %s18
      $region48: #{mixture_forward.3} parent=43 // pred_fallthru
        _
      // Predicated region
      $region49: #{mixture_forward.3} parent=43 // pred_check
        %p371 = pneg %p64
      $region50: #{mixture_forward.3} parent=43 // pred_check_branch
        %373 = sbr.rel (%p371) target = $region52
      $region51: #{mixture_forward.3} parent=43 // pred_region
        %s374 = smul.u32 2, %s18
        %p375 = scmp.lt.s32.totalorder %s374, 3
        %s376 = scalar_select %p375, %s374, 3
        %s377 = smul.addr %s376, 2
        %s378 = smul.addr %s377, 4
        %s379 = scalar_lea.vmem %s1, %s378
        %s380 = smul.u32 2, %s18
      $region52: #{mixture_forward.3} parent=43 // pred_fallthru
        _
      // Predicated region
      $region53: #{mixture_forward.3} parent=43 // pred_check
        %p381 = pneg %p90
      $region54: #{mixture_forward.3} parent=43 // pred_check_branch
        %383 = sbr.rel (%p381) target = $region56
      $region55: #{mixture_forward.3} parent=43 // pred_region
        %s384 = smul.u32 2, %s18
        %p385 = scmp.lt.s32.totalorder %s384, 3
        %s386 = scalar_select %p385, %s384, 3
        %s387 = smul.addr %s386, 2
        %s388 = scalar_lea.vmem %s2, %s387
        %s389 = smul.u32 2, %s18
      $region56: #{mixture_forward.3} parent=43 // pred_fallthru
        _
      // Predicated region
      $region57: #{mixture_forward.3} parent=43 // pred_check
        %p390 = pneg %p116
      $region58: #{mixture_forward.3} parent=43 // pred_check_branch
        %392 = sbr.rel (%p390) target = $region60
      $region59: #{mixture_forward.3} parent=43 // pred_region
        %s393 = smul.u32 2, %s18
        %p394 = scmp.lt.s32.totalorder %s393, 3
        %s395 = scalar_select %p394, %s393, 3
        %s396 = smul.addr %s395, 2
        %s397 = smul.addr %s396, 4
        %s398 = scalar_lea.vmem %s3, %s397
        %s399 = smul.u32 2, %s18
      $region60: #{mixture_forward.3} parent=43 // pred_fallthru
        _
      // Predicated region
      $region61: #{mixture_forward.3} parent=43 // pred_check
        %p400 = pneg %p142
      $region62: #{mixture_forward.3} parent=43 // pred_check_branch
        %402 = sbr.rel (%p400) target = $region64
      $region63: #{mixture_forward.3} parent=43 // pred_region
        %s403 = smul.u32 2, %s18
        %p404 = scmp.lt.s32.totalorder %s403, 3
        %s405 = scalar_select %p404, %s403, 3
        %s406 = smul.addr %s405, 2
        %s407 = smul.addr %s406, 2
        %s408 = scalar_lea.vmem %s4, %s407
        %s409 = smul.u32 2, %s18
      $region64: #{mixture_forward.3} parent=43 // pred_fallthru
        _
    $region44: #{mixture_forward.3} parent=5 // pred_fallthru
      _
    %p410 = scmp.le.s32.totalorder 1, %s18
    %p411 = scmp.lt.s32.totalorder %s18, 3
    %p412 = pnand %p410, %p411
    %p413 = pneg %p412
    // Predicated region
    $region65: #{mixture_forward.3} parent=5 // pred_check
      _
    $region66: #{mixture_forward.3} parent=5 // pred_check_branch
      %415 = sbr.rel (%p412) target = $region68
    $region67: #{mixture_forward.3} parent=5 // pred_region
      %s416 = ssub.s32 %s18, 1
      %s417 = smul.u32 2, %s23
      %p418 = scmp.lt.s32.totalorder %s417, 3
      %s419 = scalar_select %p418, %s417, 3
      %s420 = smul.addr %s419, 2
      %s421 = smul.addr %s420, 2
      %s422 = scalar_lea.vmem %s0, %s421
      %p423 = pneg %p44
      %p424 = pneg %p41
      %s425 = smul.u32 2, %s23
      %p426 = scmp.lt.s32.totalorder %s425, 3
      %s427 = scalar_select %p426, %s425, 3
      %s428 = smul.addr %s427, 2
      %s429 = smul.addr %s428, 4
      %s430 = scalar_lea.vmem %s1, %s429
      %p431 = pneg %p70
      %p432 = pneg %p67
      %s433 = smul.u32 2, %s23
      %p434 = scmp.lt.s32.totalorder %s433, 3
      %s435 = scalar_select %p434, %s433, 3
      %s436 = smul.addr %s435, 2
      %s437 = scalar_lea.vmem %s2, %s436
      %p438 = pneg %p96
      %p439 = pneg %p93
      %s440 = smul.u32 2, %s23
      %p441 = scmp.lt.s32.totalorder %s440, 3
      %s442 = scalar_select %p441, %s440, 3
      %s443 = smul.addr %s442, 2
      %s444 = smul.addr %s443, 4
      %s445 = scalar_lea.vmem %s3, %s444
      %p446 = pneg %p122
      %p447 = pneg %p119
      %s448 = smul.u32 2, %s23
      %p449 = scmp.lt.s32.totalorder %s448, 3
      %s450 = scalar_select %p449, %s448, 3
      %s451 = smul.addr %s450, 2
      %s452 = smul.addr %s451, 2
      %s453 = scalar_lea.vmem %s4, %s452
      %p454 = pneg %p148
      %p455 = pneg %p145
      %p456 = pneg %p169
      %p457 = pneg %p166
      %p458 = pneg %p190
      %p459 = pneg %p187
      %p460 = pneg %p211
      %p461 = pneg %p208
      %p462 = pneg %p232
      %p463 = pneg %p229
      %p464 = pneg %p253
      %p465 = pneg %p250
      %p466 = pneg %p274
      %p467 = pneg %p271
      %p468 = pneg %p295
      %p469 = pneg %p292
      %p470 = pneg %p321
      %p471 = pneg %p318
      %s472 = smul.u32 2, %s23
      %p473 = scmp.lt.s32.totalorder %s472, 3
      %s474 = scalar_select %p473, %s472, 3
      %s475 = smul.addr %s474, 2
      %s476 = smul.addr %s475, 2
      %s477 = scalar_lea.vmem %s12, %s476
      %s478 = smul.u32 2, %s23
      %p479 = scmp.lt.s32.totalorder %s478, 3
      %s480 = scalar_select %p479, %s478, 3
      %s481 = smul.addr %s480, 2
      %s482 = smul.addr %s481, 2
      %s483 = scalar_lea.vmem %s0, %s482
      %s484 = smul.u32 2, %s23
      %s485 = smul.u32 2, %s23
      %p486 = scmp.lt.s32.totalorder %s485, 3
      %s487 = scalar_select %p486, %s485, 3
      %s488 = smul.addr %s487, 2
      %s489 = smul.addr %s488, 4
      %s490 = scalar_lea.vmem %s1, %s489
      %s491 = smul.u32 2, %s23
      %s492 = smul.u32 2, %s23
      %p493 = scmp.lt.s32.totalorder %s492, 3
      %s494 = scalar_select %p493, %s492, 3
      %s495 = smul.addr %s494, 2
      %s496 = scalar_lea.vmem %s2, %s495
      %s497 = smul.u32 2, %s23
      %s498 = smul.u32 2, %s23
      %p499 = scmp.lt.s32.totalorder %s498, 3
      %s500 = scalar_select %p499, %s498, 3
      %s501 = smul.addr %s500, 2
      %s502 = smul.addr %s501, 4
      %s503 = scalar_lea.vmem %s3, %s502
      %s504 = smul.u32 2, %s23
      %s505 = smul.u32 2, %s23
      %p506 = scmp.lt.s32.totalorder %s505, 3
      %s507 = scalar_select %p506, %s505, 3
      %s508 = smul.addr %s507, 2
      %s509 = smul.addr %s508, 2
      %s510 = scalar_lea.vmem %s4, %s509
      %s511 = smul.u32 2, %s23
      %s512 = smul.u32 2, %s23
      %p513 = scmp.lt.s32.totalorder %s512, 3
      %s514 = scalar_select %p513, %s512, 3
      %s515 = smul.addr %s514, 2
      %s516 = smul.addr %s515, 2
      %s517 = scalar_lea.vmem %s12, %s516
      %s518 = smul.u32 2, %s23
      %v519 = vld [vmem:[%s5] sm:$0x3]
      %v520 = vld [vmem:[%s6] sm:$0x3]
      %v521 = vld [vmem:[%s10] sm:$0x3]
      %v522 = vld [vmem:[%s11] sm:$0x3]
      %v523 = vld [vmem:[%s490] sm:$0x7]
      %v524 = vmul.f32 %v523, %v523
      %vm525 = vcmask 256000
      %v526 = vsel %vm525, %v524, 0.0
      %527 = vadd.xlane.f32.xlu0 %v526
      %v528 = vpop.xlane.xlu0 %527
      %v529 = vrsqrt.pop %v528
      %v530 = vmul.f32 %v528, %v529
      %vm531 = vcmp.eq.f32.partialorder %v528, inf
      %v532 = vsel %vm531, %v528, %v530
      %vm533 = vcmp.eq.f32.partialorder %v528, 0.0
      %v534 = vand.u32 %v528, 2147483648
      %v535 = vsel %vm533, %v534, %v532
      %v536 = vmax.f32 %v535, 1e-12
      %v537 = vrcp.pop %v536
      %v538 = vmul.f32 %v523, %v537
      %v539 = vmul.f32 %v538, 5.656854
      %v540 = vlaneseq
      %v541 = vshrl.u32 %v540, 7
      %v542 = vsub.s32 0, %v541
      %v543 = vrot.slane %v520, %v542
      %v544 = vmul.f32 %v539, %v543
      %v545 = vld [vmem:[%s8] sm:$0xff]
      %v546 = vld [vmem:[%s8 + $0x8] sm:$0xff]
      %v547 = vld [vmem:[%s8 + $0x10] sm:$0xff]
      %v548 = vld [vmem:[%s8 + $0x18] sm:$0xff]
      %vm549 = vcmask 261120
      %v551 = vsel %vm549, %v544, 0
      %553 = vmatprep.subr.mxu0 0.0
      %554 = vmatpush1.msra.mxu0 0.0
      %555 = vmatprep.subr.mxu0 0.0
      %556 = vmatpush1.msra.mxu0 0.0
      %557 = vmatprep.subr.mxu0 0.0
      %558 = vmatpush1.msra.mxu0 0.0
      %559 = vmatprep.subr.mxu0 0.0
      %560 = vmatpush1.msra.mxu0 0.0
      %561 = vmatprep.subr.mxu0 0.0
      %562 = vmatpush1.msra.mxu0 0.0
      %563 = vmatprep.subr.mxu0 0.0
      %564 = vmatpush1.msra.mxu0 0.0
      %565 = vmatprep.subr.mxu0 0.0
      %566 = vmatpush1.msra.mxu0 0.0
      %567 = vmatprep.subr.mxu0 0.0
      %568 = vmatpush1.msra.mxu0 0.0
      %569 = vmatprep.subr.mxu0 0.0
      %570 = vmatpush1.msra.mxu0 0.0
      %571 = vmatprep.subr.mxu0 0.0
      %572 = vmatpush1.msra.mxu0 0.0
      %573 = vmatprep.subr.mxu0 0.0
      %574 = vmatpush1.msra.mxu0 0.0
      %575 = vmatprep.subr.mxu0 0.0
      %576 = vmatpush1.msra.mxu0 0.0
      %577 = vmatprep.subr.mxu0 0.0
      %578 = vmatpush1.msra.mxu0 %v548
      %579 = vmatprep.subr.mxu0 0.0
      %580 = vmatpush1.msra.mxu0 %v547
      %581 = vmatprep.subr.mxu0 0.0
      %582 = vmatpush1.msra.mxu0 %v546
      %583 = vmatprep.subr.mxu0 0.0
      %584 = vmatpush1.msra.mxu0 %v545
      %585 = vmatprep.subr.mxu0 0.0
      %586 = vmatpush2.msra.mxu0 0.0
      %587 = vmatprep.subr.mxu0 0.0
      %588 = vmatpush2.msra.mxu0 0.0
      %589 = vmatprep.subr.mxu0 0.0
      %590 = vmatpush2.msra.mxu0 0.0
      %591 = vmatprep.subr.mxu0 0.0
      %592 = vmatpush2.msra.mxu0 0.0
      %593 = vmatprep.subr.mxu0 0.0
      %594 = vmatpush2.msra.mxu0 0.0
      %595 = vmatprep.subr.mxu0 0.0
      %596 = vmatpush2.msra.mxu0 0.0
      %597 = vmatprep.subr.mxu0 0.0
      %598 = vmatpush2.msra.mxu0 0.0
      %599 = vmatprep.subr.mxu0 0.0
      %600 = vmatpush2.msra.mxu0 0.0
      %601 = vmatprep.subr.mxu0 0.0
      %602 = vmatpush2.msra.mxu0 0.0
      %603 = vmatprep.subr.mxu0 0.0
      %604 = vmatpush2.msra.mxu0 0.0
      %605 = vmatprep.subr.mxu0 0.0
      %606 = vmatpush2.msra.mxu0 0.0
      %607 = vmatprep.subr.mxu0 0.0
      %608 = vmatpush2.msra.mxu0 0.0
      %609 = vmatprep.subr.mxu0 0.0
      %610 = vmatpush2.msra.mxu0 0.0
      %611 = vmatprep.subr.mxu0 0.0
      %612 = vmatpush2.msra.mxu0 0.0
      %613 = vmatprep.subr.mxu0 0.0
      %614 = vmatpush2.msra.mxu0 0.0
      %615 = vmatprep.subr.mxu0 0.0
      %616 = vmatpush2.msra.mxu0 0.0
      %617 = vmatprep.mubr.f32.mxu0 0.0
      %618 = vmatmul.mubr.f32.gmra.mxu0 %v551
      %v619 = vpop.f32.mrf.mxu0
      %v620 = vadd.f32 0.0, %v619
      %v621 = vpop.f32.mrf.mxu0
      %622 = vdwg.mxu0
      %s623 = scalar_lea.vmem %s490, 4
      %v624 = vld [vmem:[%s623] sm:$0x7]
      %v625 = vmul.f32 %v624, %v624
      %v626 = vsel %vm525, %v625, 0.0
      %627 = vadd.xlane.f32.xlu0 %v626
      %v628 = vpop.xlane.xlu0 %627
      %v629 = vrsqrt.pop %v628
      %v630 = vmul.f32 %v628, %v629
      %vm631 = vcmp.eq.f32.partialorder %v628, inf
      %v632 = vsel %vm631, %v628, %v630
      %vm633 = vcmp.eq.f32.partialorder %v628, 0.0
      %v634 = vand.u32 %v628, 2147483648
      %v635 = vsel %vm633, %v634, %v632
      %v636 = vmax.f32 %v635, 1e-12
      %v637 = vrcp.pop %v636
      %v638 = vmul.f32 %v624, %v637
      %v639 = vmul.f32 %v638, 5.656854
      %v640 = vlaneseq
      %v641 = vshrl.u32 %v640, 7
      %v642 = vsub.s32 1, %v641
      %v643 = vrot.slane %v520, %v642
      %v644 = vmul.f32 %v639, %v643
      %s645 = scalar_lea.vmem %s8, 32
      %v646 = vld [vmem:[%s645] sm:$0xff]
      %v647 = vld [vmem:[%s645 + $0x8] sm:$0xff]
      %v648 = vld [vmem:[%s645 + $0x10] sm:$0xff]
      %v649 = vld [vmem:[%s645 + $0x18] sm:$0xff]
      %v651 = vsel %vm549, %v644, 0
      %653 = vmatprep.subr.mxu0 0.0
      %654 = vmatpush1.msra.mxu0 0.0
      %655 = vmatprep.subr.mxu0 0.0
      %656 = vmatpush1.msra.mxu0 0.0
      %657 = vmatprep.subr.mxu0 0.0
      %658 = vmatpush1.msra.mxu0 0.0
      %659 = vmatprep.subr.mxu0 0.0
      %660 = vmatpush1.msra.mxu0 0.0
      %661 = vmatprep.subr.mxu0 0.0
      %662 = vmatpush1.msra.mxu0 0.0
      %663 = vmatprep.subr.mxu0 0.0
      %664 = vmatpush1.msra.mxu0 0.0
      %665 = vmatprep.subr.mxu0 0.0
      %666 = vmatpush1.msra.mxu0 0.0
      %667 = vmatprep.subr.mxu0 0.0
      %668 = vmatpush1.msra.mxu0 0.0
      %669 = vmatprep.subr.mxu0 0.0
      %670 = vmatpush1.msra.mxu0 0.0
      %671 = vmatprep.subr.mxu0 0.0
      %672 = vmatpush1.msra.mxu0 0.0
      %673 = vmatprep.subr.mxu0 0.0
      %674 = vmatpush1.msra.mxu0 0.0
      %675 = vmatprep.subr.mxu0 0.0
      %676 = vmatpush1.msra.mxu0 0.0
      %677 = vmatprep.subr.mxu0 0.0
      %678 = vmatpush1.msra.mxu0 %v649
      %679 = vmatprep.subr.mxu0 0.0
      %680 = vmatpush1.msra.mxu0 %v648
      %681 = vmatprep.subr.mxu0 0.0
      %682 = vmatpush1.msra.mxu0 %v647
      %683 = vmatprep.subr.mxu0 0.0
      %684 = vmatpush1.msra.mxu0 %v646
      %685 = vmatprep.subr.mxu0 0.0
      %686 = vmatpush2.msra.mxu0 0.0
      %687 = vmatprep.subr.mxu0 0.0
      %688 = vmatpush2.msra.mxu0 0.0
      %689 = vmatprep.subr.mxu0 0.0
      %690 = vmatpush2.msra.mxu0 0.0
      %691 = vmatprep.subr.mxu0 0.0
      %692 = vmatpush2.msra.mxu0 0.0
      %693 = vmatprep.subr.mxu0 0.0
      %694 = vmatpush2.msra.mxu0 0.0
      %695 = vmatprep.subr.mxu0 0.0
      %696 = vmatpush2.msra.mxu0 0.0
      %697 = vmatprep.subr.mxu0 0.0
      %698 = vmatpush2.msra.mxu0 0.0
      %699 = vmatprep.subr.mxu0 0.0
      %700 = vmatpush2.msra.mxu0 0.0
      %701 = vmatprep.subr.mxu0 0.0
      %702 = vmatpush2.msra.mxu0 0.0
      %703 = vmatprep.subr.mxu0 0.0
      %704 = vmatpush2.msra.mxu0 0.0
      %705 = vmatprep.subr.mxu0 0.0
      %706 = vmatpush2.msra.mxu0 0.0
      %707 = vmatprep.subr.mxu0 0.0
      %708 = vmatpush2.msra.mxu0 0.0
      %709 = vmatprep.subr.mxu0 0.0
      %710 = vmatpush2.msra.mxu0 0.0
      %711 = vmatprep.subr.mxu0 0.0
      %712 = vmatpush2.msra.mxu0 0.0
      %713 = vmatprep.subr.mxu0 0.0
      %714 = vmatpush2.msra.mxu0 0.0
      %715 = vmatprep.subr.mxu0 0.0
      %716 = vmatpush2.msra.mxu0 0.0
      %717 = vmatprep.mubr.f32.mxu0 0.0
      %718 = vmatmul.mubr.f32.gmra.mxu0 %v651
      %v719 = vpop.f32.mrf.mxu0
      %v720 = vadd.f32 0.0, %v719
      %v721 = vpop.f32.mrf.mxu0
      %722 = vdwg.mxu0
      %v723 = vld [vmem:[%s483] sm:$0x3]
      %v724 = vmul.f32 %v723, %v723
      %vm725 = vcmask 254976
      %v726 = vsel %vm725, %v724, 0.0
      %727 = vadd.xlane.f32.xlu0 %v726
      %v728 = vpop.xlane.xlu0 %727
      %v729 = vrsqrt.pop %v728
      %v730 = vmul.f32 %v728, %v729
      %vm731 = vcmp.eq.f32.partialorder %v728, inf
      %v732 = vsel %vm731, %v728, %v730
      %vm733 = vcmp.eq.f32.partialorder %v728, 0.0
      %v734 = vand.u32 %v728, 2147483648
      %v735 = vsel %vm733, %v734, %v732
      %v736 = vmax.f32 %v735, 1e-12
      %v737 = vrcp.pop %v736
      %v738 = vmul.f32 %v723, %v737
      %v739 = vmul.f32 %v738, 5.656854
      %v740 = vlaneseq
      %v741 = vshrl.u32 %v740, 7
      %v742 = vsub.s32 0, %v741
      %v743 = vrot.slane %v519, %v742
      %v744 = vmul.f32 %v739, %v743
      %v745 = vld [vmem:[%s7] sm:$0xff]
      %v746 = vld [vmem:[%s7 + $0x8] sm:$0xff]
      %v747 = vld [vmem:[%s7 + $0x10] sm:$0xff]
      %v748 = vld [vmem:[%s7 + $0x18] sm:$0xff]
      %v750 = vsel %vm549, %v744, 0
      %752 = vmatprep.subr.mxu0 0.0
      %753 = vmatpush1.msra.mxu0 0.0
      %754 = vmatprep.subr.mxu0 0.0
      %755 = vmatpush1.msra.mxu0 0.0
      %756 = vmatprep.subr.mxu0 0.0
      %757 = vmatpush1.msra.mxu0 0.0
      %758 = vmatprep.subr.mxu0 0.0
      %759 = vmatpush1.msra.mxu0 0.0
      %760 = vmatprep.subr.mxu0 0.0
      %761 = vmatpush1.msra.mxu0 0.0
      %762 = vmatprep.subr.mxu0 0.0
      %763 = vmatpush1.msra.mxu0 0.0
      %764 = vmatprep.subr.mxu0 0.0
      %765 = vmatpush1.msra.mxu0 0.0
      %766 = vmatprep.subr.mxu0 0.0
      %767 = vmatpush1.msra.mxu0 0.0
      %768 = vmatprep.subr.mxu0 0.0
      %769 = vmatpush1.msra.mxu0 0.0
      %770 = vmatprep.subr.mxu0 0.0
      %771 = vmatpush1.msra.mxu0 0.0
      %772 = vmatprep.subr.mxu0 0.0
      %773 = vmatpush1.msra.mxu0 0.0
      %774 = vmatprep.subr.mxu0 0.0
      %775 = vmatpush1.msra.mxu0 0.0
      %776 = vmatprep.subr.mxu0 0.0
      %777 = vmatpush1.msra.mxu0 %v748
      %778 = vmatprep.subr.mxu0 0.0
      %779 = vmatpush1.msra.mxu0 %v747
      %780 = vmatprep.subr.mxu0 0.0
      %781 = vmatpush1.msra.mxu0 %v746
      %782 = vmatprep.subr.mxu0 0.0
      %783 = vmatpush1.msra.mxu0 %v745
      %784 = vmatprep.subr.mxu0 0.0
      %785 = vmatpush2.msra.mxu0 0.0
      %786 = vmatprep.subr.mxu0 0.0
      %787 = vmatpush2.msra.mxu0 0.0
      %788 = vmatprep.subr.mxu0 0.0
      %789 = vmatpush2.msra.mxu0 0.0
      %790 = vmatprep.subr.mxu0 0.0
      %791 = vmatpush2.msra.mxu0 0.0
      %792 = vmatprep.subr.mxu0 0.0
      %793 = vmatpush2.msra.mxu0 0.0
      %794 = vmatprep.subr.mxu0 0.0
      %795 = vmatpush2.msra.mxu0 0.0
      %796 = vmatprep.subr.mxu0 0.0
      %797 = vmatpush2.msra.mxu0 0.0
      %798 = vmatprep.subr.mxu0 0.0
      %799 = vmatpush2.msra.mxu0 0.0
      %800 = vmatprep.subr.mxu0 0.0
      %801 = vmatpush2.msra.mxu0 0.0
      %802 = vmatprep.subr.mxu0 0.0
      %803 = vmatpush2.msra.mxu0 0.0
      %804 = vmatprep.subr.mxu0 0.0
      %805 = vmatpush2.msra.mxu0 0.0
      %806 = vmatprep.subr.mxu0 0.0
      %807 = vmatpush2.msra.mxu0 0.0
      %808 = vmatprep.subr.mxu0 0.0
      %809 = vmatpush2.msra.mxu0 0.0
      %810 = vmatprep.subr.mxu0 0.0
      %811 = vmatpush2.msra.mxu0 0.0
      %812 = vmatprep.subr.mxu0 0.0
      %813 = vmatpush2.msra.mxu0 0.0
      %814 = vmatprep.subr.mxu0 0.0
      %815 = vmatpush2.msra.mxu0 0.0
      %816 = vmatprep.mubr.f32.mxu0 0.0
      %817 = vmatmul.mubr.f32.gmra.mxu0 %v750
      %v818 = vpop.f32.mrf.mxu0
      %v819 = vadd.f32 0.0, %v818
      %v820 = vpop.f32.mrf.mxu0
      %821 = vdwg.mxu0
      %v822 = vld [vmem:[%s503] sm:$0x7]
      %824 = vset.pattern.permute.xlu0 0
      %825 = vperm.xlu0 %824, %v822
      %v826 = vpop.permute.xlu0 %825
      %v828 = vmul.f32 %v720, %v826
      %v829 = vld [vmem:[%s496] sm:$0x1]
      %vm830 = vcmp.gt.f32.partialorder %v829, 0.5
      %v831 = vld [vmem:[%s9] sm:$0xff]
      %v832 = vld [vmem:[%s9 + $0x8] sm:$0xff]
      %v833 = vld [vmem:[%s9 + $0x10] sm:$0xff]
      %v834 = vld [vmem:[%s9 + $0x18] sm:$0xff]
      %vm835 = vcmask 64512
      %v837 = vsel %vm835, %v819, 0
      %v840 = vsel %vm835, %v620, 0
      %842 = vmatprep.subr.mxu0 0.0
      %843 = vmatpush1.xpose.msra.mxu0 0.0
      %844 = vmatprep.subr.mxu0 0.0
      %845 = vmatpush1.xpose.msra.mxu0 0.0
      %846 = vmatprep.subr.mxu0 0.0
      %847 = vmatpush1.xpose.msra.mxu0 0.0
      %848 = vmatprep.subr.mxu0 0.0
      %849 = vmatpush1.xpose.msra.mxu0 0.0
      %850 = vmatprep.subr.mxu0 0.0
      %851 = vmatpush1.xpose.msra.mxu0 0.0
      %852 = vmatprep.subr.mxu0 0.0
      %853 = vmatpush1.xpose.msra.mxu0 0.0
      %854 = vmatprep.subr.mxu0 0.0
      %855 = vmatpush1.xpose.msra.mxu0 0.0
      %856 = vmatprep.subr.mxu0 0.0
      %857 = vmatpush1.xpose.msra.mxu0 0.0
      %858 = vmatprep.subr.mxu0 0.0
      %859 = vmatpush1.xpose.msra.mxu0 0.0
      %860 = vmatprep.subr.mxu0 0.0
      %861 = vmatpush1.xpose.msra.mxu0 0.0
      %862 = vmatprep.subr.mxu0 0.0
      %863 = vmatpush1.xpose.msra.mxu0 0.0
      %864 = vmatprep.subr.mxu0 0.0
      %865 = vmatpush1.xpose.msra.mxu0 0.0
      %866 = vmatprep.subr.mxu0 0.0
      %867 = vmatpush1.xpose.msra.mxu0 0.0
      %868 = vmatprep.subr.mxu0 0.0
      %869 = vmatpush1.xpose.msra.mxu0 0.0
      %870 = vmatprep.subr.mxu0 0.0
      %871 = vmatpush1.xpose.msra.mxu0 0.0
      %872 = vmatprep.subr.mxu0 0.0
      %873 = vmatpush1.xpose.msra.mxu0 %v840
      %874 = vmatprep.subr.mxu0 0.0
      %875 = vmatpush2.xpose.msra.mxu0 0.0
      %876 = vmatprep.subr.mxu0 0.0
      %877 = vmatpush2.xpose.msra.mxu0 0.0
      %878 = vmatprep.subr.mxu0 0.0
      %879 = vmatpush2.xpose.msra.mxu0 0.0
      %880 = vmatprep.subr.mxu0 0.0
      %881 = vmatpush2.xpose.msra.mxu0 0.0
      %882 = vmatprep.subr.mxu0 0.0
      %883 = vmatpush2.xpose.msra.mxu0 0.0
      %884 = vmatprep.subr.mxu0 0.0
      %885 = vmatpush2.xpose.msra.mxu0 0.0
      %886 = vmatprep.subr.mxu0 0.0
      %887 = vmatpush2.xpose.msra.mxu0 0.0
      %888 = vmatprep.subr.mxu0 0.0
      %889 = vmatpush2.xpose.msra.mxu0 0.0
      %890 = vmatprep.subr.mxu0 0.0
      %891 = vmatpush2.xpose.msra.mxu0 0.0
      %892 = vmatprep.subr.mxu0 0.0
      %893 = vmatpush2.xpose.msra.mxu0 0.0
      %894 = vmatprep.subr.mxu0 0.0
      %895 = vmatpush2.xpose.msra.mxu0 0.0
      %896 = vmatprep.subr.mxu0 0.0
      %897 = vmatpush2.xpose.msra.mxu0 0.0
      %898 = vmatprep.subr.mxu0 0.0
      %899 = vmatpush2.xpose.msra.mxu0 0.0
      %900 = vmatprep.subr.mxu0 0.0
      %901 = vmatpush2.xpose.msra.mxu0 0.0
      %902 = vmatprep.subr.mxu0 0.0
      %903 = vmatpush2.xpose.msra.mxu0 0.0
      %904 = vmatprep.subr.mxu0 0.0
      %905 = vmatpush2.xpose.msra.mxu0 0.0
      %906 = vmatprep.mubr.f32.mxu0 0.0
      %907 = vmatmul.mubr.f32.gmra.mxu0 %v837
      %v908 = vpop.f32.mrf.mxu0
      %v909 = vadd.f32 0.0, %v908
      %v910 = vpop.f32.mrf.mxu0
      %911 = vdwg.mxu0
      %v912 = vmul.f32 %v909, 0.35355338
      %v913 = vsel %vm830, 1, 0
      %v914 = vlaneseq
      %v915 = vshrl.u32 %v914, 7
      %v916 = vsub.s32 0, %v915
      %v917 = vrot.slane %v913, %v916
      %vm918 = vcmp.eq.s32.totalorder %v917, 1
      %v919 = vsel %vm918, %v912, -1e+30
      %v920 = vlaneseq
      %v921 = vshrl.u32 %v920, 7
      %v922 = vsub.s32 0, %v921
      %v923 = vrot.slane %v521, %v922
      %v924 = vmul.f32 %v819, %v923
      %vm925 = vcmask 58368
      %v926 = vsel %vm925, %v924, 0.0
      %927 = vadd.xlane.f32.xlu0 %v926
      %v928 = vpop.xlane.xlu0 %927
      %v929 = vmul.f32 %v928, 0.35355338
      %vm930 = vcmask 17408
      %v931 = vsel %vm930, %v919, -inf
      %932 = vmax.xlane.f32.xlu0 %v931
      %v933 = vpop.xlane.xlu0 %932
      %v934 = vmax.f32 %v933, %v929
      %v935 = vsub.f32 %v919, %v934
      %v936 = vmul.f32 %v935, 1.442695
      %v937 = vpow.pop %v936
      %v938 = vsub.f32 %v929, %v934
      %v939 = vmul.f32 %v938, 1.442695
      %v940 = vpow.pop %v939
      %v941 = vsel %vm930, %v937, 0.0
      %942 = vadd.xlane.f32.xlu0 %v941
      %v943 = vpop.xlane.xlu0 %942
      %v944 = vadd.f32 %v940, %v943
      %v945 = vrcp.pop %v944
      %v946 = vmul.f32 %v937, %v945
      %v947 = vmul.f32 %v940, %v945
      %v948 = vlaneseq
      %v949 = vshrl.u32 %v948, 7
      %v950 = vsub.s32 0, %v949
      %v951 = vrot.slane %v522, %v950
      %v952 = vmul.f32 %v947, %v951
      %vm953 = vcmask 23552
      %v955 = vsel %vm953, %v946, 0
      %vm957 = vcmask 1042432
      %v959 = vsel %vm957, %v828, 0
      %961 = vmatprep.subr.mxu0 0.0
      %962 = vmatpush1.msra.mxu0 0.0
      %963 = vmatprep.subr.mxu0 0.0
      %964 = vmatpush1.msra.mxu0 0.0
      %965 = vmatprep.subr.mxu0 0.0
      %966 = vmatpush1.msra.mxu0 0.0
      %967 = vmatprep.subr.mxu0 0.0
      %968 = vmatpush1.msra.mxu0 0.0
      %969 = vmatprep.subr.mxu0 0.0
      %970 = vmatpush1.msra.mxu0 0.0
      %971 = vmatprep.subr.mxu0 0.0
      %972 = vmatpush1.msra.mxu0 0.0
      %973 = vmatprep.subr.mxu0 0.0
      %974 = vmatpush1.msra.mxu0 0.0
      %975 = vmatprep.subr.mxu0 0.0
      %976 = vmatpush1.msra.mxu0 0.0
      %977 = vmatprep.subr.mxu0 0.0
      %978 = vmatpush1.msra.mxu0 0.0
      %979 = vmatprep.subr.mxu0 0.0
      %980 = vmatpush1.msra.mxu0 0.0
      %981 = vmatprep.subr.mxu0 0.0
      %982 = vmatpush1.msra.mxu0 0.0
      %983 = vmatprep.subr.mxu0 0.0
      %984 = vmatpush1.msra.mxu0 0.0
      %985 = vmatprep.subr.mxu0 0.0
      %986 = vmatpush1.msra.mxu0 0.0
      %987 = vmatprep.subr.mxu0 0.0
      %988 = vmatpush1.msra.mxu0 0.0
      %989 = vmatprep.subr.mxu0 0.0
      %990 = vmatpush1.msra.mxu0 0.0
      %991 = vmatprep.subr.mxu0 0.0
      %992 = vmatpush1.msra.mxu0 %v959
      %993 = vmatprep.subr.mxu0 0.0
      %994 = vmatpush2.msra.mxu0 0.0
      %995 = vmatprep.subr.mxu0 0.0
      %996 = vmatpush2.msra.mxu0 0.0
      %997 = vmatprep.subr.mxu0 0.0
      %998 = vmatpush2.msra.mxu0 0.0
      %999 = vmatprep.subr.mxu0 0.0
      %1000 = vmatpush2.msra.mxu0 0.0
      %1001 = vmatprep.subr.mxu0 0.0
      %1002 = vmatpush2.msra.mxu0 0.0
      %1003 = vmatprep.subr.mxu0 0.0
      %1004 = vmatpush2.msra.mxu0 0.0
      %1005 = vmatprep.subr.mxu0 0.0
      %1006 = vmatpush2.msra.mxu0 0.0
      %1007 = vmatprep.subr.mxu0 0.0
      %1008 = vmatpush2.msra.mxu0 0.0
      %1009 = vmatprep.subr.mxu0 0.0
      %1010 = vmatpush2.msra.mxu0 0.0
      %1011 = vmatprep.subr.mxu0 0.0
      %1012 = vmatpush2.msra.mxu0 0.0
      %1013 = vmatprep.subr.mxu0 0.0
      %1014 = vmatpush2.msra.mxu0 0.0
      %1015 = vmatprep.subr.mxu0 0.0
      %1016 = vmatpush2.msra.mxu0 0.0
      %1017 = vmatprep.subr.mxu0 0.0
      %1018 = vmatpush2.msra.mxu0 0.0
      %1019 = vmatprep.subr.mxu0 0.0
      %1020 = vmatpush2.msra.mxu0 0.0
      %1021 = vmatprep.subr.mxu0 0.0
      %1022 = vmatpush2.msra.mxu0 0.0
      %1023 = vmatprep.subr.mxu0 0.0
      %1024 = vmatpush2.msra.mxu0 0.0
      %1025 = vmatprep.mubr.f32.mxu0 0.0
      %1026 = vmatmul.mubr.f32.gmra.mxu0 %v955
      %v1027 = vpop.f32.mrf.mxu0
      %v1028 = vadd.f32 %v952, %v1027
      %v1029 = vpop.f32.mrf.mxu0
      %1030 = vdwg.mxu0
      %1031 = vrot.lane.b32.xlu0 %v819, 120
      %v1032 = vpop.permute.xlu0 %1031
      %1033 = vrot.lane.b32.xlu0 %v620, 120
      %v1034 = vpop.permute.xlu0 %1033
      %v1035 = vsel %vm835, %v1032, 0
      %v1037 = vsel %vm835, %v1034, 0
      %1039 = vmatprep.subr.mxu0 0.0
      %1040 = vmatpush1.xpose.msra.mxu0 0.0
      %1041 = vmatprep.subr.mxu0 0.0
      %1042 = vmatpush1.xpose.msra.mxu0 0.0
      %1043 = vmatprep.subr.mxu0 0.0
      %1044 = vmatpush1.xpose.msra.mxu0 0.0
      %1045 = vmatprep.subr.mxu0 0.0
      %1046 = vmatpush1.xpose.msra.mxu0 0.0
      %1047 = vmatprep.subr.mxu0 0.0
      %1048 = vmatpush1.xpose.msra.mxu0 0.0
      %1049 = vmatprep.subr.mxu0 0.0
      %1050 = vmatpush1.xpose.msra.mxu0 0.0
      %1051 = vmatprep.subr.mxu0 0.0
      %1052 = vmatpush1.xpose.msra.mxu0 0.0
      %1053 = vmatprep.subr.mxu0 0.0
      %1054 = vmatpush1.xpose.msra.mxu0 0.0
      %1055 = vmatprep.subr.mxu0 0.0
      %1056 = vmatpush1.xpose.msra.mxu0 0.0
      %1057 = vmatprep.subr.mxu0 0.0
      %1058 = vmatpush1.xpose.msra.mxu0 0.0
      %1059 = vmatprep.subr.mxu0 0.0
      %1060 = vmatpush1.xpose.msra.mxu0 0.0
      %1061 = vmatprep.subr.mxu0 0.0
      %1062 = vmatpush1.xpose.msra.mxu0 0.0
      %1063 = vmatprep.subr.mxu0 0.0
      %1064 = vmatpush1.xpose.msra.mxu0 0.0
      %1065 = vmatprep.subr.mxu0 0.0
      %1066 = vmatpush1.xpose.msra.mxu0 0.0
      %1067 = vmatprep.subr.mxu0 0.0
      %1068 = vmatpush1.xpose.msra.mxu0 0.0
      %1069 = vmatprep.subr.mxu0 0.0
      %1070 = vmatpush1.xpose.msra.mxu0 %v1037
      %1071 = vmatprep.subr.mxu0 0.0
      %1072 = vmatpush2.xpose.msra.mxu0 0.0
      %1073 = vmatprep.subr.mxu0 0.0
      %1074 = vmatpush2.xpose.msra.mxu0 0.0
      %1075 = vmatprep.subr.mxu0 0.0
      %1076 = vmatpush2.xpose.msra.mxu0 0.0
      %1077 = vmatprep.subr.mxu0 0.0
      %1078 = vmatpush2.xpose.msra.mxu0 0.0
      %1079 = vmatprep.subr.mxu0 0.0
      %1080 = vmatpush2.xpose.msra.mxu0 0.0
      %1081 = vmatprep.subr.mxu0 0.0
      %1082 = vmatpush2.xpose.msra.mxu0 0.0
      %1083 = vmatprep.subr.mxu0 0.0
      %1084 = vmatpush2.xpose.msra.mxu0 0.0
      %1085 = vmatprep.subr.mxu0 0.0
      %1086 = vmatpush2.xpose.msra.mxu0 0.0
      %1087 = vmatprep.subr.mxu0 0.0
      %1088 = vmatpush2.xpose.msra.mxu0 0.0
      %1089 = vmatprep.subr.mxu0 0.0
      %1090 = vmatpush2.xpose.msra.mxu0 0.0
      %1091 = vmatprep.subr.mxu0 0.0
      %1092 = vmatpush2.xpose.msra.mxu0 0.0
      %1093 = vmatprep.subr.mxu0 0.0
      %1094 = vmatpush2.xpose.msra.mxu0 0.0
      %1095 = vmatprep.subr.mxu0 0.0
      %1096 = vmatpush2.xpose.msra.mxu0 0.0
      %1097 = vmatprep.subr.mxu0 0.0
      %1098 = vmatpush2.xpose.msra.mxu0 0.0
      %1099 = vmatprep.subr.mxu0 0.0
      %1100 = vmatpush2.xpose.msra.mxu0 0.0
      %1101 = vmatprep.subr.mxu0 0.0
      %1102 = vmatpush2.xpose.msra.mxu0 0.0
      %1103 = vmatprep.mubr.f32.mxu0 0.0
      %1104 = vmatmul.mubr.f32.gmra.mxu0 %v1035
      %v1105 = vpop.f32.mrf.mxu0
      %v1106 = vadd.f32 0.0, %v1105
      %v1107 = vpop.f32.mrf.mxu0
      %1108 = vdwg.mxu0
      %v1109 = vmul.f32 %v1106, 0.35355338
      %v1110 = vsel %vm918, %v1109, -1e+30
      %1112 = vrot.lane.b32.xlu0 %v924, 120
      %v1113 = vpop.permute.xlu0 %1112
      %v1115 = vsel %vm925, %v1113, 0.0
      %1116 = vadd.xlane.f32.xlu0 %v1115
      %v1117 = vpop.xlane.xlu0 %1116
      %v1118 = vmul.f32 %v1117, 0.35355338
      %v1119 = vsel %vm930, %v1110, -inf
      %1120 = vmax.xlane.f32.xlu0 %v1119
      %v1121 = vpop.xlane.xlu0 %1120
      %v1122 = vmax.f32 %v1121, %v1118
      %v1123 = vsub.f32 %v1110, %v1122
      %v1124 = vmul.f32 %v1123, 1.442695
      %v1125 = vpow.pop %v1124
      %v1126 = vsub.f32 %v1118, %v1122
      %v1127 = vmul.f32 %v1126, 1.442695
      %v1128 = vpow.pop %v1127
      %v1129 = vsel %vm930, %v1125, 0.0
      %1130 = vadd.xlane.f32.xlu0 %v1129
      %v1131 = vpop.xlane.xlu0 %1130
      %v1132 = vadd.f32 %v1128, %v1131
      %v1133 = vrcp.pop %v1132
      %v1134 = vmul.f32 %v1125, %v1133
      %v1135 = vmul.f32 %v1128, %v1133
      %v1136 = vmul.f32 %v1135, %v951
      %1137 = vrot.lane.b32.xlu0 %v828, 120
      %v1138 = vpop.permute.xlu0 %1137
      %1140 = vrot.lane.b32.xlu0 %v1136, 120
      %v1141 = vpop.permute.xlu0 %1140
      %v1144 = vsel %vm953, %v1134, 0
      %v1146 = vsel %vm957, %v1138, 0
      %1148 = vmatprep.subr.mxu0 0.0
      %1149 = vmatpush1.msra.mxu0 0.0
      %1150 = vmatprep.subr.mxu0 0.0
      %1151 = vmatpush1.msra.mxu0 0.0
      %1152 = vmatprep.subr.mxu0 0.0
      %1153 = vmatpush1.msra.mxu0 0.0
      %1154 = vmatprep.subr.mxu0 0.0
      %1155 = vmatpush1.msra.mxu0 0.0
      %1156 = vmatprep.subr.mxu0 0.0
      %1157 = vmatpush1.msra.mxu0 0.0
      %1158 = vmatprep.subr.mxu0 0.0
      %1159 = vmatpush1.msra.mxu0 0.0
      %1160 = vmatprep.subr.mxu0 0.0
      %1161 = vmatpush1.msra.mxu0 0.0
      %1162 = vmatprep.subr.mxu0 0.0
      %1163 = vmatpush1.msra.mxu0 0.0
      %1164 = vmatprep.subr.mxu0 0.0
      %1165 = vmatpush1.msra.mxu0 0.0
      %1166 = vmatprep.subr.mxu0 0.0
      %1167 = vmatpush1.msra.mxu0 0.0
      %1168 = vmatprep.subr.mxu0 0.0
      %1169 = vmatpush1.msra.mxu0 0.0
      %1170 = vmatprep.subr.mxu0 0.0
      %1171 = vmatpush1.msra.mxu0 0.0
      %1172 = vmatprep.subr.mxu0 0.0
      %1173 = vmatpush1.msra.mxu0 0.0
      %1174 = vmatprep.subr.mxu0 0.0
      %1175 = vmatpush1.msra.mxu0 0.0
      %1176 = vmatprep.subr.mxu0 0.0
      %1177 = vmatpush1.msra.mxu0 0.0
      %1178 = vmatprep.subr.mxu0 0.0
      %1179 = vmatpush1.msra.mxu0 %v1146
      %1180 = vmatprep.subr.mxu0 0.0
      %1181 = vmatpush2.msra.mxu0 0.0
      %1182 = vmatprep.subr.mxu0 0.0
      %1183 = vmatpush2.msra.mxu0 0.0
      %1184 = vmatprep.subr.mxu0 0.0
      %1185 = vmatpush2.msra.mxu0 0.0
      %1186 = vmatprep.subr.mxu0 0.0
      %1187 = vmatpush2.msra.mxu0 0.0
      %1188 = vmatprep.subr.mxu0 0.0
      %1189 = vmatpush2.msra.mxu0 0.0
      %1190 = vmatprep.subr.mxu0 0.0
      %1191 = vmatpush2.msra.mxu0 0.0
      %1192 = vmatprep.subr.mxu0 0.0
      %1193 = vmatpush2.msra.mxu0 0.0
      %1194 = vmatprep.subr.mxu0 0.0
      %1195 = vmatpush2.msra.mxu0 0.0
      %1196 = vmatprep.subr.mxu0 0.0
      %1197 = vmatpush2.msra.mxu0 0.0
      %1198 = vmatprep.subr.mxu0 0.0
      %1199 = vmatpush2.msra.mxu0 0.0
      %1200 = vmatprep.subr.mxu0 0.0
      %1201 = vmatpush2.msra.mxu0 0.0
      %1202 = vmatprep.subr.mxu0 0.0
      %1203 = vmatpush2.msra.mxu0 0.0
      %1204 = vmatprep.subr.mxu0 0.0
      %1205 = vmatpush2.msra.mxu0 0.0
      %1206 = vmatprep.subr.mxu0 0.0
      %1207 = vmatpush2.msra.mxu0 0.0
      %1208 = vmatprep.subr.mxu0 0.0
      %1209 = vmatpush2.msra.mxu0 0.0
      %1210 = vmatprep.subr.mxu0 0.0
      %1211 = vmatpush2.msra.mxu0 0.0
      %1212 = vmatprep.mubr.f32.mxu0 0.0
      %1213 = vmatmul.mubr.f32.gmra.mxu0 %v1144
      %v1214 = vpop.f32.mrf.mxu0
      %v1215 = vadd.f32 %v1141, %v1214
      %v1216 = vpop.f32.mrf.mxu0
      %1217 = vdwg.mxu0
      %v1219 = vsel %vm835, %v1215, 0
      %1221 = vmatprep.subr.mxu0 0.0
      %1222 = vmatpush1.msra.mxu0 0.0
      %1223 = vmatprep.subr.mxu0 0.0
      %1224 = vmatpush1.msra.mxu0 0.0
      %1225 = vmatprep.subr.mxu0 0.0
      %1226 = vmatpush1.msra.mxu0 0.0
      %1227 = vmatprep.subr.mxu0 0.0
      %1228 = vmatpush1.msra.mxu0 0.0
      %1229 = vmatprep.subr.mxu0 0.0
      %1230 = vmatpush1.msra.mxu0 0.0
      %1231 = vmatprep.subr.mxu0 0.0
      %1232 = vmatpush1.msra.mxu0 0.0
      %1233 = vmatprep.subr.mxu0 0.0
      %1234 = vmatpush1.msra.mxu0 0.0
      %1235 = vmatprep.subr.mxu0 0.0
      %1236 = vmatpush1.msra.mxu0 0.0
      %1237 = vmatprep.subr.mxu0 0.0
      %1238 = vmatpush1.msra.mxu0 0.0
      %1239 = vmatprep.subr.mxu0 0.0
      %1240 = vmatpush1.msra.mxu0 0.0
      %1241 = vmatprep.subr.mxu0 0.0
      %1242 = vmatpush1.msra.mxu0 0.0
      %1243 = vmatprep.subr.mxu0 0.0
      %1244 = vmatpush1.msra.mxu0 0.0
      %1245 = vmatprep.subr.mxu0 0.0
      %1246 = vmatpush1.msra.mxu0 0.0
      %1247 = vmatprep.subr.mxu0 0.0
      %1248 = vmatpush1.msra.mxu0 0.0
      %1249 = vmatprep.subr.mxu0 0.0
      %1250 = vmatpush1.msra.mxu0 0.0
      %1251 = vmatprep.subr.mxu0 0.0
      %1252 = vmatpush1.msra.mxu0 %v832
      %1253 = vmatprep.subr.mxu0 0.0
      %1254 = vmatpush2.msra.mxu0 0.0
      %1255 = vmatprep.subr.mxu0 0.0
      %1256 = vmatpush2.msra.mxu0 0.0
      %1257 = vmatprep.subr.mxu0 0.0
      %1258 = vmatpush2.msra.mxu0 0.0
      %1259 = vmatprep.subr.mxu0 0.0
      %1260 = vmatpush2.msra.mxu0 0.0
      %1261 = vmatprep.subr.mxu0 0.0
      %1262 = vmatpush2.msra.mxu0 0.0
      %1263 = vmatprep.subr.mxu0 0.0
      %1264 = vmatpush2.msra.mxu0 0.0
      %1265 = vmatprep.subr.mxu0 0.0
      %1266 = vmatpush2.msra.mxu0 0.0
      %1267 = vmatprep.subr.mxu0 0.0
      %1268 = vmatpush2.msra.mxu0 0.0
      %1269 = vmatprep.subr.mxu0 0.0
      %1270 = vmatpush2.msra.mxu0 0.0
      %1271 = vmatprep.subr.mxu0 0.0
      %1272 = vmatpush2.msra.mxu0 0.0
      %1273 = vmatprep.subr.mxu0 0.0
      %1274 = vmatpush2.msra.mxu0 0.0
      %1275 = vmatprep.subr.mxu0 0.0
      %1276 = vmatpush2.msra.mxu0 0.0
      %1277 = vmatprep.subr.mxu0 0.0
      %1278 = vmatpush2.msra.mxu0 0.0
      %1279 = vmatprep.subr.mxu0 0.0
      %1280 = vmatpush2.msra.mxu0 0.0
      %1281 = vmatprep.subr.mxu0 0.0
      %1282 = vmatpush2.msra.mxu0 0.0
      %1283 = vmatprep.subr.mxu0 0.0
      %1284 = vmatpush2.msra.mxu0 0.0
      %1285 = vmatprep.mubr.f32.mxu0 0.0
      %1286 = vmatmul.mubr.f32.gmra.mxu0 %v1219
      %v1287 = vpop.f32.mrf.mxu0
      %v1288 = vadd.f32 0.0, %v1287
      %v1289 = vpop.f32.mrf.mxu0
      %1290 = vdwg.mxu0
      %v1292 = vsel %vm835, %v1028, 0
      %1294 = vmatprep.subr.mxu0 0.0
      %1295 = vmatpush1.msra.mxu0 0.0
      %1296 = vmatprep.subr.mxu0 0.0
      %1297 = vmatpush1.msra.mxu0 0.0
      %1298 = vmatprep.subr.mxu0 0.0
      %1299 = vmatpush1.msra.mxu0 0.0
      %1300 = vmatprep.subr.mxu0 0.0
      %1301 = vmatpush1.msra.mxu0 0.0
      %1302 = vmatprep.subr.mxu0 0.0
      %1303 = vmatpush1.msra.mxu0 0.0
      %1304 = vmatprep.subr.mxu0 0.0
      %1305 = vmatpush1.msra.mxu0 0.0
      %1306 = vmatprep.subr.mxu0 0.0
      %1307 = vmatpush1.msra.mxu0 0.0
      %1308 = vmatprep.subr.mxu0 0.0
      %1309 = vmatpush1.msra.mxu0 0.0
      %1310 = vmatprep.subr.mxu0 0.0
      %1311 = vmatpush1.msra.mxu0 0.0
      %1312 = vmatprep.subr.mxu0 0.0
      %1313 = vmatpush1.msra.mxu0 0.0
      %1314 = vmatprep.subr.mxu0 0.0
      %1315 = vmatpush1.msra.mxu0 0.0
      %1316 = vmatprep.subr.mxu0 0.0
      %1317 = vmatpush1.msra.mxu0 0.0
      %1318 = vmatprep.subr.mxu0 0.0
      %1319 = vmatpush1.msra.mxu0 0.0
      %1320 = vmatprep.subr.mxu0 0.0
      %1321 = vmatpush1.msra.mxu0 0.0
      %1322 = vmatprep.subr.mxu0 0.0
      %1323 = vmatpush1.msra.mxu0 0.0
      %1324 = vmatprep.subr.mxu0 0.0
      %1325 = vmatpush1.msra.mxu0 %v831
      %1326 = vmatprep.subr.mxu0 0.0
      %1327 = vmatpush2.msra.mxu0 0.0
      %1328 = vmatprep.subr.mxu0 0.0
      %1329 = vmatpush2.msra.mxu0 0.0
      %1330 = vmatprep.subr.mxu0 0.0
      %1331 = vmatpush2.msra.mxu0 0.0
      %1332 = vmatprep.subr.mxu0 0.0
      %1333 = vmatpush2.msra.mxu0 0.0
      %1334 = vmatprep.subr.mxu0 0.0
      %1335 = vmatpush2.msra.mxu0 0.0
      %1336 = vmatprep.subr.mxu0 0.0
      %1337 = vmatpush2.msra.mxu0 0.0
      %1338 = vmatprep.subr.mxu0 0.0
      %1339 = vmatpush2.msra.mxu0 0.0
      %1340 = vmatprep.subr.mxu0 0.0
      %1341 = vmatpush2.msra.mxu0 0.0
      %1342 = vmatprep.subr.mxu0 0.0
      %1343 = vmatpush2.msra.mxu0 0.0
      %1344 = vmatprep.subr.mxu0 0.0
      %1345 = vmatpush2.msra.mxu0 0.0
      %1346 = vmatprep.subr.mxu0 0.0
      %1347 = vmatpush2.msra.mxu0 0.0
      %1348 = vmatprep.subr.mxu0 0.0
      %1349 = vmatpush2.msra.mxu0 0.0
      %1350 = vmatprep.subr.mxu0 0.0
      %1351 = vmatpush2.msra.mxu0 0.0
      %1352 = vmatprep.subr.mxu0 0.0
      %1353 = vmatpush2.msra.mxu0 0.0
      %1354 = vmatprep.subr.mxu0 0.0
      %1355 = vmatpush2.msra.mxu0 0.0
      %1356 = vmatprep.subr.mxu0 0.0
      %1357 = vmatpush2.msra.mxu0 0.0
      %1358 = vmatprep.mubr.f32.mxu0 0.0
      %1359 = vmatmul.mubr.f32.gmra.mxu0 %v1292
      %v1360 = vpop.f32.mrf.mxu0
      %v1361 = vadd.f32 %v1288, %v1360
      %v1362 = vpop.f32.mrf.mxu0
      %1363 = vdwg.mxu0
      %1364 = vrot.lane.b32.xlu0 %v819, 112
      %v1365 = vpop.permute.xlu0 %1364
      %1366 = vrot.lane.b32.xlu0 %v620, 112
      %v1367 = vpop.permute.xlu0 %1366
      %v1368 = vsel %vm835, %v1365, 0
      %v1370 = vsel %vm835, %v1367, 0
      %1372 = vmatprep.subr.mxu0 0.0
      %1373 = vmatpush1.xpose.msra.mxu0 0.0
      %1374 = vmatprep.subr.mxu0 0.0
      %1375 = vmatpush1.xpose.msra.mxu0 0.0
      %1376 = vmatprep.subr.mxu0 0.0
      %1377 = vmatpush1.xpose.msra.mxu0 0.0
      %1378 = vmatprep.subr.mxu0 0.0
      %1379 = vmatpush1.xpose.msra.mxu0 0.0
      %1380 = vmatprep.subr.mxu0 0.0
      %1381 = vmatpush1.xpose.msra.mxu0 0.0
      %1382 = vmatprep.subr.mxu0 0.0
      %1383 = vmatpush1.xpose.msra.mxu0 0.0
      %1384 = vmatprep.subr.mxu0 0.0
      %1385 = vmatpush1.xpose.msra.mxu0 0.0
      %1386 = vmatprep.subr.mxu0 0.0
      %1387 = vmatpush1.xpose.msra.mxu0 0.0
      %1388 = vmatprep.subr.mxu0 0.0
      %1389 = vmatpush1.xpose.msra.mxu0 0.0
      %1390 = vmatprep.subr.mxu0 0.0
      %1391 = vmatpush1.xpose.msra.mxu0 0.0
      %1392 = vmatprep.subr.mxu0 0.0
      %1393 = vmatpush1.xpose.msra.mxu0 0.0
      %1394 = vmatprep.subr.mxu0 0.0
      %1395 = vmatpush1.xpose.msra.mxu0 0.0
      %1396 = vmatprep.subr.mxu0 0.0
      %1397 = vmatpush1.xpose.msra.mxu0 0.0
      %1398 = vmatprep.subr.mxu0 0.0
      %1399 = vmatpush1.xpose.msra.mxu0 0.0
      %1400 = vmatprep.subr.mxu0 0.0
      %1401 = vmatpush1.xpose.msra.mxu0 0.0
      %1402 = vmatprep.subr.mxu0 0.0
      %1403 = vmatpush1.xpose.msra.mxu0 %v1370
      %1404 = vmatprep.subr.mxu0 0.0
      %1405 = vmatpush2.xpose.msra.mxu0 0.0
      %1406 = vmatprep.subr.mxu0 0.0
      %1407 = vmatpush2.xpose.msra.mxu0 0.0
      %1408 = vmatprep.subr.mxu0 0.0
      %1409 = vmatpush2.xpose.msra.mxu0 0.0
      %1410 = vmatprep.subr.mxu0 0.0
      %1411 = vmatpush2.xpose.msra.mxu0 0.0
      %1412 = vmatprep.subr.mxu0 0.0
      %1413 = vmatpush2.xpose.msra.mxu0 0.0
      %1414 = vmatprep.subr.mxu0 0.0
      %1415 = vmatpush2.xpose.msra.mxu0 0.0
      %1416 = vmatprep.subr.mxu0 0.0
      %1417 = vmatpush2.xpose.msra.mxu0 0.0
      %1418 = vmatprep.subr.mxu0 0.0
      %1419 = vmatpush2.xpose.msra.mxu0 0.0
      %1420 = vmatprep.subr.mxu0 0.0
      %1421 = vmatpush2.xpose.msra.mxu0 0.0
      %1422 = vmatprep.subr.mxu0 0.0
      %1423 = vmatpush2.xpose.msra.mxu0 0.0
      %1424 = vmatprep.subr.mxu0 0.0
      %1425 = vmatpush2.xpose.msra.mxu0 0.0
      %1426 = vmatprep.subr.mxu0 0.0
      %1427 = vmatpush2.xpose.msra.mxu0 0.0
      %1428 = vmatprep.subr.mxu0 0.0
      %1429 = vmatpush2.xpose.msra.mxu0 0.0
      %1430 = vmatprep.subr.mxu0 0.0
      %1431 = vmatpush2.xpose.msra.mxu0 0.0
      %1432 = vmatprep.subr.mxu0 0.0
      %1433 = vmatpush2.xpose.msra.mxu0 0.0
      %1434 = vmatprep.subr.mxu0 0.0
      %1435 = vmatpush2.xpose.msra.mxu0 0.0
      %1436 = vmatprep.mubr.f32.mxu0 0.0
      %1437 = vmatmul.mubr.f32.gmra.mxu0 %v1368
      %v1438 = vpop.f32.mrf.mxu0
      %v1439 = vadd.f32 0.0, %v1438
      %v1440 = vpop.f32.mrf.mxu0
      %1441 = vdwg.mxu0
      %v1442 = vmul.f32 %v1439, 0.35355338
      %v1443 = vsel %vm918, %v1442, -1e+30
      %1444 = vrot.lane.b32.xlu0 %v924, 112
      %v1445 = vpop.permute.xlu0 %1444
      %v1447 = vsel %vm925, %v1445, 0.0
      %1448 = vadd.xlane.f32.xlu0 %v1447
      %v1449 = vpop.xlane.xlu0 %1448
      %v1450 = vmul.f32 %v1449, 0.35355338
      %v1451 = vsel %vm930, %v1443, -inf
      %1452 = vmax.xlane.f32.xlu0 %v1451
      %v1453 = vpop.xlane.xlu0 %1452
      %v1454 = vmax.f32 %v1453, %v1450
      %v1455 = vsub.f32 %v1443, %v1454
      %v1456 = vmul.f32 %v1455, 1.442695
      %v1457 = vpow.pop %v1456
      %v1458 = vsub.f32 %v1450, %v1454
      %v1459 = vmul.f32 %v1458, 1.442695
      %v1460 = vpow.pop %v1459
      %v1461 = vsel %vm930, %v1457, 0.0
      %1462 = vadd.xlane.f32.xlu0 %v1461
      %v1463 = vpop.xlane.xlu0 %1462
      %v1464 = vadd.f32 %v1460, %v1463
      %v1465 = vrcp.pop %v1464
      %v1466 = vmul.f32 %v1457, %v1465
      %v1467 = vmul.f32 %v1460, %v1465
      %v1468 = vmul.f32 %v1467, %v951
      %1469 = vrot.lane.b32.xlu0 %v828, 112
      %v1470 = vpop.permute.xlu0 %1469
      %1472 = vrot.lane.b32.xlu0 %v1468, 112
      %v1473 = vpop.permute.xlu0 %1472
      %v1476 = vsel %vm953, %v1466, 0
      %v1478 = vsel %vm957, %v1470, 0
      %1480 = vmatprep.subr.mxu0 0.0
      %1481 = vmatpush1.msra.mxu0 0.0
      %1482 = vmatprep.subr.mxu0 0.0
      %1483 = vmatpush1.msra.mxu0 0.0
      %1484 = vmatprep.subr.mxu0 0.0
      %1485 = vmatpush1.msra.mxu0 0.0
      %1486 = vmatprep.subr.mxu0 0.0
      %1487 = vmatpush1.msra.mxu0 0.0
      %1488 = vmatprep.subr.mxu0 0.0
      %1489 = vmatpush1.msra.mxu0 0.0
      %1490 = vmatprep.subr.mxu0 0.0
      %1491 = vmatpush1.msra.mxu0 0.0
      %1492 = vmatprep.subr.mxu0 0.0
      %1493 = vmatpush1.msra.mxu0 0.0
      %1494 = vmatprep.subr.mxu0 0.0
      %1495 = vmatpush1.msra.mxu0 0.0
      %1496 = vmatprep.subr.mxu0 0.0
      %1497 = vmatpush1.msra.mxu0 0.0
      %1498 = vmatprep.subr.mxu0 0.0
      %1499 = vmatpush1.msra.mxu0 0.0
      %1500 = vmatprep.subr.mxu0 0.0
      %1501 = vmatpush1.msra.mxu0 0.0
      %1502 = vmatprep.subr.mxu0 0.0
      %1503 = vmatpush1.msra.mxu0 0.0
      %1504 = vmatprep.subr.mxu0 0.0
      %1505 = vmatpush1.msra.mxu0 0.0
      %1506 = vmatprep.subr.mxu0 0.0
      %1507 = vmatpush1.msra.mxu0 0.0
      %1508 = vmatprep.subr.mxu0 0.0
      %1509 = vmatpush1.msra.mxu0 0.0
      %1510 = vmatprep.subr.mxu0 0.0
      %1511 = vmatpush1.msra.mxu0 %v1478
      %1512 = vmatprep.subr.mxu0 0.0
      %1513 = vmatpush2.msra.mxu0 0.0
      %1514 = vmatprep.subr.mxu0 0.0
      %1515 = vmatpush2.msra.mxu0 0.0
      %1516 = vmatprep.subr.mxu0 0.0
      %1517 = vmatpush2.msra.mxu0 0.0
      %1518 = vmatprep.subr.mxu0 0.0
      %1519 = vmatpush2.msra.mxu0 0.0
      %1520 = vmatprep.subr.mxu0 0.0
      %1521 = vmatpush2.msra.mxu0 0.0
      %1522 = vmatprep.subr.mxu0 0.0
      %1523 = vmatpush2.msra.mxu0 0.0
      %1524 = vmatprep.subr.mxu0 0.0
      %1525 = vmatpush2.msra.mxu0 0.0
      %1526 = vmatprep.subr.mxu0 0.0
      %1527 = vmatpush2.msra.mxu0 0.0
      %1528 = vmatprep.subr.mxu0 0.0
      %1529 = vmatpush2.msra.mxu0 0.0
      %1530 = vmatprep.subr.mxu0 0.0
      %1531 = vmatpush2.msra.mxu0 0.0
      %1532 = vmatprep.subr.mxu0 0.0
      %1533 = vmatpush2.msra.mxu0 0.0
      %1534 = vmatprep.subr.mxu0 0.0
      %1535 = vmatpush2.msra.mxu0 0.0
      %1536 = vmatprep.subr.mxu0 0.0
      %1537 = vmatpush2.msra.mxu0 0.0
      %1538 = vmatprep.subr.mxu0 0.0
      %1539 = vmatpush2.msra.mxu0 0.0
      %1540 = vmatprep.subr.mxu0 0.0
      %1541 = vmatpush2.msra.mxu0 0.0
      %1542 = vmatprep.subr.mxu0 0.0
      %1543 = vmatpush2.msra.mxu0 0.0
      %1544 = vmatprep.mubr.f32.mxu0 0.0
      %1545 = vmatmul.mubr.f32.gmra.mxu0 %v1476
      %v1546 = vpop.f32.mrf.mxu0
      %v1547 = vadd.f32 %v1473, %v1546
      %v1548 = vpop.f32.mrf.mxu0
      %1549 = vdwg.mxu0
      %v1551 = vsel %vm835, %v1547, 0
      %1553 = vmatprep.subr.mxu0 0.0
      %1554 = vmatpush1.msra.mxu0 0.0
      %1555 = vmatprep.subr.mxu0 0.0
      %1556 = vmatpush1.msra.mxu0 0.0
      %1557 = vmatprep.subr.mxu0 0.0
      %1558 = vmatpush1.msra.mxu0 0.0
      %1559 = vmatprep.subr.mxu0 0.0
      %1560 = vmatpush1.msra.mxu0 0.0
      %1561 = vmatprep.subr.mxu0 0.0
      %1562 = vmatpush1.msra.mxu0 0.0
      %1563 = vmatprep.subr.mxu0 0.0
      %1564 = vmatpush1.msra.mxu0 0.0
      %1565 = vmatprep.subr.mxu0 0.0
      %1566 = vmatpush1.msra.mxu0 0.0
      %1567 = vmatprep.subr.mxu0 0.0
      %1568 = vmatpush1.msra.mxu0 0.0
      %1569 = vmatprep.subr.mxu0 0.0
      %1570 = vmatpush1.msra.mxu0 0.0
      %1571 = vmatprep.subr.mxu0 0.0
      %1572 = vmatpush1.msra.mxu0 0.0
      %1573 = vmatprep.subr.mxu0 0.0
      %1574 = vmatpush1.msra.mxu0 0.0
      %1575 = vmatprep.subr.mxu0 0.0
      %1576 = vmatpush1.msra.mxu0 0.0
      %1577 = vmatprep.subr.mxu0 0.0
      %1578 = vmatpush1.msra.mxu0 0.0
      %1579 = vmatprep.subr.mxu0 0.0
      %1580 = vmatpush1.msra.mxu0 0.0
      %1581 = vmatprep.subr.mxu0 0.0
      %1582 = vmatpush1.msra.mxu0 0.0
      %1583 = vmatprep.subr.mxu0 0.0
      %1584 = vmatpush1.msra.mxu0 %v833
      %1585 = vmatprep.subr.mxu0 0.0
      %1586 = vmatpush2.msra.mxu0 0.0
      %1587 = vmatprep.subr.mxu0 0.0
      %1588 = vmatpush2.msra.mxu0 0.0
      %1589 = vmatprep.subr.mxu0 0.0
      %1590 = vmatpush2.msra.mxu0 0.0
      %1591 = vmatprep.subr.mxu0 0.0
      %1592 = vmatpush2.msra.mxu0 0.0
      %1593 = vmatprep.subr.mxu0 0.0
      %1594 = vmatpush2.msra.mxu0 0.0
      %1595 = vmatprep.subr.mxu0 0.0
      %1596 = vmatpush2.msra.mxu0 0.0
      %1597 = vmatprep.subr.mxu0 0.0
      %1598 = vmatpush2.msra.mxu0 0.0
      %1599 = vmatprep.subr.mxu0 0.0
      %1600 = vmatpush2.msra.mxu0 0.0
      %1601 = vmatprep.subr.mxu0 0.0
      %1602 = vmatpush2.msra.mxu0 0.0
      %1603 = vmatprep.subr.mxu0 0.0
      %1604 = vmatpush2.msra.mxu0 0.0
      %1605 = vmatprep.subr.mxu0 0.0
      %1606 = vmatpush2.msra.mxu0 0.0
      %1607 = vmatprep.subr.mxu0 0.0
      %1608 = vmatpush2.msra.mxu0 0.0
      %1609 = vmatprep.subr.mxu0 0.0
      %1610 = vmatpush2.msra.mxu0 0.0
      %1611 = vmatprep.subr.mxu0 0.0
      %1612 = vmatpush2.msra.mxu0 0.0
      %1613 = vmatprep.subr.mxu0 0.0
      %1614 = vmatpush2.msra.mxu0 0.0
      %1615 = vmatprep.subr.mxu0 0.0
      %1616 = vmatpush2.msra.mxu0 0.0
      %1617 = vmatprep.mubr.f32.mxu0 0.0
      %1618 = vmatmul.mubr.f32.gmra.mxu0 %v1551
      %v1619 = vpop.f32.mrf.mxu0
      %v1620 = vadd.f32 0.0, %v1619
      %v1621 = vpop.f32.mrf.mxu0
      %1622 = vdwg.mxu0
      %v1623 = vadd.f32 %v1361, %v1620
      %1624 = vrot.lane.b32.xlu0 %v819, 104
      %v1625 = vpop.permute.xlu0 %1624
      %1626 = vrot.lane.b32.xlu0 %v620, 104
      %v1627 = vpop.permute.xlu0 %1626
      %v1628 = vsel %vm835, %v1625, 0
      %v1630 = vsel %vm835, %v1627, 0
      %1632 = vmatprep.subr.mxu0 0.0
      %1633 = vmatpush1.xpose.msra.mxu0 0.0
      %1634 = vmatprep.subr.mxu0 0.0
      %1635 = vmatpush1.xpose.msra.mxu0 0.0
      %1636 = vmatprep.subr.mxu0 0.0
      %1637 = vmatpush1.xpose.msra.mxu0 0.0
      %1638 = vmatprep.subr.mxu0 0.0
      %1639 = vmatpush1.xpose.msra.mxu0 0.0
      %1640 = vmatprep.subr.mxu0 0.0
      %1641 = vmatpush1.xpose.msra.mxu0 0.0
      %1642 = vmatprep.subr.mxu0 0.0
      %1643 = vmatpush1.xpose.msra.mxu0 0.0
      %1644 = vmatprep.subr.mxu0 0.0
      %1645 = vmatpush1.xpose.msra.mxu0 0.0
      %1646 = vmatprep.subr.mxu0 0.0
      %1647 = vmatpush1.xpose.msra.mxu0 0.0
      %1648 = vmatprep.subr.mxu0 0.0
      %1649 = vmatpush1.xpose.msra.mxu0 0.0
      %1650 = vmatprep.subr.mxu0 0.0
      %1651 = vmatpush1.xpose.msra.mxu0 0.0
      %1652 = vmatprep.subr.mxu0 0.0
      %1653 = vmatpush1.xpose.msra.mxu0 0.0
      %1654 = vmatprep.subr.mxu0 0.0
      %1655 = vmatpush1.xpose.msra.mxu0 0.0
      %1656 = vmatprep.subr.mxu0 0.0
      %1657 = vmatpush1.xpose.msra.mxu0 0.0
      %1658 = vmatprep.subr.mxu0 0.0
      %1659 = vmatpush1.xpose.msra.mxu0 0.0
      %1660 = vmatprep.subr.mxu0 0.0
      %1661 = vmatpush1.xpose.msra.mxu0 0.0
      %1662 = vmatprep.subr.mxu0 0.0
      %1663 = vmatpush1.xpose.msra.mxu0 %v1630
      %1664 = vmatprep.subr.mxu0 0.0
      %1665 = vmatpush2.xpose.msra.mxu0 0.0
      %1666 = vmatprep.subr.mxu0 0.0
      %1667 = vmatpush2.xpose.msra.mxu0 0.0
      %1668 = vmatprep.subr.mxu0 0.0
      %1669 = vmatpush2.xpose.msra.mxu0 0.0
      %1670 = vmatprep.subr.mxu0 0.0
      %1671 = vmatpush2.xpose.msra.mxu0 0.0
      %1672 = vmatprep.subr.mxu0 0.0
      %1673 = vmatpush2.xpose.msra.mxu0 0.0
      %1674 = vmatprep.subr.mxu0 0.0
      %1675 = vmatpush2.xpose.msra.mxu0 0.0
      %1676 = vmatprep.subr.mxu0 0.0
      %1677 = vmatpush2.xpose.msra.mxu0 0.0
      %1678 = vmatprep.subr.mxu0 0.0
      %1679 = vmatpush2.xpose.msra.mxu0 0.0
      %1680 = vmatprep.subr.mxu0 0.0
      %1681 = vmatpush2.xpose.msra.mxu0 0.0
      %1682 = vmatprep.subr.mxu0 0.0
      %1683 = vmatpush2.xpose.msra.mxu0 0.0
      %1684 = vmatprep.subr.mxu0 0.0
      %1685 = vmatpush2.xpose.msra.mxu0 0.0
      %1686 = vmatprep.subr.mxu0 0.0
      %1687 = vmatpush2.xpose.msra.mxu0 0.0
      %1688 = vmatprep.subr.mxu0 0.0
      %1689 = vmatpush2.xpose.msra.mxu0 0.0
      %1690 = vmatprep.subr.mxu0 0.0
      %1691 = vmatpush2.xpose.msra.mxu0 0.0
      %1692 = vmatprep.subr.mxu0 0.0
      %1693 = vmatpush2.xpose.msra.mxu0 0.0
      %1694 = vmatprep.subr.mxu0 0.0
      %1695 = vmatpush2.xpose.msra.mxu0 0.0
      %1696 = vmatprep.mubr.f32.mxu0 0.0
      %1697 = vmatmul.mubr.f32.gmra.mxu0 %v1628
      %v1698 = vpop.f32.mrf.mxu0
      %v1699 = vadd.f32 0.0, %v1698
      %v1700 = vpop.f32.mrf.mxu0
      %1701 = vdwg.mxu0
      %v1702 = vmul.f32 %v1699, 0.35355338
      %v1703 = vsel %vm918, %v1702, -1e+30
      %1704 = vrot.lane.b32.xlu0 %v924, 104
      %v1705 = vpop.permute.xlu0 %1704
      %v1707 = vsel %vm925, %v1705, 0.0
      %1708 = vadd.xlane.f32.xlu0 %v1707
      %v1709 = vpop.xlane.xlu0 %1708
      %v1710 = vmul.f32 %v1709, 0.35355338
      %v1711 = vsel %vm930, %v1703, -inf
      %1712 = vmax.xlane.f32.xlu0 %v1711
      %v1713 = vpop.xlane.xlu0 %1712
      %v1714 = vmax.f32 %v1713, %v1710
      %v1715 = vsub.f32 %v1703, %v1714
      %v1716 = vmul.f32 %v1715, 1.442695
      %v1717 = vpow.pop %v1716
      %v1718 = vsub.f32 %v1710, %v1714
      %v1719 = vmul.f32 %v1718, 1.442695
      %v1720 = vpow.pop %v1719
      %v1721 = vsel %vm930, %v1717, 0.0
      %1722 = vadd.xlane.f32.xlu0 %v1721
      %v1723 = vpop.xlane.xlu0 %1722
      %v1724 = vadd.f32 %v1720, %v1723
      %v1725 = vrcp.pop %v1724
      %v1726 = vmul.f32 %v1717, %v1725
      %v1727 = vmul.f32 %v1720, %v1725
      %v1728 = vmul.f32 %v1727, %v951
      %1729 = vrot.lane.b32.xlu0 %v828, 104
      %v1730 = vpop.permute.xlu0 %1729
      %1732 = vrot.lane.b32.xlu0 %v1728, 104
      %v1733 = vpop.permute.xlu0 %1732
      %v1736 = vsel %vm953, %v1726, 0
      %v1738 = vsel %vm957, %v1730, 0
      %1740 = vmatprep.subr.mxu0 0.0
      %1741 = vmatpush1.msra.mxu0 0.0
      %1742 = vmatprep.subr.mxu0 0.0
      %1743 = vmatpush1.msra.mxu0 0.0
      %1744 = vmatprep.subr.mxu0 0.0
      %1745 = vmatpush1.msra.mxu0 0.0
      %1746 = vmatprep.subr.mxu0 0.0
      %1747 = vmatpush1.msra.mxu0 0.0
      %1748 = vmatprep.subr.mxu0 0.0
      %1749 = vmatpush1.msra.mxu0 0.0
      %1750 = vmatprep.subr.mxu0 0.0
      %1751 = vmatpush1.msra.mxu0 0.0
      %1752 = vmatprep.subr.mxu0 0.0
      %1753 = vmatpush1.msra.mxu0 0.0
      %1754 = vmatprep.subr.mxu0 0.0
      %1755 = vmatpush1.msra.mxu0 0.0
      %1756 = vmatprep.subr.mxu0 0.0
      %1757 = vmatpush1.msra.mxu0 0.0
      %1758 = vmatprep.subr.mxu0 0.0
      %1759 = vmatpush1.msra.mxu0 0.0
      %1760 = vmatprep.subr.mxu0 0.0
      %1761 = vmatpush1.msra.mxu0 0.0
      %1762 = vmatprep.subr.mxu0 0.0
      %1763 = vmatpush1.msra.mxu0 0.0
      %1764 = vmatprep.subr.mxu0 0.0
      %1765 = vmatpush1.msra.mxu0 0.0
      %1766 = vmatprep.subr.mxu0 0.0
      %1767 = vmatpush1.msra.mxu0 0.0
      %1768 = vmatprep.subr.mxu0 0.0
      %1769 = vmatpush1.msra.mxu0 0.0
      %1770 = vmatprep.subr.mxu0 0.0
      %1771 = vmatpush1.msra.mxu0 %v1738
      %1772 = vmatprep.subr.mxu0 0.0
      %1773 = vmatpush2.msra.mxu0 0.0
      %1774 = vmatprep.subr.mxu0 0.0
      %1775 = vmatpush2.msra.mxu0 0.0
      %1776 = vmatprep.subr.mxu0 0.0
      %1777 = vmatpush2.msra.mxu0 0.0
      %1778 = vmatprep.subr.mxu0 0.0
      %1779 = vmatpush2.msra.mxu0 0.0
      %1780 = vmatprep.subr.mxu0 0.0
      %1781 = vmatpush2.msra.mxu0 0.0
      %1782 = vmatprep.subr.mxu0 0.0
      %1783 = vmatpush2.msra.mxu0 0.0
      %1784 = vmatprep.subr.mxu0 0.0
      %1785 = vmatpush2.msra.mxu0 0.0
      %1786 = vmatprep.subr.mxu0 0.0
      %1787 = vmatpush2.msra.mxu0 0.0
      %1788 = vmatprep.subr.mxu0 0.0
      %1789 = vmatpush2.msra.mxu0 0.0
      %1790 = vmatprep.subr.mxu0 0.0
      %1791 = vmatpush2.msra.mxu0 0.0
      %1792 = vmatprep.subr.mxu0 0.0
      %1793 = vmatpush2.msra.mxu0 0.0
      %1794 = vmatprep.subr.mxu0 0.0
      %1795 = vmatpush2.msra.mxu0 0.0
      %1796 = vmatprep.subr.mxu0 0.0
      %1797 = vmatpush2.msra.mxu0 0.0
      %1798 = vmatprep.subr.mxu0 0.0
      %1799 = vmatpush2.msra.mxu0 0.0
      %1800 = vmatprep.subr.mxu0 0.0
      %1801 = vmatpush2.msra.mxu0 0.0
      %1802 = vmatprep.subr.mxu0 0.0
      %1803 = vmatpush2.msra.mxu0 0.0
      %1804 = vmatprep.mubr.f32.mxu0 0.0
      %1805 = vmatmul.mubr.f32.gmra.mxu0 %v1736
      %v1806 = vpop.f32.mrf.mxu0
      %v1807 = vadd.f32 %v1733, %v1806
      %v1808 = vpop.f32.mrf.mxu0
      %1809 = vdwg.mxu0
      %v1811 = vsel %vm835, %v1807, 0
      %1813 = vmatprep.subr.mxu0 0.0
      %1814 = vmatpush1.msra.mxu0 0.0
      %1815 = vmatprep.subr.mxu0 0.0
      %1816 = vmatpush1.msra.mxu0 0.0
      %1817 = vmatprep.subr.mxu0 0.0
      %1818 = vmatpush1.msra.mxu0 0.0
      %1819 = vmatprep.subr.mxu0 0.0
      %1820 = vmatpush1.msra.mxu0 0.0
      %1821 = vmatprep.subr.mxu0 0.0
      %1822 = vmatpush1.msra.mxu0 0.0
      %1823 = vmatprep.subr.mxu0 0.0
      %1824 = vmatpush1.msra.mxu0 0.0
      %1825 = vmatprep.subr.mxu0 0.0
      %1826 = vmatpush1.msra.mxu0 0.0
      %1827 = vmatprep.subr.mxu0 0.0
      %1828 = vmatpush1.msra.mxu0 0.0
      %1829 = vmatprep.subr.mxu0 0.0
      %1830 = vmatpush1.msra.mxu0 0.0
      %1831 = vmatprep.subr.mxu0 0.0
      %1832 = vmatpush1.msra.mxu0 0.0
      %1833 = vmatprep.subr.mxu0 0.0
      %1834 = vmatpush1.msra.mxu0 0.0
      %1835 = vmatprep.subr.mxu0 0.0
      %1836 = vmatpush1.msra.mxu0 0.0
      %1837 = vmatprep.subr.mxu0 0.0
      %1838 = vmatpush1.msra.mxu0 0.0
      %1839 = vmatprep.subr.mxu0 0.0
      %1840 = vmatpush1.msra.mxu0 0.0
      %1841 = vmatprep.subr.mxu0 0.0
      %1842 = vmatpush1.msra.mxu0 0.0
      %1843 = vmatprep.subr.mxu0 0.0
      %1844 = vmatpush1.msra.mxu0 %v834
      %1845 = vmatprep.subr.mxu0 0.0
      %1846 = vmatpush2.msra.mxu0 0.0
      %1847 = vmatprep.subr.mxu0 0.0
      %1848 = vmatpush2.msra.mxu0 0.0
      %1849 = vmatprep.subr.mxu0 0.0
      %1850 = vmatpush2.msra.mxu0 0.0
      %1851 = vmatprep.subr.mxu0 0.0
      %1852 = vmatpush2.msra.mxu0 0.0
      %1853 = vmatprep.subr.mxu0 0.0
      %1854 = vmatpush2.msra.mxu0 0.0
      %1855 = vmatprep.subr.mxu0 0.0
      %1856 = vmatpush2.msra.mxu0 0.0
      %1857 = vmatprep.subr.mxu0 0.0
      %1858 = vmatpush2.msra.mxu0 0.0
      %1859 = vmatprep.subr.mxu0 0.0
      %1860 = vmatpush2.msra.mxu0 0.0
      %1861 = vmatprep.subr.mxu0 0.0
      %1862 = vmatpush2.msra.mxu0 0.0
      %1863 = vmatprep.subr.mxu0 0.0
      %1864 = vmatpush2.msra.mxu0 0.0
      %1865 = vmatprep.subr.mxu0 0.0
      %1866 = vmatpush2.msra.mxu0 0.0
      %1867 = vmatprep.subr.mxu0 0.0
      %1868 = vmatpush2.msra.mxu0 0.0
      %1869 = vmatprep.subr.mxu0 0.0
      %1870 = vmatpush2.msra.mxu0 0.0
      %1871 = vmatprep.subr.mxu0 0.0
      %1872 = vmatpush2.msra.mxu0 0.0
      %1873 = vmatprep.subr.mxu0 0.0
      %1874 = vmatpush2.msra.mxu0 0.0
      %1875 = vmatprep.subr.mxu0 0.0
      %1876 = vmatpush2.msra.mxu0 0.0
      %1877 = vmatprep.mubr.f32.mxu0 0.0
      %1878 = vmatmul.mubr.f32.gmra.mxu0 %v1811
      %v1879 = vpop.f32.mrf.mxu0
      %v1880 = vadd.f32 0.0, %v1879
      %v1881 = vpop.f32.mrf.mxu0
      %1882 = vdwg.mxu0
      %v1883 = vadd.f32 %v1623, %v1880
      %v1884 = vld [vmem:[%s510] sm:$0x3]
      %1886 = vset.pattern.permute.xlu0 0
      %1887 = vperm.xlu0 %1886, %v1884
      %v1888 = vpop.permute.xlu0 %1887
      %v1890 = vmul.f32 %v1883, %v1888
      %1891 = vst.msk [vmem:[%s517] sm:$0x3] %vm725, %v1890
      %s1892 = scalar_lea.vmem %s483, 2
      %v1893 = vld [vmem:[%s1892] sm:$0x3]
      %v1894 = vmul.f32 %v1893, %v1893
      %v1895 = vsel %vm725, %v1894, 0.0
      %1896 = vadd.xlane.f32.xlu0 %v1895
      %v1897 = vpop.xlane.xlu0 %1896
      %v1898 = vrsqrt.pop %v1897
      %v1899 = vmul.f32 %v1897, %v1898
      %vm1900 = vcmp.eq.f32.partialorder %v1897, inf
      %v1901 = vsel %vm1900, %v1897, %v1899
      %vm1902 = vcmp.eq.f32.partialorder %v1897, 0.0
      %v1903 = vand.u32 %v1897, 2147483648
      %v1904 = vsel %vm1902, %v1903, %v1901
      %v1905 = vmax.f32 %v1904, 1e-12
      %v1906 = vrcp.pop %v1905
      %v1907 = vmul.f32 %v1893, %v1906
      %v1908 = vmul.f32 %v1907, 5.656854
      %v1909 = vlaneseq
      %v1910 = vshrl.u32 %v1909, 7
      %v1911 = vsub.s32 1, %v1910
      %v1912 = vrot.slane %v519, %v1911
      %v1913 = vmul.f32 %v1908, %v1912
      %s1914 = scalar_lea.vmem %s7, 32
      %v1915 = vld [vmem:[%s1914] sm:$0xff]
      %v1916 = vld [vmem:[%s1914 + $0x8] sm:$0xff]
      %v1917 = vld [vmem:[%s1914 + $0x10] sm:$0xff]
      %v1918 = vld [vmem:[%s1914 + $0x18] sm:$0xff]
      %v1920 = vsel %vm549, %v1913, 0
      %1922 = vmatprep.subr.mxu0 0.0
      %1923 = vmatpush1.msra.mxu0 0.0
      %1924 = vmatprep.subr.mxu0 0.0
      %1925 = vmatpush1.msra.mxu0 0.0
      %1926 = vmatprep.subr.mxu0 0.0
      %1927 = vmatpush1.msra.mxu0 0.0
      %1928 = vmatprep.subr.mxu0 0.0
      %1929 = vmatpush1.msra.mxu0 0.0
      %1930 = vmatprep.subr.mxu0 0.0
      %1931 = vmatpush1.msra.mxu0 0.0
      %1932 = vmatprep.subr.mxu0 0.0
      %1933 = vmatpush1.msra.mxu0 0.0
      %1934 = vmatprep.subr.mxu0 0.0
      %1935 = vmatpush1.msra.mxu0 0.0
      %1936 = vmatprep.subr.mxu0 0.0
      %1937 = vmatpush1.msra.mxu0 0.0
      %1938 = vmatprep.subr.mxu0 0.0
      %1939 = vmatpush1.msra.mxu0 0.0
      %1940 = vmatprep.subr.mxu0 0.0
      %1941 = vmatpush1.msra.mxu0 0.0
      %1942 = vmatprep.subr.mxu0 0.0
      %1943 = vmatpush1.msra.mxu0 0.0
      %1944 = vmatprep.subr.mxu0 0.0
      %1945 = vmatpush1.msra.mxu0 0.0
      %1946 = vmatprep.subr.mxu0 0.0
      %1947 = vmatpush1.msra.mxu0 %v1918
      %1948 = vmatprep.subr.mxu0 0.0
      %1949 = vmatpush1.msra.mxu0 %v1917
      %1950 = vmatprep.subr.mxu0 0.0
      %1951 = vmatpush1.msra.mxu0 %v1916
      %1952 = vmatprep.subr.mxu0 0.0
      %1953 = vmatpush1.msra.mxu0 %v1915
      %1954 = vmatprep.subr.mxu0 0.0
      %1955 = vmatpush2.msra.mxu0 0.0
      %1956 = vmatprep.subr.mxu0 0.0
      %1957 = vmatpush2.msra.mxu0 0.0
      %1958 = vmatprep.subr.mxu0 0.0
      %1959 = vmatpush2.msra.mxu0 0.0
      %1960 = vmatprep.subr.mxu0 0.0
      %1961 = vmatpush2.msra.mxu0 0.0
      %1962 = vmatprep.subr.mxu0 0.0
      %1963 = vmatpush2.msra.mxu0 0.0
      %1964 = vmatprep.subr.mxu0 0.0
      %1965 = vmatpush2.msra.mxu0 0.0
      %1966 = vmatprep.subr.mxu0 0.0
      %1967 = vmatpush2.msra.mxu0 0.0
      %1968 = vmatprep.subr.mxu0 0.0
      %1969 = vmatpush2.msra.mxu0 0.0
      %1970 = vmatprep.subr.mxu0 0.0
      %1971 = vmatpush2.msra.mxu0 0.0
      %1972 = vmatprep.subr.mxu0 0.0
      %1973 = vmatpush2.msra.mxu0 0.0
      %1974 = vmatprep.subr.mxu0 0.0
      %1975 = vmatpush2.msra.mxu0 0.0
      %1976 = vmatprep.subr.mxu0 0.0
      %1977 = vmatpush2.msra.mxu0 0.0
      %1978 = vmatprep.subr.mxu0 0.0
      %1979 = vmatpush2.msra.mxu0 0.0
      %1980 = vmatprep.subr.mxu0 0.0
      %1981 = vmatpush2.msra.mxu0 0.0
      %1982 = vmatprep.subr.mxu0 0.0
      %1983 = vmatpush2.msra.mxu0 0.0
      %1984 = vmatprep.subr.mxu0 0.0
      %1985 = vmatpush2.msra.mxu0 0.0
      %1986 = vmatprep.mubr.f32.mxu0 0.0
      %1987 = vmatmul.mubr.f32.gmra.mxu0 %v1920
      %v1988 = vpop.f32.mrf.mxu0
      %v1989 = vadd.f32 0.0, %v1988
      %v1990 = vpop.f32.mrf.mxu0
      %1991 = vdwg.mxu0
      %s1992 = scalar_lea.vmem %s503, 4
      %v1993 = vld [vmem:[%s1992] sm:$0x7]
      %1995 = vset.pattern.permute.xlu0 0
      %1996 = vperm.xlu0 %1995, %v1993
      %v1997 = vpop.permute.xlu0 %1996
      %v1999 = vmul.f32 %v720, %v1997
      %s2000 = scalar_lea.vmem %s496, 1
      %v2001 = vld [vmem:[%s2000] sm:$0x1]
      %vm2002 = vcmp.gt.f32.partialorder %v2001, 0.5
      %s2003 = scalar_lea.vmem %s9, 32
      %v2004 = vld [vmem:[%s2003] sm:$0xff]
      %v2005 = vld [vmem:[%s2003 + $0x8] sm:$0xff]
      %v2006 = vld [vmem:[%s2003 + $0x10] sm:$0xff]
      %v2007 = vld [vmem:[%s2003 + $0x18] sm:$0xff]
      %2008 = vrot.lane.b32.xlu0 %v620, 96
      %v2009 = vpop.permute.xlu0 %2008
      %v2011 = vsel %vm835, %v1989, 0
      %v2013 = vsel %vm835, %v2009, 0
      %2015 = vmatprep.subr.mxu0 0.0
      %2016 = vmatpush1.xpose.msra.mxu0 0.0
      %2017 = vmatprep.subr.mxu0 0.0
      %2018 = vmatpush1.xpose.msra.mxu0 0.0
      %2019 = vmatprep.subr.mxu0 0.0
      %2020 = vmatpush1.xpose.msra.mxu0 0.0
      %2021 = vmatprep.subr.mxu0 0.0
      %2022 = vmatpush1.xpose.msra.mxu0 0.0
      %2023 = vmatprep.subr.mxu0 0.0
      %2024 = vmatpush1.xpose.msra.mxu0 0.0
      %2025 = vmatprep.subr.mxu0 0.0
      %2026 = vmatpush1.xpose.msra.mxu0 0.0
      %2027 = vmatprep.subr.mxu0 0.0
      %2028 = vmatpush1.xpose.msra.mxu0 0.0
      %2029 = vmatprep.subr.mxu0 0.0
      %2030 = vmatpush1.xpose.msra.mxu0 0.0
      %2031 = vmatprep.subr.mxu0 0.0
      %2032 = vmatpush1.xpose.msra.mxu0 0.0
      %2033 = vmatprep.subr.mxu0 0.0
      %2034 = vmatpush1.xpose.msra.mxu0 0.0
      %2035 = vmatprep.subr.mxu0 0.0
      %2036 = vmatpush1.xpose.msra.mxu0 0.0
      %2037 = vmatprep.subr.mxu0 0.0
      %2038 = vmatpush1.xpose.msra.mxu0 0.0
      %2039 = vmatprep.subr.mxu0 0.0
      %2040 = vmatpush1.xpose.msra.mxu0 0.0
      %2041 = vmatprep.subr.mxu0 0.0
      %2042 = vmatpush1.xpose.msra.mxu0 0.0
      %2043 = vmatprep.subr.mxu0 0.0
      %2044 = vmatpush1.xpose.msra.mxu0 0.0
      %2045 = vmatprep.subr.mxu0 0.0
      %2046 = vmatpush1.xpose.msra.mxu0 %v2013
      %2047 = vmatprep.subr.mxu0 0.0
      %2048 = vmatpush2.xpose.msra.mxu0 0.0
      %2049 = vmatprep.subr.mxu0 0.0
      %2050 = vmatpush2.xpose.msra.mxu0 0.0
      %2051 = vmatprep.subr.mxu0 0.0
      %2052 = vmatpush2.xpose.msra.mxu0 0.0
      %2053 = vmatprep.subr.mxu0 0.0
      %2054 = vmatpush2.xpose.msra.mxu0 0.0
      %2055 = vmatprep.subr.mxu0 0.0
      %2056 = vmatpush2.xpose.msra.mxu0 0.0
      %2057 = vmatprep.subr.mxu0 0.0
      %2058 = vmatpush2.xpose.msra.mxu0 0.0
      %2059 = vmatprep.subr.mxu0 0.0
      %2060 = vmatpush2.xpose.msra.mxu0 0.0
      %2061 = vmatprep.subr.mxu0 0.0
      %2062 = vmatpush2.xpose.msra.mxu0 0.0
      %2063 = vmatprep.subr.mxu0 0.0
      %2064 = vmatpush2.xpose.msra.mxu0 0.0
      %2065 = vmatprep.subr.mxu0 0.0
      %2066 = vmatpush2.xpose.msra.mxu0 0.0
      %2067 = vmatprep.subr.mxu0 0.0
      %2068 = vmatpush2.xpose.msra.mxu0 0.0
      %2069 = vmatprep.subr.mxu0 0.0
      %2070 = vmatpush2.xpose.msra.mxu0 0.0
      %2071 = vmatprep.subr.mxu0 0.0
      %2072 = vmatpush2.xpose.msra.mxu0 0.0
      %2073 = vmatprep.subr.mxu0 0.0
      %2074 = vmatpush2.xpose.msra.mxu0 0.0
      %2075 = vmatprep.subr.mxu0 0.0
      %2076 = vmatpush2.xpose.msra.mxu0 0.0
      %2077 = vmatprep.subr.mxu0 0.0
      %2078 = vmatpush2.xpose.msra.mxu0 0.0
      %2079 = vmatprep.mubr.f32.mxu0 0.0
      %2080 = vmatmul.mubr.f32.gmra.mxu0 %v2011
      %v2081 = vpop.f32.mrf.mxu0
      %v2082 = vadd.f32 0.0, %v2081
      %v2083 = vpop.f32.mrf.mxu0
      %2084 = vdwg.mxu0
      %v2085 = vmul.f32 %v2082, 0.35355338
      %v2086 = vsel %vm2002, 1, 0
      %v2087 = vlaneseq
      %v2088 = vshrl.u32 %v2087, 7
      %v2089 = vsub.s32 0, %v2088
      %v2090 = vrot.slane %v2086, %v2089
      %vm2091 = vcmp.eq.s32.totalorder %v2090, 1
      %v2092 = vsel %vm2091, %v2085, -1e+30
      %v2093 = vlaneseq
      %v2094 = vshrl.u32 %v2093, 7
      %v2095 = vsub.s32 1, %v2094
      %v2096 = vrot.slane %v521, %v2095
      %v2097 = vmul.f32 %v1989, %v2096
      %v2098 = vsel %vm925, %v2097, 0.0
      %2099 = vadd.xlane.f32.xlu0 %v2098
      %v2100 = vpop.xlane.xlu0 %2099
      %v2101 = vmul.f32 %v2100, 0.35355338
      %v2102 = vsel %vm930, %v2092, -inf
      %2103 = vmax.xlane.f32.xlu0 %v2102
      %v2104 = vpop.xlane.xlu0 %2103
      %v2105 = vmax.f32 %v2104, %v2101
      %v2106 = vsub.f32 %v2092, %v2105
      %v2107 = vmul.f32 %v2106, 1.442695
      %v2108 = vpow.pop %v2107
      %v2109 = vsub.f32 %v2101, %v2105
      %v2110 = vmul.f32 %v2109, 1.442695
      %v2111 = vpow.pop %v2110
      %v2112 = vsel %vm930, %v2108, 0.0
      %2113 = vadd.xlane.f32.xlu0 %v2112
      %v2114 = vpop.xlane.xlu0 %2113
      %v2115 = vadd.f32 %v2111, %v2114
      %v2116 = vrcp.pop %v2115
      %v2117 = vmul.f32 %v2108, %v2116
      %v2118 = vmul.f32 %v2111, %v2116
      %v2119 = vlaneseq
      %v2120 = vshrl.u32 %v2119, 7
      %v2121 = vsub.s32 1, %v2120
      %v2122 = vrot.slane %v522, %v2121
      %v2123 = vmul.f32 %v2118, %v2122
      %2125 = vrot.lane.b32.xlu0 %v1999, 96
      %v2126 = vpop.permute.xlu0 %2125
      %v2128 = vsel %vm953, %v2117, 0
      %v2130 = vsel %vm957, %v2126, 0
      %2132 = vmatprep.subr.mxu0 0.0
      %2133 = vmatpush1.msra.mxu0 0.0
      %2134 = vmatprep.subr.mxu0 0.0
      %2135 = vmatpush1.msra.mxu0 0.0
      %2136 = vmatprep.subr.mxu0 0.0
      %2137 = vmatpush1.msra.mxu0 0.0
      %2138 = vmatprep.subr.mxu0 0.0
      %2139 = vmatpush1.msra.mxu0 0.0
      %2140 = vmatprep.subr.mxu0 0.0
      %2141 = vmatpush1.msra.mxu0 0.0
      %2142 = vmatprep.subr.mxu0 0.0
      %2143 = vmatpush1.msra.mxu0 0.0
      %2144 = vmatprep.subr.mxu0 0.0
      %2145 = vmatpush1.msra.mxu0 0.0
      %2146 = vmatprep.subr.mxu0 0.0
      %2147 = vmatpush1.msra.mxu0 0.0
      %2148 = vmatprep.subr.mxu0 0.0
      %2149 = vmatpush1.msra.mxu0 0.0
      %2150 = vmatprep.subr.mxu0 0.0
      %2151 = vmatpush1.msra.mxu0 0.0
      %2152 = vmatprep.subr.mxu0 0.0
      %2153 = vmatpush1.msra.mxu0 0.0
      %2154 = vmatprep.subr.mxu0 0.0
      %2155 = vmatpush1.msra.mxu0 0.0
      %2156 = vmatprep.subr.mxu0 0.0
      %2157 = vmatpush1.msra.mxu0 0.0
      %2158 = vmatprep.subr.mxu0 0.0
      %2159 = vmatpush1.msra.mxu0 0.0
      %2160 = vmatprep.subr.mxu0 0.0
      %2161 = vmatpush1.msra.mxu0 0.0
      %2162 = vmatprep.subr.mxu0 0.0
      %2163 = vmatpush1.msra.mxu0 %v2130
      %2164 = vmatprep.subr.mxu0 0.0
      %2165 = vmatpush2.msra.mxu0 0.0
      %2166 = vmatprep.subr.mxu0 0.0
      %2167 = vmatpush2.msra.mxu0 0.0
      %2168 = vmatprep.subr.mxu0 0.0
      %2169 = vmatpush2.msra.mxu0 0.0
      %2170 = vmatprep.subr.mxu0 0.0
      %2171 = vmatpush2.msra.mxu0 0.0
      %2172 = vmatprep.subr.mxu0 0.0
      %2173 = vmatpush2.msra.mxu0 0.0
      %2174 = vmatprep.subr.mxu0 0.0
      %2175 = vmatpush2.msra.mxu0 0.0
      %2176 = vmatprep.subr.mxu0 0.0
      %2177 = vmatpush2.msra.mxu0 0.0
      %2178 = vmatprep.subr.mxu0 0.0
      %2179 = vmatpush2.msra.mxu0 0.0
      %2180 = vmatprep.subr.mxu0 0.0
      %2181 = vmatpush2.msra.mxu0 0.0
      %2182 = vmatprep.subr.mxu0 0.0
      %2183 = vmatpush2.msra.mxu0 0.0
      %2184 = vmatprep.subr.mxu0 0.0
      %2185 = vmatpush2.msra.mxu0 0.0
      %2186 = vmatprep.subr.mxu0 0.0
      %2187 = vmatpush2.msra.mxu0 0.0
      %2188 = vmatprep.subr.mxu0 0.0
      %2189 = vmatpush2.msra.mxu0 0.0
      %2190 = vmatprep.subr.mxu0 0.0
      %2191 = vmatpush2.msra.mxu0 0.0
      %2192 = vmatprep.subr.mxu0 0.0
      %2193 = vmatpush2.msra.mxu0 0.0
      %2194 = vmatprep.subr.mxu0 0.0
      %2195 = vmatpush2.msra.mxu0 0.0
      %2196 = vmatprep.mubr.f32.mxu0 0.0
      %2197 = vmatmul.mubr.f32.gmra.mxu0 %v2128
      %v2198 = vpop.f32.mrf.mxu0
      %v2199 = vadd.f32 %v2123, %v2198
      %v2200 = vpop.f32.mrf.mxu0
      %2201 = vdwg.mxu0
      %2202 = vrot.lane.b32.xlu0 %v1989, 120
      %v2203 = vpop.permute.xlu0 %2202
      %2204 = vrot.lane.b32.xlu0 %v620, 88
      %v2205 = vpop.permute.xlu0 %2204
      %v2206 = vsel %vm835, %v2203, 0
      %v2208 = vsel %vm835, %v2205, 0
      %2210 = vmatprep.subr.mxu0 0.0
      %2211 = vmatpush1.xpose.msra.mxu0 0.0
      %2212 = vmatprep.subr.mxu0 0.0
      %2213 = vmatpush1.xpose.msra.mxu0 0.0
      %2214 = vmatprep.subr.mxu0 0.0
      %2215 = vmatpush1.xpose.msra.mxu0 0.0
      %2216 = vmatprep.subr.mxu0 0.0
      %2217 = vmatpush1.xpose.msra.mxu0 0.0
      %2218 = vmatprep.subr.mxu0 0.0
      %2219 = vmatpush1.xpose.msra.mxu0 0.0
      %2220 = vmatprep.subr.mxu0 0.0
      %2221 = vmatpush1.xpose.msra.mxu0 0.0
      %2222 = vmatprep.subr.mxu0 0.0
      %2223 = vmatpush1.xpose.msra.mxu0 0.0
      %2224 = vmatprep.subr.mxu0 0.0
      %2225 = vmatpush1.xpose.msra.mxu0 0.0
      %2226 = vmatprep.subr.mxu0 0.0
      %2227 = vmatpush1.xpose.msra.mxu0 0.0
      %2228 = vmatprep.subr.mxu0 0.0
      %2229 = vmatpush1.xpose.msra.mxu0 0.0
      %2230 = vmatprep.subr.mxu0 0.0
      %2231 = vmatpush1.xpose.msra.mxu0 0.0
      %2232 = vmatprep.subr.mxu0 0.0
      %2233 = vmatpush1.xpose.msra.mxu0 0.0
      %2234 = vmatprep.subr.mxu0 0.0
      %2235 = vmatpush1.xpose.msra.mxu0 0.0
      %2236 = vmatprep.subr.mxu0 0.0
      %2237 = vmatpush1.xpose.msra.mxu0 0.0
      %2238 = vmatprep.subr.mxu0 0.0
      %2239 = vmatpush1.xpose.msra.mxu0 0.0
      %2240 = vmatprep.subr.mxu0 0.0
      %2241 = vmatpush1.xpose.msra.mxu0 %v2208
      %2242 = vmatprep.subr.mxu0 0.0
      %2243 = vmatpush2.xpose.msra.mxu0 0.0
      %2244 = vmatprep.subr.mxu0 0.0
      %2245 = vmatpush2.xpose.msra.mxu0 0.0
      %2246 = vmatprep.subr.mxu0 0.0
      %2247 = vmatpush2.xpose.msra.mxu0 0.0
      %2248 = vmatprep.subr.mxu0 0.0
      %2249 = vmatpush2.xpose.msra.mxu0 0.0
      %2250 = vmatprep.subr.mxu0 0.0
      %2251 = vmatpush2.xpose.msra.mxu0 0.0
      %2252 = vmatprep.subr.mxu0 0.0
      %2253 = vmatpush2.xpose.msra.mxu0 0.0
      %2254 = vmatprep.subr.mxu0 0.0
      %2255 = vmatpush2.xpose.msra.mxu0 0.0
      %2256 = vmatprep.subr.mxu0 0.0
      %2257 = vmatpush2.xpose.msra.mxu0 0.0
      %2258 = vmatprep.subr.mxu0 0.0
      %2259 = vmatpush2.xpose.msra.mxu0 0.0
      %2260 = vmatprep.subr.mxu0 0.0
      %2261 = vmatpush2.xpose.msra.mxu0 0.0
      %2262 = vmatprep.subr.mxu0 0.0
      %2263 = vmatpush2.xpose.msra.mxu0 0.0
      %2264 = vmatprep.subr.mxu0 0.0
      %2265 = vmatpush2.xpose.msra.mxu0 0.0
      %2266 = vmatprep.subr.mxu0 0.0
      %2267 = vmatpush2.xpose.msra.mxu0 0.0
      %2268 = vmatprep.subr.mxu0 0.0
      %2269 = vmatpush2.xpose.msra.mxu0 0.0
      %2270 = vmatprep.subr.mxu0 0.0
      %2271 = vmatpush2.xpose.msra.mxu0 0.0
      %2272 = vmatprep.subr.mxu0 0.0
      %2273 = vmatpush2.xpose.msra.mxu0 0.0
      %2274 = vmatprep.mubr.f32.mxu0 0.0
      %2275 = vmatmul.mubr.f32.gmra.mxu0 %v2206
      %v2276 = vpop.f32.mrf.mxu0
      %v2277 = vadd.f32 0.0, %v2276
      %v2278 = vpop.f32.mrf.mxu0
      %2279 = vdwg.mxu0
      %v2280 = vmul.f32 %v2277, 0.35355338
      %v2281 = vsel %vm2091, %v2280, -1e+30
      %2283 = vrot.lane.b32.xlu0 %v2097, 120
      %v2284 = vpop.permute.xlu0 %2283
      %v2286 = vsel %vm925, %v2284, 0.0
      %2287 = vadd.xlane.f32.xlu0 %v2286
      %v2288 = vpop.xlane.xlu0 %2287
      %v2289 = vmul.f32 %v2288, 0.35355338
      %v2290 = vsel %vm930, %v2281, -inf
      %2291 = vmax.xlane.f32.xlu0 %v2290
      %v2292 = vpop.xlane.xlu0 %2291
      %v2293 = vmax.f32 %v2292, %v2289
      %v2294 = vsub.f32 %v2281, %v2293
      %v2295 = vmul.f32 %v2294, 1.442695
      %v2296 = vpow.pop %v2295
      %v2297 = vsub.f32 %v2289, %v2293
      %v2298 = vmul.f32 %v2297, 1.442695
      %v2299 = vpow.pop %v2298
      %v2300 = vsel %vm930, %v2296, 0.0
      %2301 = vadd.xlane.f32.xlu0 %v2300
      %v2302 = vpop.xlane.xlu0 %2301
      %v2303 = vadd.f32 %v2299, %v2302
      %v2304 = vrcp.pop %v2303
      %v2305 = vmul.f32 %v2296, %v2304
      %v2306 = vmul.f32 %v2299, %v2304
      %v2307 = vmul.f32 %v2306, %v2122
      %2308 = vrot.lane.b32.xlu0 %v1999, 88
      %v2309 = vpop.permute.xlu0 %2308
      %2311 = vrot.lane.b32.xlu0 %v2307, 120
      %v2312 = vpop.permute.xlu0 %2311
      %v2315 = vsel %vm953, %v2305, 0
      %v2317 = vsel %vm957, %v2309, 0
      %2319 = vmatprep.subr.mxu0 0.0
      %2320 = vmatpush1.msra.mxu0 0.0
      %2321 = vmatprep.subr.mxu0 0.0
      %2322 = vmatpush1.msra.mxu0 0.0
      %2323 = vmatprep.subr.mxu0 0.0
      %2324 = vmatpush1.msra.mxu0 0.0
      %2325 = vmatprep.subr.mxu0 0.0
      %2326 = vmatpush1.msra.mxu0 0.0
      %2327 = vmatprep.subr.mxu0 0.0
      %2328 = vmatpush1.msra.mxu0 0.0
      %2329 = vmatprep.subr.mxu0 0.0
      %2330 = vmatpush1.msra.mxu0 0.0
      %2331 = vmatprep.subr.mxu0 0.0
      %2332 = vmatpush1.msra.mxu0 0.0
      %2333 = vmatprep.subr.mxu0 0.0
      %2334 = vmatpush1.msra.mxu0 0.0
      %2335 = vmatprep.subr.mxu0 0.0
      %2336 = vmatpush1.msra.mxu0 0.0
      %2337 = vmatprep.subr.mxu0 0.0
      %2338 = vmatpush1.msra.mxu0 0.0
      %2339 = vmatprep.subr.mxu0 0.0
      %2340 = vmatpush1.msra.mxu0 0.0
      %2341 = vmatprep.subr.mxu0 0.0
      %2342 = vmatpush1.msra.mxu0 0.0
      %2343 = vmatprep.subr.mxu0 0.0
      %2344 = vmatpush1.msra.mxu0 0.0
      %2345 = vmatprep.subr.mxu0 0.0
      %2346 = vmatpush1.msra.mxu0 0.0
      %2347 = vmatprep.subr.mxu0 0.0
      %2348 = vmatpush1.msra.mxu0 0.0
      %2349 = vmatprep.subr.mxu0 0.0
      %2350 = vmatpush1.msra.mxu0 %v2317
      %2351 = vmatprep.subr.mxu0 0.0
      %2352 = vmatpush2.msra.mxu0 0.0
      %2353 = vmatprep.subr.mxu0 0.0
      %2354 = vmatpush2.msra.mxu0 0.0
      %2355 = vmatprep.subr.mxu0 0.0
      %2356 = vmatpush2.msra.mxu0 0.0
      %2357 = vmatprep.subr.mxu0 0.0
      %2358 = vmatpush2.msra.mxu0 0.0
      %2359 = vmatprep.subr.mxu0 0.0
      %2360 = vmatpush2.msra.mxu0 0.0
      %2361 = vmatprep.subr.mxu0 0.0
      %2362 = vmatpush2.msra.mxu0 0.0
      %2363 = vmatprep.subr.mxu0 0.0
      %2364 = vmatpush2.msra.mxu0 0.0
      %2365 = vmatprep.subr.mxu0 0.0
      %2366 = vmatpush2.msra.mxu0 0.0
      %2367 = vmatprep.subr.mxu0 0.0
      %2368 = vmatpush2.msra.mxu0 0.0
      %2369 = vmatprep.subr.mxu0 0.0
      %2370 = vmatpush2.msra.mxu0 0.0
      %2371 = vmatprep.subr.mxu0 0.0
      %2372 = vmatpush2.msra.mxu0 0.0
      %2373 = vmatprep.subr.mxu0 0.0
      %2374 = vmatpush2.msra.mxu0 0.0
      %2375 = vmatprep.subr.mxu0 0.0
      %2376 = vmatpush2.msra.mxu0 0.0
      %2377 = vmatprep.subr.mxu0 0.0
      %2378 = vmatpush2.msra.mxu0 0.0
      %2379 = vmatprep.subr.mxu0 0.0
      %2380 = vmatpush2.msra.mxu0 0.0
      %2381 = vmatprep.subr.mxu0 0.0
      %2382 = vmatpush2.msra.mxu0 0.0
      %2383 = vmatprep.mubr.f32.mxu0 0.0
      %2384 = vmatmul.mubr.f32.gmra.mxu0 %v2315
      %v2385 = vpop.f32.mrf.mxu0
      %v2386 = vadd.f32 %v2312, %v2385
      %v2387 = vpop.f32.mrf.mxu0
      %2388 = vdwg.mxu0
      %v2390 = vsel %vm835, %v2386, 0
      %2392 = vmatprep.subr.mxu0 0.0
      %2393 = vmatpush1.msra.mxu0 0.0
      %2394 = vmatprep.subr.mxu0 0.0
      %2395 = vmatpush1.msra.mxu0 0.0
      %2396 = vmatprep.subr.mxu0 0.0
      %2397 = vmatpush1.msra.mxu0 0.0
      %2398 = vmatprep.subr.mxu0 0.0
      %2399 = vmatpush1.msra.mxu0 0.0
      %2400 = vmatprep.subr.mxu0 0.0
      %2401 = vmatpush1.msra.mxu0 0.0
      %2402 = vmatprep.subr.mxu0 0.0
      %2403 = vmatpush1.msra.mxu0 0.0
      %2404 = vmatprep.subr.mxu0 0.0
      %2405 = vmatpush1.msra.mxu0 0.0
      %2406 = vmatprep.subr.mxu0 0.0
      %2407 = vmatpush1.msra.mxu0 0.0
      %2408 = vmatprep.subr.mxu0 0.0
      %2409 = vmatpush1.msra.mxu0 0.0
      %2410 = vmatprep.subr.mxu0 0.0
      %2411 = vmatpush1.msra.mxu0 0.0
      %2412 = vmatprep.subr.mxu0 0.0
      %2413 = vmatpush1.msra.mxu0 0.0
      %2414 = vmatprep.subr.mxu0 0.0
      %2415 = vmatpush1.msra.mxu0 0.0
      %2416 = vmatprep.subr.mxu0 0.0
      %2417 = vmatpush1.msra.mxu0 0.0
      %2418 = vmatprep.subr.mxu0 0.0
      %2419 = vmatpush1.msra.mxu0 0.0
      %2420 = vmatprep.subr.mxu0 0.0
      %2421 = vmatpush1.msra.mxu0 0.0
      %2422 = vmatprep.subr.mxu0 0.0
      %2423 = vmatpush1.msra.mxu0 %v2005
      %2424 = vmatprep.subr.mxu0 0.0
      %2425 = vmatpush2.msra.mxu0 0.0
      %2426 = vmatprep.subr.mxu0 0.0
      %2427 = vmatpush2.msra.mxu0 0.0
      %2428 = vmatprep.subr.mxu0 0.0
      %2429 = vmatpush2.msra.mxu0 0.0
      %2430 = vmatprep.subr.mxu0 0.0
      %2431 = vmatpush2.msra.mxu0 0.0
      %2432 = vmatprep.subr.mxu0 0.0
      %2433 = vmatpush2.msra.mxu0 0.0
      %2434 = vmatprep.subr.mxu0 0.0
      %2435 = vmatpush2.msra.mxu0 0.0
      %2436 = vmatprep.subr.mxu0 0.0
      %2437 = vmatpush2.msra.mxu0 0.0
      %2438 = vmatprep.subr.mxu0 0.0
      %2439 = vmatpush2.msra.mxu0 0.0
      %2440 = vmatprep.subr.mxu0 0.0
      %2441 = vmatpush2.msra.mxu0 0.0
      %2442 = vmatprep.subr.mxu0 0.0
      %2443 = vmatpush2.msra.mxu0 0.0
      %2444 = vmatprep.subr.mxu0 0.0
      %2445 = vmatpush2.msra.mxu0 0.0
      %2446 = vmatprep.subr.mxu0 0.0
      %2447 = vmatpush2.msra.mxu0 0.0
      %2448 = vmatprep.subr.mxu0 0.0
      %2449 = vmatpush2.msra.mxu0 0.0
      %2450 = vmatprep.subr.mxu0 0.0
      %2451 = vmatpush2.msra.mxu0 0.0
      %2452 = vmatprep.subr.mxu0 0.0
      %2453 = vmatpush2.msra.mxu0 0.0
      %2454 = vmatprep.subr.mxu0 0.0
      %2455 = vmatpush2.msra.mxu0 0.0
      %2456 = vmatprep.mubr.f32.mxu0 0.0
      %2457 = vmatmul.mubr.f32.gmra.mxu0 %v2390
      %v2458 = vpop.f32.mrf.mxu0
      %v2459 = vadd.f32 0.0, %v2458
      %v2460 = vpop.f32.mrf.mxu0
      %2461 = vdwg.mxu0
      %v2463 = vsel %vm835, %v2199, 0
      %2465 = vmatprep.subr.mxu0 0.0
      %2466 = vmatpush1.msra.mxu0 0.0
      %2467 = vmatprep.subr.mxu0 0.0
      %2468 = vmatpush1.msra.mxu0 0.0
      %2469 = vmatprep.subr.mxu0 0.0
      %2470 = vmatpush1.msra.mxu0 0.0
      %2471 = vmatprep.subr.mxu0 0.0
      %2472 = vmatpush1.msra.mxu0 0.0
      %2473 = vmatprep.subr.mxu0 0.0
      %2474 = vmatpush1.msra.mxu0 0.0
      %2475 = vmatprep.subr.mxu0 0.0
      %2476 = vmatpush1.msra.mxu0 0.0
      %2477 = vmatprep.subr.mxu0 0.0
      %2478 = vmatpush1.msra.mxu0 0.0
      %2479 = vmatprep.subr.mxu0 0.0
      %2480 = vmatpush1.msra.mxu0 0.0
      %2481 = vmatprep.subr.mxu0 0.0
      %2482 = vmatpush1.msra.mxu0 0.0
      %2483 = vmatprep.subr.mxu0 0.0
      %2484 = vmatpush1.msra.mxu0 0.0
      %2485 = vmatprep.subr.mxu0 0.0
      %2486 = vmatpush1.msra.mxu0 0.0
      %2487 = vmatprep.subr.mxu0 0.0
      %2488 = vmatpush1.msra.mxu0 0.0
      %2489 = vmatprep.subr.mxu0 0.0
      %2490 = vmatpush1.msra.mxu0 0.0
      %2491 = vmatprep.subr.mxu0 0.0
      %2492 = vmatpush1.msra.mxu0 0.0
      %2493 = vmatprep.subr.mxu0 0.0
      %2494 = vmatpush1.msra.mxu0 0.0
      %2495 = vmatprep.subr.mxu0 0.0
      %2496 = vmatpush1.msra.mxu0 %v2004
      %2497 = vmatprep.subr.mxu0 0.0
      %2498 = vmatpush2.msra.mxu0 0.0
      %2499 = vmatprep.subr.mxu0 0.0
      %2500 = vmatpush2.msra.mxu0 0.0
      %2501 = vmatprep.subr.mxu0 0.0
      %2502 = vmatpush2.msra.mxu0 0.0
      %2503 = vmatprep.subr.mxu0 0.0
      %2504 = vmatpush2.msra.mxu0 0.0
      %2505 = vmatprep.subr.mxu0 0.0
      %2506 = vmatpush2.msra.mxu0 0.0
      %2507 = vmatprep.subr.mxu0 0.0
      %2508 = vmatpush2.msra.mxu0 0.0
      %2509 = vmatprep.subr.mxu0 0.0
      %2510 = vmatpush2.msra.mxu0 0.0
      %2511 = vmatprep.subr.mxu0 0.0
      %2512 = vmatpush2.msra.mxu0 0.0
      %2513 = vmatprep.subr.mxu0 0.0
      %2514 = vmatpush2.msra.mxu0 0.0
      %2515 = vmatprep.subr.mxu0 0.0
      %2516 = vmatpush2.msra.mxu0 0.0
      %2517 = vmatprep.subr.mxu0 0.0
      %2518 = vmatpush2.msra.mxu0 0.0
      %2519 = vmatprep.subr.mxu0 0.0
      %2520 = vmatpush2.msra.mxu0 0.0
      %2521 = vmatprep.subr.mxu0 0.0
      %2522 = vmatpush2.msra.mxu0 0.0
      %2523 = vmatprep.subr.mxu0 0.0
      %2524 = vmatpush2.msra.mxu0 0.0
      %2525 = vmatprep.subr.mxu0 0.0
      %2526 = vmatpush2.msra.mxu0 0.0
      %2527 = vmatprep.subr.mxu0 0.0
      %2528 = vmatpush2.msra.mxu0 0.0
      %2529 = vmatprep.mubr.f32.mxu0 0.0
      %2530 = vmatmul.mubr.f32.gmra.mxu0 %v2463
      %v2531 = vpop.f32.mrf.mxu0
      %v2532 = vadd.f32 %v2459, %v2531
      %v2533 = vpop.f32.mrf.mxu0
      %2534 = vdwg.mxu0
      %2535 = vrot.lane.b32.xlu0 %v1989, 112
      %v2536 = vpop.permute.xlu0 %2535
      %2537 = vrot.lane.b32.xlu0 %v620, 80
      %v2538 = vpop.permute.xlu0 %2537
      %v2539 = vsel %vm835, %v2536, 0
      %v2541 = vsel %vm835, %v2538, 0
      %2543 = vmatprep.subr.mxu0 0.0
      %2544 = vmatpush1.xpose.msra.mxu0 0.0
      %2545 = vmatprep.subr.mxu0 0.0
      %2546 = vmatpush1.xpose.msra.mxu0 0.0
      %2547 = vmatprep.subr.mxu0 0.0
      %2548 = vmatpush1.xpose.msra.mxu0 0.0
      %2549 = vmatprep.subr.mxu0 0.0
      %2550 = vmatpush1.xpose.msra.mxu0 0.0
      %2551 = vmatprep.subr.mxu0 0.0
      %2552 = vmatpush1.xpose.msra.mxu0 0.0
      %2553 = vmatprep.subr.mxu0 0.0
      %2554 = vmatpush1.xpose.msra.mxu0 0.0
      %2555 = vmatprep.subr.mxu0 0.0
      %2556 = vmatpush1.xpose.msra.mxu0 0.0
      %2557 = vmatprep.subr.mxu0 0.0
      %2558 = vmatpush1.xpose.msra.mxu0 0.0
      %2559 = vmatprep.subr.mxu0 0.0
      %2560 = vmatpush1.xpose.msra.mxu0 0.0
      %2561 = vmatprep.subr.mxu0 0.0
      %2562 = vmatpush1.xpose.msra.mxu0 0.0
      %2563 = vmatprep.subr.mxu0 0.0
      %2564 = vmatpush1.xpose.msra.mxu0 0.0
      %2565 = vmatprep.subr.mxu0 0.0
      %2566 = vmatpush1.xpose.msra.mxu0 0.0
      %2567 = vmatprep.subr.mxu0 0.0
      %2568 = vmatpush1.xpose.msra.mxu0 0.0
      %2569 = vmatprep.subr.mxu0 0.0
      %2570 = vmatpush1.xpose.msra.mxu0 0.0
      %2571 = vmatprep.subr.mxu0 0.0
      %2572 = vmatpush1.xpose.msra.mxu0 0.0
      %2573 = vmatprep.subr.mxu0 0.0
      %2574 = vmatpush1.xpose.msra.mxu0 %v2541
      %2575 = vmatprep.subr.mxu0 0.0
      %2576 = vmatpush2.xpose.msra.mxu0 0.0
      %2577 = vmatprep.subr.mxu0 0.0
      %2578 = vmatpush2.xpose.msra.mxu0 0.0
      %2579 = vmatprep.subr.mxu0 0.0
      %2580 = vmatpush2.xpose.msra.mxu0 0.0
      %2581 = vmatprep.subr.mxu0 0.0
      %2582 = vmatpush2.xpose.msra.mxu0 0.0
      %2583 = vmatprep.subr.mxu0 0.0
      %2584 = vmatpush2.xpose.msra.mxu0 0.0
      %2585 = vmatprep.subr.mxu0 0.0
      %2586 = vmatpush2.xpose.msra.mxu0 0.0
      %2587 = vmatprep.subr.mxu0 0.0
      %2588 = vmatpush2.xpose.msra.mxu0 0.0
      %2589 = vmatprep.subr.mxu0 0.0
      %2590 = vmatpush2.xpose.msra.mxu0 0.0
      %2591 = vmatprep.subr.mxu0 0.0
      %2592 = vmatpush2.xpose.msra.mxu0 0.0
      %2593 = vmatprep.subr.mxu0 0.0
      %2594 = vmatpush2.xpose.msra.mxu0 0.0
      %2595 = vmatprep.subr.mxu0 0.0
      %2596 = vmatpush2.xpose.msra.mxu0 0.0
      %2597 = vmatprep.subr.mxu0 0.0
      %2598 = vmatpush2.xpose.msra.mxu0 0.0
      %2599 = vmatprep.subr.mxu0 0.0
      %2600 = vmatpush2.xpose.msra.mxu0 0.0
      %2601 = vmatprep.subr.mxu0 0.0
      %2602 = vmatpush2.xpose.msra.mxu0 0.0
      %2603 = vmatprep.subr.mxu0 0.0
      %2604 = vmatpush2.xpose.msra.mxu0 0.0
      %2605 = vmatprep.subr.mxu0 0.0
      %2606 = vmatpush2.xpose.msra.mxu0 0.0
      %2607 = vmatprep.mubr.f32.mxu0 0.0
      %2608 = vmatmul.mubr.f32.gmra.mxu0 %v2539
      %v2609 = vpop.f32.mrf.mxu0
      %v2610 = vadd.f32 0.0, %v2609
      %v2611 = vpop.f32.mrf.mxu0
      %2612 = vdwg.mxu0
      %v2613 = vmul.f32 %v2610, 0.35355338
      %v2614 = vsel %vm2091, %v2613, -1e+30
      %2615 = vrot.lane.b32.xlu0 %v2097, 112
      %v2616 = vpop.permute.xlu0 %2615
      %v2618 = vsel %vm925, %v2616, 0.0
      %2619 = vadd.xlane.f32.xlu0 %v2618
      %v2620 = vpop.xlane.xlu0 %2619
      %v2621 = vmul.f32 %v2620, 0.35355338
      %v2622 = vsel %vm930, %v2614, -inf
      %2623 = vmax.xlane.f32.xlu0 %v2622
      %v2624 = vpop.xlane.xlu0 %2623
      %v2625 = vmax.f32 %v2624, %v2621
      %v2626 = vsub.f32 %v2614, %v2625
      %v2627 = vmul.f32 %v2626, 1.442695
      %v2628 = vpow.pop %v2627
      %v2629 = vsub.f32 %v2621, %v2625
      %v2630 = vmul.f32 %v2629, 1.442695
      %v2631 = vpow.pop %v2630
      %v2632 = vsel %vm930, %v2628, 0.0
      %2633 = vadd.xlane.f32.xlu0 %v2632
      %v2634 = vpop.xlane.xlu0 %2633
      %v2635 = vadd.f32 %v2631, %v2634
      %v2636 = vrcp.pop %v2635
      %v2637 = vmul.f32 %v2628, %v2636
      %v2638 = vmul.f32 %v2631, %v2636
      %v2639 = vmul.f32 %v2638, %v2122
      %2640 = vrot.lane.b32.xlu0 %v1999, 80
      %v2641 = vpop.permute.xlu0 %2640
      %2643 = vrot.lane.b32.xlu0 %v2639, 112
      %v2644 = vpop.permute.xlu0 %2643
      %v2647 = vsel %vm953, %v2637, 0
      %v2649 = vsel %vm957, %v2641, 0
      %2651 = vmatprep.subr.mxu0 0.0
      %2652 = vmatpush1.msra.mxu0 0.0
      %2653 = vmatprep.subr.mxu0 0.0
      %2654 = vmatpush1.msra.mxu0 0.0
      %2655 = vmatprep.subr.mxu0 0.0
      %2656 = vmatpush1.msra.mxu0 0.0
      %2657 = vmatprep.subr.mxu0 0.0
      %2658 = vmatpush1.msra.mxu0 0.0
      %2659 = vmatprep.subr.mxu0 0.0
      %2660 = vmatpush1.msra.mxu0 0.0
      %2661 = vmatprep.subr.mxu0 0.0
      %2662 = vmatpush1.msra.mxu0 0.0
      %2663 = vmatprep.subr.mxu0 0.0
      %2664 = vmatpush1.msra.mxu0 0.0
      %2665 = vmatprep.subr.mxu0 0.0
      %2666 = vmatpush1.msra.mxu0 0.0
      %2667 = vmatprep.subr.mxu0 0.0
      %2668 = vmatpush1.msra.mxu0 0.0
      %2669 = vmatprep.subr.mxu0 0.0
      %2670 = vmatpush1.msra.mxu0 0.0
      %2671 = vmatprep.subr.mxu0 0.0
      %2672 = vmatpush1.msra.mxu0 0.0
      %2673 = vmatprep.subr.mxu0 0.0
      %2674 = vmatpush1.msra.mxu0 0.0
      %2675 = vmatprep.subr.mxu0 0.0
      %2676 = vmatpush1.msra.mxu0 0.0
      %2677 = vmatprep.subr.mxu0 0.0
      %2678 = vmatpush1.msra.mxu0 0.0
      %2679 = vmatprep.subr.mxu0 0.0
      %2680 = vmatpush1.msra.mxu0 0.0
      %2681 = vmatprep.subr.mxu0 0.0
      %2682 = vmatpush1.msra.mxu0 %v2649
      %2683 = vmatprep.subr.mxu0 0.0
      %2684 = vmatpush2.msra.mxu0 0.0
      %2685 = vmatprep.subr.mxu0 0.0
      %2686 = vmatpush2.msra.mxu0 0.0
      %2687 = vmatprep.subr.mxu0 0.0
      %2688 = vmatpush2.msra.mxu0 0.0
      %2689 = vmatprep.subr.mxu0 0.0
      %2690 = vmatpush2.msra.mxu0 0.0
      %2691 = vmatprep.subr.mxu0 0.0
      %2692 = vmatpush2.msra.mxu0 0.0
      %2693 = vmatprep.subr.mxu0 0.0
      %2694 = vmatpush2.msra.mxu0 0.0
      %2695 = vmatprep.subr.mxu0 0.0
      %2696 = vmatpush2.msra.mxu0 0.0
      %2697 = vmatprep.subr.mxu0 0.0
      %2698 = vmatpush2.msra.mxu0 0.0
      %2699 = vmatprep.subr.mxu0 0.0
      %2700 = vmatpush2.msra.mxu0 0.0
      %2701 = vmatprep.subr.mxu0 0.0
      %2702 = vmatpush2.msra.mxu0 0.0
      %2703 = vmatprep.subr.mxu0 0.0
      %2704 = vmatpush2.msra.mxu0 0.0
      %2705 = vmatprep.subr.mxu0 0.0
      %2706 = vmatpush2.msra.mxu0 0.0
      %2707 = vmatprep.subr.mxu0 0.0
      %2708 = vmatpush2.msra.mxu0 0.0
      %2709 = vmatprep.subr.mxu0 0.0
      %2710 = vmatpush2.msra.mxu0 0.0
      %2711 = vmatprep.subr.mxu0 0.0
      %2712 = vmatpush2.msra.mxu0 0.0
      %2713 = vmatprep.subr.mxu0 0.0
      %2714 = vmatpush2.msra.mxu0 0.0
      %2715 = vmatprep.mubr.f32.mxu0 0.0
      %2716 = vmatmul.mubr.f32.gmra.mxu0 %v2647
      %v2717 = vpop.f32.mrf.mxu0
      %v2718 = vadd.f32 %v2644, %v2717
      %v2719 = vpop.f32.mrf.mxu0
      %2720 = vdwg.mxu0
      %v2722 = vsel %vm835, %v2718, 0
      %2724 = vmatprep.subr.mxu0 0.0
      %2725 = vmatpush1.msra.mxu0 0.0
      %2726 = vmatprep.subr.mxu0 0.0
      %2727 = vmatpush1.msra.mxu0 0.0
      %2728 = vmatprep.subr.mxu0 0.0
      %2729 = vmatpush1.msra.mxu0 0.0
      %2730 = vmatprep.subr.mxu0 0.0
      %2731 = vmatpush1.msra.mxu0 0.0
      %2732 = vmatprep.subr.mxu0 0.0
      %2733 = vmatpush1.msra.mxu0 0.0
      %2734 = vmatprep.subr.mxu0 0.0
      %2735 = vmatpush1.msra.mxu0 0.0
      %2736 = vmatprep.subr.mxu0 0.0
      %2737 = vmatpush1.msra.mxu0 0.0
      %2738 = vmatprep.subr.mxu0 0.0
      %2739 = vmatpush1.msra.mxu0 0.0
      %2740 = vmatprep.subr.mxu0 0.0
      %2741 = vmatpush1.msra.mxu0 0.0
      %2742 = vmatprep.subr.mxu0 0.0
      %2743 = vmatpush1.msra.mxu0 0.0
      %2744 = vmatprep.subr.mxu0 0.0
      %2745 = vmatpush1.msra.mxu0 0.0
      %2746 = vmatprep.subr.mxu0 0.0
      %2747 = vmatpush1.msra.mxu0 0.0
      %2748 = vmatprep.subr.mxu0 0.0
      %2749 = vmatpush1.msra.mxu0 0.0
      %2750 = vmatprep.subr.mxu0 0.0
      %2751 = vmatpush1.msra.mxu0 0.0
      %2752 = vmatprep.subr.mxu0 0.0
      %2753 = vmatpush1.msra.mxu0 0.0
      %2754 = vmatprep.subr.mxu0 0.0
      %2755 = vmatpush1.msra.mxu0 %v2006
      %2756 = vmatprep.subr.mxu0 0.0
      %2757 = vmatpush2.msra.mxu0 0.0
      %2758 = vmatprep.subr.mxu0 0.0
      %2759 = vmatpush2.msra.mxu0 0.0
      %2760 = vmatprep.subr.mxu0 0.0
      %2761 = vmatpush2.msra.mxu0 0.0
      %2762 = vmatprep.subr.mxu0 0.0
      %2763 = vmatpush2.msra.mxu0 0.0
      %2764 = vmatprep.subr.mxu0 0.0
      %2765 = vmatpush2.msra.mxu0 0.0
      %2766 = vmatprep.subr.mxu0 0.0
      %2767 = vmatpush2.msra.mxu0 0.0
      %2768 = vmatprep.subr.mxu0 0.0
      %2769 = vmatpush2.msra.mxu0 0.0
      %2770 = vmatprep.subr.mxu0 0.0
      %2771 = vmatpush2.msra.mxu0 0.0
      %2772 = vmatprep.subr.mxu0 0.0
      %2773 = vmatpush2.msra.mxu0 0.0
      %2774 = vmatprep.subr.mxu0 0.0
      %2775 = vmatpush2.msra.mxu0 0.0
      %2776 = vmatprep.subr.mxu0 0.0
      %2777 = vmatpush2.msra.mxu0 0.0
      %2778 = vmatprep.subr.mxu0 0.0
      %2779 = vmatpush2.msra.mxu0 0.0
      %2780 = vmatprep.subr.mxu0 0.0
      %2781 = vmatpush2.msra.mxu0 0.0
      %2782 = vmatprep.subr.mxu0 0.0
      %2783 = vmatpush2.msra.mxu0 0.0
      %2784 = vmatprep.subr.mxu0 0.0
      %2785 = vmatpush2.msra.mxu0 0.0
      %2786 = vmatprep.subr.mxu0 0.0
      %2787 = vmatpush2.msra.mxu0 0.0
      %2788 = vmatprep.mubr.f32.mxu0 0.0
      %2789 = vmatmul.mubr.f32.gmra.mxu0 %v2722
      %v2790 = vpop.f32.mrf.mxu0
      %v2791 = vadd.f32 0.0, %v2790
      %v2792 = vpop.f32.mrf.mxu0
      %2793 = vdwg.mxu0
      %v2794 = vadd.f32 %v2532, %v2791
      %2795 = vrot.lane.b32.xlu0 %v1989, 104
      %v2796 = vpop.permute.xlu0 %2795
      %2797 = vrot.lane.b32.xlu0 %v620, 72
      %v2798 = vpop.permute.xlu0 %2797
      %v2799 = vsel %vm835, %v2796, 0
      %v2801 = vsel %vm835, %v2798, 0
      %2803 = vmatprep.subr.mxu0 0.0
      %2804 = vmatpush1.xpose.msra.mxu0 0.0
      %2805 = vmatprep.subr.mxu0 0.0
      %2806 = vmatpush1.xpose.msra.mxu0 0.0
      %2807 = vmatprep.subr.mxu0 0.0
      %2808 = vmatpush1.xpose.msra.mxu0 0.0
      %2809 = vmatprep.subr.mxu0 0.0
      %2810 = vmatpush1.xpose.msra.mxu0 0.0
      %2811 = vmatprep.subr.mxu0 0.0
      %2812 = vmatpush1.xpose.msra.mxu0 0.0
      %2813 = vmatprep.subr.mxu0 0.0
      %2814 = vmatpush1.xpose.msra.mxu0 0.0
      %2815 = vmatprep.subr.mxu0 0.0
      %2816 = vmatpush1.xpose.msra.mxu0 0.0
      %2817 = vmatprep.subr.mxu0 0.0
      %2818 = vmatpush1.xpose.msra.mxu0 0.0
      %2819 = vmatprep.subr.mxu0 0.0
      %2820 = vmatpush1.xpose.msra.mxu0 0.0
      %2821 = vmatprep.subr.mxu0 0.0
      %2822 = vmatpush1.xpose.msra.mxu0 0.0
      %2823 = vmatprep.subr.mxu0 0.0
      %2824 = vmatpush1.xpose.msra.mxu0 0.0
      %2825 = vmatprep.subr.mxu0 0.0
      %2826 = vmatpush1.xpose.msra.mxu0 0.0
      %2827 = vmatprep.subr.mxu0 0.0
      %2828 = vmatpush1.xpose.msra.mxu0 0.0
      %2829 = vmatprep.subr.mxu0 0.0
      %2830 = vmatpush1.xpose.msra.mxu0 0.0
      %2831 = vmatprep.subr.mxu0 0.0
      %2832 = vmatpush1.xpose.msra.mxu0 0.0
      %2833 = vmatprep.subr.mxu0 0.0
      %2834 = vmatpush1.xpose.msra.mxu0 %v2801
      %2835 = vmatprep.subr.mxu0 0.0
      %2836 = vmatpush2.xpose.msra.mxu0 0.0
      %2837 = vmatprep.subr.mxu0 0.0
      %2838 = vmatpush2.xpose.msra.mxu0 0.0
      %2839 = vmatprep.subr.mxu0 0.0
      %2840 = vmatpush2.xpose.msra.mxu0 0.0
      %2841 = vmatprep.subr.mxu0 0.0
      %2842 = vmatpush2.xpose.msra.mxu0 0.0
      %2843 = vmatprep.subr.mxu0 0.0
      %2844 = vmatpush2.xpose.msra.mxu0 0.0
      %2845 = vmatprep.subr.mxu0 0.0
      %2846 = vmatpush2.xpose.msra.mxu0 0.0
      %2847 = vmatprep.subr.mxu0 0.0
      %2848 = vmatpush2.xpose.msra.mxu0 0.0
      %2849 = vmatprep.subr.mxu0 0.0
      %2850 = vmatpush2.xpose.msra.mxu0 0.0
      %2851 = vmatprep.subr.mxu0 0.0
      %2852 = vmatpush2.xpose.msra.mxu0 0.0
      %2853 = vmatprep.subr.mxu0 0.0
      %2854 = vmatpush2.xpose.msra.mxu0 0.0
      %2855 = vmatprep.subr.mxu0 0.0
      %2856 = vmatpush2.xpose.msra.mxu0 0.0
      %2857 = vmatprep.subr.mxu0 0.0
      %2858 = vmatpush2.xpose.msra.mxu0 0.0
      %2859 = vmatprep.subr.mxu0 0.0
      %2860 = vmatpush2.xpose.msra.mxu0 0.0
      %2861 = vmatprep.subr.mxu0 0.0
      %2862 = vmatpush2.xpose.msra.mxu0 0.0
      %2863 = vmatprep.subr.mxu0 0.0
      %2864 = vmatpush2.xpose.msra.mxu0 0.0
      %2865 = vmatprep.subr.mxu0 0.0
      %2866 = vmatpush2.xpose.msra.mxu0 0.0
      %2867 = vmatprep.mubr.f32.mxu0 0.0
      %2868 = vmatmul.mubr.f32.gmra.mxu0 %v2799
      %v2869 = vpop.f32.mrf.mxu0
      %v2870 = vadd.f32 0.0, %v2869
      %v2871 = vpop.f32.mrf.mxu0
      %2872 = vdwg.mxu0
      %v2873 = vmul.f32 %v2870, 0.35355338
      %v2874 = vsel %vm2091, %v2873, -1e+30
      %2875 = vrot.lane.b32.xlu0 %v2097, 104
      %v2876 = vpop.permute.xlu0 %2875
      %v2878 = vsel %vm925, %v2876, 0.0
      %2879 = vadd.xlane.f32.xlu0 %v2878
      %v2880 = vpop.xlane.xlu0 %2879
      %v2881 = vmul.f32 %v2880, 0.35355338
      %v2882 = vsel %vm930, %v2874, -inf
      %2883 = vmax.xlane.f32.xlu0 %v2882
      %v2884 = vpop.xlane.xlu0 %2883
      %v2885 = vmax.f32 %v2884, %v2881
      %v2886 = vsub.f32 %v2874, %v2885
      %v2887 = vmul.f32 %v2886, 1.442695
      %v2888 = vpow.pop %v2887
      %v2889 = vsub.f32 %v2881, %v2885
      %v2890 = vmul.f32 %v2889, 1.442695
      %v2891 = vpow.pop %v2890
      %v2892 = vsel %vm930, %v2888, 0.0
      %2893 = vadd.xlane.f32.xlu0 %v2892
      %v2894 = vpop.xlane.xlu0 %2893
      %v2895 = vadd.f32 %v2891, %v2894
      %v2896 = vrcp.pop %v2895
      %v2897 = vmul.f32 %v2888, %v2896
      %v2898 = vmul.f32 %v2891, %v2896
      %v2899 = vmul.f32 %v2898, %v2122
      %2900 = vrot.lane.b32.xlu0 %v1999, 72
      %v2901 = vpop.permute.xlu0 %2900
      %2903 = vrot.lane.b32.xlu0 %v2899, 104
      %v2904 = vpop.permute.xlu0 %2903
      %v2907 = vsel %vm953, %v2897, 0
      %v2909 = vsel %vm957, %v2901, 0
      %2911 = vmatprep.subr.mxu0 0.0
      %2912 = vmatpush1.msra.mxu0 0.0
      %2913 = vmatprep.subr.mxu0 0.0
      %2914 = vmatpush1.msra.mxu0 0.0
      %2915 = vmatprep.subr.mxu0 0.0
      %2916 = vmatpush1.msra.mxu0 0.0
      %2917 = vmatprep.subr.mxu0 0.0
      %2918 = vmatpush1.msra.mxu0 0.0
      %2919 = vmatprep.subr.mxu0 0.0
      %2920 = vmatpush1.msra.mxu0 0.0
      %2921 = vmatprep.subr.mxu0 0.0
      %2922 = vmatpush1.msra.mxu0 0.0
      %2923 = vmatprep.subr.mxu0 0.0
      %2924 = vmatpush1.msra.mxu0 0.0
      %2925 = vmatprep.subr.mxu0 0.0
      %2926 = vmatpush1.msra.mxu0 0.0
      %2927 = vmatprep.subr.mxu0 0.0
      %2928 = vmatpush1.msra.mxu0 0.0
      %2929 = vmatprep.subr.mxu0 0.0
      %2930 = vmatpush1.msra.mxu0 0.0
      %2931 = vmatprep.subr.mxu0 0.0
      %2932 = vmatpush1.msra.mxu0 0.0
      %2933 = vmatprep.subr.mxu0 0.0
      %2934 = vmatpush1.msra.mxu0 0.0
      %2935 = vmatprep.subr.mxu0 0.0
      %2936 = vmatpush1.msra.mxu0 0.0
      %2937 = vmatprep.subr.mxu0 0.0
      %2938 = vmatpush1.msra.mxu0 0.0
      %2939 = vmatprep.subr.mxu0 0.0
      %2940 = vmatpush1.msra.mxu0 0.0
      %2941 = vmatprep.subr.mxu0 0.0
      %2942 = vmatpush1.msra.mxu0 %v2909
      %2943 = vmatprep.subr.mxu0 0.0
      %2944 = vmatpush2.msra.mxu0 0.0
      %2945 = vmatprep.subr.mxu0 0.0
      %2946 = vmatpush2.msra.mxu0 0.0
      %2947 = vmatprep.subr.mxu0 0.0
      %2948 = vmatpush2.msra.mxu0 0.0
      %2949 = vmatprep.subr.mxu0 0.0
      %2950 = vmatpush2.msra.mxu0 0.0
      %2951 = vmatprep.subr.mxu0 0.0
      %2952 = vmatpush2.msra.mxu0 0.0
      %2953 = vmatprep.subr.mxu0 0.0
      %2954 = vmatpush2.msra.mxu0 0.0
      %2955 = vmatprep.subr.mxu0 0.0
      %2956 = vmatpush2.msra.mxu0 0.0
      %2957 = vmatprep.subr.mxu0 0.0
      %2958 = vmatpush2.msra.mxu0 0.0
      %2959 = vmatprep.subr.mxu0 0.0
      %2960 = vmatpush2.msra.mxu0 0.0
      %2961 = vmatprep.subr.mxu0 0.0
      %2962 = vmatpush2.msra.mxu0 0.0
      %2963 = vmatprep.subr.mxu0 0.0
      %2964 = vmatpush2.msra.mxu0 0.0
      %2965 = vmatprep.subr.mxu0 0.0
      %2966 = vmatpush2.msra.mxu0 0.0
      %2967 = vmatprep.subr.mxu0 0.0
      %2968 = vmatpush2.msra.mxu0 0.0
      %2969 = vmatprep.subr.mxu0 0.0
      %2970 = vmatpush2.msra.mxu0 0.0
      %2971 = vmatprep.subr.mxu0 0.0
      %2972 = vmatpush2.msra.mxu0 0.0
      %2973 = vmatprep.subr.mxu0 0.0
      %2974 = vmatpush2.msra.mxu0 0.0
      %2975 = vmatprep.mubr.f32.mxu0 0.0
      %2976 = vmatmul.mubr.f32.gmra.mxu0 %v2907
      %v2977 = vpop.f32.mrf.mxu0
      %v2978 = vadd.f32 %v2904, %v2977
      %v2979 = vpop.f32.mrf.mxu0
      %2980 = vdwg.mxu0
      %v2982 = vsel %vm835, %v2978, 0
      %2984 = vmatprep.subr.mxu0 0.0
      %2985 = vmatpush1.msra.mxu0 0.0
      %2986 = vmatprep.subr.mxu0 0.0
      %2987 = vmatpush1.msra.mxu0 0.0
      %2988 = vmatprep.subr.mxu0 0.0
      %2989 = vmatpush1.msra.mxu0 0.0
      %2990 = vmatprep.subr.mxu0 0.0
      %2991 = vmatpush1.msra.mxu0 0.0
      %2992 = vmatprep.subr.mxu0 0.0
      %2993 = vmatpush1.msra.mxu0 0.0
      %2994 = vmatprep.subr.mxu0 0.0
      %2995 = vmatpush1.msra.mxu0 0.0
      %2996 = vmatprep.subr.mxu0 0.0
      %2997 = vmatpush1.msra.mxu0 0.0
      %2998 = vmatprep.subr.mxu0 0.0
      %2999 = vmatpush1.msra.mxu0 0.0
      %3000 = vmatprep.subr.mxu0 0.0
      %3001 = vmatpush1.msra.mxu0 0.0
      %3002 = vmatprep.subr.mxu0 0.0
      %3003 = vmatpush1.msra.mxu0 0.0
      %3004 = vmatprep.subr.mxu0 0.0
      %3005 = vmatpush1.msra.mxu0 0.0
      %3006 = vmatprep.subr.mxu0 0.0
      %3007 = vmatpush1.msra.mxu0 0.0
      %3008 = vmatprep.subr.mxu0 0.0
      %3009 = vmatpush1.msra.mxu0 0.0
      %3010 = vmatprep.subr.mxu0 0.0
      %3011 = vmatpush1.msra.mxu0 0.0
      %3012 = vmatprep.subr.mxu0 0.0
      %3013 = vmatpush1.msra.mxu0 0.0
      %3014 = vmatprep.subr.mxu0 0.0
      %3015 = vmatpush1.msra.mxu0 %v2007
      %3016 = vmatprep.subr.mxu0 0.0
      %3017 = vmatpush2.msra.mxu0 0.0
      %3018 = vmatprep.subr.mxu0 0.0
      %3019 = vmatpush2.msra.mxu0 0.0
      %3020 = vmatprep.subr.mxu0 0.0
      %3021 = vmatpush2.msra.mxu0 0.0
      %3022 = vmatprep.subr.mxu0 0.0
      %3023 = vmatpush2.msra.mxu0 0.0
      %3024 = vmatprep.subr.mxu0 0.0
      %3025 = vmatpush2.msra.mxu0 0.0
      %3026 = vmatprep.subr.mxu0 0.0
      %3027 = vmatpush2.msra.mxu0 0.0
      %3028 = vmatprep.subr.mxu0 0.0
      %3029 = vmatpush2.msra.mxu0 0.0
      %3030 = vmatprep.subr.mxu0 0.0
      %3031 = vmatpush2.msra.mxu0 0.0
      %3032 = vmatprep.subr.mxu0 0.0
      %3033 = vmatpush2.msra.mxu0 0.0
      %3034 = vmatprep.subr.mxu0 0.0
      %3035 = vmatpush2.msra.mxu0 0.0
      %3036 = vmatprep.subr.mxu0 0.0
      %3037 = vmatpush2.msra.mxu0 0.0
      %3038 = vmatprep.subr.mxu0 0.0
      %3039 = vmatpush2.msra.mxu0 0.0
      %3040 = vmatprep.subr.mxu0 0.0
      %3041 = vmatpush2.msra.mxu0 0.0
      %3042 = vmatprep.subr.mxu0 0.0
      %3043 = vmatpush2.msra.mxu0 0.0
      %3044 = vmatprep.subr.mxu0 0.0
      %3045 = vmatpush2.msra.mxu0 0.0
      %3046 = vmatprep.subr.mxu0 0.0
      %3047 = vmatpush2.msra.mxu0 0.0
      %3048 = vmatprep.mubr.f32.mxu0 0.0
      %3049 = vmatmul.mubr.f32.gmra.mxu0 %v2982
      %v3050 = vpop.f32.mrf.mxu0
      %v3051 = vadd.f32 0.0, %v3050
      %v3052 = vpop.f32.mrf.mxu0
      %3053 = vdwg.mxu0
      %v3054 = vadd.f32 %v2794, %v3051
      %s3055 = scalar_lea.vmem %s510, 2
      %v3056 = vld [vmem:[%s3055] sm:$0x3]
      %3058 = vset.pattern.permute.xlu0 0
      %3059 = vperm.xlu0 %3058, %v3056
      %v3060 = vpop.permute.xlu0 %3059
      %v3062 = vmul.f32 %v3054, %v3060
      %s3063 = scalar_lea.vmem %s517, 2
      %3064 = vst.msk [vmem:[%s3063] sm:$0x3] %vm725, %v3062
      %s3065 = scalar_lea.vmem %s490, 8
      %v3066 = vld [vmem:[%s3065] sm:$0x7]
      %v3067 = vmul.f32 %v3066, %v3066
      %v3068 = vsel %vm525, %v3067, 0.0
      %3069 = vadd.xlane.f32.xlu0 %v3068
      %v3070 = vpop.xlane.xlu0 %3069
      %v3071 = vrsqrt.pop %v3070
      %v3072 = vmul.f32 %v3070, %v3071
      %vm3073 = vcmp.eq.f32.partialorder %v3070, inf
      %v3074 = vsel %vm3073, %v3070, %v3072
      %vm3075 = vcmp.eq.f32.partialorder %v3070, 0.0
      %v3076 = vand.u32 %v3070, 2147483648
      %v3077 = vsel %vm3075, %v3076, %v3074
      %v3078 = vmax.f32 %v3077, 1e-12
      %v3079 = vrcp.pop %v3078
      %v3080 = vmul.f32 %v3066, %v3079
      %v3081 = vmul.f32 %v3080, 5.656854
      %v3082 = vmul.f32 %v3081, %v543
      %v3083 = vld [vmem:[%s8] sm:$0xff]
      %v3084 = vld [vmem:[%s8 + $0x8] sm:$0xff]
      %v3085 = vld [vmem:[%s8 + $0x10] sm:$0xff]
      %v3086 = vld [vmem:[%s8 + $0x18] sm:$0xff]
      %v3088 = vsel %vm549, %v3082, 0
      %3090 = vmatprep.subr.mxu0 0.0
      %3091 = vmatpush1.msra.mxu0 0.0
      %3092 = vmatprep.subr.mxu0 0.0
      %3093 = vmatpush1.msra.mxu0 0.0
      %3094 = vmatprep.subr.mxu0 0.0
      %3095 = vmatpush1.msra.mxu0 0.0
      %3096 = vmatprep.subr.mxu0 0.0
      %3097 = vmatpush1.msra.mxu0 0.0
      %3098 = vmatprep.subr.mxu0 0.0
      %3099 = vmatpush1.msra.mxu0 0.0
      %3100 = vmatprep.subr.mxu0 0.0
      %3101 = vmatpush1.msra.mxu0 0.0
      %3102 = vmatprep.subr.mxu0 0.0
      %3103 = vmatpush1.msra.mxu0 0.0
      %3104 = vmatprep.subr.mxu0 0.0
      %3105 = vmatpush1.msra.mxu0 0.0
      %3106 = vmatprep.subr.mxu0 0.0
      %3107 = vmatpush1.msra.mxu0 0.0
      %3108 = vmatprep.subr.mxu0 0.0
      %3109 = vmatpush1.msra.mxu0 0.0
      %3110 = vmatprep.subr.mxu0 0.0
      %3111 = vmatpush1.msra.mxu0 0.0
      %3112 = vmatprep.subr.mxu0 0.0
      %3113 = vmatpush1.msra.mxu0 0.0
      %3114 = vmatprep.subr.mxu0 0.0
      %3115 = vmatpush1.msra.mxu0 %v3086
      %3116 = vmatprep.subr.mxu0 0.0
      %3117 = vmatpush1.msra.mxu0 %v3085
      %3118 = vmatprep.subr.mxu0 0.0
      %3119 = vmatpush1.msra.mxu0 %v3084
      %3120 = vmatprep.subr.mxu0 0.0
      %3121 = vmatpush1.msra.mxu0 %v3083
      %3122 = vmatprep.subr.mxu0 0.0
      %3123 = vmatpush2.msra.mxu0 0.0
      %3124 = vmatprep.subr.mxu0 0.0
      %3125 = vmatpush2.msra.mxu0 0.0
      %3126 = vmatprep.subr.mxu0 0.0
      %3127 = vmatpush2.msra.mxu0 0.0
      %3128 = vmatprep.subr.mxu0 0.0
      %3129 = vmatpush2.msra.mxu0 0.0
      %3130 = vmatprep.subr.mxu0 0.0
      %3131 = vmatpush2.msra.mxu0 0.0
      %3132 = vmatprep.subr.mxu0 0.0
      %3133 = vmatpush2.msra.mxu0 0.0
      %3134 = vmatprep.subr.mxu0 0.0
      %3135 = vmatpush2.msra.mxu0 0.0
      %3136 = vmatprep.subr.mxu0 0.0
      %3137 = vmatpush2.msra.mxu0 0.0
      %3138 = vmatprep.subr.mxu0 0.0
      %3139 = vmatpush2.msra.mxu0 0.0
      %3140 = vmatprep.subr.mxu0 0.0
      %3141 = vmatpush2.msra.mxu0 0.0
      %3142 = vmatprep.subr.mxu0 0.0
      %3143 = vmatpush2.msra.mxu0 0.0
      %3144 = vmatprep.subr.mxu0 0.0
      %3145 = vmatpush2.msra.mxu0 0.0
      %3146 = vmatprep.subr.mxu0 0.0
      %3147 = vmatpush2.msra.mxu0 0.0
      %3148 = vmatprep.subr.mxu0 0.0
      %3149 = vmatpush2.msra.mxu0 0.0
      %3150 = vmatprep.subr.mxu0 0.0
      %3151 = vmatpush2.msra.mxu0 0.0
      %3152 = vmatprep.subr.mxu0 0.0
      %3153 = vmatpush2.msra.mxu0 0.0
      %3154 = vmatprep.mubr.f32.mxu0 0.0
      %3155 = vmatmul.mubr.f32.gmra.mxu0 %v3088
      %v3156 = vpop.f32.mrf.mxu0
      %v3157 = vadd.f32 0.0, %v3156
      %v3158 = vpop.f32.mrf.mxu0
      %3159 = vdwg.mxu0
      %s3160 = scalar_lea.vmem %s490, 12
      %v3161 = vld [vmem:[%s3160] sm:$0x7]
      %v3162 = vmul.f32 %v3161, %v3161
      %v3163 = vsel %vm525, %v3162, 0.0
      %3164 = vadd.xlane.f32.xlu0 %v3163
      %v3165 = vpop.xlane.xlu0 %3164
      %v3166 = vrsqrt.pop %v3165
      %v3167 = vmul.f32 %v3165, %v3166
      %vm3168 = vcmp.eq.f32.partialorder %v3165, inf
      %v3169 = vsel %vm3168, %v3165, %v3167
      %vm3170 = vcmp.eq.f32.partialorder %v3165, 0.0
      %v3171 = vand.u32 %v3165, 2147483648
      %v3172 = vsel %vm3170, %v3171, %v3169
      %v3173 = vmax.f32 %v3172, 1e-12
      %v3174 = vrcp.pop %v3173
      %v3175 = vmul.f32 %v3161, %v3174
      %v3176 = vmul.f32 %v3175, 5.656854
      %v3177 = vmul.f32 %v3176, %v643
      %v3178 = vld [vmem:[%s645] sm:$0xff]
      %v3179 = vld [vmem:[%s645 + $0x8] sm:$0xff]
      %v3180 = vld [vmem:[%s645 + $0x10] sm:$0xff]
      %v3181 = vld [vmem:[%s645 + $0x18] sm:$0xff]
      %v3183 = vsel %vm549, %v3177, 0
      %3185 = vmatprep.subr.mxu0 0.0
      %3186 = vmatpush1.msra.mxu0 0.0
      %3187 = vmatprep.subr.mxu0 0.0
      %3188 = vmatpush1.msra.mxu0 0.0
      %3189 = vmatprep.subr.mxu0 0.0
      %3190 = vmatpush1.msra.mxu0 0.0
      %3191 = vmatprep.subr.mxu0 0.0
      %3192 = vmatpush1.msra.mxu0 0.0
      %3193 = vmatprep.subr.mxu0 0.0
      %3194 = vmatpush1.msra.mxu0 0.0
      %3195 = vmatprep.subr.mxu0 0.0
      %3196 = vmatpush1.msra.mxu0 0.0
      %3197 = vmatprep.subr.mxu0 0.0
      %3198 = vmatpush1.msra.mxu0 0.0
      %3199 = vmatprep.subr.mxu0 0.0
      %3200 = vmatpush1.msra.mxu0 0.0
      %3201 = vmatprep.subr.mxu0 0.0
      %3202 = vmatpush1.msra.mxu0 0.0
      %3203 = vmatprep.subr.mxu0 0.0
      %3204 = vmatpush1.msra.mxu0 0.0
      %3205 = vmatprep.subr.mxu0 0.0
      %3206 = vmatpush1.msra.mxu0 0.0
      %3207 = vmatprep.subr.mxu0 0.0
      %3208 = vmatpush1.msra.mxu0 0.0
      %3209 = vmatprep.subr.mxu0 0.0
      %3210 = vmatpush1.msra.mxu0 %v3181
      %3211 = vmatprep.subr.mxu0 0.0
      %3212 = vmatpush1.msra.mxu0 %v3180
      %3213 = vmatprep.subr.mxu0 0.0
      %3214 = vmatpush1.msra.mxu0 %v3179
      %3215 = vmatprep.subr.mxu0 0.0
      %3216 = vmatpush1.msra.mxu0 %v3178
      %3217 = vmatprep.subr.mxu0 0.0
      %3218 = vmatpush2.msra.mxu0 0.0
      %3219 = vmatprep.subr.mxu0 0.0
      %3220 = vmatpush2.msra.mxu0 0.0
      %3221 = vmatprep.subr.mxu0 0.0
      %3222 = vmatpush2.msra.mxu0 0.0
      %3223 = vmatprep.subr.mxu0 0.0
      %3224 = vmatpush2.msra.mxu0 0.0
      %3225 = vmatprep.subr.mxu0 0.0
      %3226 = vmatpush2.msra.mxu0 0.0
      %3227 = vmatprep.subr.mxu0 0.0
      %3228 = vmatpush2.msra.mxu0 0.0
      %3229 = vmatprep.subr.mxu0 0.0
      %3230 = vmatpush2.msra.mxu0 0.0
      %3231 = vmatprep.subr.mxu0 0.0
      %3232 = vmatpush2.msra.mxu0 0.0
      %3233 = vmatprep.subr.mxu0 0.0
      %3234 = vmatpush2.msra.mxu0 0.0
      %3235 = vmatprep.subr.mxu0 0.0
      %3236 = vmatpush2.msra.mxu0 0.0
      %3237 = vmatprep.subr.mxu0 0.0
      %3238 = vmatpush2.msra.mxu0 0.0
      %3239 = vmatprep.subr.mxu0 0.0
      %3240 = vmatpush2.msra.mxu0 0.0
      %3241 = vmatprep.subr.mxu0 0.0
      %3242 = vmatpush2.msra.mxu0 0.0
      %3243 = vmatprep.subr.mxu0 0.0
      %3244 = vmatpush2.msra.mxu0 0.0
      %3245 = vmatprep.subr.mxu0 0.0
      %3246 = vmatpush2.msra.mxu0 0.0
      %3247 = vmatprep.subr.mxu0 0.0
      %3248 = vmatpush2.msra.mxu0 0.0
      %3249 = vmatprep.mubr.f32.mxu0 0.0
      %3250 = vmatmul.mubr.f32.gmra.mxu0 %v3183
      %v3251 = vpop.f32.mrf.mxu0
      %v3252 = vadd.f32 0.0, %v3251
      %v3253 = vpop.f32.mrf.mxu0
      %3254 = vdwg.mxu0
      %s3255 = scalar_lea.vmem %s483, 4
      %v3256 = vld [vmem:[%s3255] sm:$0x3]
      %v3257 = vmul.f32 %v3256, %v3256
      %v3258 = vsel %vm725, %v3257, 0.0
      %3259 = vadd.xlane.f32.xlu0 %v3258
      %v3260 = vpop.xlane.xlu0 %3259
      %v3261 = vrsqrt.pop %v3260
      %v3262 = vmul.f32 %v3260, %v3261
      %vm3263 = vcmp.eq.f32.partialorder %v3260, inf
      %v3264 = vsel %vm3263, %v3260, %v3262
      %vm3265 = vcmp.eq.f32.partialorder %v3260, 0.0
      %v3266 = vand.u32 %v3260, 2147483648
      %v3267 = vsel %vm3265, %v3266, %v3264
      %v3268 = vmax.f32 %v3267, 1e-12
      %v3269 = vrcp.pop %v3268
      %v3270 = vmul.f32 %v3256, %v3269
      %v3271 = vmul.f32 %v3270, 5.656854
      %v3272 = vmul.f32 %v3271, %v743
      %v3273 = vld [vmem:[%s7] sm:$0xff]
      %v3274 = vld [vmem:[%s7 + $0x8] sm:$0xff]
      %v3275 = vld [vmem:[%s7 + $0x10] sm:$0xff]
      %v3276 = vld [vmem:[%s7 + $0x18] sm:$0xff]
      %v3278 = vsel %vm549, %v3272, 0
      %3280 = vmatprep.subr.mxu0 0.0
      %3281 = vmatpush1.msra.mxu0 0.0
      %3282 = vmatprep.subr.mxu0 0.0
      %3283 = vmatpush1.msra.mxu0 0.0
      %3284 = vmatprep.subr.mxu0 0.0
      %3285 = vmatpush1.msra.mxu0 0.0
      %3286 = vmatprep.subr.mxu0 0.0
      %3287 = vmatpush1.msra.mxu0 0.0
      %3288 = vmatprep.subr.mxu0 0.0
      %3289 = vmatpush1.msra.mxu0 0.0
      %3290 = vmatprep.subr.mxu0 0.0
      %3291 = vmatpush1.msra.mxu0 0.0
      %3292 = vmatprep.subr.mxu0 0.0
      %3293 = vmatpush1.msra.mxu0 0.0
      %3294 = vmatprep.subr.mxu0 0.0
      %3295 = vmatpush1.msra.mxu0 0.0
      %3296 = vmatprep.subr.mxu0 0.0
      %3297 = vmatpush1.msra.mxu0 0.0
      %3298 = vmatprep.subr.mxu0 0.0
      %3299 = vmatpush1.msra.mxu0 0.0
      %3300 = vmatprep.subr.mxu0 0.0
      %3301 = vmatpush1.msra.mxu0 0.0
      %3302 = vmatprep.subr.mxu0 0.0
      %3303 = vmatpush1.msra.mxu0 0.0
      %3304 = vmatprep.subr.mxu0 0.0
      %3305 = vmatpush1.msra.mxu0 %v3276
      %3306 = vmatprep.subr.mxu0 0.0
      %3307 = vmatpush1.msra.mxu0 %v3275
      %3308 = vmatprep.subr.mxu0 0.0
      %3309 = vmatpush1.msra.mxu0 %v3274
      %3310 = vmatprep.subr.mxu0 0.0
      %3311 = vmatpush1.msra.mxu0 %v3273
      %3312 = vmatprep.subr.mxu0 0.0
      %3313 = vmatpush2.msra.mxu0 0.0
      %3314 = vmatprep.subr.mxu0 0.0
      %3315 = vmatpush2.msra.mxu0 0.0
      %3316 = vmatprep.subr.mxu0 0.0
      %3317 = vmatpush2.msra.mxu0 0.0
      %3318 = vmatprep.subr.mxu0 0.0
      %3319 = vmatpush2.msra.mxu0 0.0
      %3320 = vmatprep.subr.mxu0 0.0
      %3321 = vmatpush2.msra.mxu0 0.0
      %3322 = vmatprep.subr.mxu0 0.0
      %3323 = vmatpush2.msra.mxu0 0.0
      %3324 = vmatprep.subr.mxu0 0.0
      %3325 = vmatpush2.msra.mxu0 0.0
      %3326 = vmatprep.subr.mxu0 0.0
      %3327 = vmatpush2.msra.mxu0 0.0
      %3328 = vmatprep.subr.mxu0 0.0
      %3329 = vmatpush2.msra.mxu0 0.0
      %3330 = vmatprep.subr.mxu0 0.0
      %3331 = vmatpush2.msra.mxu0 0.0
      %3332 = vmatprep.subr.mxu0 0.0
      %3333 = vmatpush2.msra.mxu0 0.0
      %3334 = vmatprep.subr.mxu0 0.0
      %3335 = vmatpush2.msra.mxu0 0.0
      %3336 = vmatprep.subr.mxu0 0.0
      %3337 = vmatpush2.msra.mxu0 0.0
      %3338 = vmatprep.subr.mxu0 0.0
      %3339 = vmatpush2.msra.mxu0 0.0
      %3340 = vmatprep.subr.mxu0 0.0
      %3341 = vmatpush2.msra.mxu0 0.0
      %3342 = vmatprep.subr.mxu0 0.0
      %3343 = vmatpush2.msra.mxu0 0.0
      %3344 = vmatprep.mubr.f32.mxu0 0.0
      %3345 = vmatmul.mubr.f32.gmra.mxu0 %v3278
      %v3346 = vpop.f32.mrf.mxu0
      %v3347 = vadd.f32 0.0, %v3346
      %v3348 = vpop.f32.mrf.mxu0
      %3349 = vdwg.mxu0
      %s3350 = scalar_lea.vmem %s503, 8
      %v3351 = vld [vmem:[%s3350] sm:$0x7]
      %3353 = vset.pattern.permute.xlu0 0
      %3354 = vperm.xlu0 %3353, %v3351
      %v3355 = vpop.permute.xlu0 %3354
      %v3357 = vmul.f32 %v3252, %v3355
      %s3358 = scalar_lea.vmem %s496, 2
      %v3359 = vld [vmem:[%s3358] sm:$0x1]
      %vm3360 = vcmp.gt.f32.partialorder %v3359, 0.5
      %v3361 = vld [vmem:[%s9] sm:$0xff]
      %v3362 = vld [vmem:[%s9 + $0x8] sm:$0xff]
      %v3363 = vld [vmem:[%s9 + $0x10] sm:$0xff]
      %v3364 = vld [vmem:[%s9 + $0x18] sm:$0xff]
      %v3366 = vsel %vm835, %v3347, 0
      %v3369 = vsel %vm835, %v3157, 0
      %3371 = vmatprep.subr.mxu0 0.0
      %3372 = vmatpush1.xpose.msra.mxu0 0.0
      %3373 = vmatprep.subr.mxu0 0.0
      %3374 = vmatpush1.xpose.msra.mxu0 0.0
      %3375 = vmatprep.subr.mxu0 0.0
      %3376 = vmatpush1.xpose.msra.mxu0 0.0
      %3377 = vmatprep.subr.mxu0 0.0
      %3378 = vmatpush1.xpose.msra.mxu0 0.0
      %3379 = vmatprep.subr.mxu0 0.0
      %3380 = vmatpush1.xpose.msra.mxu0 0.0
      %3381 = vmatprep.subr.mxu0 0.0
      %3382 = vmatpush1.xpose.msra.mxu0 0.0
      %3383 = vmatprep.subr.mxu0 0.0
      %3384 = vmatpush1.xpose.msra.mxu0 0.0
      %3385 = vmatprep.subr.mxu0 0.0
      %3386 = vmatpush1.xpose.msra.mxu0 0.0
      %3387 = vmatprep.subr.mxu0 0.0
      %3388 = vmatpush1.xpose.msra.mxu0 0.0
      %3389 = vmatprep.subr.mxu0 0.0
      %3390 = vmatpush1.xpose.msra.mxu0 0.0
      %3391 = vmatprep.subr.mxu0 0.0
      %3392 = vmatpush1.xpose.msra.mxu0 0.0
      %3393 = vmatprep.subr.mxu0 0.0
      %3394 = vmatpush1.xpose.msra.mxu0 0.0
      %3395 = vmatprep.subr.mxu0 0.0
      %3396 = vmatpush1.xpose.msra.mxu0 0.0
      %3397 = vmatprep.subr.mxu0 0.0
      %3398 = vmatpush1.xpose.msra.mxu0 0.0
      %3399 = vmatprep.subr.mxu0 0.0
      %3400 = vmatpush1.xpose.msra.mxu0 0.0
      %3401 = vmatprep.subr.mxu0 0.0
      %3402 = vmatpush1.xpose.msra.mxu0 %v3369
      %3403 = vmatprep.subr.mxu0 0.0
      %3404 = vmatpush2.xpose.msra.mxu0 0.0
      %3405 = vmatprep.subr.mxu0 0.0
      %3406 = vmatpush2.xpose.msra.mxu0 0.0
      %3407 = vmatprep.subr.mxu0 0.0
      %3408 = vmatpush2.xpose.msra.mxu0 0.0
      %3409 = vmatprep.subr.mxu0 0.0
      %3410 = vmatpush2.xpose.msra.mxu0 0.0
      %3411 = vmatprep.subr.mxu0 0.0
      %3412 = vmatpush2.xpose.msra.mxu0 0.0
      %3413 = vmatprep.subr.mxu0 0.0
      %3414 = vmatpush2.xpose.msra.mxu0 0.0
      %3415 = vmatprep.subr.mxu0 0.0
      %3416 = vmatpush2.xpose.msra.mxu0 0.0
      %3417 = vmatprep.subr.mxu0 0.0
      %3418 = vmatpush2.xpose.msra.mxu0 0.0
      %3419 = vmatprep.subr.mxu0 0.0
      %3420 = vmatpush2.xpose.msra.mxu0 0.0
      %3421 = vmatprep.subr.mxu0 0.0
      %3422 = vmatpush2.xpose.msra.mxu0 0.0
      %3423 = vmatprep.subr.mxu0 0.0
      %3424 = vmatpush2.xpose.msra.mxu0 0.0
      %3425 = vmatprep.subr.mxu0 0.0
      %3426 = vmatpush2.xpose.msra.mxu0 0.0
      %3427 = vmatprep.subr.mxu0 0.0
      %3428 = vmatpush2.xpose.msra.mxu0 0.0
      %3429 = vmatprep.subr.mxu0 0.0
      %3430 = vmatpush2.xpose.msra.mxu0 0.0
      %3431 = vmatprep.subr.mxu0 0.0
      %3432 = vmatpush2.xpose.msra.mxu0 0.0
      %3433 = vmatprep.subr.mxu0 0.0
      %3434 = vmatpush2.xpose.msra.mxu0 0.0
      %3435 = vmatprep.mubr.f32.mxu0 0.0
      %3436 = vmatmul.mubr.f32.gmra.mxu0 %v3366
      %v3437 = vpop.f32.mrf.mxu0
      %v3438 = vadd.f32 0.0, %v3437
      %v3439 = vpop.f32.mrf.mxu0
      %3440 = vdwg.mxu0
      %v3441 = vmul.f32 %v3438, 0.35355338
      %v3442 = vsel %vm3360, 1, 0
      %v3443 = vlaneseq
      %v3444 = vshrl.u32 %v3443, 7
      %v3445 = vsub.s32 0, %v3444
      %v3446 = vrot.slane %v3442, %v3445
      %vm3447 = vcmp.eq.s32.totalorder %v3446, 1
      %v3448 = vsel %vm3447, %v3441, -1e+30
      %v3449 = vmul.f32 %v3347, %v923
      %v3450 = vsel %vm925, %v3449, 0.0
      %3451 = vadd.xlane.f32.xlu0 %v3450
      %v3452 = vpop.xlane.xlu0 %3451
      %v3453 = vmul.f32 %v3452, 0.35355338
      %v3454 = vsel %vm930, %v3448, -inf
      %3455 = vmax.xlane.f32.xlu0 %v3454
      %v3456 = vpop.xlane.xlu0 %3455
      %v3457 = vmax.f32 %v3456, %v3453
      %v3458 = vsub.f32 %v3448, %v3457
      %v3459 = vmul.f32 %v3458, 1.442695
      %v3460 = vpow.pop %v3459
      %v3461 = vsub.f32 %v3453, %v3457
      %v3462 = vmul.f32 %v3461, 1.442695
      %v3463 = vpow.pop %v3462
      %v3464 = vsel %vm930, %v3460, 0.0
      %3465 = vadd.xlane.f32.xlu0 %v3464
      %v3466 = vpop.xlane.xlu0 %3465
      %v3467 = vadd.f32 %v3463, %v3466
      %v3468 = vrcp.pop %v3467
      %v3469 = vmul.f32 %v3460, %v3468
      %v3470 = vmul.f32 %v3463, %v3468
      %v3471 = vmul.f32 %v3470, %v951
      %v3473 = vsel %vm953, %v3469, 0
      %v3476 = vsel %vm957, %v3357, 0
      %3478 = vmatprep.subr.mxu0 0.0
      %3479 = vmatpush1.msra.mxu0 0.0
      %3480 = vmatprep.subr.mxu0 0.0
      %3481 = vmatpush1.msra.mxu0 0.0
      %3482 = vmatprep.subr.mxu0 0.0
      %3483 = vmatpush1.msra.mxu0 0.0
      %3484 = vmatprep.subr.mxu0 0.0
      %3485 = vmatpush1.msra.mxu0 0.0
      %3486 = vmatprep.subr.mxu0 0.0
      %3487 = vmatpush1.msra.mxu0 0.0
      %3488 = vmatprep.subr.mxu0 0.0
      %3489 = vmatpush1.msra.mxu0 0.0
      %3490 = vmatprep.subr.mxu0 0.0
      %3491 = vmatpush1.msra.mxu0 0.0
      %3492 = vmatprep.subr.mxu0 0.0
      %3493 = vmatpush1.msra.mxu0 0.0
      %3494 = vmatprep.subr.mxu0 0.0
      %3495 = vmatpush1.msra.mxu0 0.0
      %3496 = vmatprep.subr.mxu0 0.0
      %3497 = vmatpush1.msra.mxu0 0.0
      %3498 = vmatprep.subr.mxu0 0.0
      %3499 = vmatpush1.msra.mxu0 0.0
      %3500 = vmatprep.subr.mxu0 0.0
      %3501 = vmatpush1.msra.mxu0 0.0
      %3502 = vmatprep.subr.mxu0 0.0
      %3503 = vmatpush1.msra.mxu0 0.0
      %3504 = vmatprep.subr.mxu0 0.0
      %3505 = vmatpush1.msra.mxu0 0.0
      %3506 = vmatprep.subr.mxu0 0.0
      %3507 = vmatpush1.msra.mxu0 0.0
      %3508 = vmatprep.subr.mxu0 0.0
      %3509 = vmatpush1.msra.mxu0 %v3476
      %3510 = vmatprep.subr.mxu0 0.0
      %3511 = vmatpush2.msra.mxu0 0.0
      %3512 = vmatprep.subr.mxu0 0.0
      %3513 = vmatpush2.msra.mxu0 0.0
      %3514 = vmatprep.subr.mxu0 0.0
      %3515 = vmatpush2.msra.mxu0 0.0
      %3516 = vmatprep.subr.mxu0 0.0
      %3517 = vmatpush2.msra.mxu0 0.0
      %3518 = vmatprep.subr.mxu0 0.0
      %3519 = vmatpush2.msra.mxu0 0.0
      %3520 = vmatprep.subr.mxu0 0.0
      %3521 = vmatpush2.msra.mxu0 0.0
      %3522 = vmatprep.subr.mxu0 0.0
      %3523 = vmatpush2.msra.mxu0 0.0
      %3524 = vmatprep.subr.mxu0 0.0
      %3525 = vmatpush2.msra.mxu0 0.0
      %3526 = vmatprep.subr.mxu0 0.0
      %3527 = vmatpush2.msra.mxu0 0.0
      %3528 = vmatprep.subr.mxu0 0.0
      %3529 = vmatpush2.msra.mxu0 0.0
      %3530 = vmatprep.subr.mxu0 0.0
      %3531 = vmatpush2.msra.mxu0 0.0
      %3532 = vmatprep.subr.mxu0 0.0
      %3533 = vmatpush2.msra.mxu0 0.0
      %3534 = vmatprep.subr.mxu0 0.0
      %3535 = vmatpush2.msra.mxu0 0.0
      %3536 = vmatprep.subr.mxu0 0.0
      %3537 = vmatpush2.msra.mxu0 0.0
      %3538 = vmatprep.subr.mxu0 0.0
      %3539 = vmatpush2.msra.mxu0 0.0
      %3540 = vmatprep.subr.mxu0 0.0
      %3541 = vmatpush2.msra.mxu0 0.0
      %3542 = vmatprep.mubr.f32.mxu0 0.0
      %3543 = vmatmul.mubr.f32.gmra.mxu0 %v3473
      %v3544 = vpop.f32.mrf.mxu0
      %v3545 = vadd.f32 %v3471, %v3544
      %v3546 = vpop.f32.mrf.mxu0
      %3547 = vdwg.mxu0
      %3548 = vrot.lane.b32.xlu0 %v3347, 120
      %v3549 = vpop.permute.xlu0 %3548
      %3550 = vrot.lane.b32.xlu0 %v3157, 120
      %v3551 = vpop.permute.xlu0 %3550
      %v3552 = vsel %vm835, %v3549, 0
      %v3554 = vsel %vm835, %v3551, 0
      %3556 = vmatprep.subr.mxu0 0.0
      %3557 = vmatpush1.xpose.msra.mxu0 0.0
      %3558 = vmatprep.subr.mxu0 0.0
      %3559 = vmatpush1.xpose.msra.mxu0 0.0
      %3560 = vmatprep.subr.mxu0 0.0
      %3561 = vmatpush1.xpose.msra.mxu0 0.0
      %3562 = vmatprep.subr.mxu0 0.0
      %3563 = vmatpush1.xpose.msra.mxu0 0.0
      %3564 = vmatprep.subr.mxu0 0.0
      %3565 = vmatpush1.xpose.msra.mxu0 0.0
      %3566 = vmatprep.subr.mxu0 0.0
      %3567 = vmatpush1.xpose.msra.mxu0 0.0
      %3568 = vmatprep.subr.mxu0 0.0
      %3569 = vmatpush1.xpose.msra.mxu0 0.0
      %3570 = vmatprep.subr.mxu0 0.0
      %3571 = vmatpush1.xpose.msra.mxu0 0.0
      %3572 = vmatprep.subr.mxu0 0.0
      %3573 = vmatpush1.xpose.msra.mxu0 0.0
      %3574 = vmatprep.subr.mxu0 0.0
      %3575 = vmatpush1.xpose.msra.mxu0 0.0
      %3576 = vmatprep.subr.mxu0 0.0
      %3577 = vmatpush1.xpose.msra.mxu0 0.0
      %3578 = vmatprep.subr.mxu0 0.0
      %3579 = vmatpush1.xpose.msra.mxu0 0.0
      %3580 = vmatprep.subr.mxu0 0.0
      %3581 = vmatpush1.xpose.msra.mxu0 0.0
      %3582 = vmatprep.subr.mxu0 0.0
      %3583 = vmatpush1.xpose.msra.mxu0 0.0
      %3584 = vmatprep.subr.mxu0 0.0
      %3585 = vmatpush1.xpose.msra.mxu0 0.0
      %3586 = vmatprep.subr.mxu0 0.0
      %3587 = vmatpush1.xpose.msra.mxu0 %v3554
      %3588 = vmatprep.subr.mxu0 0.0
      %3589 = vmatpush2.xpose.msra.mxu0 0.0
      %3590 = vmatprep.subr.mxu0 0.0
      %3591 = vmatpush2.xpose.msra.mxu0 0.0
      %3592 = vmatprep.subr.mxu0 0.0
      %3593 = vmatpush2.xpose.msra.mxu0 0.0
      %3594 = vmatprep.subr.mxu0 0.0
      %3595 = vmatpush2.xpose.msra.mxu0 0.0
      %3596 = vmatprep.subr.mxu0 0.0
      %3597 = vmatpush2.xpose.msra.mxu0 0.0
      %3598 = vmatprep.subr.mxu0 0.0
      %3599 = vmatpush2.xpose.msra.mxu0 0.0
      %3600 = vmatprep.subr.mxu0 0.0
      %3601 = vmatpush2.xpose.msra.mxu0 0.0
      %3602 = vmatprep.subr.mxu0 0.0
      %3603 = vmatpush2.xpose.msra.mxu0 0.0
      %3604 = vmatprep.subr.mxu0 0.0
      %3605 = vmatpush2.xpose.msra.mxu0 0.0
      %3606 = vmatprep.subr.mxu0 0.0
      %3607 = vmatpush2.xpose.msra.mxu0 0.0
      %3608 = vmatprep.subr.mxu0 0.0
      %3609 = vmatpush2.xpose.msra.mxu0 0.0
      %3610 = vmatprep.subr.mxu0 0.0
      %3611 = vmatpush2.xpose.msra.mxu0 0.0
      %3612 = vmatprep.subr.mxu0 0.0
      %3613 = vmatpush2.xpose.msra.mxu0 0.0
      %3614 = vmatprep.subr.mxu0 0.0
      %3615 = vmatpush2.xpose.msra.mxu0 0.0
      %3616 = vmatprep.subr.mxu0 0.0
      %3617 = vmatpush2.xpose.msra.mxu0 0.0
      %3618 = vmatprep.subr.mxu0 0.0
      %3619 = vmatpush2.xpose.msra.mxu0 0.0
      %3620 = vmatprep.mubr.f32.mxu0 0.0
      %3621 = vmatmul.mubr.f32.gmra.mxu0 %v3552
      %v3622 = vpop.f32.mrf.mxu0
      %v3623 = vadd.f32 0.0, %v3622
      %v3624 = vpop.f32.mrf.mxu0
      %3625 = vdwg.mxu0
      %v3626 = vmul.f32 %v3623, 0.35355338
      %v3627 = vsel %vm3447, %v3626, -1e+30
      %3629 = vrot.lane.b32.xlu0 %v3449, 120
      %v3630 = vpop.permute.xlu0 %3629
      %v3632 = vsel %vm925, %v3630, 0.0
      %3633 = vadd.xlane.f32.xlu0 %v3632
      %v3634 = vpop.xlane.xlu0 %3633
      %v3635 = vmul.f32 %v3634, 0.35355338
      %v3636 = vsel %vm930, %v3627, -inf
      %3637 = vmax.xlane.f32.xlu0 %v3636
      %v3638 = vpop.xlane.xlu0 %3637
      %v3639 = vmax.f32 %v3638, %v3635
      %v3640 = vsub.f32 %v3627, %v3639
      %v3641 = vmul.f32 %v3640, 1.442695
      %v3642 = vpow.pop %v3641
      %v3643 = vsub.f32 %v3635, %v3639
      %v3644 = vmul.f32 %v3643, 1.442695
      %v3645 = vpow.pop %v3644
      %v3646 = vsel %vm930, %v3642, 0.0
      %3647 = vadd.xlane.f32.xlu0 %v3646
      %v3648 = vpop.xlane.xlu0 %3647
      %v3649 = vadd.f32 %v3645, %v3648
      %v3650 = vrcp.pop %v3649
      %v3651 = vmul.f32 %v3642, %v3650
      %v3652 = vmul.f32 %v3645, %v3650
      %v3653 = vmul.f32 %v3652, %v951
      %3654 = vrot.lane.b32.xlu0 %v3357, 120
      %v3655 = vpop.permute.xlu0 %3654
      %3657 = vrot.lane.b32.xlu0 %v3653, 120
      %v3658 = vpop.permute.xlu0 %3657
      %v3661 = vsel %vm953, %v3651, 0
      %v3663 = vsel %vm957, %v3655, 0
      %3665 = vmatprep.subr.mxu0 0.0
      %3666 = vmatpush1.msra.mxu0 0.0
      %3667 = vmatprep.subr.mxu0 0.0
      %3668 = vmatpush1.msra.mxu0 0.0
      %3669 = vmatprep.subr.mxu0 0.0
      %3670 = vmatpush1.msra.mxu0 0.0
      %3671 = vmatprep.subr.mxu0 0.0
      %3672 = vmatpush1.msra.mxu0 0.0
      %3673 = vmatprep.subr.mxu0 0.0
      %3674 = vmatpush1.msra.mxu0 0.0
      %3675 = vmatprep.subr.mxu0 0.0
      %3676 = vmatpush1.msra.mxu0 0.0
      %3677 = vmatprep.subr.mxu0 0.0
      %3678 = vmatpush1.msra.mxu0 0.0
      %3679 = vmatprep.subr.mxu0 0.0
      %3680 = vmatpush1.msra.mxu0 0.0
      %3681 = vmatprep.subr.mxu0 0.0
      %3682 = vmatpush1.msra.mxu0 0.0
      %3683 = vmatprep.subr.mxu0 0.0
      %3684 = vmatpush1.msra.mxu0 0.0
      %3685 = vmatprep.subr.mxu0 0.0
      %3686 = vmatpush1.msra.mxu0 0.0
      %3687 = vmatprep.subr.mxu0 0.0
      %3688 = vmatpush1.msra.mxu0 0.0
      %3689 = vmatprep.subr.mxu0 0.0
      %3690 = vmatpush1.msra.mxu0 0.0
      %3691 = vmatprep.subr.mxu0 0.0
      %3692 = vmatpush1.msra.mxu0 0.0
      %3693 = vmatprep.subr.mxu0 0.0
      %3694 = vmatpush1.msra.mxu0 0.0
      %3695 = vmatprep.subr.mxu0 0.0
      %3696 = vmatpush1.msra.mxu0 %v3663
      %3697 = vmatprep.subr.mxu0 0.0
      %3698 = vmatpush2.msra.mxu0 0.0
      %3699 = vmatprep.subr.mxu0 0.0
      %3700 = vmatpush2.msra.mxu0 0.0
      %3701 = vmatprep.subr.mxu0 0.0
      %3702 = vmatpush2.msra.mxu0 0.0
      %3703 = vmatprep.subr.mxu0 0.0
      %3704 = vmatpush2.msra.mxu0 0.0
      %3705 = vmatprep.subr.mxu0 0.0
      %3706 = vmatpush2.msra.mxu0 0.0
      %3707 = vmatprep.subr.mxu0 0.0
      %3708 = vmatpush2.msra.mxu0 0.0
      %3709 = vmatprep.subr.mxu0 0.0
      %3710 = vmatpush2.msra.mxu0 0.0
      %3711 = vmatprep.subr.mxu0 0.0
      %3712 = vmatpush2.msra.mxu0 0.0
      %3713 = vmatprep.subr.mxu0 0.0
      %3714 = vmatpush2.msra.mxu0 0.0
      %3715 = vmatprep.subr.mxu0 0.0
      %3716 = vmatpush2.msra.mxu0 0.0
      %3717 = vmatprep.subr.mxu0 0.0
      %3718 = vmatpush2.msra.mxu0 0.0
      %3719 = vmatprep.subr.mxu0 0.0
      %3720 = vmatpush2.msra.mxu0 0.0
      %3721 = vmatprep.subr.mxu0 0.0
      %3722 = vmatpush2.msra.mxu0 0.0
      %3723 = vmatprep.subr.mxu0 0.0
      %3724 = vmatpush2.msra.mxu0 0.0
      %3725 = vmatprep.subr.mxu0 0.0
      %3726 = vmatpush2.msra.mxu0 0.0
      %3727 = vmatprep.subr.mxu0 0.0
      %3728 = vmatpush2.msra.mxu0 0.0
      %3729 = vmatprep.mubr.f32.mxu0 0.0
      %3730 = vmatmul.mubr.f32.gmra.mxu0 %v3661
      %v3731 = vpop.f32.mrf.mxu0
      %v3732 = vadd.f32 %v3658, %v3731
      %v3733 = vpop.f32.mrf.mxu0
      %3734 = vdwg.mxu0
      %v3736 = vsel %vm835, %v3732, 0
      %3738 = vmatprep.subr.mxu0 0.0
      %3739 = vmatpush1.msra.mxu0 0.0
      %3740 = vmatprep.subr.mxu0 0.0
      %3741 = vmatpush1.msra.mxu0 0.0
      %3742 = vmatprep.subr.mxu0 0.0
      %3743 = vmatpush1.msra.mxu0 0.0
      %3744 = vmatprep.subr.mxu0 0.0
      %3745 = vmatpush1.msra.mxu0 0.0
      %3746 = vmatprep.subr.mxu0 0.0
      %3747 = vmatpush1.msra.mxu0 0.0
      %3748 = vmatprep.subr.mxu0 0.0
      %3749 = vmatpush1.msra.mxu0 0.0
      %3750 = vmatprep.subr.mxu0 0.0
      %3751 = vmatpush1.msra.mxu0 0.0
      %3752 = vmatprep.subr.mxu0 0.0
      %3753 = vmatpush1.msra.mxu0 0.0
      %3754 = vmatprep.subr.mxu0 0.0
      %3755 = vmatpush1.msra.mxu0 0.0
      %3756 = vmatprep.subr.mxu0 0.0
      %3757 = vmatpush1.msra.mxu0 0.0
      %3758 = vmatprep.subr.mxu0 0.0
      %3759 = vmatpush1.msra.mxu0 0.0
      %3760 = vmatprep.subr.mxu0 0.0
      %3761 = vmatpush1.msra.mxu0 0.0
      %3762 = vmatprep.subr.mxu0 0.0
      %3763 = vmatpush1.msra.mxu0 0.0
      %3764 = vmatprep.subr.mxu0 0.0
      %3765 = vmatpush1.msra.mxu0 0.0
      %3766 = vmatprep.subr.mxu0 0.0
      %3767 = vmatpush1.msra.mxu0 0.0
      %3768 = vmatprep.subr.mxu0 0.0
      %3769 = vmatpush1.msra.mxu0 %v3362
      %3770 = vmatprep.subr.mxu0 0.0
      %3771 = vmatpush2.msra.mxu0 0.0
      %3772 = vmatprep.subr.mxu0 0.0
      %3773 = vmatpush2.msra.mxu0 0.0
      %3774 = vmatprep.subr.mxu0 0.0
      %3775 = vmatpush2.msra.mxu0 0.0
      %3776 = vmatprep.subr.mxu0 0.0
      %3777 = vmatpush2.msra.mxu0 0.0
      %3778 = vmatprep.subr.mxu0 0.0
      %3779 = vmatpush2.msra.mxu0 0.0
      %3780 = vmatprep.subr.mxu0 0.0
      %3781 = vmatpush2.msra.mxu0 0.0
      %3782 = vmatprep.subr.mxu0 0.0
      %3783 = vmatpush2.msra.mxu0 0.0
      %3784 = vmatprep.subr.mxu0 0.0
      %3785 = vmatpush2.msra.mxu0 0.0
      %3786 = vmatprep.subr.mxu0 0.0
      %3787 = vmatpush2.msra.mxu0 0.0
      %3788 = vmatprep.subr.mxu0 0.0
      %3789 = vmatpush2.msra.mxu0 0.0
      %3790 = vmatprep.subr.mxu0 0.0
      %3791 = vmatpush2.msra.mxu0 0.0
      %3792 = vmatprep.subr.mxu0 0.0
      %3793 = vmatpush2.msra.mxu0 0.0
      %3794 = vmatprep.subr.mxu0 0.0
      %3795 = vmatpush2.msra.mxu0 0.0
      %3796 = vmatprep.subr.mxu0 0.0
      %3797 = vmatpush2.msra.mxu0 0.0
      %3798 = vmatprep.subr.mxu0 0.0
      %3799 = vmatpush2.msra.mxu0 0.0
      %3800 = vmatprep.subr.mxu0 0.0
      %3801 = vmatpush2.msra.mxu0 0.0
      %3802 = vmatprep.mubr.f32.mxu0 0.0
      %3803 = vmatmul.mubr.f32.gmra.mxu0 %v3736
      %v3804 = vpop.f32.mrf.mxu0
      %v3805 = vadd.f32 0.0, %v3804
      %v3806 = vpop.f32.mrf.mxu0
      %3807 = vdwg.mxu0
      %v3809 = vsel %vm835, %v3545, 0
      %3811 = vmatprep.subr.mxu0 0.0
      %3812 = vmatpush1.msra.mxu0 0.0
      %3813 = vmatprep.subr.mxu0 0.0
      %3814 = vmatpush1.msra.mxu0 0.0
      %3815 = vmatprep.subr.mxu0 0.0
      %3816 = vmatpush1.msra.mxu0 0.0
      %3817 = vmatprep.subr.mxu0 0.0
      %3818 = vmatpush1.msra.mxu0 0.0
      %3819 = vmatprep.subr.mxu0 0.0
      %3820 = vmatpush1.msra.mxu0 0.0
      %3821 = vmatprep.subr.mxu0 0.0
      %3822 = vmatpush1.msra.mxu0 0.0
      %3823 = vmatprep.subr.mxu0 0.0
      %3824 = vmatpush1.msra.mxu0 0.0
      %3825 = vmatprep.subr.mxu0 0.0
      %3826 = vmatpush1.msra.mxu0 0.0
      %3827 = vmatprep.subr.mxu0 0.0
      %3828 = vmatpush1.msra.mxu0 0.0
      %3829 = vmatprep.subr.mxu0 0.0
      %3830 = vmatpush1.msra.mxu0 0.0
      %3831 = vmatprep.subr.mxu0 0.0
      %3832 = vmatpush1.msra.mxu0 0.0
      %3833 = vmatprep.subr.mxu0 0.0
      %3834 = vmatpush1.msra.mxu0 0.0
      %3835 = vmatprep.subr.mxu0 0.0
      %3836 = vmatpush1.msra.mxu0 0.0
      %3837 = vmatprep.subr.mxu0 0.0
      %3838 = vmatpush1.msra.mxu0 0.0
      %3839 = vmatprep.subr.mxu0 0.0
      %3840 = vmatpush1.msra.mxu0 0.0
      %3841 = vmatprep.subr.mxu0 0.0
      %3842 = vmatpush1.msra.mxu0 %v3361
      %3843 = vmatprep.subr.mxu0 0.0
      %3844 = vmatpush2.msra.mxu0 0.0
      %3845 = vmatprep.subr.mxu0 0.0
      %3846 = vmatpush2.msra.mxu0 0.0
      %3847 = vmatprep.subr.mxu0 0.0
      %3848 = vmatpush2.msra.mxu0 0.0
      %3849 = vmatprep.subr.mxu0 0.0
      %3850 = vmatpush2.msra.mxu0 0.0
      %3851 = vmatprep.subr.mxu0 0.0
      %3852 = vmatpush2.msra.mxu0 0.0
      %3853 = vmatprep.subr.mxu0 0.0
      %3854 = vmatpush2.msra.mxu0 0.0
      %3855 = vmatprep.subr.mxu0 0.0
      %3856 = vmatpush2.msra.mxu0 0.0
      %3857 = vmatprep.subr.mxu0 0.0
      %3858 = vmatpush2.msra.mxu0 0.0
      %3859 = vmatprep.subr.mxu0 0.0
      %3860 = vmatpush2.msra.mxu0 0.0
      %3861 = vmatprep.subr.mxu0 0.0
      %3862 = vmatpush2.msra.mxu0 0.0
      %3863 = vmatprep.subr.mxu0 0.0
      %3864 = vmatpush2.msra.mxu0 0.0
      %3865 = vmatprep.subr.mxu0 0.0
      %3866 = vmatpush2.msra.mxu0 0.0
      %3867 = vmatprep.subr.mxu0 0.0
      %3868 = vmatpush2.msra.mxu0 0.0
      %3869 = vmatprep.subr.mxu0 0.0
      %3870 = vmatpush2.msra.mxu0 0.0
      %3871 = vmatprep.subr.mxu0 0.0
      %3872 = vmatpush2.msra.mxu0 0.0
      %3873 = vmatprep.subr.mxu0 0.0
      %3874 = vmatpush2.msra.mxu0 0.0
      %3875 = vmatprep.mubr.f32.mxu0 0.0
      %3876 = vmatmul.mubr.f32.gmra.mxu0 %v3809
      %v3877 = vpop.f32.mrf.mxu0
      %v3878 = vadd.f32 %v3805, %v3877
      %v3879 = vpop.f32.mrf.mxu0
      %3880 = vdwg.mxu0
      %3881 = vrot.lane.b32.xlu0 %v3347, 112
      %v3882 = vpop.permute.xlu0 %3881
      %3883 = vrot.lane.b32.xlu0 %v3157, 112
      %v3884 = vpop.permute.xlu0 %3883
      %v3885 = vsel %vm835, %v3882, 0
      %v3887 = vsel %vm835, %v3884, 0
      %3889 = vmatprep.subr.mxu0 0.0
      %3890 = vmatpush1.xpose.msra.mxu0 0.0
      %3891 = vmatprep.subr.mxu0 0.0
      %3892 = vmatpush1.xpose.msra.mxu0 0.0
      %3893 = vmatprep.subr.mxu0 0.0
      %3894 = vmatpush1.xpose.msra.mxu0 0.0
      %3895 = vmatprep.subr.mxu0 0.0
      %3896 = vmatpush1.xpose.msra.mxu0 0.0
      %3897 = vmatprep.subr.mxu0 0.0
      %3898 = vmatpush1.xpose.msra.mxu0 0.0
      %3899 = vmatprep.subr.mxu0 0.0
      %3900 = vmatpush1.xpose.msra.mxu0 0.0
      %3901 = vmatprep.subr.mxu0 0.0
      %3902 = vmatpush1.xpose.msra.mxu0 0.0
      %3903 = vmatprep.subr.mxu0 0.0
      %3904 = vmatpush1.xpose.msra.mxu0 0.0
      %3905 = vmatprep.subr.mxu0 0.0
      %3906 = vmatpush1.xpose.msra.mxu0 0.0
      %3907 = vmatprep.subr.mxu0 0.0
      %3908 = vmatpush1.xpose.msra.mxu0 0.0
      %3909 = vmatprep.subr.mxu0 0.0
      %3910 = vmatpush1.xpose.msra.mxu0 0.0
      %3911 = vmatprep.subr.mxu0 0.0
      %3912 = vmatpush1.xpose.msra.mxu0 0.0
      %3913 = vmatprep.subr.mxu0 0.0
      %3914 = vmatpush1.xpose.msra.mxu0 0.0
      %3915 = vmatprep.subr.mxu0 0.0
      %3916 = vmatpush1.xpose.msra.mxu0 0.0
      %3917 = vmatprep.subr.mxu0 0.0
      %3918 = vmatpush1.xpose.msra.mxu0 0.0
      %3919 = vmatprep.subr.mxu0 0.0
      %3920 = vmatpush1.xpose.msra.mxu0 %v3887
      %3921 = vmatprep.subr.mxu0 0.0
      %3922 = vmatpush2.xpose.msra.mxu0 0.0
      %3923 = vmatprep.subr.mxu0 0.0
      %3924 = vmatpush2.xpose.msra.mxu0 0.0
      %3925 = vmatprep.subr.mxu0 0.0
      %3926 = vmatpush2.xpose.msra.mxu0 0.0
      %3927 = vmatprep.subr.mxu0 0.0
      %3928 = vmatpush2.xpose.msra.mxu0 0.0
      %3929 = vmatprep.subr.mxu0 0.0
      %3930 = vmatpush2.xpose.msra.mxu0 0.0
      %3931 = vmatprep.subr.mxu0 0.0
      %3932 = vmatpush2.xpose.msra.mxu0 0.0
      %3933 = vmatprep.subr.mxu0 0.0
      %3934 = vmatpush2.xpose.msra.mxu0 0.0
      %3935 = vmatprep.subr.mxu0 0.0
      %3936 = vmatpush2.xpose.msra.mxu0 0.0
      %3937 = vmatprep.subr.mxu0 0.0
      %3938 = vmatpush2.xpose.msra.mxu0 0.0
      %3939 = vmatprep.subr.mxu0 0.0
      %3940 = vmatpush2.xpose.msra.mxu0 0.0
      %3941 = vmatprep.subr.mxu0 0.0
      %3942 = vmatpush2.xpose.msra.mxu0 0.0
      %3943 = vmatprep.subr.mxu0 0.0
      %3944 = vmatpush2.xpose.msra.mxu0 0.0
      %3945 = vmatprep.subr.mxu0 0.0
      %3946 = vmatpush2.xpose.msra.mxu0 0.0
      %3947 = vmatprep.subr.mxu0 0.0
      %3948 = vmatpush2.xpose.msra.mxu0 0.0
      %3949 = vmatprep.subr.mxu0 0.0
      %3950 = vmatpush2.xpose.msra.mxu0 0.0
      %3951 = vmatprep.subr.mxu0 0.0
      %3952 = vmatpush2.xpose.msra.mxu0 0.0
      %3953 = vmatprep.mubr.f32.mxu0 0.0
      %3954 = vmatmul.mubr.f32.gmra.mxu0 %v3885
      %v3955 = vpop.f32.mrf.mxu0
      %v3956 = vadd.f32 0.0, %v3955
      %v3957 = vpop.f32.mrf.mxu0
      %3958 = vdwg.mxu0
      %v3959 = vmul.f32 %v3956, 0.35355338
      %v3960 = vsel %vm3447, %v3959, -1e+30
      %3961 = vrot.lane.b32.xlu0 %v3449, 112
      %v3962 = vpop.permute.xlu0 %3961
      %v3964 = vsel %vm925, %v3962, 0.0
      %3965 = vadd.xlane.f32.xlu0 %v3964
      %v3966 = vpop.xlane.xlu0 %3965
      %v3967 = vmul.f32 %v3966, 0.35355338
      %v3968 = vsel %vm930, %v3960, -inf
      %3969 = vmax.xlane.f32.xlu0 %v3968
      %v3970 = vpop.xlane.xlu0 %3969
      %v3971 = vmax.f32 %v3970, %v3967
      %v3972 = vsub.f32 %v3960, %v3971
      %v3973 = vmul.f32 %v3972, 1.442695
      %v3974 = vpow.pop %v3973
      %v3975 = vsub.f32 %v3967, %v3971
      %v3976 = vmul.f32 %v3975, 1.442695
      %v3977 = vpow.pop %v3976
      %v3978 = vsel %vm930, %v3974, 0.0
      %3979 = vadd.xlane.f32.xlu0 %v3978
      %v3980 = vpop.xlane.xlu0 %3979
      %v3981 = vadd.f32 %v3977, %v3980
      %v3982 = vrcp.pop %v3981
      %v3983 = vmul.f32 %v3974, %v3982
      %v3984 = vmul.f32 %v3977, %v3982
      %v3985 = vmul.f32 %v3984, %v951
      %3986 = vrot.lane.b32.xlu0 %v3357, 112
      %v3987 = vpop.permute.xlu0 %3986
      %3989 = vrot.lane.b32.xlu0 %v3985, 112
      %v3990 = vpop.permute.xlu0 %3989
      %v3993 = vsel %vm953, %v3983, 0
      %v3995 = vsel %vm957, %v3987, 0
      %3997 = vmatprep.subr.mxu0 0.0
      %3998 = vmatpush1.msra.mxu0 0.0
      %3999 = vmatprep.subr.mxu0 0.0
      %4000 = vmatpush1.msra.mxu0 0.0
      %4001 = vmatprep.subr.mxu0 0.0
      %4002 = vmatpush1.msra.mxu0 0.0
      %4003 = vmatprep.subr.mxu0 0.0
      %4004 = vmatpush1.msra.mxu0 0.0
      %4005 = vmatprep.subr.mxu0 0.0
      %4006 = vmatpush1.msra.mxu0 0.0
      %4007 = vmatprep.subr.mxu0 0.0
      %4008 = vmatpush1.msra.mxu0 0.0
      %4009 = vmatprep.subr.mxu0 0.0
      %4010 = vmatpush1.msra.mxu0 0.0
      %4011 = vmatprep.subr.mxu0 0.0
      %4012 = vmatpush1.msra.mxu0 0.0
      %4013 = vmatprep.subr.mxu0 0.0
      %4014 = vmatpush1.msra.mxu0 0.0
      %4015 = vmatprep.subr.mxu0 0.0
      %4016 = vmatpush1.msra.mxu0 0.0
      %4017 = vmatprep.subr.mxu0 0.0
      %4018 = vmatpush1.msra.mxu0 0.0
      %4019 = vmatprep.subr.mxu0 0.0
      %4020 = vmatpush1.msra.mxu0 0.0
      %4021 = vmatprep.subr.mxu0 0.0
      %4022 = vmatpush1.msra.mxu0 0.0
      %4023 = vmatprep.subr.mxu0 0.0
      %4024 = vmatpush1.msra.mxu0 0.0
      %4025 = vmatprep.subr.mxu0 0.0
      %4026 = vmatpush1.msra.mxu0 0.0
      %4027 = vmatprep.subr.mxu0 0.0
      %4028 = vmatpush1.msra.mxu0 %v3995
      %4029 = vmatprep.subr.mxu0 0.0
      %4030 = vmatpush2.msra.mxu0 0.0
      %4031 = vmatprep.subr.mxu0 0.0
      %4032 = vmatpush2.msra.mxu0 0.0
      %4033 = vmatprep.subr.mxu0 0.0
      %4034 = vmatpush2.msra.mxu0 0.0
      %4035 = vmatprep.subr.mxu0 0.0
      %4036 = vmatpush2.msra.mxu0 0.0
      %4037 = vmatprep.subr.mxu0 0.0
      %4038 = vmatpush2.msra.mxu0 0.0
      %4039 = vmatprep.subr.mxu0 0.0
      %4040 = vmatpush2.msra.mxu0 0.0
      %4041 = vmatprep.subr.mxu0 0.0
      %4042 = vmatpush2.msra.mxu0 0.0
      %4043 = vmatprep.subr.mxu0 0.0
      %4044 = vmatpush2.msra.mxu0 0.0
      %4045 = vmatprep.subr.mxu0 0.0
      %4046 = vmatpush2.msra.mxu0 0.0
      %4047 = vmatprep.subr.mxu0 0.0
      %4048 = vmatpush2.msra.mxu0 0.0
      %4049 = vmatprep.subr.mxu0 0.0
      %4050 = vmatpush2.msra.mxu0 0.0
      %4051 = vmatprep.subr.mxu0 0.0
      %4052 = vmatpush2.msra.mxu0 0.0
      %4053 = vmatprep.subr.mxu0 0.0
      %4054 = vmatpush2.msra.mxu0 0.0
      %4055 = vmatprep.subr.mxu0 0.0
      %4056 = vmatpush2.msra.mxu0 0.0
      %4057 = vmatprep.subr.mxu0 0.0
      %4058 = vmatpush2.msra.mxu0 0.0
      %4059 = vmatprep.subr.mxu0 0.0
      %4060 = vmatpush2.msra.mxu0 0.0
      %4061 = vmatprep.mubr.f32.mxu0 0.0
      %4062 = vmatmul.mubr.f32.gmra.mxu0 %v3993
      %v4063 = vpop.f32.mrf.mxu0
      %v4064 = vadd.f32 %v3990, %v4063
      %v4065 = vpop.f32.mrf.mxu0
      %4066 = vdwg.mxu0
      %v4068 = vsel %vm835, %v4064, 0
      %4070 = vmatprep.subr.mxu0 0.0
      %4071 = vmatpush1.msra.mxu0 0.0
      %4072 = vmatprep.subr.mxu0 0.0
      %4073 = vmatpush1.msra.mxu0 0.0
      %4074 = vmatprep.subr.mxu0 0.0
      %4075 = vmatpush1.msra.mxu0 0.0
      %4076 = vmatprep.subr.mxu0 0.0
      %4077 = vmatpush1.msra.mxu0 0.0
      %4078 = vmatprep.subr.mxu0 0.0
      %4079 = vmatpush1.msra.mxu0 0.0
      %4080 = vmatprep.subr.mxu0 0.0
      %4081 = vmatpush1.msra.mxu0 0.0
      %4082 = vmatprep.subr.mxu0 0.0
      %4083 = vmatpush1.msra.mxu0 0.0
      %4084 = vmatprep.subr.mxu0 0.0
      %4085 = vmatpush1.msra.mxu0 0.0
      %4086 = vmatprep.subr.mxu0 0.0
      %4087 = vmatpush1.msra.mxu0 0.0
      %4088 = vmatprep.subr.mxu0 0.0
      %4089 = vmatpush1.msra.mxu0 0.0
      %4090 = vmatprep.subr.mxu0 0.0
      %4091 = vmatpush1.msra.mxu0 0.0
      %4092 = vmatprep.subr.mxu0 0.0
      %4093 = vmatpush1.msra.mxu0 0.0
      %4094 = vmatprep.subr.mxu0 0.0
      %4095 = vmatpush1.msra.mxu0 0.0
      %4096 = vmatprep.subr.mxu0 0.0
      %4097 = vmatpush1.msra.mxu0 0.0
      %4098 = vmatprep.subr.mxu0 0.0
      %4099 = vmatpush1.msra.mxu0 0.0
      %4100 = vmatprep.subr.mxu0 0.0
      %4101 = vmatpush1.msra.mxu0 %v3363
      %4102 = vmatprep.subr.mxu0 0.0
      %4103 = vmatpush2.msra.mxu0 0.0
      %4104 = vmatprep.subr.mxu0 0.0
      %4105 = vmatpush2.msra.mxu0 0.0
      %4106 = vmatprep.subr.mxu0 0.0
      %4107 = vmatpush2.msra.mxu0 0.0
      %4108 = vmatprep.subr.mxu0 0.0
      %4109 = vmatpush2.msra.mxu0 0.0
      %4110 = vmatprep.subr.mxu0 0.0
      %4111 = vmatpush2.msra.mxu0 0.0
      %4112 = vmatprep.subr.mxu0 0.0
      %4113 = vmatpush2.msra.mxu0 0.0
      %4114 = vmatprep.subr.mxu0 0.0
      %4115 = vmatpush2.msra.mxu0 0.0
      %4116 = vmatprep.subr.mxu0 0.0
      %4117 = vmatpush2.msra.mxu0 0.0
      %4118 = vmatprep.subr.mxu0 0.0
      %4119 = vmatpush2.msra.mxu0 0.0
      %4120 = vmatprep.subr.mxu0 0.0
      %4121 = vmatpush2.msra.mxu0 0.0
      %4122 = vmatprep.subr.mxu0 0.0
      %4123 = vmatpush2.msra.mxu0 0.0
      %4124 = vmatprep.subr.mxu0 0.0
      %4125 = vmatpush2.msra.mxu0 0.0
      %4126 = vmatprep.subr.mxu0 0.0
      %4127 = vmatpush2.msra.mxu0 0.0
      %4128 = vmatprep.subr.mxu0 0.0
      %4129 = vmatpush2.msra.mxu0 0.0
      %4130 = vmatprep.subr.mxu0 0.0
      %4131 = vmatpush2.msra.mxu0 0.0
      %4132 = vmatprep.subr.mxu0 0.0
      %4133 = vmatpush2.msra.mxu0 0.0
      %4134 = vmatprep.mubr.f32.mxu0 0.0
      %4135 = vmatmul.mubr.f32.gmra.mxu0 %v4068
      %v4136 = vpop.f32.mrf.mxu0
      %v4137 = vadd.f32 0.0, %v4136
      %v4138 = vpop.f32.mrf.mxu0
      %4139 = vdwg.mxu0
      %v4140 = vadd.f32 %v3878, %v4137
      %4141 = vrot.lane.b32.xlu0 %v3347, 104
      %v4142 = vpop.permute.xlu0 %4141
      %4143 = vrot.lane.b32.xlu0 %v3157, 104
      %v4144 = vpop.permute.xlu0 %4143
      %v4145 = vsel %vm835, %v4142, 0
      %v4147 = vsel %vm835, %v4144, 0
      %4149 = vmatprep.subr.mxu0 0.0
      %4150 = vmatpush1.xpose.msra.mxu0 0.0
      %4151 = vmatprep.subr.mxu0 0.0
      %4152 = vmatpush1.xpose.msra.mxu0 0.0
      %4153 = vmatprep.subr.mxu0 0.0
      %4154 = vmatpush1.xpose.msra.mxu0 0.0
      %4155 = vmatprep.subr.mxu0 0.0
      %4156 = vmatpush1.xpose.msra.mxu0 0.0
      %4157 = vmatprep.subr.mxu0 0.0
      %4158 = vmatpush1.xpose.msra.mxu0 0.0
      %4159 = vmatprep.subr.mxu0 0.0
      %4160 = vmatpush1.xpose.msra.mxu0 0.0
      %4161 = vmatprep.subr.mxu0 0.0
      %4162 = vmatpush1.xpose.msra.mxu0 0.0
      %4163 = vmatprep.subr.mxu0 0.0
      %4164 = vmatpush1.xpose.msra.mxu0 0.0
      %4165 = vmatprep.subr.mxu0 0.0
      %4166 = vmatpush1.xpose.msra.mxu0 0.0
      %4167 = vmatprep.subr.mxu0 0.0
      %4168 = vmatpush1.xpose.msra.mxu0 0.0
      %4169 = vmatprep.subr.mxu0 0.0
      %4170 = vmatpush1.xpose.msra.mxu0 0.0
      %4171 = vmatprep.subr.mxu0 0.0
      %4172 = vmatpush1.xpose.msra.mxu0 0.0
      %4173 = vmatprep.subr.mxu0 0.0
      %4174 = vmatpush1.xpose.msra.mxu0 0.0
      %4175 = vmatprep.subr.mxu0 0.0
      %4176 = vmatpush1.xpose.msra.mxu0 0.0
      %4177 = vmatprep.subr.mxu0 0.0
      %4178 = vmatpush1.xpose.msra.mxu0 0.0
      %4179 = vmatprep.subr.mxu0 0.0
      %4180 = vmatpush1.xpose.msra.mxu0 %v4147
      %4181 = vmatprep.subr.mxu0 0.0
      %4182 = vmatpush2.xpose.msra.mxu0 0.0
      %4183 = vmatprep.subr.mxu0 0.0
      %4184 = vmatpush2.xpose.msra.mxu0 0.0
      %4185 = vmatprep.subr.mxu0 0.0
      %4186 = vmatpush2.xpose.msra.mxu0 0.0
      %4187 = vmatprep.subr.mxu0 0.0
      %4188 = vmatpush2.xpose.msra.mxu0 0.0
      %4189 = vmatprep.subr.mxu0 0.0
      %4190 = vmatpush2.xpose.msra.mxu0 0.0
      %4191 = vmatprep.subr.mxu0 0.0
      %4192 = vmatpush2.xpose.msra.mxu0 0.0
      %4193 = vmatprep.subr.mxu0 0.0
      %4194 = vmatpush2.xpose.msra.mxu0 0.0
      %4195 = vmatprep.subr.mxu0 0.0
      %4196 = vmatpush2.xpose.msra.mxu0 0.0
      %4197 = vmatprep.subr.mxu0 0.0
      %4198 = vmatpush2.xpose.msra.mxu0 0.0
      %4199 = vmatprep.subr.mxu0 0.0
      %4200 = vmatpush2.xpose.msra.mxu0 0.0
      %4201 = vmatprep.subr.mxu0 0.0
      %4202 = vmatpush2.xpose.msra.mxu0 0.0
      %4203 = vmatprep.subr.mxu0 0.0
      %4204 = vmatpush2.xpose.msra.mxu0 0.0
      %4205 = vmatprep.subr.mxu0 0.0
      %4206 = vmatpush2.xpose.msra.mxu0 0.0
      %4207 = vmatprep.subr.mxu0 0.0
      %4208 = vmatpush2.xpose.msra.mxu0 0.0
      %4209 = vmatprep.subr.mxu0 0.0
      %4210 = vmatpush2.xpose.msra.mxu0 0.0
      %4211 = vmatprep.subr.mxu0 0.0
      %4212 = vmatpush2.xpose.msra.mxu0 0.0
      %4213 = vmatprep.mubr.f32.mxu0 0.0
      %4214 = vmatmul.mubr.f32.gmra.mxu0 %v4145
      %v4215 = vpop.f32.mrf.mxu0
      %v4216 = vadd.f32 0.0, %v4215
      %v4217 = vpop.f32.mrf.mxu0
      %4218 = vdwg.mxu0
      %v4219 = vmul.f32 %v4216, 0.35355338
      %v4220 = vsel %vm3447, %v4219, -1e+30
      %4221 = vrot.lane.b32.xlu0 %v3449, 104
      %v4222 = vpop.permute.xlu0 %4221
      %v4224 = vsel %vm925, %v4222, 0.0
      %4225 = vadd.xlane.f32.xlu0 %v4224
      %v4226 = vpop.xlane.xlu0 %4225
      %v4227 = vmul.f32 %v4226, 0.35355338
      %v4228 = vsel %vm930, %v4220, -inf
      %4229 = vmax.xlane.f32.xlu0 %v4228
      %v4230 = vpop.xlane.xlu0 %4229
      %v4231 = vmax.f32 %v4230, %v4227
      %v4232 = vsub.f32 %v4220, %v4231
      %v4233 = vmul.f32 %v4232, 1.442695
      %v4234 = vpow.pop %v4233
      %v4235 = vsub.f32 %v4227, %v4231
      %v4236 = vmul.f32 %v4235, 1.442695
      %v4237 = vpow.pop %v4236
      %v4238 = vsel %vm930, %v4234, 0.0
      %4239 = vadd.xlane.f32.xlu0 %v4238
      %v4240 = vpop.xlane.xlu0 %4239
      %v4241 = vadd.f32 %v4237, %v4240
      %v4242 = vrcp.pop %v4241
      %v4243 = vmul.f32 %v4234, %v4242
      %v4244 = vmul.f32 %v4237, %v4242
      %v4245 = vmul.f32 %v4244, %v951
      %4246 = vrot.lane.b32.xlu0 %v3357, 104
      %v4247 = vpop.permute.xlu0 %4246
      %4249 = vrot.lane.b32.xlu0 %v4245, 104
      %v4250 = vpop.permute.xlu0 %4249
      %v4253 = vsel %vm953, %v4243, 0
      %v4255 = vsel %vm957, %v4247, 0
      %4257 = vmatprep.subr.mxu0 0.0
      %4258 = vmatpush1.msra.mxu0 0.0
      %4259 = vmatprep.subr.mxu0 0.0
      %4260 = vmatpush1.msra.mxu0 0.0
      %4261 = vmatprep.subr.mxu0 0.0
      %4262 = vmatpush1.msra.mxu0 0.0
      %4263 = vmatprep.subr.mxu0 0.0
      %4264 = vmatpush1.msra.mxu0 0.0
      %4265 = vmatprep.subr.mxu0 0.0
      %4266 = vmatpush1.msra.mxu0 0.0
      %4267 = vmatprep.subr.mxu0 0.0
      %4268 = vmatpush1.msra.mxu0 0.0
      %4269 = vmatprep.subr.mxu0 0.0
      %4270 = vmatpush1.msra.mxu0 0.0
      %4271 = vmatprep.subr.mxu0 0.0
      %4272 = vmatpush1.msra.mxu0 0.0
      %4273 = vmatprep.subr.mxu0 0.0
      %4274 = vmatpush1.msra.mxu0 0.0
      %4275 = vmatprep.subr.mxu0 0.0
      %4276 = vmatpush1.msra.mxu0 0.0
      %4277 = vmatprep.subr.mxu0 0.0
      %4278 = vmatpush1.msra.mxu0 0.0
      %4279 = vmatprep.subr.mxu0 0.0
      %4280 = vmatpush1.msra.mxu0 0.0
      %4281 = vmatprep.subr.mxu0 0.0
      %4282 = vmatpush1.msra.mxu0 0.0
      %4283 = vmatprep.subr.mxu0 0.0
      %4284 = vmatpush1.msra.mxu0 0.0
      %4285 = vmatprep.subr.mxu0 0.0
      %4286 = vmatpush1.msra.mxu0 0.0
      %4287 = vmatprep.subr.mxu0 0.0
      %4288 = vmatpush1.msra.mxu0 %v4255
      %4289 = vmatprep.subr.mxu0 0.0
      %4290 = vmatpush2.msra.mxu0 0.0
      %4291 = vmatprep.subr.mxu0 0.0
      %4292 = vmatpush2.msra.mxu0 0.0
      %4293 = vmatprep.subr.mxu0 0.0
      %4294 = vmatpush2.msra.mxu0 0.0
      %4295 = vmatprep.subr.mxu0 0.0
      %4296 = vmatpush2.msra.mxu0 0.0
      %4297 = vmatprep.subr.mxu0 0.0
      %4298 = vmatpush2.msra.mxu0 0.0
      %4299 = vmatprep.subr.mxu0 0.0
      %4300 = vmatpush2.msra.mxu0 0.0
      %4301 = vmatprep.subr.mxu0 0.0
      %4302 = vmatpush2.msra.mxu0 0.0
      %4303 = vmatprep.subr.mxu0 0.0
      %4304 = vmatpush2.msra.mxu0 0.0
      %4305 = vmatprep.subr.mxu0 0.0
      %4306 = vmatpush2.msra.mxu0 0.0
      %4307 = vmatprep.subr.mxu0 0.0
      %4308 = vmatpush2.msra.mxu0 0.0
      %4309 = vmatprep.subr.mxu0 0.0
      %4310 = vmatpush2.msra.mxu0 0.0
      %4311 = vmatprep.subr.mxu0 0.0
      %4312 = vmatpush2.msra.mxu0 0.0
      %4313 = vmatprep.subr.mxu0 0.0
      %4314 = vmatpush2.msra.mxu0 0.0
      %4315 = vmatprep.subr.mxu0 0.0
      %4316 = vmatpush2.msra.mxu0 0.0
      %4317 = vmatprep.subr.mxu0 0.0
      %4318 = vmatpush2.msra.mxu0 0.0
      %4319 = vmatprep.subr.mxu0 0.0
      %4320 = vmatpush2.msra.mxu0 0.0
      %4321 = vmatprep.mubr.f32.mxu0 0.0
      %4322 = vmatmul.mubr.f32.gmra.mxu0 %v4253
      %v4323 = vpop.f32.mrf.mxu0
      %v4324 = vadd.f32 %v4250, %v4323
      %v4325 = vpop.f32.mrf.mxu0
      %4326 = vdwg.mxu0
      %v4328 = vsel %vm835, %v4324, 0
      %4330 = vmatprep.subr.mxu0 0.0
      %4331 = vmatpush1.msra.mxu0 0.0
      %4332 = vmatprep.subr.mxu0 0.0
      %4333 = vmatpush1.msra.mxu0 0.0
      %4334 = vmatprep.subr.mxu0 0.0
      %4335 = vmatpush1.msra.mxu0 0.0
      %4336 = vmatprep.subr.mxu0 0.0
      %4337 = vmatpush1.msra.mxu0 0.0
      %4338 = vmatprep.subr.mxu0 0.0
      %4339 = vmatpush1.msra.mxu0 0.0
      %4340 = vmatprep.subr.mxu0 0.0
      %4341 = vmatpush1.msra.mxu0 0.0
      %4342 = vmatprep.subr.mxu0 0.0
      %4343 = vmatpush1.msra.mxu0 0.0
      %4344 = vmatprep.subr.mxu0 0.0
      %4345 = vmatpush1.msra.mxu0 0.0
      %4346 = vmatprep.subr.mxu0 0.0
      %4347 = vmatpush1.msra.mxu0 0.0
      %4348 = vmatprep.subr.mxu0 0.0
      %4349 = vmatpush1.msra.mxu0 0.0
      %4350 = vmatprep.subr.mxu0 0.0
      %4351 = vmatpush1.msra.mxu0 0.0
      %4352 = vmatprep.subr.mxu0 0.0
      %4353 = vmatpush1.msra.mxu0 0.0
      %4354 = vmatprep.subr.mxu0 0.0
      %4355 = vmatpush1.msra.mxu0 0.0
      %4356 = vmatprep.subr.mxu0 0.0
      %4357 = vmatpush1.msra.mxu0 0.0
      %4358 = vmatprep.subr.mxu0 0.0
      %4359 = vmatpush1.msra.mxu0 0.0
      %4360 = vmatprep.subr.mxu0 0.0
      %4361 = vmatpush1.msra.mxu0 %v3364
      %4362 = vmatprep.subr.mxu0 0.0
      %4363 = vmatpush2.msra.mxu0 0.0
      %4364 = vmatprep.subr.mxu0 0.0
      %4365 = vmatpush2.msra.mxu0 0.0
      %4366 = vmatprep.subr.mxu0 0.0
      %4367 = vmatpush2.msra.mxu0 0.0
      %4368 = vmatprep.subr.mxu0 0.0
      %4369 = vmatpush2.msra.mxu0 0.0
      %4370 = vmatprep.subr.mxu0 0.0
      %4371 = vmatpush2.msra.mxu0 0.0
      %4372 = vmatprep.subr.mxu0 0.0
      %4373 = vmatpush2.msra.mxu0 0.0
      %4374 = vmatprep.subr.mxu0 0.0
      %4375 = vmatpush2.msra.mxu0 0.0
      %4376 = vmatprep.subr.mxu0 0.0
      %4377 = vmatpush2.msra.mxu0 0.0
      %4378 = vmatprep.subr.mxu0 0.0
      %4379 = vmatpush2.msra.mxu0 0.0
      %4380 = vmatprep.subr.mxu0 0.0
      %4381 = vmatpush2.msra.mxu0 0.0
      %4382 = vmatprep.subr.mxu0 0.0
      %4383 = vmatpush2.msra.mxu0 0.0
      %4384 = vmatprep.subr.mxu0 0.0
      %4385 = vmatpush2.msra.mxu0 0.0
      %4386 = vmatprep.subr.mxu0 0.0
      %4387 = vmatpush2.msra.mxu0 0.0
      %4388 = vmatprep.subr.mxu0 0.0
      %4389 = vmatpush2.msra.mxu0 0.0
      %4390 = vmatprep.subr.mxu0 0.0
      %4391 = vmatpush2.msra.mxu0 0.0
      %4392 = vmatprep.subr.mxu0 0.0
      %4393 = vmatpush2.msra.mxu0 0.0
      %4394 = vmatprep.mubr.f32.mxu0 0.0
      %4395 = vmatmul.mubr.f32.gmra.mxu0 %v4328
      %v4396 = vpop.f32.mrf.mxu0
      %v4397 = vadd.f32 0.0, %v4396
      %v4398 = vpop.f32.mrf.mxu0
      %4399 = vdwg.mxu0
      %v4400 = vadd.f32 %v4140, %v4397
      %s4401 = scalar_lea.vmem %s510, 4
      %v4402 = vld [vmem:[%s4401] sm:$0x3]
      %4404 = vset.pattern.permute.xlu0 0
      %4405 = vperm.xlu0 %4404, %v4402
      %v4406 = vpop.permute.xlu0 %4405
      %v4408 = vmul.f32 %v4400, %v4406
      %s4409 = scalar_lea.vmem %s517, 4
      %4410 = vst.msk [vmem:[%s4409] sm:$0x3] %vm725, %v4408
      %s4411 = scalar_lea.vmem %s483, 6
      %v4412 = vld [vmem:[%s4411] sm:$0x3]
      %v4413 = vmul.f32 %v4412, %v4412
      %v4414 = vsel %vm725, %v4413, 0.0
      %4415 = vadd.xlane.f32.xlu0 %v4414
      %v4416 = vpop.xlane.xlu0 %4415
      %v4417 = vrsqrt.pop %v4416
      %v4418 = vmul.f32 %v4416, %v4417
      %vm4419 = vcmp.eq.f32.partialorder %v4416, inf
      %v4420 = vsel %vm4419, %v4416, %v4418
      %vm4421 = vcmp.eq.f32.partialorder %v4416, 0.0
      %v4422 = vand.u32 %v4416, 2147483648
      %v4423 = vsel %vm4421, %v4422, %v4420
      %v4424 = vmax.f32 %v4423, 1e-12
      %v4425 = vrcp.pop %v4424
      %v4426 = vmul.f32 %v4412, %v4425
      %v4427 = vmul.f32 %v4426, 5.656854
      %v4428 = vmul.f32 %v4427, %v1912
      %v4429 = vld [vmem:[%s1914] sm:$0xff]
      %v4430 = vld [vmem:[%s1914 + $0x8] sm:$0xff]
      %v4431 = vld [vmem:[%s1914 + $0x10] sm:$0xff]
      %v4432 = vld [vmem:[%s1914 + $0x18] sm:$0xff]
      %v4434 = vsel %vm549, %v4428, 0
      %4436 = vmatprep.subr.mxu0 0.0
      %4437 = vmatpush1.msra.mxu0 0.0
      %4438 = vmatprep.subr.mxu0 0.0
      %4439 = vmatpush1.msra.mxu0 0.0
      %4440 = vmatprep.subr.mxu0 0.0
      %4441 = vmatpush1.msra.mxu0 0.0
      %4442 = vmatprep.subr.mxu0 0.0
      %4443 = vmatpush1.msra.mxu0 0.0
      %4444 = vmatprep.subr.mxu0 0.0
      %4445 = vmatpush1.msra.mxu0 0.0
      %4446 = vmatprep.subr.mxu0 0.0
      %4447 = vmatpush1.msra.mxu0 0.0
      %4448 = vmatprep.subr.mxu0 0.0
      %4449 = vmatpush1.msra.mxu0 0.0
      %4450 = vmatprep.subr.mxu0 0.0
      %4451 = vmatpush1.msra.mxu0 0.0
      %4452 = vmatprep.subr.mxu0 0.0
      %4453 = vmatpush1.msra.mxu0 0.0
      %4454 = vmatprep.subr.mxu0 0.0
      %4455 = vmatpush1.msra.mxu0 0.0
      %4456 = vmatprep.subr.mxu0 0.0
      %4457 = vmatpush1.msra.mxu0 0.0
      %4458 = vmatprep.subr.mxu0 0.0
      %4459 = vmatpush1.msra.mxu0 0.0
      %4460 = vmatprep.subr.mxu0 0.0
      %4461 = vmatpush1.msra.mxu0 %v4432
      %4462 = vmatprep.subr.mxu0 0.0
      %4463 = vmatpush1.msra.mxu0 %v4431
      %4464 = vmatprep.subr.mxu0 0.0
      %4465 = vmatpush1.msra.mxu0 %v4430
      %4466 = vmatprep.subr.mxu0 0.0
      %4467 = vmatpush1.msra.mxu0 %v4429
      %4468 = vmatprep.subr.mxu0 0.0
      %4469 = vmatpush2.msra.mxu0 0.0
      %4470 = vmatprep.subr.mxu0 0.0
      %4471 = vmatpush2.msra.mxu0 0.0
      %4472 = vmatprep.subr.mxu0 0.0
      %4473 = vmatpush2.msra.mxu0 0.0
      %4474 = vmatprep.subr.mxu0 0.0
      %4475 = vmatpush2.msra.mxu0 0.0
      %4476 = vmatprep.subr.mxu0 0.0
      %4477 = vmatpush2.msra.mxu0 0.0
      %4478 = vmatprep.subr.mxu0 0.0
      %4479 = vmatpush2.msra.mxu0 0.0
      %4480 = vmatprep.subr.mxu0 0.0
      %4481 = vmatpush2.msra.mxu0 0.0
      %4482 = vmatprep.subr.mxu0 0.0
      %4483 = vmatpush2.msra.mxu0 0.0
      %4484 = vmatprep.subr.mxu0 0.0
      %4485 = vmatpush2.msra.mxu0 0.0
      %4486 = vmatprep.subr.mxu0 0.0
      %4487 = vmatpush2.msra.mxu0 0.0
      %4488 = vmatprep.subr.mxu0 0.0
      %4489 = vmatpush2.msra.mxu0 0.0
      %4490 = vmatprep.subr.mxu0 0.0
      %4491 = vmatpush2.msra.mxu0 0.0
      %4492 = vmatprep.subr.mxu0 0.0
      %4493 = vmatpush2.msra.mxu0 0.0
      %4494 = vmatprep.subr.mxu0 0.0
      %4495 = vmatpush2.msra.mxu0 0.0
      %4496 = vmatprep.subr.mxu0 0.0
      %4497 = vmatpush2.msra.mxu0 0.0
      %4498 = vmatprep.subr.mxu0 0.0
      %4499 = vmatpush2.msra.mxu0 0.0
      %4500 = vmatprep.mubr.f32.mxu0 0.0
      %4501 = vmatmul.mubr.f32.gmra.mxu0 %v4434
      %v4502 = vpop.f32.mrf.mxu0
      %v4503 = vadd.f32 0.0, %v4502
      %v4504 = vpop.f32.mrf.mxu0
      %4505 = vdwg.mxu0
      %s4506 = scalar_lea.vmem %s503, 12
      %v4507 = vld [vmem:[%s4506] sm:$0x7]
      %4509 = vset.pattern.permute.xlu0 0
      %4510 = vperm.xlu0 %4509, %v4507
      %v4511 = vpop.permute.xlu0 %4510
      %v4513 = vmul.f32 %v3252, %v4511
      %s4514 = scalar_lea.vmem %s496, 3
      %v4515 = vld [vmem:[%s4514] sm:$0x1]
      %vm4516 = vcmp.gt.f32.partialorder %v4515, 0.5
      %v4517 = vld [vmem:[%s2003] sm:$0xff]
      %v4518 = vld [vmem:[%s2003 + $0x8] sm:$0xff]
      %v4519 = vld [vmem:[%s2003 + $0x10] sm:$0xff]
      %v4520 = vld [vmem:[%s2003 + $0x18] sm:$0xff]
      %4521 = vrot.lane.b32.xlu0 %v3157, 96
      %v4522 = vpop.permute.xlu0 %4521
      %v4524 = vsel %vm835, %v4503, 0
      %v4526 = vsel %vm835, %v4522, 0
      %4528 = vmatprep.subr.mxu0 0.0
      %4529 = vmatpush1.xpose.msra.mxu0 0.0
      %4530 = vmatprep.subr.mxu0 0.0
      %4531 = vmatpush1.xpose.msra.mxu0 0.0
      %4532 = vmatprep.subr.mxu0 0.0
      %4533 = vmatpush1.xpose.msra.mxu0 0.0
      %4534 = vmatprep.subr.mxu0 0.0
      %4535 = vmatpush1.xpose.msra.mxu0 0.0
      %4536 = vmatprep.subr.mxu0 0.0
      %4537 = vmatpush1.xpose.msra.mxu0 0.0
      %4538 = vmatprep.subr.mxu0 0.0
      %4539 = vmatpush1.xpose.msra.mxu0 0.0
      %4540 = vmatprep.subr.mxu0 0.0
      %4541 = vmatpush1.xpose.msra.mxu0 0.0
      %4542 = vmatprep.subr.mxu0 0.0
      %4543 = vmatpush1.xpose.msra.mxu0 0.0
      %4544 = vmatprep.subr.mxu0 0.0
      %4545 = vmatpush1.xpose.msra.mxu0 0.0
      %4546 = vmatprep.subr.mxu0 0.0
      %4547 = vmatpush1.xpose.msra.mxu0 0.0
      %4548 = vmatprep.subr.mxu0 0.0
      %4549 = vmatpush1.xpose.msra.mxu0 0.0
      %4550 = vmatprep.subr.mxu0 0.0
      %4551 = vmatpush1.xpose.msra.mxu0 0.0
      %4552 = vmatprep.subr.mxu0 0.0
      %4553 = vmatpush1.xpose.msra.mxu0 0.0
      %4554 = vmatprep.subr.mxu0 0.0
      %4555 = vmatpush1.xpose.msra.mxu0 0.0
      %4556 = vmatprep.subr.mxu0 0.0
      %4557 = vmatpush1.xpose.msra.mxu0 0.0
      %4558 = vmatprep.subr.mxu0 0.0
      %4559 = vmatpush1.xpose.msra.mxu0 %v4526
      %4560 = vmatprep.subr.mxu0 0.0
      %4561 = vmatpush2.xpose.msra.mxu0 0.0
      %4562 = vmatprep.subr.mxu0 0.0
      %4563 = vmatpush2.xpose.msra.mxu0 0.0
      %4564 = vmatprep.subr.mxu0 0.0
      %4565 = vmatpush2.xpose.msra.mxu0 0.0
      %4566 = vmatprep.subr.mxu0 0.0
      %4567 = vmatpush2.xpose.msra.mxu0 0.0
      %4568 = vmatprep.subr.mxu0 0.0
      %4569 = vmatpush2.xpose.msra.mxu0 0.0
      %4570 = vmatprep.subr.mxu0 0.0
      %4571 = vmatpush2.xpose.msra.mxu0 0.0
      %4572 = vmatprep.subr.mxu0 0.0
      %4573 = vmatpush2.xpose.msra.mxu0 0.0
      %4574 = vmatprep.subr.mxu0 0.0
      %4575 = vmatpush2.xpose.msra.mxu0 0.0
      %4576 = vmatprep.subr.mxu0 0.0
      %4577 = vmatpush2.xpose.msra.mxu0 0.0
      %4578 = vmatprep.subr.mxu0 0.0
      %4579 = vmatpush2.xpose.msra.mxu0 0.0
      %4580 = vmatprep.subr.mxu0 0.0
      %4581 = vmatpush2.xpose.msra.mxu0 0.0
      %4582 = vmatprep.subr.mxu0 0.0
      %4583 = vmatpush2.xpose.msra.mxu0 0.0
      %4584 = vmatprep.subr.mxu0 0.0
      %4585 = vmatpush2.xpose.msra.mxu0 0.0
      %4586 = vmatprep.subr.mxu0 0.0
      %4587 = vmatpush2.xpose.msra.mxu0 0.0
      %4588 = vmatprep.subr.mxu0 0.0
      %4589 = vmatpush2.xpose.msra.mxu0 0.0
      %4590 = vmatprep.subr.mxu0 0.0
      %4591 = vmatpush2.xpose.msra.mxu0 0.0
      %4592 = vmatprep.mubr.f32.mxu0 0.0
      %4593 = vmatmul.mubr.f32.gmra.mxu0 %v4524
      %v4594 = vpop.f32.mrf.mxu0
      %v4595 = vadd.f32 0.0, %v4594
      %v4596 = vpop.f32.mrf.mxu0
      %4597 = vdwg.mxu0
      %v4598 = vmul.f32 %v4595, 0.35355338
      %v4599 = vsel %vm4516, 1, 0
      %v4600 = vlaneseq
      %v4601 = vshrl.u32 %v4600, 7
      %v4602 = vsub.s32 0, %v4601
      %v4603 = vrot.slane %v4599, %v4602
      %vm4604 = vcmp.eq.s32.totalorder %v4603, 1
      %v4605 = vsel %vm4604, %v4598, -1e+30
      %v4606 = vmul.f32 %v4503, %v2096
      %v4607 = vsel %vm925, %v4606, 0.0
      %4608 = vadd.xlane.f32.xlu0 %v4607
      %v4609 = vpop.xlane.xlu0 %4608
      %v4610 = vmul.f32 %v4609, 0.35355338
      %v4611 = vsel %vm930, %v4605, -inf
      %4612 = vmax.xlane.f32.xlu0 %v4611
      %v4613 = vpop.xlane.xlu0 %4612
      %v4614 = vmax.f32 %v4613, %v4610
      %v4615 = vsub.f32 %v4605, %v4614
      %v4616 = vmul.f32 %v4615, 1.442695
      %v4617 = vpow.pop %v4616
      %v4618 = vsub.f32 %v4610, %v4614
      %v4619 = vmul.f32 %v4618, 1.442695
      %v4620 = vpow.pop %v4619
      %v4621 = vsel %vm930, %v4617, 0.0
      %4622 = vadd.xlane.f32.xlu0 %v4621
      %v4623 = vpop.xlane.xlu0 %4622
      %v4624 = vadd.f32 %v4620, %v4623
      %v4625 = vrcp.pop %v4624
      %v4626 = vmul.f32 %v4617, %v4625
      %v4627 = vmul.f32 %v4620, %v4625
      %v4628 = vmul.f32 %v4627, %v2122
      %4630 = vrot.lane.b32.xlu0 %v4513, 96
      %v4631 = vpop.permute.xlu0 %4630
      %v4633 = vsel %vm953, %v4626, 0
      %v4635 = vsel %vm957, %v4631, 0
      %4637 = vmatprep.subr.mxu0 0.0
      %4638 = vmatpush1.msra.mxu0 0.0
      %4639 = vmatprep.subr.mxu0 0.0
      %4640 = vmatpush1.msra.mxu0 0.0
      %4641 = vmatprep.subr.mxu0 0.0
      %4642 = vmatpush1.msra.mxu0 0.0
      %4643 = vmatprep.subr.mxu0 0.0
      %4644 = vmatpush1.msra.mxu0 0.0
      %4645 = vmatprep.subr.mxu0 0.0
      %4646 = vmatpush1.msra.mxu0 0.0
      %4647 = vmatprep.subr.mxu0 0.0
      %4648 = vmatpush1.msra.mxu0 0.0
      %4649 = vmatprep.subr.mxu0 0.0
      %4650 = vmatpush1.msra.mxu0 0.0
      %4651 = vmatprep.subr.mxu0 0.0
      %4652 = vmatpush1.msra.mxu0 0.0
      %4653 = vmatprep.subr.mxu0 0.0
      %4654 = vmatpush1.msra.mxu0 0.0
      %4655 = vmatprep.subr.mxu0 0.0
      %4656 = vmatpush1.msra.mxu0 0.0
      %4657 = vmatprep.subr.mxu0 0.0
      %4658 = vmatpush1.msra.mxu0 0.0
      %4659 = vmatprep.subr.mxu0 0.0
      %4660 = vmatpush1.msra.mxu0 0.0
      %4661 = vmatprep.subr.mxu0 0.0
      %4662 = vmatpush1.msra.mxu0 0.0
      %4663 = vmatprep.subr.mxu0 0.0
      %4664 = vmatpush1.msra.mxu0 0.0
      %4665 = vmatprep.subr.mxu0 0.0
      %4666 = vmatpush1.msra.mxu0 0.0
      %4667 = vmatprep.subr.mxu0 0.0
      %4668 = vmatpush1.msra.mxu0 %v4635
      %4669 = vmatprep.subr.mxu0 0.0
      %4670 = vmatpush2.msra.mxu0 0.0
      %4671 = vmatprep.subr.mxu0 0.0
      %4672 = vmatpush2.msra.mxu0 0.0
      %4673 = vmatprep.subr.mxu0 0.0
      %4674 = vmatpush2.msra.mxu0 0.0
      %4675 = vmatprep.subr.mxu0 0.0
      %4676 = vmatpush2.msra.mxu0 0.0
      %4677 = vmatprep.subr.mxu0 0.0
      %4678 = vmatpush2.msra.mxu0 0.0
      %4679 = vmatprep.subr.mxu0 0.0
      %4680 = vmatpush2.msra.mxu0 0.0
      %4681 = vmatprep.subr.mxu0 0.0
      %4682 = vmatpush2.msra.mxu0 0.0
      %4683 = vmatprep.subr.mxu0 0.0
      %4684 = vmatpush2.msra.mxu0 0.0
      %4685 = vmatprep.subr.mxu0 0.0
      %4686 = vmatpush2.msra.mxu0 0.0
      %4687 = vmatprep.subr.mxu0 0.0
      %4688 = vmatpush2.msra.mxu0 0.0
      %4689 = vmatprep.subr.mxu0 0.0
      %4690 = vmatpush2.msra.mxu0 0.0
      %4691 = vmatprep.subr.mxu0 0.0
      %4692 = vmatpush2.msra.mxu0 0.0
      %4693 = vmatprep.subr.mxu0 0.0
      %4694 = vmatpush2.msra.mxu0 0.0
      %4695 = vmatprep.subr.mxu0 0.0
      %4696 = vmatpush2.msra.mxu0 0.0
      %4697 = vmatprep.subr.mxu0 0.0
      %4698 = vmatpush2.msra.mxu0 0.0
      %4699 = vmatprep.subr.mxu0 0.0
      %4700 = vmatpush2.msra.mxu0 0.0
      %4701 = vmatprep.mubr.f32.mxu0 0.0
      %4702 = vmatmul.mubr.f32.gmra.mxu0 %v4633
      %v4703 = vpop.f32.mrf.mxu0
      %v4704 = vadd.f32 %v4628, %v4703
      %v4705 = vpop.f32.mrf.mxu0
      %4706 = vdwg.mxu0
      %4707 = vrot.lane.b32.xlu0 %v4503, 120
      %v4708 = vpop.permute.xlu0 %4707
      %4709 = vrot.lane.b32.xlu0 %v3157, 88
      %v4710 = vpop.permute.xlu0 %4709
      %v4711 = vsel %vm835, %v4708, 0
      %v4713 = vsel %vm835, %v4710, 0
      %4715 = vmatprep.subr.mxu0 0.0
      %4716 = vmatpush1.xpose.msra.mxu0 0.0
      %4717 = vmatprep.subr.mxu0 0.0
      %4718 = vmatpush1.xpose.msra.mxu0 0.0
      %4719 = vmatprep.subr.mxu0 0.0
      %4720 = vmatpush1.xpose.msra.mxu0 0.0
      %4721 = vmatprep.subr.mxu0 0.0
      %4722 = vmatpush1.xpose.msra.mxu0 0.0
      %4723 = vmatprep.subr.mxu0 0.0
      %4724 = vmatpush1.xpose.msra.mxu0 0.0
      %4725 = vmatprep.subr.mxu0 0.0
      %4726 = vmatpush1.xpose.msra.mxu0 0.0
      %4727 = vmatprep.subr.mxu0 0.0
      %4728 = vmatpush1.xpose.msra.mxu0 0.0
      %4729 = vmatprep.subr.mxu0 0.0
      %4730 = vmatpush1.xpose.msra.mxu0 0.0
      %4731 = vmatprep.subr.mxu0 0.0
      %4732 = vmatpush1.xpose.msra.mxu0 0.0
      %4733 = vmatprep.subr.mxu0 0.0
      %4734 = vmatpush1.xpose.msra.mxu0 0.0
      %4735 = vmatprep.subr.mxu0 0.0
      %4736 = vmatpush1.xpose.msra.mxu0 0.0
      %4737 = vmatprep.subr.mxu0 0.0
      %4738 = vmatpush1.xpose.msra.mxu0 0.0
      %4739 = vmatprep.subr.mxu0 0.0
      %4740 = vmatpush1.xpose.msra.mxu0 0.0
      %4741 = vmatprep.subr.mxu0 0.0
      %4742 = vmatpush1.xpose.msra.mxu0 0.0
      %4743 = vmatprep.subr.mxu0 0.0
      %4744 = vmatpush1.xpose.msra.mxu0 0.0
      %4745 = vmatprep.subr.mxu0 0.0
      %4746 = vmatpush1.xpose.msra.mxu0 %v4713
      %4747 = vmatprep.subr.mxu0 0.0
      %4748 = vmatpush2.xpose.msra.mxu0 0.0
      %4749 = vmatprep.subr.mxu0 0.0
      %4750 = vmatpush2.xpose.msra.mxu0 0.0
      %4751 = vmatprep.subr.mxu0 0.0
      %4752 = vmatpush2.xpose.msra.mxu0 0.0
      %4753 = vmatprep.subr.mxu0 0.0
      %4754 = vmatpush2.xpose.msra.mxu0 0.0
      %4755 = vmatprep.subr.mxu0 0.0
      %4756 = vmatpush2.xpose.msra.mxu0 0.0
      %4757 = vmatprep.subr.mxu0 0.0
      %4758 = vmatpush2.xpose.msra.mxu0 0.0
      %4759 = vmatprep.subr.mxu0 0.0
      %4760 = vmatpush2.xpose.msra.mxu0 0.0
      %4761 = vmatprep.subr.mxu0 0.0
      %4762 = vmatpush2.xpose.msra.mxu0 0.0
      %4763 = vmatprep.subr.mxu0 0.0
      %4764 = vmatpush2.xpose.msra.mxu0 0.0
      %4765 = vmatprep.subr.mxu0 0.0
      %4766 = vmatpush2.xpose.msra.mxu0 0.0
      %4767 = vmatprep.subr.mxu0 0.0
      %4768 = vmatpush2.xpose.msra.mxu0 0.0
      %4769 = vmatprep.subr.mxu0 0.0
      %4770 = vmatpush2.xpose.msra.mxu0 0.0
      %4771 = vmatprep.subr.mxu0 0.0
      %4772 = vmatpush2.xpose.msra.mxu0 0.0
      %4773 = vmatprep.subr.mxu0 0.0
      %4774 = vmatpush2.xpose.msra.mxu0 0.0
      %4775 = vmatprep.subr.mxu0 0.0
      %4776 = vmatpush2.xpose.msra.mxu0 0.0
      %4777 = vmatprep.subr.mxu0 0.0
      %4778 = vmatpush2.xpose.msra.mxu0 0.0
      %4779 = vmatprep.mubr.f32.mxu0 0.0
      %4780 = vmatmul.mubr.f32.gmra.mxu0 %v4711
      %v4781 = vpop.f32.mrf.mxu0
      %v4782 = vadd.f32 0.0, %v4781
      %v4783 = vpop.f32.mrf.mxu0
      %4784 = vdwg.mxu0
      %v4785 = vmul.f32 %v4782, 0.35355338
      %v4786 = vsel %vm4604, %v4785, -1e+30
      %4788 = vrot.lane.b32.xlu0 %v4606, 120
      %v4789 = vpop.permute.xlu0 %4788
      %v4791 = vsel %vm925, %v4789, 0.0
      %4792 = vadd.xlane.f32.xlu0 %v4791
      %v4793 = vpop.xlane.xlu0 %4792
      %v4794 = vmul.f32 %v4793, 0.35355338
      %v4795 = vsel %vm930, %v4786, -inf
      %4796 = vmax.xlane.f32.xlu0 %v4795
      %v4797 = vpop.xlane.xlu0 %4796
      %v4798 = vmax.f32 %v4797, %v4794
      %v4799 = vsub.f32 %v4786, %v4798
      %v4800 = vmul.f32 %v4799, 1.442695
      %v4801 = vpow.pop %v4800
      %v4802 = vsub.f32 %v4794, %v4798
      %v4803 = vmul.f32 %v4802, 1.442695
      %v4804 = vpow.pop %v4803
      %v4805 = vsel %vm930, %v4801, 0.0
      %4806 = vadd.xlane.f32.xlu0 %v4805
      %v4807 = vpop.xlane.xlu0 %4806
      %v4808 = vadd.f32 %v4804, %v4807
      %v4809 = vrcp.pop %v4808
      %v4810 = vmul.f32 %v4801, %v4809
      %v4811 = vmul.f32 %v4804, %v4809
      %v4812 = vmul.f32 %v4811, %v2122
      %4813 = vrot.lane.b32.xlu0 %v4513, 88
      %v4814 = vpop.permute.xlu0 %4813
      %4816 = vrot.lane.b32.xlu0 %v4812, 120
      %v4817 = vpop.permute.xlu0 %4816
      %v4820 = vsel %vm953, %v4810, 0
      %v4822 = vsel %vm957, %v4814, 0
      %4824 = vmatprep.subr.mxu0 0.0
      %4825 = vmatpush1.msra.mxu0 0.0
      %4826 = vmatprep.subr.mxu0 0.0
      %4827 = vmatpush1.msra.mxu0 0.0
      %4828 = vmatprep.subr.mxu0 0.0
      %4829 = vmatpush1.msra.mxu0 0.0
      %4830 = vmatprep.subr.mxu0 0.0
      %4831 = vmatpush1.msra.mxu0 0.0
      %4832 = vmatprep.subr.mxu0 0.0
      %4833 = vmatpush1.msra.mxu0 0.0
      %4834 = vmatprep.subr.mxu0 0.0
      %4835 = vmatpush1.msra.mxu0 0.0
      %4836 = vmatprep.subr.mxu0 0.0
      %4837 = vmatpush1.msra.mxu0 0.0
      %4838 = vmatprep.subr.mxu0 0.0
      %4839 = vmatpush1.msra.mxu0 0.0
      %4840 = vmatprep.subr.mxu0 0.0
      %4841 = vmatpush1.msra.mxu0 0.0
      %4842 = vmatprep.subr.mxu0 0.0
      %4843 = vmatpush1.msra.mxu0 0.0
      %4844 = vmatprep.subr.mxu0 0.0
      %4845 = vmatpush1.msra.mxu0 0.0
      %4846 = vmatprep.subr.mxu0 0.0
      %4847 = vmatpush1.msra.mxu0 0.0
      %4848 = vmatprep.subr.mxu0 0.0
      %4849 = vmatpush1.msra.mxu0 0.0
      %4850 = vmatprep.subr.mxu0 0.0
      %4851 = vmatpush1.msra.mxu0 0.0
      %4852 = vmatprep.subr.mxu0 0.0
      %4853 = vmatpush1.msra.mxu0 0.0
      %4854 = vmatprep.subr.mxu0 0.0
      %4855 = vmatpush1.msra.mxu0 %v4822
      %4856 = vmatprep.subr.mxu0 0.0
      %4857 = vmatpush2.msra.mxu0 0.0
      %4858 = vmatprep.subr.mxu0 0.0
      %4859 = vmatpush2.msra.mxu0 0.0
      %4860 = vmatprep.subr.mxu0 0.0
      %4861 = vmatpush2.msra.mxu0 0.0
      %4862 = vmatprep.subr.mxu0 0.0
      %4863 = vmatpush2.msra.mxu0 0.0
      %4864 = vmatprep.subr.mxu0 0.0
      %4865 = vmatpush2.msra.mxu0 0.0
      %4866 = vmatprep.subr.mxu0 0.0
      %4867 = vmatpush2.msra.mxu0 0.0
      %4868 = vmatprep.subr.mxu0 0.0
      %4869 = vmatpush2.msra.mxu0 0.0
      %4870 = vmatprep.subr.mxu0 0.0
      %4871 = vmatpush2.msra.mxu0 0.0
      %4872 = vmatprep.subr.mxu0 0.0
      %4873 = vmatpush2.msra.mxu0 0.0
      %4874 = vmatprep.subr.mxu0 0.0
      %4875 = vmatpush2.msra.mxu0 0.0
      %4876 = vmatprep.subr.mxu0 0.0
      %4877 = vmatpush2.msra.mxu0 0.0
      %4878 = vmatprep.subr.mxu0 0.0
      %4879 = vmatpush2.msra.mxu0 0.0
      %4880 = vmatprep.subr.mxu0 0.0
      %4881 = vmatpush2.msra.mxu0 0.0
      %4882 = vmatprep.subr.mxu0 0.0
      %4883 = vmatpush2.msra.mxu0 0.0
      %4884 = vmatprep.subr.mxu0 0.0
      %4885 = vmatpush2.msra.mxu0 0.0
      %4886 = vmatprep.subr.mxu0 0.0
      %4887 = vmatpush2.msra.mxu0 0.0
      %4888 = vmatprep.mubr.f32.mxu0 0.0
      %4889 = vmatmul.mubr.f32.gmra.mxu0 %v4820
      %v4890 = vpop.f32.mrf.mxu0
      %v4891 = vadd.f32 %v4817, %v4890
      %v4892 = vpop.f32.mrf.mxu0
      %4893 = vdwg.mxu0
      %v4895 = vsel %vm835, %v4891, 0
      %4897 = vmatprep.subr.mxu0 0.0
      %4898 = vmatpush1.msra.mxu0 0.0
      %4899 = vmatprep.subr.mxu0 0.0
      %4900 = vmatpush1.msra.mxu0 0.0
      %4901 = vmatprep.subr.mxu0 0.0
      %4902 = vmatpush1.msra.mxu0 0.0
      %4903 = vmatprep.subr.mxu0 0.0
      %4904 = vmatpush1.msra.mxu0 0.0
      %4905 = vmatprep.subr.mxu0 0.0
      %4906 = vmatpush1.msra.mxu0 0.0
      %4907 = vmatprep.subr.mxu0 0.0
      %4908 = vmatpush1.msra.mxu0 0.0
      %4909 = vmatprep.subr.mxu0 0.0
      %4910 = vmatpush1.msra.mxu0 0.0
      %4911 = vmatprep.subr.mxu0 0.0
      %4912 = vmatpush1.msra.mxu0 0.0
      %4913 = vmatprep.subr.mxu0 0.0
      %4914 = vmatpush1.msra.mxu0 0.0
      %4915 = vmatprep.subr.mxu0 0.0
      %4916 = vmatpush1.msra.mxu0 0.0
      %4917 = vmatprep.subr.mxu0 0.0
      %4918 = vmatpush1.msra.mxu0 0.0
      %4919 = vmatprep.subr.mxu0 0.0
      %4920 = vmatpush1.msra.mxu0 0.0
      %4921 = vmatprep.subr.mxu0 0.0
      %4922 = vmatpush1.msra.mxu0 0.0
      %4923 = vmatprep.subr.mxu0 0.0
      %4924 = vmatpush1.msra.mxu0 0.0
      %4925 = vmatprep.subr.mxu0 0.0
      %4926 = vmatpush1.msra.mxu0 0.0
      %4927 = vmatprep.subr.mxu0 0.0
      %4928 = vmatpush1.msra.mxu0 %v4518
      %4929 = vmatprep.subr.mxu0 0.0
      %4930 = vmatpush2.msra.mxu0 0.0
      %4931 = vmatprep.subr.mxu0 0.0
      %4932 = vmatpush2.msra.mxu0 0.0
      %4933 = vmatprep.subr.mxu0 0.0
      %4934 = vmatpush2.msra.mxu0 0.0
      %4935 = vmatprep.subr.mxu0 0.0
      %4936 = vmatpush2.msra.mxu0 0.0
      %4937 = vmatprep.subr.mxu0 0.0
      %4938 = vmatpush2.msra.mxu0 0.0
      %4939 = vmatprep.subr.mxu0 0.0
      %4940 = vmatpush2.msra.mxu0 0.0
      %4941 = vmatprep.subr.mxu0 0.0
      %4942 = vmatpush2.msra.mxu0 0.0
      %4943 = vmatprep.subr.mxu0 0.0
      %4944 = vmatpush2.msra.mxu0 0.0
      %4945 = vmatprep.subr.mxu0 0.0
      %4946 = vmatpush2.msra.mxu0 0.0
      %4947 = vmatprep.subr.mxu0 0.0
      %4948 = vmatpush2.msra.mxu0 0.0
      %4949 = vmatprep.subr.mxu0 0.0
      %4950 = vmatpush2.msra.mxu0 0.0
      %4951 = vmatprep.subr.mxu0 0.0
      %4952 = vmatpush2.msra.mxu0 0.0
      %4953 = vmatprep.subr.mxu0 0.0
      %4954 = vmatpush2.msra.mxu0 0.0
      %4955 = vmatprep.subr.mxu0 0.0
      %4956 = vmatpush2.msra.mxu0 0.0
      %4957 = vmatprep.subr.mxu0 0.0
      %4958 = vmatpush2.msra.mxu0 0.0
      %4959 = vmatprep.subr.mxu0 0.0
      %4960 = vmatpush2.msra.mxu0 0.0
      %4961 = vmatprep.mubr.f32.mxu0 0.0
      %4962 = vmatmul.mubr.f32.gmra.mxu0 %v4895
      %v4963 = vpop.f32.mrf.mxu0
      %v4964 = vadd.f32 0.0, %v4963
      %v4965 = vpop.f32.mrf.mxu0
      %4966 = vdwg.mxu0
      %v4968 = vsel %vm835, %v4704, 0
      %4970 = vmatprep.subr.mxu0 0.0
      %4971 = vmatpush1.msra.mxu0 0.0
      %4972 = vmatprep.subr.mxu0 0.0
      %4973 = vmatpush1.msra.mxu0 0.0
      %4974 = vmatprep.subr.mxu0 0.0
      %4975 = vmatpush1.msra.mxu0 0.0
      %4976 = vmatprep.subr.mxu0 0.0
      %4977 = vmatpush1.msra.mxu0 0.0
      %4978 = vmatprep.subr.mxu0 0.0
      %4979 = vmatpush1.msra.mxu0 0.0
      %4980 = vmatprep.subr.mxu0 0.0
      %4981 = vmatpush1.msra.mxu0 0.0
      %4982 = vmatprep.subr.mxu0 0.0
      %4983 = vmatpush1.msra.mxu0 0.0
      %4984 = vmatprep.subr.mxu0 0.0
      %4985 = vmatpush1.msra.mxu0 0.0
      %4986 = vmatprep.subr.mxu0 0.0
      %4987 = vmatpush1.msra.mxu0 0.0
      %4988 = vmatprep.subr.mxu0 0.0
      %4989 = vmatpush1.msra.mxu0 0.0
      %4990 = vmatprep.subr.mxu0 0.0
      %4991 = vmatpush1.msra.mxu0 0.0
      %4992 = vmatprep.subr.mxu0 0.0
      %4993 = vmatpush1.msra.mxu0 0.0
      %4994 = vmatprep.subr.mxu0 0.0
      %4995 = vmatpush1.msra.mxu0 0.0
      %4996 = vmatprep.subr.mxu0 0.0
      %4997 = vmatpush1.msra.mxu0 0.0
      %4998 = vmatprep.subr.mxu0 0.0
      %4999 = vmatpush1.msra.mxu0 0.0
      %5000 = vmatprep.subr.mxu0 0.0
      %5001 = vmatpush1.msra.mxu0 %v4517
      %5002 = vmatprep.subr.mxu0 0.0
      %5003 = vmatpush2.msra.mxu0 0.0
      %5004 = vmatprep.subr.mxu0 0.0
      %5005 = vmatpush2.msra.mxu0 0.0
      %5006 = vmatprep.subr.mxu0 0.0
      %5007 = vmatpush2.msra.mxu0 0.0
      %5008 = vmatprep.subr.mxu0 0.0
      %5009 = vmatpush2.msra.mxu0 0.0
      %5010 = vmatprep.subr.mxu0 0.0
      %5011 = vmatpush2.msra.mxu0 0.0
      %5012 = vmatprep.subr.mxu0 0.0
      %5013 = vmatpush2.msra.mxu0 0.0
      %5014 = vmatprep.subr.mxu0 0.0
      %5015 = vmatpush2.msra.mxu0 0.0
      %5016 = vmatprep.subr.mxu0 0.0
      %5017 = vmatpush2.msra.mxu0 0.0
      %5018 = vmatprep.subr.mxu0 0.0
      %5019 = vmatpush2.msra.mxu0 0.0
      %5020 = vmatprep.subr.mxu0 0.0
      %5021 = vmatpush2.msra.mxu0 0.0
      %5022 = vmatprep.subr.mxu0 0.0
      %5023 = vmatpush2.msra.mxu0 0.0
      %5024 = vmatprep.subr.mxu0 0.0
      %5025 = vmatpush2.msra.mxu0 0.0
      %5026 = vmatprep.subr.mxu0 0.0
      %5027 = vmatpush2.msra.mxu0 0.0
      %5028 = vmatprep.subr.mxu0 0.0
      %5029 = vmatpush2.msra.mxu0 0.0
      %5030 = vmatprep.subr.mxu0 0.0
      %5031 = vmatpush2.msra.mxu0 0.0
      %5032 = vmatprep.subr.mxu0 0.0
      %5033 = vmatpush2.msra.mxu0 0.0
      %5034 = vmatprep.mubr.f32.mxu0 0.0
      %5035 = vmatmul.mubr.f32.gmra.mxu0 %v4968
      %v5036 = vpop.f32.mrf.mxu0
      %v5037 = vadd.f32 %v4964, %v5036
      %v5038 = vpop.f32.mrf.mxu0
      %5039 = vdwg.mxu0
      %5040 = vrot.lane.b32.xlu0 %v4503, 112
      %v5041 = vpop.permute.xlu0 %5040
      %5042 = vrot.lane.b32.xlu0 %v3157, 80
      %v5043 = vpop.permute.xlu0 %5042
      %v5044 = vsel %vm835, %v5041, 0
      %v5046 = vsel %vm835, %v5043, 0
      %5048 = vmatprep.subr.mxu0 0.0
      %5049 = vmatpush1.xpose.msra.mxu0 0.0
      %5050 = vmatprep.subr.mxu0 0.0
      %5051 = vmatpush1.xpose.msra.mxu0 0.0
      %5052 = vmatprep.subr.mxu0 0.0
      %5053 = vmatpush1.xpose.msra.mxu0 0.0
      %5054 = vmatprep.subr.mxu0 0.0
      %5055 = vmatpush1.xpose.msra.mxu0 0.0
      %5056 = vmatprep.subr.mxu0 0.0
      %5057 = vmatpush1.xpose.msra.mxu0 0.0
      %5058 = vmatprep.subr.mxu0 0.0
      %5059 = vmatpush1.xpose.msra.mxu0 0.0
      %5060 = vmatprep.subr.mxu0 0.0
      %5061 = vmatpush1.xpose.msra.mxu0 0.0
      %5062 = vmatprep.subr.mxu0 0.0
      %5063 = vmatpush1.xpose.msra.mxu0 0.0
      %5064 = vmatprep.subr.mxu0 0.0
      %5065 = vmatpush1.xpose.msra.mxu0 0.0
      %5066 = vmatprep.subr.mxu0 0.0
      %5067 = vmatpush1.xpose.msra.mxu0 0.0
      %5068 = vmatprep.subr.mxu0 0.0
      %5069 = vmatpush1.xpose.msra.mxu0 0.0
      %5070 = vmatprep.subr.mxu0 0.0
      %5071 = vmatpush1.xpose.msra.mxu0 0.0
      %5072 = vmatprep.subr.mxu0 0.0
      %5073 = vmatpush1.xpose.msra.mxu0 0.0
      %5074 = vmatprep.subr.mxu0 0.0
      %5075 = vmatpush1.xpose.msra.mxu0 0.0
      %5076 = vmatprep.subr.mxu0 0.0
      %5077 = vmatpush1.xpose.msra.mxu0 0.0
      %5078 = vmatprep.subr.mxu0 0.0
      %5079 = vmatpush1.xpose.msra.mxu0 %v5046
      %5080 = vmatprep.subr.mxu0 0.0
      %5081 = vmatpush2.xpose.msra.mxu0 0.0
      %5082 = vmatprep.subr.mxu0 0.0
      %5083 = vmatpush2.xpose.msra.mxu0 0.0
      %5084 = vmatprep.subr.mxu0 0.0
      %5085 = vmatpush2.xpose.msra.mxu0 0.0
      %5086 = vmatprep.subr.mxu0 0.0
      %5087 = vmatpush2.xpose.msra.mxu0 0.0
      %5088 = vmatprep.subr.mxu0 0.0
      %5089 = vmatpush2.xpose.msra.mxu0 0.0
      %5090 = vmatprep.subr.mxu0 0.0
      %5091 = vmatpush2.xpose.msra.mxu0 0.0
      %5092 = vmatprep.subr.mxu0 0.0
      %5093 = vmatpush2.xpose.msra.mxu0 0.0
      %5094 = vmatprep.subr.mxu0 0.0
      %5095 = vmatpush2.xpose.msra.mxu0 0.0
      %5096 = vmatprep.subr.mxu0 0.0
      %5097 = vmatpush2.xpose.msra.mxu0 0.0
      %5098 = vmatprep.subr.mxu0 0.0
      %5099 = vmatpush2.xpose.msra.mxu0 0.0
      %5100 = vmatprep.subr.mxu0 0.0
      %5101 = vmatpush2.xpose.msra.mxu0 0.0
      %5102 = vmatprep.subr.mxu0 0.0
      %5103 = vmatpush2.xpose.msra.mxu0 0.0
      %5104 = vmatprep.subr.mxu0 0.0
      %5105 = vmatpush2.xpose.msra.mxu0 0.0
      %5106 = vmatprep.subr.mxu0 0.0
      %5107 = vmatpush2.xpose.msra.mxu0 0.0
      %5108 = vmatprep.subr.mxu0 0.0
      %5109 = vmatpush2.xpose.msra.mxu0 0.0
      %5110 = vmatprep.subr.mxu0 0.0
      %5111 = vmatpush2.xpose.msra.mxu0 0.0
      %5112 = vmatprep.mubr.f32.mxu0 0.0
      %5113 = vmatmul.mubr.f32.gmra.mxu0 %v5044
      %v5114 = vpop.f32.mrf.mxu0
      %v5115 = vadd.f32 0.0, %v5114
      %v5116 = vpop.f32.mrf.mxu0
      %5117 = vdwg.mxu0
      %v5118 = vmul.f32 %v5115, 0.35355338
      %v5119 = vsel %vm4604, %v5118, -1e+30
      %5120 = vrot.lane.b32.xlu0 %v4606, 112
      %v5121 = vpop.permute.xlu0 %5120
      %v5123 = vsel %vm925, %v5121, 0.0
      %5124 = vadd.xlane.f32.xlu0 %v5123
      %v5125 = vpop.xlane.xlu0 %5124
      %v5126 = vmul.f32 %v5125, 0.35355338
      %v5127 = vsel %vm930, %v5119, -inf
      %5128 = vmax.xlane.f32.xlu0 %v5127
      %v5129 = vpop.xlane.xlu0 %5128
      %v5130 = vmax.f32 %v5129, %v5126
      %v5131 = vsub.f32 %v5119, %v5130
      %v5132 = vmul.f32 %v5131, 1.442695
      %v5133 = vpow.pop %v5132
      %v5134 = vsub.f32 %v5126, %v5130
      %v5135 = vmul.f32 %v5134, 1.442695
      %v5136 = vpow.pop %v5135
      %v5137 = vsel %vm930, %v5133, 0.0
      %5138 = vadd.xlane.f32.xlu0 %v5137
      %v5139 = vpop.xlane.xlu0 %5138
      %v5140 = vadd.f32 %v5136, %v5139
      %v5141 = vrcp.pop %v5140
      %v5142 = vmul.f32 %v5133, %v5141
      %v5143 = vmul.f32 %v5136, %v5141
      %v5144 = vmul.f32 %v5143, %v2122
      %5145 = vrot.lane.b32.xlu0 %v4513, 80
      %v5146 = vpop.permute.xlu0 %5145
      %5148 = vrot.lane.b32.xlu0 %v5144, 112
      %v5149 = vpop.permute.xlu0 %5148
      %v5152 = vsel %vm953, %v5142, 0
      %v5154 = vsel %vm957, %v5146, 0
      %5156 = vmatprep.subr.mxu0 0.0
      %5157 = vmatpush1.msra.mxu0 0.0
      %5158 = vmatprep.subr.mxu0 0.0
      %5159 = vmatpush1.msra.mxu0 0.0
      %5160 = vmatprep.subr.mxu0 0.0
      %5161 = vmatpush1.msra.mxu0 0.0
      %5162 = vmatprep.subr.mxu0 0.0
      %5163 = vmatpush1.msra.mxu0 0.0
      %5164 = vmatprep.subr.mxu0 0.0
      %5165 = vmatpush1.msra.mxu0 0.0
      %5166 = vmatprep.subr.mxu0 0.0
      %5167 = vmatpush1.msra.mxu0 0.0
      %5168 = vmatprep.subr.mxu0 0.0
      %5169 = vmatpush1.msra.mxu0 0.0
      %5170 = vmatprep.subr.mxu0 0.0
      %5171 = vmatpush1.msra.mxu0 0.0
      %5172 = vmatprep.subr.mxu0 0.0
      %5173 = vmatpush1.msra.mxu0 0.0
      %5174 = vmatprep.subr.mxu0 0.0
      %5175 = vmatpush1.msra.mxu0 0.0
      %5176 = vmatprep.subr.mxu0 0.0
      %5177 = vmatpush1.msra.mxu0 0.0
      %5178 = vmatprep.subr.mxu0 0.0
      %5179 = vmatpush1.msra.mxu0 0.0
      %5180 = vmatprep.subr.mxu0 0.0
      %5181 = vmatpush1.msra.mxu0 0.0
      %5182 = vmatprep.subr.mxu0 0.0
      %5183 = vmatpush1.msra.mxu0 0.0
      %5184 = vmatprep.subr.mxu0 0.0
      %5185 = vmatpush1.msra.mxu0 0.0
      %5186 = vmatprep.subr.mxu0 0.0
      %5187 = vmatpush1.msra.mxu0 %v5154
      %5188 = vmatprep.subr.mxu0 0.0
      %5189 = vmatpush2.msra.mxu0 0.0
      %5190 = vmatprep.subr.mxu0 0.0
      %5191 = vmatpush2.msra.mxu0 0.0
      %5192 = vmatprep.subr.mxu0 0.0
      %5193 = vmatpush2.msra.mxu0 0.0
      %5194 = vmatprep.subr.mxu0 0.0
      %5195 = vmatpush2.msra.mxu0 0.0
      %5196 = vmatprep.subr.mxu0 0.0
      %5197 = vmatpush2.msra.mxu0 0.0
      %5198 = vmatprep.subr.mxu0 0.0
      %5199 = vmatpush2.msra.mxu0 0.0
      %5200 = vmatprep.subr.mxu0 0.0
      %5201 = vmatpush2.msra.mxu0 0.0
      %5202 = vmatprep.subr.mxu0 0.0
      %5203 = vmatpush2.msra.mxu0 0.0
      %5204 = vmatprep.subr.mxu0 0.0
      %5205 = vmatpush2.msra.mxu0 0.0
      %5206 = vmatprep.subr.mxu0 0.0
      %5207 = vmatpush2.msra.mxu0 0.0
      %5208 = vmatprep.subr.mxu0 0.0
      %5209 = vmatpush2.msra.mxu0 0.0
      %5210 = vmatprep.subr.mxu0 0.0
      %5211 = vmatpush2.msra.mxu0 0.0
      %5212 = vmatprep.subr.mxu0 0.0
      %5213 = vmatpush2.msra.mxu0 0.0
      %5214 = vmatprep.subr.mxu0 0.0
      %5215 = vmatpush2.msra.mxu0 0.0
      %5216 = vmatprep.subr.mxu0 0.0
      %5217 = vmatpush2.msra.mxu0 0.0
      %5218 = vmatprep.subr.mxu0 0.0
      %5219 = vmatpush2.msra.mxu0 0.0
      %5220 = vmatprep.mubr.f32.mxu0 0.0
      %5221 = vmatmul.mubr.f32.gmra.mxu0 %v5152
      %v5222 = vpop.f32.mrf.mxu0
      %v5223 = vadd.f32 %v5149, %v5222
      %v5224 = vpop.f32.mrf.mxu0
      %5225 = vdwg.mxu0
      %v5227 = vsel %vm835, %v5223, 0
      %5229 = vmatprep.subr.mxu0 0.0
      %5230 = vmatpush1.msra.mxu0 0.0
      %5231 = vmatprep.subr.mxu0 0.0
      %5232 = vmatpush1.msra.mxu0 0.0
      %5233 = vmatprep.subr.mxu0 0.0
      %5234 = vmatpush1.msra.mxu0 0.0
      %5235 = vmatprep.subr.mxu0 0.0
      %5236 = vmatpush1.msra.mxu0 0.0
      %5237 = vmatprep.subr.mxu0 0.0
      %5238 = vmatpush1.msra.mxu0 0.0
      %5239 = vmatprep.subr.mxu0 0.0
      %5240 = vmatpush1.msra.mxu0 0.0
      %5241 = vmatprep.subr.mxu0 0.0
      %5242 = vmatpush1.msra.mxu0 0.0
      %5243 = vmatprep.subr.mxu0 0.0
      %5244 = vmatpush1.msra.mxu0 0.0
      %5245 = vmatprep.subr.mxu0 0.0
      %5246 = vmatpush1.msra.mxu0 0.0
      %5247 = vmatprep.subr.mxu0 0.0
      %5248 = vmatpush1.msra.mxu0 0.0
      %5249 = vmatprep.subr.mxu0 0.0
      %5250 = vmatpush1.msra.mxu0 0.0
      %5251 = vmatprep.subr.mxu0 0.0
      %5252 = vmatpush1.msra.mxu0 0.0
      %5253 = vmatprep.subr.mxu0 0.0
      %5254 = vmatpush1.msra.mxu0 0.0
      %5255 = vmatprep.subr.mxu0 0.0
      %5256 = vmatpush1.msra.mxu0 0.0
      %5257 = vmatprep.subr.mxu0 0.0
      %5258 = vmatpush1.msra.mxu0 0.0
      %5259 = vmatprep.subr.mxu0 0.0
      %5260 = vmatpush1.msra.mxu0 %v4519
      %5261 = vmatprep.subr.mxu0 0.0
      %5262 = vmatpush2.msra.mxu0 0.0
      %5263 = vmatprep.subr.mxu0 0.0
      %5264 = vmatpush2.msra.mxu0 0.0
      %5265 = vmatprep.subr.mxu0 0.0
      %5266 = vmatpush2.msra.mxu0 0.0
      %5267 = vmatprep.subr.mxu0 0.0
      %5268 = vmatpush2.msra.mxu0 0.0
      %5269 = vmatprep.subr.mxu0 0.0
      %5270 = vmatpush2.msra.mxu0 0.0
      %5271 = vmatprep.subr.mxu0 0.0
      %5272 = vmatpush2.msra.mxu0 0.0
      %5273 = vmatprep.subr.mxu0 0.0
      %5274 = vmatpush2.msra.mxu0 0.0
      %5275 = vmatprep.subr.mxu0 0.0
      %5276 = vmatpush2.msra.mxu0 0.0
      %5277 = vmatprep.subr.mxu0 0.0
      %5278 = vmatpush2.msra.mxu0 0.0
      %5279 = vmatprep.subr.mxu0 0.0
      %5280 = vmatpush2.msra.mxu0 0.0
      %5281 = vmatprep.subr.mxu0 0.0
      %5282 = vmatpush2.msra.mxu0 0.0
      %5283 = vmatprep.subr.mxu0 0.0
      %5284 = vmatpush2.msra.mxu0 0.0
      %5285 = vmatprep.subr.mxu0 0.0
      %5286 = vmatpush2.msra.mxu0 0.0
      %5287 = vmatprep.subr.mxu0 0.0
      %5288 = vmatpush2.msra.mxu0 0.0
      %5289 = vmatprep.subr.mxu0 0.0
      %5290 = vmatpush2.msra.mxu0 0.0
      %5291 = vmatprep.subr.mxu0 0.0
      %5292 = vmatpush2.msra.mxu0 0.0
      %5293 = vmatprep.mubr.f32.mxu0 0.0
      %5294 = vmatmul.mubr.f32.gmra.mxu0 %v5227
      %v5295 = vpop.f32.mrf.mxu0
      %v5296 = vadd.f32 0.0, %v5295
      %v5297 = vpop.f32.mrf.mxu0
      %5298 = vdwg.mxu0
      %v5299 = vadd.f32 %v5037, %v5296
      %5300 = vrot.lane.b32.xlu0 %v4503, 104
      %v5301 = vpop.permute.xlu0 %5300
      %5302 = vrot.lane.b32.xlu0 %v3157, 72
      %v5303 = vpop.permute.xlu0 %5302
      %v5304 = vsel %vm835, %v5301, 0
      %v5306 = vsel %vm835, %v5303, 0
      %5308 = vmatprep.subr.mxu0 0.0
      %5309 = vmatpush1.xpose.msra.mxu0 0.0
      %5310 = vmatprep.subr.mxu0 0.0
      %5311 = vmatpush1.xpose.msra.mxu0 0.0
      %5312 = vmatprep.subr.mxu0 0.0
      %5313 = vmatpush1.xpose.msra.mxu0 0.0
      %5314 = vmatprep.subr.mxu0 0.0
      %5315 = vmatpush1.xpose.msra.mxu0 0.0
      %5316 = vmatprep.subr.mxu0 0.0
      %5317 = vmatpush1.xpose.msra.mxu0 0.0
      %5318 = vmatprep.subr.mxu0 0.0
      %5319 = vmatpush1.xpose.msra.mxu0 0.0
      %5320 = vmatprep.subr.mxu0 0.0
      %5321 = vmatpush1.xpose.msra.mxu0 0.0
      %5322 = vmatprep.subr.mxu0 0.0
      %5323 = vmatpush1.xpose.msra.mxu0 0.0
      %5324 = vmatprep.subr.mxu0 0.0
      %5325 = vmatpush1.xpose.msra.mxu0 0.0
      %5326 = vmatprep.subr.mxu0 0.0
      %5327 = vmatpush1.xpose.msra.mxu0 0.0
      %5328 = vmatprep.subr.mxu0 0.0
      %5329 = vmatpush1.xpose.msra.mxu0 0.0
      %5330 = vmatprep.subr.mxu0 0.0
      %5331 = vmatpush1.xpose.msra.mxu0 0.0
      %5332 = vmatprep.subr.mxu0 0.0
      %5333 = vmatpush1.xpose.msra.mxu0 0.0
      %5334 = vmatprep.subr.mxu0 0.0
      %5335 = vmatpush1.xpose.msra.mxu0 0.0
      %5336 = vmatprep.subr.mxu0 0.0
      %5337 = vmatpush1.xpose.msra.mxu0 0.0
      %5338 = vmatprep.subr.mxu0 0.0
      %5339 = vmatpush1.xpose.msra.mxu0 %v5306
      %5340 = vmatprep.subr.mxu0 0.0
      %5341 = vmatpush2.xpose.msra.mxu0 0.0
      %5342 = vmatprep.subr.mxu0 0.0
      %5343 = vmatpush2.xpose.msra.mxu0 0.0
      %5344 = vmatprep.subr.mxu0 0.0
      %5345 = vmatpush2.xpose.msra.mxu0 0.0
      %5346 = vmatprep.subr.mxu0 0.0
      %5347 = vmatpush2.xpose.msra.mxu0 0.0
      %5348 = vmatprep.subr.mxu0 0.0
      %5349 = vmatpush2.xpose.msra.mxu0 0.0
      %5350 = vmatprep.subr.mxu0 0.0
      %5351 = vmatpush2.xpose.msra.mxu0 0.0
      %5352 = vmatprep.subr.mxu0 0.0
      %5353 = vmatpush2.xpose.msra.mxu0 0.0
      %5354 = vmatprep.subr.mxu0 0.0
      %5355 = vmatpush2.xpose.msra.mxu0 0.0
      %5356 = vmatprep.subr.mxu0 0.0
      %5357 = vmatpush2.xpose.msra.mxu0 0.0
      %5358 = vmatprep.subr.mxu0 0.0
      %5359 = vmatpush2.xpose.msra.mxu0 0.0
      %5360 = vmatprep.subr.mxu0 0.0
      %5361 = vmatpush2.xpose.msra.mxu0 0.0
      %5362 = vmatprep.subr.mxu0 0.0
      %5363 = vmatpush2.xpose.msra.mxu0 0.0
      %5364 = vmatprep.subr.mxu0 0.0
      %5365 = vmatpush2.xpose.msra.mxu0 0.0
      %5366 = vmatprep.subr.mxu0 0.0
      %5367 = vmatpush2.xpose.msra.mxu0 0.0
      %5368 = vmatprep.subr.mxu0 0.0
      %5369 = vmatpush2.xpose.msra.mxu0 0.0
      %5370 = vmatprep.subr.mxu0 0.0
      %5371 = vmatpush2.xpose.msra.mxu0 0.0
      %5372 = vmatprep.mubr.f32.mxu0 0.0
      %5373 = vmatmul.mubr.f32.gmra.mxu0 %v5304
      %v5374 = vpop.f32.mrf.mxu0
      %v5375 = vadd.f32 0.0, %v5374
      %v5376 = vpop.f32.mrf.mxu0
      %5377 = vdwg.mxu0
      %v5378 = vmul.f32 %v5375, 0.35355338
      %v5379 = vsel %vm4604, %v5378, -1e+30
      %5380 = vrot.lane.b32.xlu0 %v4606, 104
      %v5381 = vpop.permute.xlu0 %5380
      %v5383 = vsel %vm925, %v5381, 0.0
      %5384 = vadd.xlane.f32.xlu0 %v5383
      %v5385 = vpop.xlane.xlu0 %5384
      %v5386 = vmul.f32 %v5385, 0.35355338
      %v5387 = vsel %vm930, %v5379, -inf
      %5388 = vmax.xlane.f32.xlu0 %v5387
      %v5389 = vpop.xlane.xlu0 %5388
      %v5390 = vmax.f32 %v5389, %v5386
      %v5391 = vsub.f32 %v5379, %v5390
      %v5392 = vmul.f32 %v5391, 1.442695
      %v5393 = vpow.pop %v5392
      %v5394 = vsub.f32 %v5386, %v5390
      %v5395 = vmul.f32 %v5394, 1.442695
      %v5396 = vpow.pop %v5395
      %v5397 = vsel %vm930, %v5393, 0.0
      %5398 = vadd.xlane.f32.xlu0 %v5397
      %v5399 = vpop.xlane.xlu0 %5398
      %v5400 = vadd.f32 %v5396, %v5399
      %v5401 = vrcp.pop %v5400
      %v5402 = vmul.f32 %v5393, %v5401
      %v5403 = vmul.f32 %v5396, %v5401
      %v5404 = vmul.f32 %v5403, %v2122
      %5405 = vrot.lane.b32.xlu0 %v4513, 72
      %v5406 = vpop.permute.xlu0 %5405
      %5408 = vrot.lane.b32.xlu0 %v5404, 104
      %v5409 = vpop.permute.xlu0 %5408
      %v5412 = vsel %vm953, %v5402, 0
      %v5414 = vsel %vm957, %v5406, 0
      %5416 = vmatprep.subr.mxu0 0.0
      %5417 = vmatpush1.msra.mxu0 0.0
      %5418 = vmatprep.subr.mxu0 0.0
      %5419 = vmatpush1.msra.mxu0 0.0
      %5420 = vmatprep.subr.mxu0 0.0
      %5421 = vmatpush1.msra.mxu0 0.0
      %5422 = vmatprep.subr.mxu0 0.0
      %5423 = vmatpush1.msra.mxu0 0.0
      %5424 = vmatprep.subr.mxu0 0.0
      %5425 = vmatpush1.msra.mxu0 0.0
      %5426 = vmatprep.subr.mxu0 0.0
      %5427 = vmatpush1.msra.mxu0 0.0
      %5428 = vmatprep.subr.mxu0 0.0
      %5429 = vmatpush1.msra.mxu0 0.0
      %5430 = vmatprep.subr.mxu0 0.0
      %5431 = vmatpush1.msra.mxu0 0.0
      %5432 = vmatprep.subr.mxu0 0.0
      %5433 = vmatpush1.msra.mxu0 0.0
      %5434 = vmatprep.subr.mxu0 0.0
      %5435 = vmatpush1.msra.mxu0 0.0
      %5436 = vmatprep.subr.mxu0 0.0
      %5437 = vmatpush1.msra.mxu0 0.0
      %5438 = vmatprep.subr.mxu0 0.0
      %5439 = vmatpush1.msra.mxu0 0.0
      %5440 = vmatprep.subr.mxu0 0.0
      %5441 = vmatpush1.msra.mxu0 0.0
      %5442 = vmatprep.subr.mxu0 0.0
      %5443 = vmatpush1.msra.mxu0 0.0
      %5444 = vmatprep.subr.mxu0 0.0
      %5445 = vmatpush1.msra.mxu0 0.0
      %5446 = vmatprep.subr.mxu0 0.0
      %5447 = vmatpush1.msra.mxu0 %v5414
      %5448 = vmatprep.subr.mxu0 0.0
      %5449 = vmatpush2.msra.mxu0 0.0
      %5450 = vmatprep.subr.mxu0 0.0
      %5451 = vmatpush2.msra.mxu0 0.0
      %5452 = vmatprep.subr.mxu0 0.0
      %5453 = vmatpush2.msra.mxu0 0.0
      %5454 = vmatprep.subr.mxu0 0.0
      %5455 = vmatpush2.msra.mxu0 0.0
      %5456 = vmatprep.subr.mxu0 0.0
      %5457 = vmatpush2.msra.mxu0 0.0
      %5458 = vmatprep.subr.mxu0 0.0
      %5459 = vmatpush2.msra.mxu0 0.0
      %5460 = vmatprep.subr.mxu0 0.0
      %5461 = vmatpush2.msra.mxu0 0.0
      %5462 = vmatprep.subr.mxu0 0.0
      %5463 = vmatpush2.msra.mxu0 0.0
      %5464 = vmatprep.subr.mxu0 0.0
      %5465 = vmatpush2.msra.mxu0 0.0
      %5466 = vmatprep.subr.mxu0 0.0
      %5467 = vmatpush2.msra.mxu0 0.0
      %5468 = vmatprep.subr.mxu0 0.0
      %5469 = vmatpush2.msra.mxu0 0.0
      %5470 = vmatprep.subr.mxu0 0.0
      %5471 = vmatpush2.msra.mxu0 0.0
      %5472 = vmatprep.subr.mxu0 0.0
      %5473 = vmatpush2.msra.mxu0 0.0
      %5474 = vmatprep.subr.mxu0 0.0
      %5475 = vmatpush2.msra.mxu0 0.0
      %5476 = vmatprep.subr.mxu0 0.0
      %5477 = vmatpush2.msra.mxu0 0.0
      %5478 = vmatprep.subr.mxu0 0.0
      %5479 = vmatpush2.msra.mxu0 0.0
      %5480 = vmatprep.mubr.f32.mxu0 0.0
      %5481 = vmatmul.mubr.f32.gmra.mxu0 %v5412
      %v5482 = vpop.f32.mrf.mxu0
      %v5483 = vadd.f32 %v5409, %v5482
      %v5484 = vpop.f32.mrf.mxu0
      %5485 = vdwg.mxu0
      %v5487 = vsel %vm835, %v5483, 0
      %5489 = vmatprep.subr.mxu0 0.0
      %5490 = vmatpush1.msra.mxu0 0.0
      %5491 = vmatprep.subr.mxu0 0.0
      %5492 = vmatpush1.msra.mxu0 0.0
      %5493 = vmatprep.subr.mxu0 0.0
      %5494 = vmatpush1.msra.mxu0 0.0
      %5495 = vmatprep.subr.mxu0 0.0
      %5496 = vmatpush1.msra.mxu0 0.0
      %5497 = vmatprep.subr.mxu0 0.0
      %5498 = vmatpush1.msra.mxu0 0.0
      %5499 = vmatprep.subr.mxu0 0.0
      %5500 = vmatpush1.msra.mxu0 0.0
      %5501 = vmatprep.subr.mxu0 0.0
      %5502 = vmatpush1.msra.mxu0 0.0
      %5503 = vmatprep.subr.mxu0 0.0
      %5504 = vmatpush1.msra.mxu0 0.0
      %5505 = vmatprep.subr.mxu0 0.0
      %5506 = vmatpush1.msra.mxu0 0.0
      %5507 = vmatprep.subr.mxu0 0.0
      %5508 = vmatpush1.msra.mxu0 0.0
      %5509 = vmatprep.subr.mxu0 0.0
      %5510 = vmatpush1.msra.mxu0 0.0
      %5511 = vmatprep.subr.mxu0 0.0
      %5512 = vmatpush1.msra.mxu0 0.0
      %5513 = vmatprep.subr.mxu0 0.0
      %5514 = vmatpush1.msra.mxu0 0.0
      %5515 = vmatprep.subr.mxu0 0.0
      %5516 = vmatpush1.msra.mxu0 0.0
      %5517 = vmatprep.subr.mxu0 0.0
      %5518 = vmatpush1.msra.mxu0 0.0
      %5519 = vmatprep.subr.mxu0 0.0
      %5520 = vmatpush1.msra.mxu0 %v4520
      %5521 = vmatprep.subr.mxu0 0.0
      %5522 = vmatpush2.msra.mxu0 0.0
      %5523 = vmatprep.subr.mxu0 0.0
      %5524 = vmatpush2.msra.mxu0 0.0
      %5525 = vmatprep.subr.mxu0 0.0
      %5526 = vmatpush2.msra.mxu0 0.0
      %5527 = vmatprep.subr.mxu0 0.0
      %5528 = vmatpush2.msra.mxu0 0.0
      %5529 = vmatprep.subr.mxu0 0.0
      %5530 = vmatpush2.msra.mxu0 0.0
      %5531 = vmatprep.subr.mxu0 0.0
      %5532 = vmatpush2.msra.mxu0 0.0
      %5533 = vmatprep.subr.mxu0 0.0
      %5534 = vmatpush2.msra.mxu0 0.0
      %5535 = vmatprep.subr.mxu0 0.0
      %5536 = vmatpush2.msra.mxu0 0.0
      %5537 = vmatprep.subr.mxu0 0.0
      %5538 = vmatpush2.msra.mxu0 0.0
      %5539 = vmatprep.subr.mxu0 0.0
      %5540 = vmatpush2.msra.mxu0 0.0
      %5541 = vmatprep.subr.mxu0 0.0
      %5542 = vmatpush2.msra.mxu0 0.0
      %5543 = vmatprep.subr.mxu0 0.0
      %5544 = vmatpush2.msra.mxu0 0.0
      %5545 = vmatprep.subr.mxu0 0.0
      %5546 = vmatpush2.msra.mxu0 0.0
      %5547 = vmatprep.subr.mxu0 0.0
      %5548 = vmatpush2.msra.mxu0 0.0
      %5549 = vmatprep.subr.mxu0 0.0
      %5550 = vmatpush2.msra.mxu0 0.0
      %5551 = vmatprep.subr.mxu0 0.0
      %5552 = vmatpush2.msra.mxu0 0.0
      %5553 = vmatprep.mubr.f32.mxu0 0.0
      %5554 = vmatmul.mubr.f32.gmra.mxu0 %v5487
      %v5555 = vpop.f32.mrf.mxu0
      %v5556 = vadd.f32 0.0, %v5555
      %v5557 = vpop.f32.mrf.mxu0
      %5558 = vdwg.mxu0
      %v5559 = vadd.f32 %v5299, %v5556
      %s5560 = scalar_lea.vmem %s510, 6
      %v5561 = vld [vmem:[%s5560] sm:$0x3]
      %5563 = vset.pattern.permute.xlu0 0
      %5564 = vperm.xlu0 %5563, %v5561
      %v5565 = vpop.permute.xlu0 %5564
      %v5567 = vmul.f32 %v5559, %v5565
      %s5568 = scalar_lea.vmem %s517, 6
      %5569 = vst.msk [vmem:[%s5568] sm:$0x3] %vm725, %v5567
      %s5570 = smul.u32 2, %s23
      %p5571 = scmp.lt.s32.totalorder %s5570, 3
      %s5572 = scalar_select %p5571, %s5570, 3
      %s5573 = smul.addr %s5572, 2
      %s5574 = smul.addr %s5573, 2
      %s5575 = scalar_lea.vmem %s12, %s5574
      // Predicated region
      $region69: #{mixture_forward.3} parent=67 // pred_check
        %p5576 = pneg %p318
      $region70: #{mixture_forward.3} parent=67 // pred_check_branch
        %5578 = sbr.rel (%p5576) target = $region72
      $region71: #{mixture_forward.3} parent=67 // pred_region
        %s5579 = smul.u32 2, %s23
      $region72: #{mixture_forward.3} parent=67 // pred_fallthru
        _
    $region68: #{mixture_forward.3} parent=5 // pred_fallthru
      _
    %p5580 = scmp.le.s32.totalorder 2, %s18
    // Predicated region
    $region73: #{mixture_forward.3} parent=5 // pred_check
      %p5581 = pneg %p5580
    $region74: #{mixture_forward.3} parent=5 // pred_check_branch
      %5583 = sbr.rel (%p5581) target = $region76
    $region75: #{mixture_forward.3} parent=5 // pred_region
      %s5584 = ssub.s32 %s18, 2
      // Predicated region
      $region77: #{mixture_forward.3} parent=75 // pred_check
        %p5585 = pneg %p324
      $region78: #{mixture_forward.3} parent=75 // pred_check_branch
        %5587 = sbr.rel (%p5585) target = $region80
      $region79: #{mixture_forward.3} parent=75 // pred_region
        %s5588 = smul.u32 2, %s24
        %p5589 = scmp.lt.s32.totalorder %s5588, 3
        %s5590 = scalar_select %p5589, %s5588, 3
        %s5591 = smul.addr %s5590, 2
        %s5592 = smul.addr %s5591, 2
        %s5593 = scalar_lea.vmem %s12, %s5592
      $region80: #{mixture_forward.3} parent=75 // pred_fallthru
        _
    $region76: #{mixture_forward.3} parent=5 // pred_fallthru
      _
  $region6: #{mixture_forward.3} parent=0 // loop_footer
    %s22 = sadd.s32 1, %s18
  $region7: #{mixture_forward.3} parent=0 // loop_footer_branch
    %17 = sbr.rel target = $region3
  $region8: #{mixture_forward.3} parent=0 // loop_exit
    _

</llo_original>
